<compile_context>
chip_gen: v5e
topology: v5e:2x2
jax: 0.10.0
libtpu: 0.0.40
codegen_flags: <defaults>
</compile_context>

<pallas_src>
import math

import numpy as np
import jax
import jax.numpy as jnp
from jax import lax
from jax.experimental import pallas as pl
from jax.experimental.pallas import tpu as pltpu  # noqa: F401

H, W = 13, 4
HW = H * W                 # 52 valid spatial positions
M = 64                     # rows padded up to a multiple of 8 sublanes
CIN0 = 6
CIN0_PAD = 8               # layer-1 input channels padded for aligned slices
COUTS = (64, 128, 256, 256)
N_TAPS = 9
N_SHIFT_TAPS = 8           # center tap (1,1) is the identity -> uses x directly


# -----------------------------------------------------------------------------
# Fused Pallas kernel: 4 convs; each conv = 1 fused shift matmul + 9 tap matmuls
# -----------------------------------------------------------------------------
def _cnn_c_kernel(x_ref, s_ref,
                  w1_ref, b1_ref, w2_ref, b2_ref,
                  w3_ref, b3_ref, w4_ref, b4_ref, o_ref):
    # x_ref : (64, 8)         flattened HWC input (rows >= 52 and chans >= 6 zero)
    # s_ref : (8*64, 64)      stacked 0/1 shift/selection matrices (non-center taps)
    # wX_ref: (9*Cin, Cout)   stacked per-tap weight mats, row order (dh, dw, ci)
    # bX_ref: (64, Cout)      bias broadcast to rows, pre-masked to rows < 52
    # o_ref : (64, 256)

    def conv(x, w_ref, b_ref, cin):
        # ONE fused MXU matmul builds all 8 non-center zero-padded tap shifts
        # of x: (512, 64) @ (64, cin) -> (512, cin).  X is loaded into the MXU
        # once (vs. 9x before).
        shifted = jnp.dot(s_ref[...], x, preferred_element_type=jnp.float32)
        acc = b_ref[...]                                    # (64, cout) f32
        si = 0
        for t in range(N_TAPS):                             # static unroll
            if t == 4:                                      # center tap == identity
                src = x
            else:
                src = shifted[si * M:(si + 1) * M, :]       # static, 64-row aligned
                si += 1
            w_t = w_ref[t * cin:(t + 1) * cin, :]           # (cin, cout)
            acc = acc + jnp.dot(src, w_t, preferred_element_type=jnp.float32)
        return acc

    x = x_ref[...]
    a = conv(x, w1_ref, b1_ref, CIN0_PAD)
    a = conv(a, w2_ref, b2_ref, COUTS[0])
    a = conv(a, w3_ref, b3_ref, COUTS[1])
    a = conv(a, w4_ref, b4_ref, COUTS[2])
    o_ref[...] = a


# -----------------------------------------------------------------------------
# Constant shift/selection matrices implementing the 3x3 pad=1 taps
# (non-center taps only; row order is tap-major, matching the weight stacking
#  order (dh, dw) with (1,1) skipped)
# -----------------------------------------------------------------------------
def _build_shift_matrices():
    taps = [(dh, dw) for dh in range(3) for dw in range(3)
            if not (dh == 1 and dw == 1)]
    S = np.zeros((N_SHIFT_TAPS * M, M), np.float32)
    for ti, (dh, dw) in enumerate(taps):
        for h in range(H):
            for w in range(W):
                hi, wi = h + dh - 1, w + dw - 1
                if 0 <= hi < H and 0 <= wi < W:
                    S[ti * M + h * W + w, hi * W + wi] = 1.0
    return jnp.asarray(S)


# -----------------------------------------------------------------------------
# Parameters (deterministic xavier_uniform weights, zero biases, like CNN_C)
# -----------------------------------------------------------------------------
def xavier_uniform_conv(key, cout, cin, k=3):
    fan_in = cin * k * k
    fan_out = cout * k * k
    bound = math.sqrt(6.0 / (fan_in + fan_out))
    return jax.random.uniform(key, (cout, cin, k, k),
                              minval=-bound, maxval=bound, dtype=jnp.float32)


def make_params():
    k1, k2, k3, k4 = jax.random.split(jax.random.PRNGKey(0), 4)
    return {
        "w1": xavier_uniform_conv(k1, 64, 6),
        "b1": jnp.zeros((64,), jnp.float32),
        "w2": xavier_uniform_conv(k2, 128, 64),
        "b2": jnp.zeros((128,), jnp.float32),
        "w3": xavier_uniform_conv(k3, 256, 128),
        "b3": jnp.zeros((256,), jnp.float32),
        "w4": xavier_uniform_conv(k4, 256, 256),
        "b4": jnp.zeros((256,), jnp.float32),
    }


def conv_weight_to_mat(w):
    # (Cout, Cin, kh, kw) -> (kh*kw*Cin, Cout), row order (dh, dw, ci),
    # matching the tap order of the shift matrices / kernel loop.
    cout, cin, kh, kw = w.shape
    return jnp.transpose(w, (2, 3, 1, 0)).reshape(kh * kw * cin, cout)


def prepare_kernel_params(params):
    row_mask = (jnp.arange(M) < HW).astype(jnp.float32)[:, None]     # (64, 1)
    w1_pad = jnp.pad(params["w1"], ((0, 0), (0, CIN0_PAD - CIN0), (0, 0), (0, 0)))
    return {
        "S": _build_shift_matrices(),
        "w1": conv_weight_to_mat(w1_pad),
        "w2": conv_weight_to_mat(params["w2"]),
        "w3": conv_weight_to_mat(params["w3"]),
        "w4": conv_weight_to_mat(params["w4"]),
        "b1": row_mask * params["b1"][None, :],
        "b2": row_mask * params["b2"][None, :],
        "b3": row_mask * params["b3"][None, :],
        "b4": row_mask * params["b4"][None, :],
    }


# -----------------------------------------------------------------------------
# Full forward pass (CHW in, CHW out), matching CNN_C.forward
# -----------------------------------------------------------------------------
def cnn_c_forward(kp, x_chw):
    assert x_chw.shape == (CIN0, H, W), \
        f"Wrong input shape {x_chw.shape}, should be ({CIN0}, {H}, {W})."
    # one-off boundary glue: CHW -> flattened lane-dense HWC, padded to (64, 8)
    x = jnp.transpose(x_chw, (1, 2, 0)).reshape(HW, CIN0)
    x = jnp.pad(x, ((0, M - HW), (0, CIN0_PAD - CIN0)))

    out = pl.pallas_call(
        _cnn_c_kernel,
        out_shape=jax.ShapeDtypeStruct((M, COUTS[3]), jnp.float32),
        in_specs=[
            pl.BlockSpec((M, CIN0_PAD), lambda: (0, 0)),
            pl.BlockSpec((N_SHIFT_TAPS * M, M), lambda: (0, 0)),
            pl.BlockSpec((N_TAPS * CIN0_PAD, COUTS[0]), lambda: (0, 0)),
            pl.BlockSpec((M, COUTS[0]), lambda: (0, 0)),
            pl.BlockSpec((N_TAPS * COUTS[0], COUTS[1]), lambda: (0, 0)),
            pl.BlockSpec((M, COUTS[1]), lambda: (0, 0)),
            pl.BlockSpec((N_TAPS * COUTS[1], COUTS[2]), lambda: (0, 0)),
            pl.BlockSpec((M, COUTS[2]), lambda: (0, 0)),
            pl.BlockSpec((N_TAPS * COUTS[2], COUTS[3]), lambda: (0, 0)),
            pl.BlockSpec((M, COUTS[3]), lambda: (0, 0)),
        ],
        out_specs=pl.BlockSpec((M, COUTS[3]), lambda: (0, 0)),
    )(x, kp["S"], kp["w1"], kp["b1"], kp["w2"], kp["b2"],
      kp["w3"], kp["b3"], kp["w4"], kp["b4"])

    out = out[:HW].reshape(H, W, COUTS[3])
    return jnp.transpose(out, (2, 0, 1))        # (256, 13, 4)


# -----------------------------------------------------------------------------
# Pure-JAX reference (lax.conv) for correctness checking
# -----------------------------------------------------------------------------
def _reference_forward(params, x_chw):
    x = x_chw[None]                              # (1, 6, 13, 4)
    for i in (1, 2, 3, 4):
        w = params[f"w{i}"]
        b = params[f"b{i}"]
        x = lax.conv_general_dilated(
            x, w, window_strides=(1, 1), padding=((1, 1), (1, 1)),
            dimension_numbers=("NCHW", "OIHW", "NCHW"))
        x = x + b[None, :, None, None]
    return x[0]


if __name__ == "__main__":
    params = make_params()
    kp = prepare_kernel_params(params)

    x = jax.random.normal(jax.random.PRNGKey(0), (CIN0, H, W), dtype=jnp.float32)

    fwd = jax.jit(cnn_c_forward)
    out = fwd(kp, x)
    jax.block_until_ready(out)

    assert out.shape == (256, H, W), out.shape
    assert out.dtype == jnp.float32
    assert bool(jnp.all(jnp.isfinite(out)))

    ref = _reference_forward(params, x)
    max_err = float(jnp.max(jnp.abs(out - ref)))
    assert max_err < 1e-3, f"max abs error vs lax.conv reference: {max_err}"

    print("KERNEL_OK")
</pallas_src>

<mosaic_0001>
module attributes {stable_mosaic.version = 11 : i64} {
  func.func @_cnn_c_kernel(%arg0: memref<64x8xf32, #tpu.memory_space<vmem>>, %arg1: memref<512x64xf32, #tpu.memory_space<vmem>>, %arg2: memref<72x64xf32, #tpu.memory_space<vmem>>, %arg3: memref<64x64xf32, #tpu.memory_space<vmem>>, %arg4: memref<576x128xf32, #tpu.memory_space<vmem>>, %arg5: memref<64x128xf32, #tpu.memory_space<vmem>>, %arg6: memref<1152x256xf32, #tpu.memory_space<vmem>>, %arg7: memref<64x256xf32, #tpu.memory_space<vmem>>, %arg8: memref<2304x256xf32, #tpu.memory_space<vmem>>, %arg9: memref<64x256xf32, #tpu.memory_space<vmem>>, %arg10: memref<64x256xf32, #tpu.memory_space<vmem>>) attributes {dimension_semantics = [], scalar_prefetch = 0 : i64, scratch_operands = 0 : i64, tpu.core_type = #tpu.core_type<tc>} {
    %c0 = arith.constant 0 : index
    %c0_0 = arith.constant 0 : index
    %0 = vector.load %arg0[%c0, %c0_0] : memref<64x8xf32, #tpu.memory_space<vmem>>, vector<64x8xf32>
    %c0_1 = arith.constant 0 : index
    %c0_2 = arith.constant 0 : index
    %1 = vector.load %arg1[%c0_1, %c0_2] : memref<512x64xf32, #tpu.memory_space<vmem>>, vector<512x64xf32>
    %cst = arith.constant dense<0.000000e+00> : vector<512x8xf32>
    %2 = tpu.matmul %1, %0, %cst {dimension_numbers = #tpu.dot_dimension_numbers<[1], [0], [0], [1], [0, 0, 1, 1], [], []>} : vector<512x64xf32>, vector<64x8xf32>, vector<512x8xf32> -> vector<512x8xf32>
    %c0_3 = arith.constant 0 : index
    %c0_4 = arith.constant 0 : index
    %3 = vector.load %arg3[%c0_3, %c0_4] : memref<64x64xf32, #tpu.memory_space<vmem>>, vector<64x64xf32>
    %4 = vector.extract_strided_slice %2 {offsets = [0, 0], sizes = [64, 8], strides = [1, 1]} : vector<512x8xf32> to vector<64x8xf32>
    %c0_5 = arith.constant 0 : index
    %c0_6 = arith.constant 0 : index
    %5 = vector.load %arg2[%c0_5, %c0_6] : memref<72x64xf32, #tpu.memory_space<vmem>>, vector<8x64xf32>
    %cst_7 = arith.constant dense<0.000000e+00> : vector<64x64xf32>
    %6 = tpu.matmul %4, %5, %cst_7 {dimension_numbers = #tpu.dot_dimension_numbers<[1], [0], [0], [1], [0, 0, 1, 1], [], []>} : vector<64x8xf32>, vector<8x64xf32>, vector<64x64xf32> -> vector<64x64xf32>
    %7 = arith.addf %3, %6 : vector<64x64xf32>
    %8 = vector.extract_strided_slice %2 {offsets = [64, 0], sizes = [64, 8], strides = [1, 1]} : vector<512x8xf32> to vector<64x8xf32>
    %c8 = arith.constant 8 : index
    %c0_8 = arith.constant 0 : index
    %9 = vector.load %arg2[%c8, %c0_8] : memref<72x64xf32, #tpu.memory_space<vmem>>, vector<8x64xf32>
    %cst_9 = arith.constant dense<0.000000e+00> : vector<64x64xf32>
    %10 = tpu.matmul %8, %9, %cst_9 {dimension_numbers = #tpu.dot_dimension_numbers<[1], [0], [0], [1], [0, 0, 1, 1], [], []>} : vector<64x8xf32>, vector<8x64xf32>, vector<64x64xf32> -> vector<64x64xf32>
    %11 = arith.addf %7, %10 : vector<64x64xf32>
    %12 = vector.extract_strided_slice %2 {offsets = [128, 0], sizes = [64, 8], strides = [1, 1]} : vector<512x8xf32> to vector<64x8xf32>
    %c16 = arith.constant 16 : index
    %c0_10 = arith.constant 0 : index
    %13 = vector.load %arg2[%c16, %c0_10] : memref<72x64xf32, #tpu.memory_space<vmem>>, vector<8x64xf32>
    %cst_11 = arith.constant dense<0.000000e+00> : vector<64x64xf32>
    %14 = tpu.matmul %12, %13, %cst_11 {dimension_numbers = #tpu.dot_dimension_numbers<[1], [0], [0], [1], [0, 0, 1, 1], [], []>} : vector<64x8xf32>, vector<8x64xf32>, vector<64x64xf32> -> vector<64x64xf32>
    %15 = arith.addf %11, %14 : vector<64x64xf32>
    %16 = vector.extract_strided_slice %2 {offsets = [192, 0], sizes = [64, 8], strides = [1, 1]} : vector<512x8xf32> to vector<64x8xf32>
    %c24 = arith.constant 24 : index
    %c0_12 = arith.constant 0 : index
    %17 = vector.load %arg2[%c24, %c0_12] : memref<72x64xf32, #tpu.memory_space<vmem>>, vector<8x64xf32>
    %cst_13 = arith.constant dense<0.000000e+00> : vector<64x64xf32>
    %18 = tpu.matmul %16, %17, %cst_13 {dimension_numbers = #tpu.dot_dimension_numbers<[1], [0], [0], [1], [0, 0, 1, 1], [], []>} : vector<64x8xf32>, vector<8x64xf32>, vector<64x64xf32> -> vector<64x64xf32>
    %19 = arith.addf %15, %18 : vector<64x64xf32>
    %c32 = arith.constant 32 : index
    %c0_14 = arith.constant 0 : index
    %20 = vector.load %arg2[%c32, %c0_14] : memref<72x64xf32, #tpu.memory_space<vmem>>, vector<8x64xf32>
    %cst_15 = arith.constant dense<0.000000e+00> : vector<64x64xf32>
    %21 = tpu.matmul %0, %20, %cst_15 {dimension_numbers = #tpu.dot_dimension_numbers<[1], [0], [0], [1], [0, 0, 1, 1], [], []>} : vector<64x8xf32>, vector<8x64xf32>, vector<64x64xf32> -> vector<64x64xf32>
    %22 = arith.addf %19, %21 : vector<64x64xf32>
    %23 = vector.extract_strided_slice %2 {offsets = [256, 0], sizes = [64, 8], strides = [1, 1]} : vector<512x8xf32> to vector<64x8xf32>
    %c40 = arith.constant 40 : index
    %c0_16 = arith.constant 0 : index
    %24 = vector.load %arg2[%c40, %c0_16] : memref<72x64xf32, #tpu.memory_space<vmem>>, vector<8x64xf32>
    %cst_17 = arith.constant dense<0.000000e+00> : vector<64x64xf32>
    %25 = tpu.matmul %23, %24, %cst_17 {dimension_numbers = #tpu.dot_dimension_numbers<[1], [0], [0], [1], [0, 0, 1, 1], [], []>} : vector<64x8xf32>, vector<8x64xf32>, vector<64x64xf32> -> vector<64x64xf32>
    %26 = arith.addf %22, %25 : vector<64x64xf32>
    %27 = vector.extract_strided_slice %2 {offsets = [320, 0], sizes = [64, 8], strides = [1, 1]} : vector<512x8xf32> to vector<64x8xf32>
    %c48 = arith.constant 48 : index
    %c0_18 = arith.constant 0 : index
    %28 = vector.load %arg2[%c48, %c0_18] : memref<72x64xf32, #tpu.memory_space<vmem>>, vector<8x64xf32>
    %cst_19 = arith.constant dense<0.000000e+00> : vector<64x64xf32>
    %29 = tpu.matmul %27, %28, %cst_19 {dimension_numbers = #tpu.dot_dimension_numbers<[1], [0], [0], [1], [0, 0, 1, 1], [], []>} : vector<64x8xf32>, vector<8x64xf32>, vector<64x64xf32> -> vector<64x64xf32>
    %30 = arith.addf %26, %29 : vector<64x64xf32>
    %31 = vector.extract_strided_slice %2 {offsets = [384, 0], sizes = [64, 8], strides = [1, 1]} : vector<512x8xf32> to vector<64x8xf32>
    %c56 = arith.constant 56 : index
    %c0_20 = arith.constant 0 : index
    %32 = vector.load %arg2[%c56, %c0_20] : memref<72x64xf32, #tpu.memory_space<vmem>>, vector<8x64xf32>
    %cst_21 = arith.constant dense<0.000000e+00> : vector<64x64xf32>
    %33 = tpu.matmul %31, %32, %cst_21 {dimension_numbers = #tpu.dot_dimension_numbers<[1], [0], [0], [1], [0, 0, 1, 1], [], []>} : vector<64x8xf32>, vector<8x64xf32>, vector<64x64xf32> -> vector<64x64xf32>
    %34 = arith.addf %30, %33 : vector<64x64xf32>
    %35 = vector.extract_strided_slice %2 {offsets = [448, 0], sizes = [64, 8], strides = [1, 1]} : vector<512x8xf32> to vector<64x8xf32>
    %c64 = arith.constant 64 : index
    %c0_22 = arith.constant 0 : index
    %36 = vector.load %arg2[%c64, %c0_22] : memref<72x64xf32, #tpu.memory_space<vmem>>, vector<8x64xf32>
    %cst_23 = arith.constant dense<0.000000e+00> : vector<64x64xf32>
    %37 = tpu.matmul %35, %36, %cst_23 {dimension_numbers = #tpu.dot_dimension_numbers<[1], [0], [0], [1], [0, 0, 1, 1], [], []>} : vector<64x8xf32>, vector<8x64xf32>, vector<64x64xf32> -> vector<64x64xf32>
    %38 = arith.addf %34, %37 : vector<64x64xf32>
    %c0_24 = arith.constant 0 : index
    %c0_25 = arith.constant 0 : index
    %39 = vector.load %arg1[%c0_24, %c0_25] : memref<512x64xf32, #tpu.memory_space<vmem>>, vector<512x64xf32>
    %cst_26 = arith.constant dense<0.000000e+00> : vector<512x64xf32>
    %40 = tpu.matmul %39, %38, %cst_26 {dimension_numbers = #tpu.dot_dimension_numbers<[1], [0], [0], [1], [0, 0, 1, 1], [], []>} : vector<512x64xf32>, vector<64x64xf32>, vector<512x64xf32> -> vector<512x64xf32>
    %c0_27 = arith.constant 0 : index
    %c0_28 = arith.constant 0 : index
    %41 = vector.load %arg5[%c0_27, %c0_28] : memref<64x128xf32, #tpu.memory_space<vmem>>, vector<64x128xf32>
    %42 = vector.extract_strided_slice %40 {offsets = [0, 0], sizes = [64, 64], strides = [1, 1]} : vector<512x64xf32> to vector<64x64xf32>
    %c0_29 = arith.constant 0 : index
    %c0_30 = arith.constant 0 : index
    %43 = vector.load %arg4[%c0_29, %c0_30] : memref<576x128xf32, #tpu.memory_space<vmem>>, vector<64x128xf32>
    %cst_31 = arith.constant dense<0.000000e+00> : vector<64x128xf32>
    %44 = tpu.matmul %42, %43, %cst_31 {dimension_numbers = #tpu.dot_dimension_numbers<[1], [0], [0], [1], [0, 0, 1, 1], [], []>} : vector<64x64xf32>, vector<64x128xf32>, vector<64x128xf32> -> vector<64x128xf32>
    %45 = arith.addf %41, %44 : vector<64x128xf32>
    %46 = vector.extract_strided_slice %40 {offsets = [64, 0], sizes = [64, 64], strides = [1, 1]} : vector<512x64xf32> to vector<64x64xf32>
    %c64_32 = arith.constant 64 : index
    %c0_33 = arith.constant 0 : index
    %47 = vector.load %arg4[%c64_32, %c0_33] : memref<576x128xf32, #tpu.memory_space<vmem>>, vector<64x128xf32>
    %cst_34 = arith.constant dense<0.000000e+00> : vector<64x128xf32>
    %48 = tpu.matmul %46, %47, %cst_34 {dimension_numbers = #tpu.dot_dimension_numbers<[1], [0], [0], [1], [0, 0, 1, 1], [], []>} : vector<64x64xf32>, vector<64x128xf32>, vector<64x128xf32> -> vector<64x128xf32>
    %49 = arith.addf %45, %48 : vector<64x128xf32>
    %50 = vector.extract_strided_slice %40 {offsets = [128, 0], sizes = [64, 64], strides = [1, 1]} : vector<512x64xf32> to vector<64x64xf32>
    %c128 = arith.constant 128 : index
    %c0_35 = arith.constant 0 : index
    %51 = vector.load %arg4[%c128, %c0_35] : memref<576x128xf32, #tpu.memory_space<vmem>>, vector<64x128xf32>
    %cst_36 = arith.constant dense<0.000000e+00> : vector<64x128xf32>
    %52 = tpu.matmul %50, %51, %cst_36 {dimension_numbers = #tpu.dot_dimension_numbers<[1], [0], [0], [1], [0, 0, 1, 1], [], []>} : vector<64x64xf32>, vector<64x128xf32>, vector<64x128xf32> -> vector<64x128xf32>
    %53 = arith.addf %49, %52 : vector<64x128xf32>
    %54 = vector.extract_strided_slice %40 {offsets = [192, 0], sizes = [64, 64], strides = [1, 1]} : vector<512x64xf32> to vector<64x64xf32>
    %c192 = arith.constant 192 : index
    %c0_37 = arith.constant 0 : index
    %55 = vector.load %arg4[%c192, %c0_37] : memref<576x128xf32, #tpu.memory_space<vmem>>, vector<64x128xf32>
    %cst_38 = arith.constant dense<0.000000e+00> : vector<64x128xf32>
    %56 = tpu.matmul %54, %55, %cst_38 {dimension_numbers = #tpu.dot_dimension_numbers<[1], [0], [0], [1], [0, 0, 1, 1], [], []>} : vector<64x64xf32>, vector<64x128xf32>, vector<64x128xf32> -> vector<64x128xf32>
    %57 = arith.addf %53, %56 : vector<64x128xf32>
    %c256 = arith.constant 256 : index
    %c0_39 = arith.constant 0 : index
    %58 = vector.load %arg4[%c256, %c0_39] : memref<576x128xf32, #tpu.memory_space<vmem>>, vector<64x128xf32>
    %cst_40 = arith.constant dense<0.000000e+00> : vector<64x128xf32>
    %59 = tpu.matmul %38, %58, %cst_40 {dimension_numbers = #tpu.dot_dimension_numbers<[1], [0], [0], [1], [0, 0, 1, 1], [], []>} : vector<64x64xf32>, vector<64x128xf32>, vector<64x128xf32> -> vector<64x128xf32>
    %60 = arith.addf %57, %59 : vector<64x128xf32>
    %61 = vector.extract_strided_slice %40 {offsets = [256, 0], sizes = [64, 64], strides = [1, 1]} : vector<512x64xf32> to vector<64x64xf32>
    %c320 = arith.constant 320 : index
    %c0_41 = arith.constant 0 : index
    %62 = vector.load %arg4[%c320, %c0_41] : memref<576x128xf32, #tpu.memory_space<vmem>>, vector<64x128xf32>
    %cst_42 = arith.constant dense<0.000000e+00> : vector<64x128xf32>
    %63 = tpu.matmul %61, %62, %cst_42 {dimension_numbers = #tpu.dot_dimension_numbers<[1], [0], [0], [1], [0, 0, 1, 1], [], []>} : vector<64x64xf32>, vector<64x128xf32>, vector<64x128xf32> -> vector<64x128xf32>
    %64 = arith.addf %60, %63 : vector<64x128xf32>
    %65 = vector.extract_strided_slice %40 {offsets = [320, 0], sizes = [64, 64], strides = [1, 1]} : vector<512x64xf32> to vector<64x64xf32>
    %c384 = arith.constant 384 : index
    %c0_43 = arith.constant 0 : index
    %66 = vector.load %arg4[%c384, %c0_43] : memref<576x128xf32, #tpu.memory_space<vmem>>, vector<64x128xf32>
    %cst_44 = arith.constant dense<0.000000e+00> : vector<64x128xf32>
    %67 = tpu.matmul %65, %66, %cst_44 {dimension_numbers = #tpu.dot_dimension_numbers<[1], [0], [0], [1], [0, 0, 1, 1], [], []>} : vector<64x64xf32>, vector<64x128xf32>, vector<64x128xf32> -> vector<64x128xf32>
    %68 = arith.addf %64, %67 : vector<64x128xf32>
    %69 = vector.extract_strided_slice %40 {offsets = [384, 0], sizes = [64, 64], strides = [1, 1]} : vector<512x64xf32> to vector<64x64xf32>
    %c448 = arith.constant 448 : index
    %c0_45 = arith.constant 0 : index
    %70 = vector.load %arg4[%c448, %c0_45] : memref<576x128xf32, #tpu.memory_space<vmem>>, vector<64x128xf32>
    %cst_46 = arith.constant dense<0.000000e+00> : vector<64x128xf32>
    %71 = tpu.matmul %69, %70, %cst_46 {dimension_numbers = #tpu.dot_dimension_numbers<[1], [0], [0], [1], [0, 0, 1, 1], [], []>} : vector<64x64xf32>, vector<64x128xf32>, vector<64x128xf32> -> vector<64x128xf32>
    %72 = arith.addf %68, %71 : vector<64x128xf32>
    %73 = vector.extract_strided_slice %40 {offsets = [448, 0], sizes = [64, 64], strides = [1, 1]} : vector<512x64xf32> to vector<64x64xf32>
    %c512 = arith.constant 512 : index
    %c0_47 = arith.constant 0 : index
    %74 = vector.load %arg4[%c512, %c0_47] : memref<576x128xf32, #tpu.memory_space<vmem>>, vector<64x128xf32>
    %cst_48 = arith.constant dense<0.000000e+00> : vector<64x128xf32>
    %75 = tpu.matmul %73, %74, %cst_48 {dimension_numbers = #tpu.dot_dimension_numbers<[1], [0], [0], [1], [0, 0, 1, 1], [], []>} : vector<64x64xf32>, vector<64x128xf32>, vector<64x128xf32> -> vector<64x128xf32>
    %76 = arith.addf %72, %75 : vector<64x128xf32>
    %c0_49 = arith.constant 0 : index
    %c0_50 = arith.constant 0 : index
    %77 = vector.load %arg1[%c0_49, %c0_50] : memref<512x64xf32, #tpu.memory_space<vmem>>, vector<512x64xf32>
    %cst_51 = arith.constant dense<0.000000e+00> : vector<512x128xf32>
    %78 = tpu.matmul %77, %76, %cst_51 {dimension_numbers = #tpu.dot_dimension_numbers<[1], [0], [0], [1], [0, 0, 1, 1], [], []>} : vector<512x64xf32>, vector<64x128xf32>, vector<512x128xf32> -> vector<512x128xf32>
    %c0_52 = arith.constant 0 : index
    %c0_53 = arith.constant 0 : index
    %79 = vector.load %arg7[%c0_52, %c0_53] : memref<64x256xf32, #tpu.memory_space<vmem>>, vector<64x256xf32>
    %80 = vector.extract_strided_slice %78 {offsets = [0, 0], sizes = [64, 128], strides = [1, 1]} : vector<512x128xf32> to vector<64x128xf32>
    %c0_54 = arith.constant 0 : index
    %c0_55 = arith.constant 0 : index
    %81 = vector.load %arg6[%c0_54, %c0_55] : memref<1152x256xf32, #tpu.memory_space<vmem>>, vector<128x256xf32>
    %cst_56 = arith.constant dense<0.000000e+00> : vector<64x256xf32>
    %82 = tpu.matmul %80, %81, %cst_56 {dimension_numbers = #tpu.dot_dimension_numbers<[1], [0], [0], [1], [0, 0, 1, 1], [], []>} : vector<64x128xf32>, vector<128x256xf32>, vector<64x256xf32> -> vector<64x256xf32>
    %83 = arith.addf %79, %82 : vector<64x256xf32>
    %84 = vector.extract_strided_slice %78 {offsets = [64, 0], sizes = [64, 128], strides = [1, 1]} : vector<512x128xf32> to vector<64x128xf32>
    %c128_57 = arith.constant 128 : index
    %c0_58 = arith.constant 0 : index
    %85 = vector.load %arg6[%c128_57, %c0_58] : memref<1152x256xf32, #tpu.memory_space<vmem>>, vector<128x256xf32>
    %cst_59 = arith.constant dense<0.000000e+00> : vector<64x256xf32>
    %86 = tpu.matmul %84, %85, %cst_59 {dimension_numbers = #tpu.dot_dimension_numbers<[1], [0], [0], [1], [0, 0, 1, 1], [], []>} : vector<64x128xf32>, vector<128x256xf32>, vector<64x256xf32> -> vector<64x256xf32>
    %87 = arith.addf %83, %86 : vector<64x256xf32>
    %88 = vector.extract_strided_slice %78 {offsets = [128, 0], sizes = [64, 128], strides = [1, 1]} : vector<512x128xf32> to vector<64x128xf32>
    %c256_60 = arith.constant 256 : index
    %c0_61 = arith.constant 0 : index
    %89 = vector.load %arg6[%c256_60, %c0_61] : memref<1152x256xf32, #tpu.memory_space<vmem>>, vector<128x256xf32>
    %cst_62 = arith.constant dense<0.000000e+00> : vector<64x256xf32>
    %90 = tpu.matmul %88, %89, %cst_62 {dimension_numbers = #tpu.dot_dimension_numbers<[1], [0], [0], [1], [0, 0, 1, 1], [], []>} : vector<64x128xf32>, vector<128x256xf32>, vector<64x256xf32> -> vector<64x256xf32>
    %91 = arith.addf %87, %90 : vector<64x256xf32>
    %92 = vector.extract_strided_slice %78 {offsets = [192, 0], sizes = [64, 128], strides = [1, 1]} : vector<512x128xf32> to vector<64x128xf32>
    %c384_63 = arith.constant 384 : index
    %c0_64 = arith.constant 0 : index
    %93 = vector.load %arg6[%c384_63, %c0_64] : memref<1152x256xf32, #tpu.memory_space<vmem>>, vector<128x256xf32>
    %cst_65 = arith.constant dense<0.000000e+00> : vector<64x256xf32>
    %94 = tpu.matmul %92, %93, %cst_65 {dimension_numbers = #tpu.dot_dimension_numbers<[1], [0], [0], [1], [0, 0, 1, 1], [], []>} : vector<64x128xf32>, vector<128x256xf32>, vector<64x256xf32> -> vector<64x256xf32>
    %95 = arith.addf %91, %94 : vector<64x256xf32>
    %c512_66 = arith.constant 512 : index
    %c0_67 = arith.constant 0 : index
    %96 = vector.load %arg6[%c512_66, %c0_67] : memref<1152x256xf32, #tpu.memory_space<vmem>>, vector<128x256xf32>
    %cst_68 = arith.constant dense<0.000000e+00> : vector<64x256xf32>
    %97 = tpu.matmul %76, %96, %cst_68 {dimension_numbers = #tpu.dot_dimension_numbers<[1], [0], [0], [1], [0, 0, 1, 1], [], []>} : vector<64x128xf32>, vector<128x256xf32>, vector<64x256xf32> -> vector<64x256xf32>
    %98 = arith.addf %95, %97 : vector<64x256xf32>
    %99 = vector.extract_strided_slice %78 {offsets = [256, 0], sizes = [64, 128], strides = [1, 1]} : vector<512x128xf32> to vector<64x128xf32>
    %c640 = arith.constant 640 : index
    %c0_69 = arith.constant 0 : index
    %100 = vector.load %arg6[%c640, %c0_69] : memref<1152x256xf32, #tpu.memory_space<vmem>>, vector<128x256xf32>
    %cst_70 = arith.constant dense<0.000000e+00> : vector<64x256xf32>
    %101 = tpu.matmul %99, %100, %cst_70 {dimension_numbers = #tpu.dot_dimension_numbers<[1], [0], [0], [1], [0, 0, 1, 1], [], []>} : vector<64x128xf32>, vector<128x256xf32>, vector<64x256xf32> -> vector<64x256xf32>
    %102 = arith.addf %98, %101 : vector<64x256xf32>
    %103 = vector.extract_strided_slice %78 {offsets = [320, 0], sizes = [64, 128], strides = [1, 1]} : vector<512x128xf32> to vector<64x128xf32>
    %c768 = arith.constant 768 : index
    %c0_71 = arith.constant 0 : index
    %104 = vector.load %arg6[%c768, %c0_71] : memref<1152x256xf32, #tpu.memory_space<vmem>>, vector<128x256xf32>
    %cst_72 = arith.constant dense<0.000000e+00> : vector<64x256xf32>
    %105 = tpu.matmul %103, %104, %cst_72 {dimension_numbers = #tpu.dot_dimension_numbers<[1], [0], [0], [1], [0, 0, 1, 1], [], []>} : vector<64x128xf32>, vector<128x256xf32>, vector<64x256xf32> -> vector<64x256xf32>
    %106 = arith.addf %102, %105 : vector<64x256xf32>
    %107 = vector.extract_strided_slice %78 {offsets = [384, 0], sizes = [64, 128], strides = [1, 1]} : vector<512x128xf32> to vector<64x128xf32>
    %c896 = arith.constant 896 : index
    %c0_73 = arith.constant 0 : index
    %108 = vector.load %arg6[%c896, %c0_73] : memref<1152x256xf32, #tpu.memory_space<vmem>>, vector<128x256xf32>
    %cst_74 = arith.constant dense<0.000000e+00> : vector<64x256xf32>
    %109 = tpu.matmul %107, %108, %cst_74 {dimension_numbers = #tpu.dot_dimension_numbers<[1], [0], [0], [1], [0, 0, 1, 1], [], []>} : vector<64x128xf32>, vector<128x256xf32>, vector<64x256xf32> -> vector<64x256xf32>
    %110 = arith.addf %106, %109 : vector<64x256xf32>
    %111 = vector.extract_strided_slice %78 {offsets = [448, 0], sizes = [64, 128], strides = [1, 1]} : vector<512x128xf32> to vector<64x128xf32>
    %c1024 = arith.constant 1024 : index
    %c0_75 = arith.constant 0 : index
    %112 = vector.load %arg6[%c1024, %c0_75] : memref<1152x256xf32, #tpu.memory_space<vmem>>, vector<128x256xf32>
    %cst_76 = arith.constant dense<0.000000e+00> : vector<64x256xf32>
    %113 = tpu.matmul %111, %112, %cst_76 {dimension_numbers = #tpu.dot_dimension_numbers<[1], [0], [0], [1], [0, 0, 1, 1], [], []>} : vector<64x128xf32>, vector<128x256xf32>, vector<64x256xf32> -> vector<64x256xf32>
    %114 = arith.addf %110, %113 : vector<64x256xf32>
    %c0_77 = arith.constant 0 : index
    %c0_78 = arith.constant 0 : index
    %115 = vector.load %arg1[%c0_77, %c0_78] : memref<512x64xf32, #tpu.memory_space<vmem>>, vector<512x64xf32>
    %cst_79 = arith.constant dense<0.000000e+00> : vector<512x256xf32>
    %116 = tpu.matmul %115, %114, %cst_79 {dimension_numbers = #tpu.dot_dimension_numbers<[1], [0], [0], [1], [0, 0, 1, 1], [], []>} : vector<512x64xf32>, vector<64x256xf32>, vector<512x256xf32> -> vector<512x256xf32>
    %c0_80 = arith.constant 0 : index
    %c0_81 = arith.constant 0 : index
    %117 = vector.load %arg9[%c0_80, %c0_81] : memref<64x256xf32, #tpu.memory_space<vmem>>, vector<64x256xf32>
    %118 = vector.extract_strided_slice %116 {offsets = [0, 0], sizes = [64, 256], strides = [1, 1]} : vector<512x256xf32> to vector<64x256xf32>
    %c0_82 = arith.constant 0 : index
    %c0_83 = arith.constant 0 : index
    %119 = vector.load %arg8[%c0_82, %c0_83] : memref<2304x256xf32, #tpu.memory_space<vmem>>, vector<256x256xf32>
    %cst_84 = arith.constant dense<0.000000e+00> : vector<64x256xf32>
    %120 = tpu.matmul %118, %119, %cst_84 {dimension_numbers = #tpu.dot_dimension_numbers<[1], [0], [0], [1], [0, 0, 1, 1], [], []>} : vector<64x256xf32>, vector<256x256xf32>, vector<64x256xf32> -> vector<64x256xf32>
    %121 = arith.addf %117, %120 : vector<64x256xf32>
    %122 = vector.extract_strided_slice %116 {offsets = [64, 0], sizes = [64, 256], strides = [1, 1]} : vector<512x256xf32> to vector<64x256xf32>
    %c256_85 = arith.constant 256 : index
    %c0_86 = arith.constant 0 : index
    %123 = vector.load %arg8[%c256_85, %c0_86] : memref<2304x256xf32, #tpu.memory_space<vmem>>, vector<256x256xf32>
    %cst_87 = arith.constant dense<0.000000e+00> : vector<64x256xf32>
    %124 = tpu.matmul %122, %123, %cst_87 {dimension_numbers = #tpu.dot_dimension_numbers<[1], [0], [0], [1], [0, 0, 1, 1], [], []>} : vector<64x256xf32>, vector<256x256xf32>, vector<64x256xf32> -> vector<64x256xf32>
    %125 = arith.addf %121, %124 : vector<64x256xf32>
    %126 = vector.extract_strided_slice %116 {offsets = [128, 0], sizes = [64, 256], strides = [1, 1]} : vector<512x256xf32> to vector<64x256xf32>
    %c512_88 = arith.constant 512 : index
    %c0_89 = arith.constant 0 : index
    %127 = vector.load %arg8[%c512_88, %c0_89] : memref<2304x256xf32, #tpu.memory_space<vmem>>, vector<256x256xf32>
    %cst_90 = arith.constant dense<0.000000e+00> : vector<64x256xf32>
    %128 = tpu.matmul %126, %127, %cst_90 {dimension_numbers = #tpu.dot_dimension_numbers<[1], [0], [0], [1], [0, 0, 1, 1], [], []>} : vector<64x256xf32>, vector<256x256xf32>, vector<64x256xf32> -> vector<64x256xf32>
    %129 = arith.addf %125, %128 : vector<64x256xf32>
    %130 = vector.extract_strided_slice %116 {offsets = [192, 0], sizes = [64, 256], strides = [1, 1]} : vector<512x256xf32> to vector<64x256xf32>
    %c768_91 = arith.constant 768 : index
    %c0_92 = arith.constant 0 : index
    %131 = vector.load %arg8[%c768_91, %c0_92] : memref<2304x256xf32, #tpu.memory_space<vmem>>, vector<256x256xf32>
    %cst_93 = arith.constant dense<0.000000e+00> : vector<64x256xf32>
    %132 = tpu.matmul %130, %131, %cst_93 {dimension_numbers = #tpu.dot_dimension_numbers<[1], [0], [0], [1], [0, 0, 1, 1], [], []>} : vector<64x256xf32>, vector<256x256xf32>, vector<64x256xf32> -> vector<64x256xf32>
    %133 = arith.addf %129, %132 : vector<64x256xf32>
    %c1024_94 = arith.constant 1024 : index
    %c0_95 = arith.constant 0 : index
    %134 = vector.load %arg8[%c1024_94, %c0_95] : memref<2304x256xf32, #tpu.memory_space<vmem>>, vector<256x256xf32>
    %cst_96 = arith.constant dense<0.000000e+00> : vector<64x256xf32>
    %135 = tpu.matmul %114, %134, %cst_96 {dimension_numbers = #tpu.dot_dimension_numbers<[1], [0], [0], [1], [0, 0, 1, 1], [], []>} : vector<64x256xf32>, vector<256x256xf32>, vector<64x256xf32> -> vector<64x256xf32>
    %136 = arith.addf %133, %135 : vector<64x256xf32>
    %137 = vector.extract_strided_slice %116 {offsets = [256, 0], sizes = [64, 256], strides = [1, 1]} : vector<512x256xf32> to vector<64x256xf32>
    %c1280 = arith.constant 1280 : index
    %c0_97 = arith.constant 0 : index
    %138 = vector.load %arg8[%c1280, %c0_97] : memref<2304x256xf32, #tpu.memory_space<vmem>>, vector<256x256xf32>
    %cst_98 = arith.constant dense<0.000000e+00> : vector<64x256xf32>
    %139 = tpu.matmul %137, %138, %cst_98 {dimension_numbers = #tpu.dot_dimension_numbers<[1], [0], [0], [1], [0, 0, 1, 1], [], []>} : vector<64x256xf32>, vector<256x256xf32>, vector<64x256xf32> -> vector<64x256xf32>
    %140 = arith.addf %136, %139 : vector<64x256xf32>
    %141 = vector.extract_strided_slice %116 {offsets = [320, 0], sizes = [64, 256], strides = [1, 1]} : vector<512x256xf32> to vector<64x256xf32>
    %c1536 = arith.constant 1536 : index
    %c0_99 = arith.constant 0 : index
    %142 = vector.load %arg8[%c1536, %c0_99] : memref<2304x256xf32, #tpu.memory_space<vmem>>, vector<256x256xf32>
    %cst_100 = arith.constant dense<0.000000e+00> : vector<64x256xf32>
    %143 = tpu.matmul %141, %142, %cst_100 {dimension_numbers = #tpu.dot_dimension_numbers<[1], [0], [0], [1], [0, 0, 1, 1], [], []>} : vector<64x256xf32>, vector<256x256xf32>, vector<64x256xf32> -> vector<64x256xf32>
    %144 = arith.addf %140, %143 : vector<64x256xf32>
    %145 = vector.extract_strided_slice %116 {offsets = [384, 0], sizes = [64, 256], strides = [1, 1]} : vector<512x256xf32> to vector<64x256xf32>
    %c1792 = arith.constant 1792 : index
    %c0_101 = arith.constant 0 : index
    %146 = vector.load %arg8[%c1792, %c0_101] : memref<2304x256xf32, #tpu.memory_space<vmem>>, vector<256x256xf32>
    %cst_102 = arith.constant dense<0.000000e+00> : vector<64x256xf32>
    %147 = tpu.matmul %145, %146, %cst_102 {dimension_numbers = #tpu.dot_dimension_numbers<[1], [0], [0], [1], [0, 0, 1, 1], [], []>} : vector<64x256xf32>, vector<256x256xf32>, vector<64x256xf32> -> vector<64x256xf32>
    %148 = arith.addf %144, %147 : vector<64x256xf32>
    %149 = vector.extract_strided_slice %116 {offsets = [448, 0], sizes = [64, 256], strides = [1, 1]} : vector<512x256xf32> to vector<64x256xf32>
    %c2048 = arith.constant 2048 : index
    %c0_103 = arith.constant 0 : index
    %150 = vector.load %arg8[%c2048, %c0_103] : memref<2304x256xf32, #tpu.memory_space<vmem>>, vector<256x256xf32>
    %cst_104 = arith.constant dense<0.000000e+00> : vector<64x256xf32>
    %151 = tpu.matmul %149, %150, %cst_104 {dimension_numbers = #tpu.dot_dimension_numbers<[1], [0], [0], [1], [0, 0, 1, 1], [], []>} : vector<64x256xf32>, vector<256x256xf32>, vector<64x256xf32> -> vector<64x256xf32>
    %152 = arith.addf %148, %151 : vector<64x256xf32>
    %c0_105 = arith.constant 0 : index
    %c0_106 = arith.constant 0 : index
    %153 = vector.load %arg10[%c0_105, %c0_106] : memref<64x256xf32, #tpu.memory_space<vmem>>, vector<64x256xf32>
    tpu.vector_store %arg10[%c0_105, %c0_106], %152 {strides = array<i32>} : memref<64x256xf32, #tpu.memory_space<vmem>>, vector<64x256xf32>,
    return
  }
}

</mosaic_0001>

<llo_original>
// kernel: cnn_c_forward.1
$region0: #{cnn_c_forward.1}
  #allocation0 [shape = 'u32[]', space=smem, size = 0x4, offset = 0x4, fixed_abs, tag = 'smem constant byte address 0x4 - core index']
  #allocation1 [shape = 'u32[72,128]{1,0:T(1,128)}', space=vmem, size = 0x9000, scoped, tag = 'internal scratch']
  %s0 = inlined_call_operand.vmem [shape: f32[64,8], index: 0, kind: input, shape index: {}]
  %s1 = inlined_call_operand.vmem [shape: f32[512,64], index: 1, kind: input, shape index: {}]
  %s2 = inlined_call_operand.vmem [shape: f32[72,64], index: 2, kind: input, shape index: {}]
  %s3 = inlined_call_operand.hbm [shape: f32[64,64], index: 3, kind: input, shape index: {}]
  %s4 = inlined_call_operand.hbm [shape: f32[576,128], index: 4, kind: input, shape index: {}]
  %s5 = inlined_call_operand.hbm [shape: f32[64,128], index: 5, kind: input, shape index: {}]
  %s6 = inlined_call_operand.hbm [shape: f32[1152,256], index: 6, kind: input, shape index: {}]
  %s7 = inlined_call_operand.hbm [shape: f32[64,256], index: 7, kind: input, shape index: {}]
  %s8 = inlined_call_operand.hbm [shape: f32[2304,256], index: 8, kind: input, shape index: {}]
  %s9 = inlined_call_operand.hbm [shape: f32[64,256], index: 9, kind: input, shape index: {}]
  %s10 = inlined_call_operand.vmem [shape: f32[64,256], index: 10, kind: output, shape index: {}]
  %s11 = sld [smem:[#allocation0]]
  $region78: #{cnn_c_forward.1} parent=0
    _
  %s13 = ssub.s32 1, %s11
  %s14 = scalar_select 0, %s13, %s11
  $region1: #{cnn_c_forward.1} parent=0
    #allocation2 [shape = 'u8[32768]{0}', space=vmem, size = 0x8000, scoped, tag = 'input window, operand 3, single buffered']
    #allocation3 [shape = 's32[1]{0}', space=sflag, size = 0x4, scoped, tag = 'scoped memory for cnn_c_forward.1']
    #allocation4 [shape = 'u8[294912]{0}', space=vmem, size = 0x48000, scoped, tag = 'input window, operand 4, single buffered']
    #allocation5 [shape = 's32[1]{0}', space=sflag, size = 0x4, scoped, tag = 'scoped memory for cnn_c_forward.1']
    #allocation6 [shape = 'u8[32768]{0}', space=vmem, size = 0x8000, scoped, tag = 'input window, operand 5, single buffered']
    #allocation7 [shape = 'u8[1179648]{0}', space=vmem, size = 0x120000, scoped, tag = 'input window, operand 6, single buffered']
    #allocation8 [shape = 's32[1]{0}', space=sflag, size = 0x4, scoped, tag = 'scoped memory for cnn_c_forward.1']
    #allocation9 [shape = 'u8[65536]{0}', space=vmem, size = 0x10000, scoped, tag = 'input window, operand 7, single buffered']
    #allocation10 [shape = 'u8[2359296]{0}', space=vmem, size = 0x240000, scoped, tag = 'input window, operand 8, single buffered']
    #allocation11 [shape = 's32[1]{0}', space=sflag, size = 0x4, scoped, tag = 'scoped memory for cnn_c_forward.1']
    #allocation12 [shape = 'u8[65536]{0}', space=vmem, size = 0x10000, scoped, tag = 'input window, operand 9, single buffered']
    %15 = vsyncpa [#allocation3], 0
    %16 = vsyncpa [#allocation5], 0
    %17 = vsyncpa [#allocation8], 0
    %18 = vsyncpa [#allocation11], 0
    // Predicated region
    $region2: #{cnn_c_forward.1} parent=1 // pred_check
      _
    $region3: #{cnn_c_forward.1} parent=1 // pred_check_branch
      %20 = sbr.rel (0) target = $region5
    $region4: #{cnn_c_forward.1} parent=1 // pred_region
      _
    $region5: #{cnn_c_forward.1} parent=1 // pred_fallthru
      _
    // Predicated region
    $region6: #{cnn_c_forward.1} parent=1 // pred_check
      _
    $region7: #{cnn_c_forward.1} parent=1 // pred_check_branch
      %22 = sbr.rel (0) target = $region9
    $region8: #{cnn_c_forward.1} parent=1 // pred_region
      _
    $region9: #{cnn_c_forward.1} parent=1 // pred_fallthru
      _
    // Predicated region
    $region10: #{cnn_c_forward.1} parent=1 // pred_check
      _
    $region11: #{cnn_c_forward.1} parent=1 // pred_check_branch
      %24 = sbr.rel (0) target = $region13
    $region12: #{cnn_c_forward.1} parent=1 // pred_region
      _
    $region13: #{cnn_c_forward.1} parent=1 // pred_fallthru
      _
    // Predicated region
    $region14: #{cnn_c_forward.1} parent=1 // pred_check
      _
    $region15: #{cnn_c_forward.1} parent=1 // pred_check_branch
      %26 = sbr.rel (0) target = $region17
    $region16: #{cnn_c_forward.1} parent=1 // pred_region
      %28 = vsyncadd [#allocation3], 0
      %s29 = sshll.u32 %s3, 4
      %s30 = int_to_ptr.hbm [resolvable:$true] %s29
      %s31 = sshll.u32 [#allocation2], 4
      %s32 = int_to_ptr.vmem [resolvable:$true] %s31
      %37 = dma.hbm_to_vmem [thread:$0]  %s30, 1024, %s32, [#allocation3], 128, 128, 8
    $region17: #{cnn_c_forward.1} parent=1 // pred_fallthru
      _
    // Predicated region
    $region18: #{cnn_c_forward.1} parent=1 // pred_check
      _
    $region19: #{cnn_c_forward.1} parent=1 // pred_check_branch
      %39 = sbr.rel (0) target = $region21
    $region20: #{cnn_c_forward.1} parent=1 // pred_region
      %41 = vsyncadd [#allocation5], 0
      %s42 = sshll.u32 %s4, 4
      %s43 = int_to_ptr.hbm [resolvable:$true] %s42
      %s44 = sshll.u32 [#allocation4], 4
      %s45 = int_to_ptr.vmem [resolvable:$true] %s44
      %50 = dma.hbm_to_vmem [thread:$0]  %s43, 9216, %s45, [#allocation5], 128, 128, 8
    $region21: #{cnn_c_forward.1} parent=1 // pred_fallthru
      _
    // Predicated region
    $region22: #{cnn_c_forward.1} parent=1 // pred_check
      _
    $region23: #{cnn_c_forward.1} parent=1 // pred_check_branch
      %52 = sbr.rel (0) target = $region25
    $region24: #{cnn_c_forward.1} parent=1 // pred_region
      %54 = vsyncadd [#allocation5], 0
      %s55 = sshll.u32 %s5, 4
      %s56 = int_to_ptr.hbm [resolvable:$true] %s55
      %s57 = sshll.u32 [#allocation6], 4
      %s58 = int_to_ptr.vmem [resolvable:$true] %s57
      %63 = dma.hbm_to_vmem [thread:$0]  %s56, 1024, %s58, [#allocation5], 128, 128, 8
    $region25: #{cnn_c_forward.1} parent=1 // pred_fallthru
      _
    // Predicated region
    $region26: #{cnn_c_forward.1} parent=1 // pred_check
      _
    $region27: #{cnn_c_forward.1} parent=1 // pred_check_branch
      %65 = sbr.rel (0) target = $region29
    $region28: #{cnn_c_forward.1} parent=1 // pred_region
      %67 = vsyncadd [#allocation8], 0
      %s68 = sshll.u32 %s6, 4
      %s69 = int_to_ptr.hbm [resolvable:$true] %s68
      %s70 = sshll.u32 [#allocation7], 4
      %s71 = int_to_ptr.vmem [resolvable:$true] %s70
      %76 = dma.hbm_to_vmem [thread:$0]  %s69, 36864, %s71, [#allocation8], 256, 256, 16
    $region29: #{cnn_c_forward.1} parent=1 // pred_fallthru
      _
    // Predicated region
    $region30: #{cnn_c_forward.1} parent=1 // pred_check
      _
    $region31: #{cnn_c_forward.1} parent=1 // pred_check_branch
      %78 = sbr.rel (0) target = $region33
    $region32: #{cnn_c_forward.1} parent=1 // pred_region
      %80 = vsyncadd [#allocation8], 0
      %s81 = sshll.u32 %s7, 4
      %s82 = int_to_ptr.hbm [resolvable:$true] %s81
      %s83 = sshll.u32 [#allocation9], 4
      %s84 = int_to_ptr.vmem [resolvable:$true] %s83
      %89 = dma.hbm_to_vmem [thread:$0]  %s82, 2048, %s84, [#allocation8], 256, 256, 16
    $region33: #{cnn_c_forward.1} parent=1 // pred_fallthru
      _
    // Predicated region
    $region34: #{cnn_c_forward.1} parent=1 // pred_check
      _
    $region35: #{cnn_c_forward.1} parent=1 // pred_check_branch
      %91 = sbr.rel (0) target = $region37
    $region36: #{cnn_c_forward.1} parent=1 // pred_region
      %93 = vsyncadd [#allocation11], 0
      %s94 = sshll.u32 %s8, 4
      %s95 = int_to_ptr.hbm [resolvable:$true] %s94
      %s96 = sshll.u32 [#allocation10], 4
      %s97 = int_to_ptr.vmem [resolvable:$true] %s96
      %102 = dma.hbm_to_vmem [thread:$0]  %s95, 73728, %s97, [#allocation11], 256, 256, 16
    $region37: #{cnn_c_forward.1} parent=1 // pred_fallthru
      _
    // Predicated region
    $region38: #{cnn_c_forward.1} parent=1 // pred_check
      _
    $region39: #{cnn_c_forward.1} parent=1 // pred_check_branch
      %104 = sbr.rel (0) target = $region41
    $region40: #{cnn_c_forward.1} parent=1 // pred_region
      %106 = vsyncadd [#allocation11], 0
      %s107 = sshll.u32 %s9, 4
      %s108 = int_to_ptr.hbm [resolvable:$true] %s107
      %s109 = sshll.u32 [#allocation12], 4
      %s110 = int_to_ptr.vmem [resolvable:$true] %s109
      %115 = dma.hbm_to_vmem [thread:$0]  %s108, 2048, %s110, [#allocation11], 256, 256, 16
    $region41: #{cnn_c_forward.1} parent=1 // pred_fallthru
      _
    // Predicated region
    $region42: #{cnn_c_forward.1} parent=1 // pred_check
      _
    $region43: #{cnn_c_forward.1} parent=1 // pred_check_branch
      %117 = sbr.rel (0) target = $region45
    $region44: #{cnn_c_forward.1} parent=1 // pred_region
      %119 = dma.done [#allocation3], 1024
    $region45: #{cnn_c_forward.1} parent=1 // pred_fallthru
      _
    // Predicated region
    $region46: #{cnn_c_forward.1} parent=1 // pred_check
      _
    $region47: #{cnn_c_forward.1} parent=1 // pred_check_branch
      %121 = sbr.rel (0) target = $region49
    $region48: #{cnn_c_forward.1} parent=1 // pred_region
      %123 = dma.done [#allocation5], 9216
    $region49: #{cnn_c_forward.1} parent=1 // pred_fallthru
      _
    // Predicated region
    $region50: #{cnn_c_forward.1} parent=1 // pred_check
      _
    $region51: #{cnn_c_forward.1} parent=1 // pred_check_branch
      %125 = sbr.rel (0) target = $region53
    $region52: #{cnn_c_forward.1} parent=1 // pred_region
      %127 = dma.done [#allocation5], 1024
    $region53: #{cnn_c_forward.1} parent=1 // pred_fallthru
      _
    // Predicated region
    $region54: #{cnn_c_forward.1} parent=1 // pred_check
      _
    $region55: #{cnn_c_forward.1} parent=1 // pred_check_branch
      %129 = sbr.rel (0) target = $region57
    $region56: #{cnn_c_forward.1} parent=1 // pred_region
      %131 = dma.done [#allocation8], 36864
    $region57: #{cnn_c_forward.1} parent=1 // pred_fallthru
      _
    // Predicated region
    $region58: #{cnn_c_forward.1} parent=1 // pred_check
      _
    $region59: #{cnn_c_forward.1} parent=1 // pred_check_branch
      %133 = sbr.rel (0) target = $region61
    $region60: #{cnn_c_forward.1} parent=1 // pred_region
      %135 = dma.done [#allocation8], 2048
    $region61: #{cnn_c_forward.1} parent=1 // pred_fallthru
      _
    // Predicated region
    $region62: #{cnn_c_forward.1} parent=1 // pred_check
      _
    $region63: #{cnn_c_forward.1} parent=1 // pred_check_branch
      %137 = sbr.rel (0) target = $region65
    $region64: #{cnn_c_forward.1} parent=1 // pred_region
      %139 = dma.done [#allocation11], 73728
    $region65: #{cnn_c_forward.1} parent=1 // pred_fallthru
      _
    // Predicated region
    $region66: #{cnn_c_forward.1} parent=1 // pred_check
      _
    $region67: #{cnn_c_forward.1} parent=1 // pred_check_branch
      %141 = sbr.rel (0) target = $region69
    $region68: #{cnn_c_forward.1} parent=1 // pred_region
      %143 = dma.done [#allocation11], 2048
    $region69: #{cnn_c_forward.1} parent=1 // pred_fallthru
      _
    %v144 = vld [vmem:[%s0] sm:$0xff]
    %v145 = vld [vmem:[%s0 + $0x8] sm:$0xff]
    %v146 = vld [vmem:[%s0 + $0x10] sm:$0xff]
    %v147 = vld [vmem:[%s0 + $0x18] sm:$0xff]
    %v148 = vld [vmem:[%s0 + $0x20] sm:$0xff]
    %v149 = vld [vmem:[%s0 + $0x28] sm:$0xff]
    %v150 = vld [vmem:[%s0 + $0x30] sm:$0xff]
    %v151 = vld [vmem:[%s0 + $0x38] sm:$0xff]
    %v152 = vld [vmem:[%s1] sm:$0xff]
    %v153 = vld [vmem:[%s1 + $0x8] sm:$0xff]
    %v154 = vld [vmem:[%s1 + $0x10] sm:$0xff]
    %v155 = vld [vmem:[%s1 + $0x18] sm:$0xff]
    %v156 = vld [vmem:[%s1 + $0x20] sm:$0xff]
    %v157 = vld [vmem:[%s1 + $0x28] sm:$0xff]
    %v158 = vld [vmem:[%s1 + $0x30] sm:$0xff]
    %v159 = vld [vmem:[%s1 + $0x38] sm:$0xff]
    %v160 = vld [vmem:[%s1 + $0x40] sm:$0xff]
    %v161 = vld [vmem:[%s1 + $0x48] sm:$0xff]
    %v162 = vld [vmem:[%s1 + $0x50] sm:$0xff]
    %v163 = vld [vmem:[%s1 + $0x58] sm:$0xff]
    %v164 = vld [vmem:[%s1 + $0x60] sm:$0xff]
    %v165 = vld [vmem:[%s1 + $0x68] sm:$0xff]
    %v166 = vld [vmem:[%s1 + $0x70] sm:$0xff]
    %v167 = vld [vmem:[%s1 + $0x78] sm:$0xff]
    %v168 = vld [vmem:[%s1 + $0x80] sm:$0xff]
    %v169 = vld [vmem:[%s1 + $0x88] sm:$0xff]
    %v170 = vld [vmem:[%s1 + $0x90] sm:$0xff]
    %v171 = vld [vmem:[%s1 + $0x98] sm:$0xff]
    %v172 = vld [vmem:[%s1 + $0xa0] sm:$0xff]
    %v173 = vld [vmem:[%s1 + $0xa8] sm:$0xff]
    %v174 = vld [vmem:[%s1 + $0xb0] sm:$0xff]
    %v175 = vld [vmem:[%s1 + $0xb8] sm:$0xff]
    %v176 = vld [vmem:[%s1 + $0xc0] sm:$0xff]
    %v177 = vld [vmem:[%s1 + $0xc8] sm:$0xff]
    %v178 = vld [vmem:[%s1 + $0xd0] sm:$0xff]
    %v179 = vld [vmem:[%s1 + $0xd8] sm:$0xff]
    %v180 = vld [vmem:[%s1 + $0xe0] sm:$0xff]
    %v181 = vld [vmem:[%s1 + $0xe8] sm:$0xff]
    %v182 = vld [vmem:[%s1 + $0xf0] sm:$0xff]
    %v183 = vld [vmem:[%s1 + $0xf8] sm:$0xff]
    %v184 = vld [vmem:[%s1 + $0x100] sm:$0xff]
    %v185 = vld [vmem:[%s1 + $0x108] sm:$0xff]
    %v186 = vld [vmem:[%s1 + $0x110] sm:$0xff]
    %v187 = vld [vmem:[%s1 + $0x118] sm:$0xff]
    %v188 = vld [vmem:[%s1 + $0x120] sm:$0xff]
    %v189 = vld [vmem:[%s1 + $0x128] sm:$0xff]
    %v190 = vld [vmem:[%s1 + $0x130] sm:$0xff]
    %v191 = vld [vmem:[%s1 + $0x138] sm:$0xff]
    %v192 = vld [vmem:[%s1 + $0x140] sm:$0xff]
    %v193 = vld [vmem:[%s1 + $0x148] sm:$0xff]
    %v194 = vld [vmem:[%s1 + $0x150] sm:$0xff]
    %v195 = vld [vmem:[%s1 + $0x158] sm:$0xff]
    %v196 = vld [vmem:[%s1 + $0x160] sm:$0xff]
    %v197 = vld [vmem:[%s1 + $0x168] sm:$0xff]
    %v198 = vld [vmem:[%s1 + $0x170] sm:$0xff]
    %v199 = vld [vmem:[%s1 + $0x178] sm:$0xff]
    %v200 = vld [vmem:[%s1 + $0x180] sm:$0xff]
    %v201 = vld [vmem:[%s1 + $0x188] sm:$0xff]
    %v202 = vld [vmem:[%s1 + $0x190] sm:$0xff]
    %v203 = vld [vmem:[%s1 + $0x198] sm:$0xff]
    %v204 = vld [vmem:[%s1 + $0x1a0] sm:$0xff]
    %v205 = vld [vmem:[%s1 + $0x1a8] sm:$0xff]
    %v206 = vld [vmem:[%s1 + $0x1b0] sm:$0xff]
    %v207 = vld [vmem:[%s1 + $0x1b8] sm:$0xff]
    %v208 = vld [vmem:[%s1 + $0x1c0] sm:$0xff]
    %v209 = vld [vmem:[%s1 + $0x1c8] sm:$0xff]
    %v210 = vld [vmem:[%s1 + $0x1d0] sm:$0xff]
    %v211 = vld [vmem:[%s1 + $0x1d8] sm:$0xff]
    %v212 = vld [vmem:[%s1 + $0x1e0] sm:$0xff]
    %v213 = vld [vmem:[%s1 + $0x1e8] sm:$0xff]
    %v214 = vld [vmem:[%s1 + $0x1f0] sm:$0xff]
    %v215 = vld [vmem:[%s1 + $0x1f8] sm:$0xff]
    %vm216 = vcmask 523264
    %v218 = vsel %vm216, %v152, 0
    %v221 = vsel %vm216, %v153, 0
    %v224 = vsel %vm216, %v154, 0
    %v227 = vsel %vm216, %v155, 0
    %v230 = vsel %vm216, %v156, 0
    %v233 = vsel %vm216, %v157, 0
    %v236 = vsel %vm216, %v158, 0
    %v239 = vsel %vm216, %v159, 0
    %v242 = vsel %vm216, %v160, 0
    %v245 = vsel %vm216, %v161, 0
    %v248 = vsel %vm216, %v162, 0
    %v251 = vsel %vm216, %v163, 0
    %v254 = vsel %vm216, %v164, 0
    %v257 = vsel %vm216, %v165, 0
    %v260 = vsel %vm216, %v166, 0
    %v263 = vsel %vm216, %v167, 0
    %v266 = vsel %vm216, %v168, 0
    %v269 = vsel %vm216, %v169, 0
    %v272 = vsel %vm216, %v170, 0
    %v275 = vsel %vm216, %v171, 0
    %v278 = vsel %vm216, %v172, 0
    %v281 = vsel %vm216, %v173, 0
    %v284 = vsel %vm216, %v174, 0
    %v287 = vsel %vm216, %v175, 0
    %v290 = vsel %vm216, %v176, 0
    %v293 = vsel %vm216, %v177, 0
    %v296 = vsel %vm216, %v178, 0
    %v299 = vsel %vm216, %v179, 0
    %v302 = vsel %vm216, %v180, 0
    %v305 = vsel %vm216, %v181, 0
    %v308 = vsel %vm216, %v182, 0
    %v311 = vsel %vm216, %v183, 0
    %v314 = vsel %vm216, %v184, 0
    %v317 = vsel %vm216, %v185, 0
    %v320 = vsel %vm216, %v186, 0
    %v323 = vsel %vm216, %v187, 0
    %v326 = vsel %vm216, %v188, 0
    %v329 = vsel %vm216, %v189, 0
    %v332 = vsel %vm216, %v190, 0
    %v335 = vsel %vm216, %v191, 0
    %v338 = vsel %vm216, %v192, 0
    %v341 = vsel %vm216, %v193, 0
    %v344 = vsel %vm216, %v194, 0
    %v347 = vsel %vm216, %v195, 0
    %v350 = vsel %vm216, %v196, 0
    %v353 = vsel %vm216, %v197, 0
    %v356 = vsel %vm216, %v198, 0
    %v359 = vsel %vm216, %v199, 0
    %v362 = vsel %vm216, %v200, 0
    %v365 = vsel %vm216, %v201, 0
    %v368 = vsel %vm216, %v202, 0
    %v371 = vsel %vm216, %v203, 0
    %v374 = vsel %vm216, %v204, 0
    %v377 = vsel %vm216, %v205, 0
    %v380 = vsel %vm216, %v206, 0
    %v383 = vsel %vm216, %v207, 0
    %v386 = vsel %vm216, %v208, 0
    %v389 = vsel %vm216, %v209, 0
    %v392 = vsel %vm216, %v210, 0
    %v395 = vsel %vm216, %v211, 0
    %v398 = vsel %vm216, %v212, 0
    %v401 = vsel %vm216, %v213, 0
    %v404 = vsel %vm216, %v214, 0
    %v407 = vsel %vm216, %v215, 0
    %409 = vmatpush.msra.mxu0 0.0
    %410 = vmatpush.msra.mxu0 0.0
    %411 = vmatpush.msra.mxu0 0.0
    %412 = vmatpush.msra.mxu0 0.0
    %413 = vmatpush.msra.mxu0 0.0
    %414 = vmatpush.msra.mxu0 0.0
    %415 = vmatpush.msra.mxu0 0.0
    %416 = vmatpush.msra.mxu0 0.0
    %417 = vmatpush.msra.mxu0 %v151
    %418 = vmatpush.msra.mxu0 %v150
    %419 = vmatpush.msra.mxu0 %v149
    %420 = vmatpush.msra.mxu0 %v148
    %421 = vmatpush.msra.mxu0 %v147
    %422 = vmatpush.msra.mxu0 %v146
    %423 = vmatpush.msra.mxu0 %v145
    %424 = vmatpush.msra.mxu0 %v144
    %425 = vmatmul.f32.gmra.mxu0 %v218
    %v426 = vpop.f32.mrf.mxu0
    %v427 = vadd.f32 0.0, %v426
    %428 = vmatmul.f32.gmra.mxu0 %v221
    %v429 = vpop.f32.mrf.mxu0
    %v430 = vadd.f32 0.0, %v429
    %431 = vmatmul.f32.gmra.mxu0 %v224
    %v432 = vpop.f32.mrf.mxu0
    %v433 = vadd.f32 0.0, %v432
    %434 = vmatmul.f32.gmra.mxu0 %v227
    %v435 = vpop.f32.mrf.mxu0
    %v436 = vadd.f32 0.0, %v435
    %437 = vmatmul.f32.gmra.mxu0 %v230
    %v438 = vpop.f32.mrf.mxu0
    %v439 = vadd.f32 0.0, %v438
    %440 = vmatmul.f32.gmra.mxu0 %v233
    %v441 = vpop.f32.mrf.mxu0
    %v442 = vadd.f32 0.0, %v441
    %443 = vmatmul.f32.gmra.mxu0 %v236
    %v444 = vpop.f32.mrf.mxu0
    %v445 = vadd.f32 0.0, %v444
    %446 = vmatmul.f32.gmra.mxu0 %v239
    %v447 = vpop.f32.mrf.mxu0
    %v448 = vadd.f32 0.0, %v447
    %449 = vmatmul.f32.gmra.mxu0 %v242
    %v450 = vpop.f32.mrf.mxu0
    %v451 = vadd.f32 0.0, %v450
    %452 = vmatmul.f32.gmra.mxu0 %v245
    %v453 = vpop.f32.mrf.mxu0
    %v454 = vadd.f32 0.0, %v453
    %455 = vmatmul.f32.gmra.mxu0 %v248
    %v456 = vpop.f32.mrf.mxu0
    %v457 = vadd.f32 0.0, %v456
    %458 = vmatmul.f32.gmra.mxu0 %v251
    %v459 = vpop.f32.mrf.mxu0
    %v460 = vadd.f32 0.0, %v459
    %461 = vmatmul.f32.gmra.mxu0 %v254
    %v462 = vpop.f32.mrf.mxu0
    %v463 = vadd.f32 0.0, %v462
    %464 = vmatmul.f32.gmra.mxu0 %v257
    %v465 = vpop.f32.mrf.mxu0
    %v466 = vadd.f32 0.0, %v465
    %467 = vmatmul.f32.gmra.mxu0 %v260
    %v468 = vpop.f32.mrf.mxu0
    %v469 = vadd.f32 0.0, %v468
    %470 = vmatmul.f32.gmra.mxu0 %v263
    %v471 = vpop.f32.mrf.mxu0
    %v472 = vadd.f32 0.0, %v471
    %473 = vmatmul.f32.gmra.mxu0 %v266
    %v474 = vpop.f32.mrf.mxu0
    %v475 = vadd.f32 0.0, %v474
    %476 = vmatmul.f32.gmra.mxu0 %v269
    %v477 = vpop.f32.mrf.mxu0
    %v478 = vadd.f32 0.0, %v477
    %479 = vmatmul.f32.gmra.mxu0 %v272
    %v480 = vpop.f32.mrf.mxu0
    %v481 = vadd.f32 0.0, %v480
    %482 = vmatmul.f32.gmra.mxu0 %v275
    %v483 = vpop.f32.mrf.mxu0
    %v484 = vadd.f32 0.0, %v483
    %485 = vmatmul.f32.gmra.mxu0 %v278
    %v486 = vpop.f32.mrf.mxu0
    %v487 = vadd.f32 0.0, %v486
    %488 = vmatmul.f32.gmra.mxu0 %v281
    %v489 = vpop.f32.mrf.mxu0
    %v490 = vadd.f32 0.0, %v489
    %491 = vmatmul.f32.gmra.mxu0 %v284
    %v492 = vpop.f32.mrf.mxu0
    %v493 = vadd.f32 0.0, %v492
    %494 = vmatmul.f32.gmra.mxu0 %v287
    %v495 = vpop.f32.mrf.mxu0
    %v496 = vadd.f32 0.0, %v495
    %497 = vmatmul.f32.gmra.mxu0 %v290
    %v498 = vpop.f32.mrf.mxu0
    %v499 = vadd.f32 0.0, %v498
    %500 = vmatmul.f32.gmra.mxu0 %v293
    %v501 = vpop.f32.mrf.mxu0
    %v502 = vadd.f32 0.0, %v501
    %503 = vmatmul.f32.gmra.mxu0 %v296
    %v504 = vpop.f32.mrf.mxu0
    %v505 = vadd.f32 0.0, %v504
    %506 = vmatmul.f32.gmra.mxu0 %v299
    %v507 = vpop.f32.mrf.mxu0
    %v508 = vadd.f32 0.0, %v507
    %509 = vmatmul.f32.gmra.mxu0 %v302
    %v510 = vpop.f32.mrf.mxu0
    %v511 = vadd.f32 0.0, %v510
    %512 = vmatmul.f32.gmra.mxu0 %v305
    %v513 = vpop.f32.mrf.mxu0
    %v514 = vadd.f32 0.0, %v513
    %515 = vmatmul.f32.gmra.mxu0 %v308
    %v516 = vpop.f32.mrf.mxu0
    %v517 = vadd.f32 0.0, %v516
    %518 = vmatmul.f32.gmra.mxu0 %v311
    %v519 = vpop.f32.mrf.mxu0
    %v520 = vadd.f32 0.0, %v519
    %521 = vmatmul.f32.gmra.mxu0 %v314
    %v522 = vpop.f32.mrf.mxu0
    %v523 = vadd.f32 0.0, %v522
    %524 = vmatmul.f32.gmra.mxu0 %v317
    %v525 = vpop.f32.mrf.mxu0
    %v526 = vadd.f32 0.0, %v525
    %527 = vmatmul.f32.gmra.mxu0 %v320
    %v528 = vpop.f32.mrf.mxu0
    %v529 = vadd.f32 0.0, %v528
    %530 = vmatmul.f32.gmra.mxu0 %v323
    %v531 = vpop.f32.mrf.mxu0
    %v532 = vadd.f32 0.0, %v531
    %533 = vmatmul.f32.gmra.mxu0 %v326
    %v534 = vpop.f32.mrf.mxu0
    %v535 = vadd.f32 0.0, %v534
    %536 = vmatmul.f32.gmra.mxu0 %v329
    %v537 = vpop.f32.mrf.mxu0
    %v538 = vadd.f32 0.0, %v537
    %539 = vmatmul.f32.gmra.mxu0 %v332
    %v540 = vpop.f32.mrf.mxu0
    %v541 = vadd.f32 0.0, %v540
    %542 = vmatmul.f32.gmra.mxu0 %v335
    %v543 = vpop.f32.mrf.mxu0
    %v544 = vadd.f32 0.0, %v543
    %545 = vmatmul.f32.gmra.mxu0 %v338
    %v546 = vpop.f32.mrf.mxu0
    %v547 = vadd.f32 0.0, %v546
    %548 = vmatmul.f32.gmra.mxu0 %v341
    %v549 = vpop.f32.mrf.mxu0
    %v550 = vadd.f32 0.0, %v549
    %551 = vmatmul.f32.gmra.mxu0 %v344
    %v552 = vpop.f32.mrf.mxu0
    %v553 = vadd.f32 0.0, %v552
    %554 = vmatmul.f32.gmra.mxu0 %v347
    %v555 = vpop.f32.mrf.mxu0
    %v556 = vadd.f32 0.0, %v555
    %557 = vmatmul.f32.gmra.mxu0 %v350
    %v558 = vpop.f32.mrf.mxu0
    %v559 = vadd.f32 0.0, %v558
    %560 = vmatmul.f32.gmra.mxu0 %v353
    %v561 = vpop.f32.mrf.mxu0
    %v562 = vadd.f32 0.0, %v561
    %563 = vmatmul.f32.gmra.mxu0 %v356
    %v564 = vpop.f32.mrf.mxu0
    %v565 = vadd.f32 0.0, %v564
    %566 = vmatmul.f32.gmra.mxu0 %v359
    %v567 = vpop.f32.mrf.mxu0
    %v568 = vadd.f32 0.0, %v567
    %569 = vmatmul.f32.gmra.mxu0 %v362
    %v570 = vpop.f32.mrf.mxu0
    %v571 = vadd.f32 0.0, %v570
    %572 = vmatmul.f32.gmra.mxu0 %v365
    %v573 = vpop.f32.mrf.mxu0
    %v574 = vadd.f32 0.0, %v573
    %575 = vmatmul.f32.gmra.mxu0 %v368
    %v576 = vpop.f32.mrf.mxu0
    %v577 = vadd.f32 0.0, %v576
    %578 = vmatmul.f32.gmra.mxu0 %v371
    %v579 = vpop.f32.mrf.mxu0
    %v580 = vadd.f32 0.0, %v579
    %581 = vmatmul.f32.gmra.mxu0 %v374
    %v582 = vpop.f32.mrf.mxu0
    %v583 = vadd.f32 0.0, %v582
    %584 = vmatmul.f32.gmra.mxu0 %v377
    %v585 = vpop.f32.mrf.mxu0
    %v586 = vadd.f32 0.0, %v585
    %587 = vmatmul.f32.gmra.mxu0 %v380
    %v588 = vpop.f32.mrf.mxu0
    %v589 = vadd.f32 0.0, %v588
    %590 = vmatmul.f32.gmra.mxu0 %v383
    %v591 = vpop.f32.mrf.mxu0
    %v592 = vadd.f32 0.0, %v591
    %593 = vmatmul.f32.gmra.mxu0 %v386
    %v594 = vpop.f32.mrf.mxu0
    %v595 = vadd.f32 0.0, %v594
    %596 = vmatmul.f32.gmra.mxu0 %v389
    %v597 = vpop.f32.mrf.mxu0
    %v598 = vadd.f32 0.0, %v597
    %599 = vmatmul.f32.gmra.mxu0 %v392
    %v600 = vpop.f32.mrf.mxu0
    %v601 = vadd.f32 0.0, %v600
    %602 = vmatmul.f32.gmra.mxu0 %v395
    %v603 = vpop.f32.mrf.mxu0
    %v604 = vadd.f32 0.0, %v603
    %605 = vmatmul.f32.gmra.mxu0 %v398
    %v606 = vpop.f32.mrf.mxu0
    %v607 = vadd.f32 0.0, %v606
    %608 = vmatmul.f32.gmra.mxu0 %v401
    %v609 = vpop.f32.mrf.mxu0
    %v610 = vadd.f32 0.0, %v609
    %611 = vmatmul.f32.gmra.mxu0 %v404
    %v612 = vpop.f32.mrf.mxu0
    %v613 = vadd.f32 0.0, %v612
    %614 = vmatmul.f32.gmra.mxu0 %v407
    %v615 = vpop.f32.mrf.mxu0
    %v616 = vadd.f32 0.0, %v615
    %617 = vdwg.mxu0
    %v618 = vld [vmem:[#allocation2] sm:$0xff]
    %v619 = vld [vmem:[#allocation2 + $0x8] sm:$0xff]
    %v620 = vld [vmem:[#allocation2 + $0x10] sm:$0xff]
    %v621 = vld [vmem:[#allocation2 + $0x18] sm:$0xff]
    %v622 = vld [vmem:[#allocation2 + $0x20] sm:$0xff]
    %v623 = vld [vmem:[#allocation2 + $0x28] sm:$0xff]
    %v624 = vld [vmem:[#allocation2 + $0x30] sm:$0xff]
    %v625 = vld [vmem:[#allocation2 + $0x38] sm:$0xff]
    %v626 = vld [vmem:[%s2] sm:$0xff]
    %vm627 = vcmask 64512
    %v629 = vsel %vm627, %v427, 0
    %v632 = vsel %vm627, %v430, 0
    %v635 = vsel %vm627, %v433, 0
    %v638 = vsel %vm627, %v436, 0
    %v641 = vsel %vm627, %v439, 0
    %v644 = vsel %vm627, %v442, 0
    %v647 = vsel %vm627, %v445, 0
    %v650 = vsel %vm627, %v448, 0
    %652 = vmatpush.msra.mxu0 0.0
    %653 = vmatpush.msra.mxu0 0.0
    %654 = vmatpush.msra.mxu0 0.0
    %655 = vmatpush.msra.mxu0 0.0
    %656 = vmatpush.msra.mxu0 0.0
    %657 = vmatpush.msra.mxu0 0.0
    %658 = vmatpush.msra.mxu0 0.0
    %659 = vmatpush.msra.mxu0 0.0
    %660 = vmatpush.msra.mxu0 0.0
    %661 = vmatpush.msra.mxu0 0.0
    %662 = vmatpush.msra.mxu0 0.0
    %663 = vmatpush.msra.mxu0 0.0
    %664 = vmatpush.msra.mxu0 0.0
    %665 = vmatpush.msra.mxu0 0.0
    %666 = vmatpush.msra.mxu0 0.0
    %667 = vmatpush.msra.mxu0 %v626
    %668 = vmatmul.f32.gmra.mxu0 %v629
    %v669 = vpop.f32.mrf.mxu0
    %v670 = vadd.f32 0.0, %v669
    %671 = vmatmul.f32.gmra.mxu0 %v632
    %v672 = vpop.f32.mrf.mxu0
    %v673 = vadd.f32 0.0, %v672
    %674 = vmatmul.f32.gmra.mxu0 %v635
    %v675 = vpop.f32.mrf.mxu0
    %v676 = vadd.f32 0.0, %v675
    %677 = vmatmul.f32.gmra.mxu0 %v638
    %v678 = vpop.f32.mrf.mxu0
    %v679 = vadd.f32 0.0, %v678
    %680 = vmatmul.f32.gmra.mxu0 %v641
    %v681 = vpop.f32.mrf.mxu0
    %v682 = vadd.f32 0.0, %v681
    %683 = vmatmul.f32.gmra.mxu0 %v644
    %v684 = vpop.f32.mrf.mxu0
    %v685 = vadd.f32 0.0, %v684
    %686 = vmatmul.f32.gmra.mxu0 %v647
    %v687 = vpop.f32.mrf.mxu0
    %v688 = vadd.f32 0.0, %v687
    %689 = vmatmul.f32.gmra.mxu0 %v650
    %v690 = vpop.f32.mrf.mxu0
    %v691 = vadd.f32 0.0, %v690
    %692 = vdwg.mxu0
    %v693 = vadd.f32 %v618, %v670
    %v694 = vadd.f32 %v619, %v673
    %v695 = vadd.f32 %v620, %v676
    %v696 = vadd.f32 %v621, %v679
    %v697 = vadd.f32 %v622, %v682
    %v698 = vadd.f32 %v623, %v685
    %v699 = vadd.f32 %v624, %v688
    %v700 = vadd.f32 %v625, %v691
    %v701 = vld [vmem:[%s2 + $0x8] sm:$0xff]
    %v703 = vsel %vm627, %v451, 0
    %v706 = vsel %vm627, %v454, 0
    %v709 = vsel %vm627, %v457, 0
    %v712 = vsel %vm627, %v460, 0
    %v715 = vsel %vm627, %v463, 0
    %v718 = vsel %vm627, %v466, 0
    %v721 = vsel %vm627, %v469, 0
    %v724 = vsel %vm627, %v472, 0
    %726 = vmatpush.msra.mxu0 0.0
    %727 = vmatpush.msra.mxu0 0.0
    %728 = vmatpush.msra.mxu0 0.0
    %729 = vmatpush.msra.mxu0 0.0
    %730 = vmatpush.msra.mxu0 0.0
    %731 = vmatpush.msra.mxu0 0.0
    %732 = vmatpush.msra.mxu0 0.0
    %733 = vmatpush.msra.mxu0 0.0
    %734 = vmatpush.msra.mxu0 0.0
    %735 = vmatpush.msra.mxu0 0.0
    %736 = vmatpush.msra.mxu0 0.0
    %737 = vmatpush.msra.mxu0 0.0
    %738 = vmatpush.msra.mxu0 0.0
    %739 = vmatpush.msra.mxu0 0.0
    %740 = vmatpush.msra.mxu0 0.0
    %741 = vmatpush.msra.mxu0 %v701
    %742 = vmatmul.f32.gmra.mxu0 %v703
    %v743 = vpop.f32.mrf.mxu0
    %v744 = vadd.f32 0.0, %v743
    %745 = vmatmul.f32.gmra.mxu0 %v706
    %v746 = vpop.f32.mrf.mxu0
    %v747 = vadd.f32 0.0, %v746
    %748 = vmatmul.f32.gmra.mxu0 %v709
    %v749 = vpop.f32.mrf.mxu0
    %v750 = vadd.f32 0.0, %v749
    %751 = vmatmul.f32.gmra.mxu0 %v712
    %v752 = vpop.f32.mrf.mxu0
    %v753 = vadd.f32 0.0, %v752
    %754 = vmatmul.f32.gmra.mxu0 %v715
    %v755 = vpop.f32.mrf.mxu0
    %v756 = vadd.f32 0.0, %v755
    %757 = vmatmul.f32.gmra.mxu0 %v718
    %v758 = vpop.f32.mrf.mxu0
    %v759 = vadd.f32 0.0, %v758
    %760 = vmatmul.f32.gmra.mxu0 %v721
    %v761 = vpop.f32.mrf.mxu0
    %v762 = vadd.f32 0.0, %v761
    %763 = vmatmul.f32.gmra.mxu0 %v724
    %v764 = vpop.f32.mrf.mxu0
    %v765 = vadd.f32 0.0, %v764
    %766 = vdwg.mxu0
    %v767 = vadd.f32 %v693, %v744
    %v768 = vadd.f32 %v694, %v747
    %v769 = vadd.f32 %v695, %v750
    %v770 = vadd.f32 %v696, %v753
    %v771 = vadd.f32 %v697, %v756
    %v772 = vadd.f32 %v698, %v759
    %v773 = vadd.f32 %v699, %v762
    %v774 = vadd.f32 %v700, %v765
    %v775 = vld [vmem:[%s2 + $0x10] sm:$0xff]
    %v777 = vsel %vm627, %v475, 0
    %v780 = vsel %vm627, %v478, 0
    %v783 = vsel %vm627, %v481, 0
    %v786 = vsel %vm627, %v484, 0
    %v789 = vsel %vm627, %v487, 0
    %v792 = vsel %vm627, %v490, 0
    %v795 = vsel %vm627, %v493, 0
    %v798 = vsel %vm627, %v496, 0
    %800 = vmatpush.msra.mxu0 0.0
    %801 = vmatpush.msra.mxu0 0.0
    %802 = vmatpush.msra.mxu0 0.0
    %803 = vmatpush.msra.mxu0 0.0
    %804 = vmatpush.msra.mxu0 0.0
    %805 = vmatpush.msra.mxu0 0.0
    %806 = vmatpush.msra.mxu0 0.0
    %807 = vmatpush.msra.mxu0 0.0
    %808 = vmatpush.msra.mxu0 0.0
    %809 = vmatpush.msra.mxu0 0.0
    %810 = vmatpush.msra.mxu0 0.0
    %811 = vmatpush.msra.mxu0 0.0
    %812 = vmatpush.msra.mxu0 0.0
    %813 = vmatpush.msra.mxu0 0.0
    %814 = vmatpush.msra.mxu0 0.0
    %815 = vmatpush.msra.mxu0 %v775
    %816 = vmatmul.f32.gmra.mxu0 %v777
    %v817 = vpop.f32.mrf.mxu0
    %v818 = vadd.f32 0.0, %v817
    %819 = vmatmul.f32.gmra.mxu0 %v780
    %v820 = vpop.f32.mrf.mxu0
    %v821 = vadd.f32 0.0, %v820
    %822 = vmatmul.f32.gmra.mxu0 %v783
    %v823 = vpop.f32.mrf.mxu0
    %v824 = vadd.f32 0.0, %v823
    %825 = vmatmul.f32.gmra.mxu0 %v786
    %v826 = vpop.f32.mrf.mxu0
    %v827 = vadd.f32 0.0, %v826
    %828 = vmatmul.f32.gmra.mxu0 %v789
    %v829 = vpop.f32.mrf.mxu0
    %v830 = vadd.f32 0.0, %v829
    %831 = vmatmul.f32.gmra.mxu0 %v792
    %v832 = vpop.f32.mrf.mxu0
    %v833 = vadd.f32 0.0, %v832
    %834 = vmatmul.f32.gmra.mxu0 %v795
    %v835 = vpop.f32.mrf.mxu0
    %v836 = vadd.f32 0.0, %v835
    %837 = vmatmul.f32.gmra.mxu0 %v798
    %v838 = vpop.f32.mrf.mxu0
    %v839 = vadd.f32 0.0, %v838
    %840 = vdwg.mxu0
    %v841 = vadd.f32 %v767, %v818
    %v842 = vadd.f32 %v768, %v821
    %v843 = vadd.f32 %v769, %v824
    %v844 = vadd.f32 %v770, %v827
    %v845 = vadd.f32 %v771, %v830
    %v846 = vadd.f32 %v772, %v833
    %v847 = vadd.f32 %v773, %v836
    %v848 = vadd.f32 %v774, %v839
    %v849 = vld [vmem:[%s2 + $0x18] sm:$0xff]
    %v851 = vsel %vm627, %v499, 0
    %v854 = vsel %vm627, %v502, 0
    %v857 = vsel %vm627, %v505, 0
    %v860 = vsel %vm627, %v508, 0
    %v863 = vsel %vm627, %v511, 0
    %v866 = vsel %vm627, %v514, 0
    %v869 = vsel %vm627, %v517, 0
    %v872 = vsel %vm627, %v520, 0
    %874 = vmatpush.msra.mxu0 0.0
    %875 = vmatpush.msra.mxu0 0.0
    %876 = vmatpush.msra.mxu0 0.0
    %877 = vmatpush.msra.mxu0 0.0
    %878 = vmatpush.msra.mxu0 0.0
    %879 = vmatpush.msra.mxu0 0.0
    %880 = vmatpush.msra.mxu0 0.0
    %881 = vmatpush.msra.mxu0 0.0
    %882 = vmatpush.msra.mxu0 0.0
    %883 = vmatpush.msra.mxu0 0.0
    %884 = vmatpush.msra.mxu0 0.0
    %885 = vmatpush.msra.mxu0 0.0
    %886 = vmatpush.msra.mxu0 0.0
    %887 = vmatpush.msra.mxu0 0.0
    %888 = vmatpush.msra.mxu0 0.0
    %889 = vmatpush.msra.mxu0 %v849
    %890 = vmatmul.f32.gmra.mxu0 %v851
    %v891 = vpop.f32.mrf.mxu0
    %v892 = vadd.f32 0.0, %v891
    %893 = vmatmul.f32.gmra.mxu0 %v854
    %v894 = vpop.f32.mrf.mxu0
    %v895 = vadd.f32 0.0, %v894
    %896 = vmatmul.f32.gmra.mxu0 %v857
    %v897 = vpop.f32.mrf.mxu0
    %v898 = vadd.f32 0.0, %v897
    %899 = vmatmul.f32.gmra.mxu0 %v860
    %v900 = vpop.f32.mrf.mxu0
    %v901 = vadd.f32 0.0, %v900
    %902 = vmatmul.f32.gmra.mxu0 %v863
    %v903 = vpop.f32.mrf.mxu0
    %v904 = vadd.f32 0.0, %v903
    %905 = vmatmul.f32.gmra.mxu0 %v866
    %v906 = vpop.f32.mrf.mxu0
    %v907 = vadd.f32 0.0, %v906
    %908 = vmatmul.f32.gmra.mxu0 %v869
    %v909 = vpop.f32.mrf.mxu0
    %v910 = vadd.f32 0.0, %v909
    %911 = vmatmul.f32.gmra.mxu0 %v872
    %v912 = vpop.f32.mrf.mxu0
    %v913 = vadd.f32 0.0, %v912
    %914 = vdwg.mxu0
    %v915 = vadd.f32 %v841, %v892
    %v916 = vadd.f32 %v842, %v895
    %v917 = vadd.f32 %v843, %v898
    %v918 = vadd.f32 %v844, %v901
    %v919 = vadd.f32 %v845, %v904
    %v920 = vadd.f32 %v846, %v907
    %v921 = vadd.f32 %v847, %v910
    %v922 = vadd.f32 %v848, %v913
    %v923 = vld [vmem:[%s2 + $0x20] sm:$0xff]
    %v925 = vsel %vm627, %v144, 0
    %v928 = vsel %vm627, %v145, 0
    %v931 = vsel %vm627, %v146, 0
    %v934 = vsel %vm627, %v147, 0
    %v937 = vsel %vm627, %v148, 0
    %v940 = vsel %vm627, %v149, 0
    %v943 = vsel %vm627, %v150, 0
    %v946 = vsel %vm627, %v151, 0
    %948 = vmatpush.msra.mxu0 0.0
    %949 = vmatpush.msra.mxu0 0.0
    %950 = vmatpush.msra.mxu0 0.0
    %951 = vmatpush.msra.mxu0 0.0
    %952 = vmatpush.msra.mxu0 0.0
    %953 = vmatpush.msra.mxu0 0.0
    %954 = vmatpush.msra.mxu0 0.0
    %955 = vmatpush.msra.mxu0 0.0
    %956 = vmatpush.msra.mxu0 0.0
    %957 = vmatpush.msra.mxu0 0.0
    %958 = vmatpush.msra.mxu0 0.0
    %959 = vmatpush.msra.mxu0 0.0
    %960 = vmatpush.msra.mxu0 0.0
    %961 = vmatpush.msra.mxu0 0.0
    %962 = vmatpush.msra.mxu0 0.0
    %963 = vmatpush.msra.mxu0 %v923
    %964 = vmatmul.f32.gmra.mxu0 %v925
    %v965 = vpop.f32.mrf.mxu0
    %v966 = vadd.f32 0.0, %v965
    %967 = vmatmul.f32.gmra.mxu0 %v928
    %v968 = vpop.f32.mrf.mxu0
    %v969 = vadd.f32 0.0, %v968
    %970 = vmatmul.f32.gmra.mxu0 %v931
    %v971 = vpop.f32.mrf.mxu0
    %v972 = vadd.f32 0.0, %v971
    %973 = vmatmul.f32.gmra.mxu0 %v934
    %v974 = vpop.f32.mrf.mxu0
    %v975 = vadd.f32 0.0, %v974
    %976 = vmatmul.f32.gmra.mxu0 %v937
    %v977 = vpop.f32.mrf.mxu0
    %v978 = vadd.f32 0.0, %v977
    %979 = vmatmul.f32.gmra.mxu0 %v940
    %v980 = vpop.f32.mrf.mxu0
    %v981 = vadd.f32 0.0, %v980
    %982 = vmatmul.f32.gmra.mxu0 %v943
    %v983 = vpop.f32.mrf.mxu0
    %v984 = vadd.f32 0.0, %v983
    %985 = vmatmul.f32.gmra.mxu0 %v946
    %v986 = vpop.f32.mrf.mxu0
    %v987 = vadd.f32 0.0, %v986
    %988 = vdwg.mxu0
    %v989 = vadd.f32 %v915, %v966
    %v990 = vadd.f32 %v916, %v969
    %v991 = vadd.f32 %v917, %v972
    %v992 = vadd.f32 %v918, %v975
    %v993 = vadd.f32 %v919, %v978
    %v994 = vadd.f32 %v920, %v981
    %v995 = vadd.f32 %v921, %v984
    %v996 = vadd.f32 %v922, %v987
    %v997 = vld [vmem:[%s2 + $0x28] sm:$0xff]
    %v999 = vsel %vm627, %v523, 0
    %v1002 = vsel %vm627, %v526, 0
    %v1005 = vsel %vm627, %v529, 0
    %v1008 = vsel %vm627, %v532, 0
    %v1011 = vsel %vm627, %v535, 0
    %v1014 = vsel %vm627, %v538, 0
    %v1017 = vsel %vm627, %v541, 0
    %v1020 = vsel %vm627, %v544, 0
    %1022 = vmatpush.msra.mxu0 0.0
    %1023 = vmatpush.msra.mxu0 0.0
    %1024 = vmatpush.msra.mxu0 0.0
    %1025 = vmatpush.msra.mxu0 0.0
    %1026 = vmatpush.msra.mxu0 0.0
    %1027 = vmatpush.msra.mxu0 0.0
    %1028 = vmatpush.msra.mxu0 0.0
    %1029 = vmatpush.msra.mxu0 0.0
    %1030 = vmatpush.msra.mxu0 0.0
    %1031 = vmatpush.msra.mxu0 0.0
    %1032 = vmatpush.msra.mxu0 0.0
    %1033 = vmatpush.msra.mxu0 0.0
    %1034 = vmatpush.msra.mxu0 0.0
    %1035 = vmatpush.msra.mxu0 0.0
    %1036 = vmatpush.msra.mxu0 0.0
    %1037 = vmatpush.msra.mxu0 %v997
    %1038 = vmatmul.f32.gmra.mxu0 %v999
    %v1039 = vpop.f32.mrf.mxu0
    %v1040 = vadd.f32 0.0, %v1039
    %1041 = vmatmul.f32.gmra.mxu0 %v1002
    %v1042 = vpop.f32.mrf.mxu0
    %v1043 = vadd.f32 0.0, %v1042
    %1044 = vmatmul.f32.gmra.mxu0 %v1005
    %v1045 = vpop.f32.mrf.mxu0
    %v1046 = vadd.f32 0.0, %v1045
    %1047 = vmatmul.f32.gmra.mxu0 %v1008
    %v1048 = vpop.f32.mrf.mxu0
    %v1049 = vadd.f32 0.0, %v1048
    %1050 = vmatmul.f32.gmra.mxu0 %v1011
    %v1051 = vpop.f32.mrf.mxu0
    %v1052 = vadd.f32 0.0, %v1051
    %1053 = vmatmul.f32.gmra.mxu0 %v1014
    %v1054 = vpop.f32.mrf.mxu0
    %v1055 = vadd.f32 0.0, %v1054
    %1056 = vmatmul.f32.gmra.mxu0 %v1017
    %v1057 = vpop.f32.mrf.mxu0
    %v1058 = vadd.f32 0.0, %v1057
    %1059 = vmatmul.f32.gmra.mxu0 %v1020
    %v1060 = vpop.f32.mrf.mxu0
    %v1061 = vadd.f32 0.0, %v1060
    %1062 = vdwg.mxu0
    %v1063 = vadd.f32 %v989, %v1040
    %v1064 = vadd.f32 %v990, %v1043
    %v1065 = vadd.f32 %v991, %v1046
    %v1066 = vadd.f32 %v992, %v1049
    %v1067 = vadd.f32 %v993, %v1052
    %v1068 = vadd.f32 %v994, %v1055
    %v1069 = vadd.f32 %v995, %v1058
    %v1070 = vadd.f32 %v996, %v1061
    %v1071 = vld [vmem:[%s2 + $0x30] sm:$0xff]
    %v1073 = vsel %vm627, %v547, 0
    %v1076 = vsel %vm627, %v550, 0
    %v1079 = vsel %vm627, %v553, 0
    %v1082 = vsel %vm627, %v556, 0
    %v1085 = vsel %vm627, %v559, 0
    %v1088 = vsel %vm627, %v562, 0
    %v1091 = vsel %vm627, %v565, 0
    %v1094 = vsel %vm627, %v568, 0
    %1096 = vmatpush.msra.mxu0 0.0
    %1097 = vmatpush.msra.mxu0 0.0
    %1098 = vmatpush.msra.mxu0 0.0
    %1099 = vmatpush.msra.mxu0 0.0
    %1100 = vmatpush.msra.mxu0 0.0
    %1101 = vmatpush.msra.mxu0 0.0
    %1102 = vmatpush.msra.mxu0 0.0
    %1103 = vmatpush.msra.mxu0 0.0
    %1104 = vmatpush.msra.mxu0 0.0
    %1105 = vmatpush.msra.mxu0 0.0
    %1106 = vmatpush.msra.mxu0 0.0
    %1107 = vmatpush.msra.mxu0 0.0
    %1108 = vmatpush.msra.mxu0 0.0
    %1109 = vmatpush.msra.mxu0 0.0
    %1110 = vmatpush.msra.mxu0 0.0
    %1111 = vmatpush.msra.mxu0 %v1071
    %1112 = vmatmul.f32.gmra.mxu0 %v1073
    %v1113 = vpop.f32.mrf.mxu0
    %v1114 = vadd.f32 0.0, %v1113
    %1115 = vmatmul.f32.gmra.mxu0 %v1076
    %v1116 = vpop.f32.mrf.mxu0
    %v1117 = vadd.f32 0.0, %v1116
    %1118 = vmatmul.f32.gmra.mxu0 %v1079
    %v1119 = vpop.f32.mrf.mxu0
    %v1120 = vadd.f32 0.0, %v1119
    %1121 = vmatmul.f32.gmra.mxu0 %v1082
    %v1122 = vpop.f32.mrf.mxu0
    %v1123 = vadd.f32 0.0, %v1122
    %1124 = vmatmul.f32.gmra.mxu0 %v1085
    %v1125 = vpop.f32.mrf.mxu0
    %v1126 = vadd.f32 0.0, %v1125
    %1127 = vmatmul.f32.gmra.mxu0 %v1088
    %v1128 = vpop.f32.mrf.mxu0
    %v1129 = vadd.f32 0.0, %v1128
    %1130 = vmatmul.f32.gmra.mxu0 %v1091
    %v1131 = vpop.f32.mrf.mxu0
    %v1132 = vadd.f32 0.0, %v1131
    %1133 = vmatmul.f32.gmra.mxu0 %v1094
    %v1134 = vpop.f32.mrf.mxu0
    %v1135 = vadd.f32 0.0, %v1134
    %1136 = vdwg.mxu0
    %v1137 = vadd.f32 %v1063, %v1114
    %v1138 = vadd.f32 %v1064, %v1117
    %v1139 = vadd.f32 %v1065, %v1120
    %v1140 = vadd.f32 %v1066, %v1123
    %v1141 = vadd.f32 %v1067, %v1126
    %v1142 = vadd.f32 %v1068, %v1129
    %v1143 = vadd.f32 %v1069, %v1132
    %v1144 = vadd.f32 %v1070, %v1135
    %v1145 = vld [vmem:[%s2 + $0x38] sm:$0xff]
    %v1147 = vsel %vm627, %v571, 0
    %v1150 = vsel %vm627, %v574, 0
    %v1153 = vsel %vm627, %v577, 0
    %v1156 = vsel %vm627, %v580, 0
    %v1159 = vsel %vm627, %v583, 0
    %v1162 = vsel %vm627, %v586, 0
    %v1165 = vsel %vm627, %v589, 0
    %v1168 = vsel %vm627, %v592, 0
    %1170 = vmatpush.msra.mxu0 0.0
    %1171 = vmatpush.msra.mxu0 0.0
    %1172 = vmatpush.msra.mxu0 0.0
    %1173 = vmatpush.msra.mxu0 0.0
    %1174 = vmatpush.msra.mxu0 0.0
    %1175 = vmatpush.msra.mxu0 0.0
    %1176 = vmatpush.msra.mxu0 0.0
    %1177 = vmatpush.msra.mxu0 0.0
    %1178 = vmatpush.msra.mxu0 0.0
    %1179 = vmatpush.msra.mxu0 0.0
    %1180 = vmatpush.msra.mxu0 0.0
    %1181 = vmatpush.msra.mxu0 0.0
    %1182 = vmatpush.msra.mxu0 0.0
    %1183 = vmatpush.msra.mxu0 0.0
    %1184 = vmatpush.msra.mxu0 0.0
    %1185 = vmatpush.msra.mxu0 %v1145
    %1186 = vmatmul.f32.gmra.mxu0 %v1147
    %v1187 = vpop.f32.mrf.mxu0
    %v1188 = vadd.f32 0.0, %v1187
    %1189 = vmatmul.f32.gmra.mxu0 %v1150
    %v1190 = vpop.f32.mrf.mxu0
    %v1191 = vadd.f32 0.0, %v1190
    %1192 = vmatmul.f32.gmra.mxu0 %v1153
    %v1193 = vpop.f32.mrf.mxu0
    %v1194 = vadd.f32 0.0, %v1193
    %1195 = vmatmul.f32.gmra.mxu0 %v1156
    %v1196 = vpop.f32.mrf.mxu0
    %v1197 = vadd.f32 0.0, %v1196
    %1198 = vmatmul.f32.gmra.mxu0 %v1159
    %v1199 = vpop.f32.mrf.mxu0
    %v1200 = vadd.f32 0.0, %v1199
    %1201 = vmatmul.f32.gmra.mxu0 %v1162
    %v1202 = vpop.f32.mrf.mxu0
    %v1203 = vadd.f32 0.0, %v1202
    %1204 = vmatmul.f32.gmra.mxu0 %v1165
    %v1205 = vpop.f32.mrf.mxu0
    %v1206 = vadd.f32 0.0, %v1205
    %1207 = vmatmul.f32.gmra.mxu0 %v1168
    %v1208 = vpop.f32.mrf.mxu0
    %v1209 = vadd.f32 0.0, %v1208
    %1210 = vdwg.mxu0
    %v1211 = vadd.f32 %v1137, %v1188
    %v1212 = vadd.f32 %v1138, %v1191
    %v1213 = vadd.f32 %v1139, %v1194
    %v1214 = vadd.f32 %v1140, %v1197
    %v1215 = vadd.f32 %v1141, %v1200
    %v1216 = vadd.f32 %v1142, %v1203
    %v1217 = vadd.f32 %v1143, %v1206
    %v1218 = vadd.f32 %v1144, %v1209
    %v1219 = vld [vmem:[%s2 + $0x40] sm:$0xff]
    %v1221 = vsel %vm627, %v595, 0
    %v1224 = vsel %vm627, %v598, 0
    %v1227 = vsel %vm627, %v601, 0
    %v1230 = vsel %vm627, %v604, 0
    %v1233 = vsel %vm627, %v607, 0
    %v1236 = vsel %vm627, %v610, 0
    %v1239 = vsel %vm627, %v613, 0
    %v1242 = vsel %vm627, %v616, 0
    %1244 = vmatpush.msra.mxu0 0.0
    %1245 = vmatpush.msra.mxu0 0.0
    %1246 = vmatpush.msra.mxu0 0.0
    %1247 = vmatpush.msra.mxu0 0.0
    %1248 = vmatpush.msra.mxu0 0.0
    %1249 = vmatpush.msra.mxu0 0.0
    %1250 = vmatpush.msra.mxu0 0.0
    %1251 = vmatpush.msra.mxu0 0.0
    %1252 = vmatpush.msra.mxu0 0.0
    %1253 = vmatpush.msra.mxu0 0.0
    %1254 = vmatpush.msra.mxu0 0.0
    %1255 = vmatpush.msra.mxu0 0.0
    %1256 = vmatpush.msra.mxu0 0.0
    %1257 = vmatpush.msra.mxu0 0.0
    %1258 = vmatpush.msra.mxu0 0.0
    %1259 = vmatpush.msra.mxu0 %v1219
    %1260 = vmatmul.f32.gmra.mxu0 %v1221
    %v1261 = vpop.f32.mrf.mxu0
    %v1262 = vadd.f32 0.0, %v1261
    %1263 = vmatmul.f32.gmra.mxu0 %v1224
    %v1264 = vpop.f32.mrf.mxu0
    %v1265 = vadd.f32 0.0, %v1264
    %1266 = vmatmul.f32.gmra.mxu0 %v1227
    %v1267 = vpop.f32.mrf.mxu0
    %v1268 = vadd.f32 0.0, %v1267
    %1269 = vmatmul.f32.gmra.mxu0 %v1230
    %v1270 = vpop.f32.mrf.mxu0
    %v1271 = vadd.f32 0.0, %v1270
    %1272 = vmatmul.f32.gmra.mxu0 %v1233
    %v1273 = vpop.f32.mrf.mxu0
    %v1274 = vadd.f32 0.0, %v1273
    %1275 = vmatmul.f32.gmra.mxu0 %v1236
    %v1276 = vpop.f32.mrf.mxu0
    %v1277 = vadd.f32 0.0, %v1276
    %1278 = vmatmul.f32.gmra.mxu0 %v1239
    %v1279 = vpop.f32.mrf.mxu0
    %v1280 = vadd.f32 0.0, %v1279
    %1281 = vmatmul.f32.gmra.mxu0 %v1242
    %v1282 = vpop.f32.mrf.mxu0
    %v1283 = vadd.f32 0.0, %v1282
    %1284 = vdwg.mxu0
    %v1285 = vadd.f32 %v1211, %v1262
    %v1286 = vadd.f32 %v1212, %v1265
    %v1287 = vadd.f32 %v1213, %v1268
    %v1288 = vadd.f32 %v1214, %v1271
    %v1289 = vadd.f32 %v1215, %v1274
    %v1290 = vadd.f32 %v1216, %v1277
    %v1291 = vadd.f32 %v1217, %v1280
    %v1292 = vadd.f32 %v1218, %v1283
    %1293 = vmatpush.msra.mxu0 0.0
    %1294 = vmatpush.msra.mxu0 0.0
    %1295 = vmatpush.msra.mxu0 0.0
    %1296 = vmatpush.msra.mxu0 0.0
    %1297 = vmatpush.msra.mxu0 0.0
    %1298 = vmatpush.msra.mxu0 0.0
    %1299 = vmatpush.msra.mxu0 0.0
    %1300 = vmatpush.msra.mxu0 0.0
    %1301 = vmatpush.msra.mxu0 %v1292
    %1302 = vmatpush.msra.mxu0 %v1291
    %1303 = vmatpush.msra.mxu0 %v1290
    %1304 = vmatpush.msra.mxu0 %v1289
    %1305 = vmatpush.msra.mxu0 %v1288
    %1306 = vmatpush.msra.mxu0 %v1287
    %1307 = vmatpush.msra.mxu0 %v1286
    %1308 = vmatpush.msra.mxu0 %v1285
    %1309 = vmatmul.f32.gmra.mxu0 %v218
    %v1310 = vpop.f32.mrf.mxu0
    %v1311 = vadd.f32 0.0, %v1310
    %1312 = vmatmul.f32.gmra.mxu0 %v221
    %v1313 = vpop.f32.mrf.mxu0
    %v1314 = vadd.f32 0.0, %v1313
    %1315 = vmatmul.f32.gmra.mxu0 %v224
    %v1316 = vpop.f32.mrf.mxu0
    %v1317 = vadd.f32 0.0, %v1316
    %1318 = vmatmul.f32.gmra.mxu0 %v227
    %v1319 = vpop.f32.mrf.mxu0
    %v1320 = vadd.f32 0.0, %v1319
    %1321 = vmatmul.f32.gmra.mxu0 %v230
    %v1322 = vpop.f32.mrf.mxu0
    %v1323 = vadd.f32 0.0, %v1322
    %1324 = vmatmul.f32.gmra.mxu0 %v233
    %v1325 = vpop.f32.mrf.mxu0
    %v1326 = vadd.f32 0.0, %v1325
    %1327 = vmatmul.f32.gmra.mxu0 %v236
    %v1328 = vpop.f32.mrf.mxu0
    %v1329 = vadd.f32 0.0, %v1328
    %1330 = vmatmul.f32.gmra.mxu0 %v239
    %v1331 = vpop.f32.mrf.mxu0
    %v1332 = vadd.f32 0.0, %v1331
    %1333 = vmatmul.f32.gmra.mxu0 %v242
    %v1334 = vpop.f32.mrf.mxu0
    %v1335 = vadd.f32 0.0, %v1334
    %1336 = vmatmul.f32.gmra.mxu0 %v245
    %v1337 = vpop.f32.mrf.mxu0
    %v1338 = vadd.f32 0.0, %v1337
    %1339 = vmatmul.f32.gmra.mxu0 %v248
    %v1340 = vpop.f32.mrf.mxu0
    %v1341 = vadd.f32 0.0, %v1340
    %1342 = vmatmul.f32.gmra.mxu0 %v251
    %v1343 = vpop.f32.mrf.mxu0
    %v1344 = vadd.f32 0.0, %v1343
    %1345 = vmatmul.f32.gmra.mxu0 %v254
    %v1346 = vpop.f32.mrf.mxu0
    %v1347 = vadd.f32 0.0, %v1346
    %1348 = vmatmul.f32.gmra.mxu0 %v257
    %v1349 = vpop.f32.mrf.mxu0
    %v1350 = vadd.f32 0.0, %v1349
    %1351 = vmatmul.f32.gmra.mxu0 %v260
    %v1352 = vpop.f32.mrf.mxu0
    %v1353 = vadd.f32 0.0, %v1352
    %1354 = vmatmul.f32.gmra.mxu0 %v263
    %v1355 = vpop.f32.mrf.mxu0
    %v1356 = vadd.f32 0.0, %v1355
    %1357 = vmatmul.f32.gmra.mxu0 %v266
    %v1358 = vpop.f32.mrf.mxu0
    %v1359 = vadd.f32 0.0, %v1358
    %1360 = vmatmul.f32.gmra.mxu0 %v269
    %v1361 = vpop.f32.mrf.mxu0
    %v1362 = vadd.f32 0.0, %v1361
    %1363 = vmatmul.f32.gmra.mxu0 %v272
    %v1364 = vpop.f32.mrf.mxu0
    %v1365 = vadd.f32 0.0, %v1364
    %1366 = vmatmul.f32.gmra.mxu0 %v275
    %v1367 = vpop.f32.mrf.mxu0
    %v1368 = vadd.f32 0.0, %v1367
    %1369 = vmatmul.f32.gmra.mxu0 %v278
    %v1370 = vpop.f32.mrf.mxu0
    %v1371 = vadd.f32 0.0, %v1370
    %1372 = vmatmul.f32.gmra.mxu0 %v281
    %v1373 = vpop.f32.mrf.mxu0
    %v1374 = vadd.f32 0.0, %v1373
    %1375 = vmatmul.f32.gmra.mxu0 %v284
    %v1376 = vpop.f32.mrf.mxu0
    %v1377 = vadd.f32 0.0, %v1376
    %1378 = vmatmul.f32.gmra.mxu0 %v287
    %v1379 = vpop.f32.mrf.mxu0
    %v1380 = vadd.f32 0.0, %v1379
    %1381 = vmatmul.f32.gmra.mxu0 %v290
    %v1382 = vpop.f32.mrf.mxu0
    %v1383 = vadd.f32 0.0, %v1382
    %1384 = vmatmul.f32.gmra.mxu0 %v293
    %v1385 = vpop.f32.mrf.mxu0
    %v1386 = vadd.f32 0.0, %v1385
    %1387 = vmatmul.f32.gmra.mxu0 %v296
    %v1388 = vpop.f32.mrf.mxu0
    %v1389 = vadd.f32 0.0, %v1388
    %1390 = vmatmul.f32.gmra.mxu0 %v299
    %v1391 = vpop.f32.mrf.mxu0
    %v1392 = vadd.f32 0.0, %v1391
    %1393 = vmatmul.f32.gmra.mxu0 %v302
    %v1394 = vpop.f32.mrf.mxu0
    %v1395 = vadd.f32 0.0, %v1394
    %1396 = vmatmul.f32.gmra.mxu0 %v305
    %v1397 = vpop.f32.mrf.mxu0
    %v1398 = vadd.f32 0.0, %v1397
    %1399 = vmatmul.f32.gmra.mxu0 %v308
    %v1400 = vpop.f32.mrf.mxu0
    %v1401 = vadd.f32 0.0, %v1400
    %1402 = vmatmul.f32.gmra.mxu0 %v311
    %v1403 = vpop.f32.mrf.mxu0
    %v1404 = vadd.f32 0.0, %v1403
    %1405 = vmatmul.f32.gmra.mxu0 %v314
    %v1406 = vpop.f32.mrf.mxu0
    %v1407 = vadd.f32 0.0, %v1406
    %1408 = vmatmul.f32.gmra.mxu0 %v317
    %v1409 = vpop.f32.mrf.mxu0
    %v1410 = vadd.f32 0.0, %v1409
    %1411 = vmatmul.f32.gmra.mxu0 %v320
    %v1412 = vpop.f32.mrf.mxu0
    %v1413 = vadd.f32 0.0, %v1412
    %1414 = vmatmul.f32.gmra.mxu0 %v323
    %v1415 = vpop.f32.mrf.mxu0
    %v1416 = vadd.f32 0.0, %v1415
    %1417 = vmatmul.f32.gmra.mxu0 %v326
    %v1418 = vpop.f32.mrf.mxu0
    %v1419 = vadd.f32 0.0, %v1418
    %1420 = vmatmul.f32.gmra.mxu0 %v329
    %v1421 = vpop.f32.mrf.mxu0
    %v1422 = vadd.f32 0.0, %v1421
    %1423 = vmatmul.f32.gmra.mxu0 %v332
    %v1424 = vpop.f32.mrf.mxu0
    %v1425 = vadd.f32 0.0, %v1424
    %1426 = vmatmul.f32.gmra.mxu0 %v335
    %v1427 = vpop.f32.mrf.mxu0
    %v1428 = vadd.f32 0.0, %v1427
    %1429 = vmatmul.f32.gmra.mxu0 %v338
    %v1430 = vpop.f32.mrf.mxu0
    %v1431 = vadd.f32 0.0, %v1430
    %1432 = vmatmul.f32.gmra.mxu0 %v341
    %v1433 = vpop.f32.mrf.mxu0
    %v1434 = vadd.f32 0.0, %v1433
    %1435 = vmatmul.f32.gmra.mxu0 %v344
    %v1436 = vpop.f32.mrf.mxu0
    %v1437 = vadd.f32 0.0, %v1436
    %1438 = vmatmul.f32.gmra.mxu0 %v347
    %v1439 = vpop.f32.mrf.mxu0
    %v1440 = vadd.f32 0.0, %v1439
    %1441 = vmatmul.f32.gmra.mxu0 %v350
    %v1442 = vpop.f32.mrf.mxu0
    %v1443 = vadd.f32 0.0, %v1442
    %1444 = vmatmul.f32.gmra.mxu0 %v353
    %v1445 = vpop.f32.mrf.mxu0
    %v1446 = vadd.f32 0.0, %v1445
    %1447 = vmatmul.f32.gmra.mxu0 %v356
    %v1448 = vpop.f32.mrf.mxu0
    %v1449 = vadd.f32 0.0, %v1448
    %1450 = vmatmul.f32.gmra.mxu0 %v359
    %v1451 = vpop.f32.mrf.mxu0
    %v1452 = vadd.f32 0.0, %v1451
    %1453 = vmatmul.f32.gmra.mxu0 %v362
    %v1454 = vpop.f32.mrf.mxu0
    %v1455 = vadd.f32 0.0, %v1454
    %1456 = vmatmul.f32.gmra.mxu0 %v365
    %v1457 = vpop.f32.mrf.mxu0
    %v1458 = vadd.f32 0.0, %v1457
    %1459 = vmatmul.f32.gmra.mxu0 %v368
    %v1460 = vpop.f32.mrf.mxu0
    %v1461 = vadd.f32 0.0, %v1460
    %1462 = vmatmul.f32.gmra.mxu0 %v371
    %v1463 = vpop.f32.mrf.mxu0
    %v1464 = vadd.f32 0.0, %v1463
    %1465 = vmatmul.f32.gmra.mxu0 %v374
    %v1466 = vpop.f32.mrf.mxu0
    %v1467 = vadd.f32 0.0, %v1466
    %1468 = vmatmul.f32.gmra.mxu0 %v377
    %v1469 = vpop.f32.mrf.mxu0
    %v1470 = vadd.f32 0.0, %v1469
    %1471 = vmatmul.f32.gmra.mxu0 %v380
    %v1472 = vpop.f32.mrf.mxu0
    %v1473 = vadd.f32 0.0, %v1472
    %1474 = vmatmul.f32.gmra.mxu0 %v383
    %v1475 = vpop.f32.mrf.mxu0
    %v1476 = vadd.f32 0.0, %v1475
    %1477 = vmatmul.f32.gmra.mxu0 %v386
    %v1478 = vpop.f32.mrf.mxu0
    %v1479 = vadd.f32 0.0, %v1478
    %1480 = vmatmul.f32.gmra.mxu0 %v389
    %v1481 = vpop.f32.mrf.mxu0
    %v1482 = vadd.f32 0.0, %v1481
    %1483 = vmatmul.f32.gmra.mxu0 %v392
    %v1484 = vpop.f32.mrf.mxu0
    %v1485 = vadd.f32 0.0, %v1484
    %1486 = vmatmul.f32.gmra.mxu0 %v395
    %v1487 = vpop.f32.mrf.mxu0
    %v1488 = vadd.f32 0.0, %v1487
    %1489 = vmatmul.f32.gmra.mxu0 %v398
    %v1490 = vpop.f32.mrf.mxu0
    %v1491 = vadd.f32 0.0, %v1490
    %1492 = vmatmul.f32.gmra.mxu0 %v401
    %v1493 = vpop.f32.mrf.mxu0
    %v1494 = vadd.f32 0.0, %v1493
    %1495 = vmatmul.f32.gmra.mxu0 %v404
    %v1496 = vpop.f32.mrf.mxu0
    %v1497 = vadd.f32 0.0, %v1496
    %1498 = vmatmul.f32.gmra.mxu0 %v407
    %v1499 = vpop.f32.mrf.mxu0
    %v1500 = vadd.f32 0.0, %v1499
    %1501 = vdwg.mxu0
    %v1502 = vld [vmem:[#allocation6] sm:$0xff]
    %v1503 = vld [vmem:[#allocation6 + $0x8] sm:$0xff]
    %v1504 = vld [vmem:[#allocation6 + $0x10] sm:$0xff]
    %v1505 = vld [vmem:[#allocation6 + $0x18] sm:$0xff]
    %v1506 = vld [vmem:[#allocation6 + $0x20] sm:$0xff]
    %v1507 = vld [vmem:[#allocation6 + $0x28] sm:$0xff]
    %v1508 = vld [vmem:[#allocation6 + $0x30] sm:$0xff]
    %v1509 = vld [vmem:[#allocation6 + $0x38] sm:$0xff]
    %v1510 = vld [vmem:[#allocation4] sm:$0xff]
    %v1511 = vld [vmem:[#allocation4 + $0x8] sm:$0xff]
    %v1512 = vld [vmem:[#allocation4 + $0x10] sm:$0xff]
    %v1513 = vld [vmem:[#allocation4 + $0x18] sm:$0xff]
    %v1514 = vld [vmem:[#allocation4 + $0x20] sm:$0xff]
    %v1515 = vld [vmem:[#allocation4 + $0x28] sm:$0xff]
    %v1516 = vld [vmem:[#allocation4 + $0x30] sm:$0xff]
    %v1517 = vld [vmem:[#allocation4 + $0x38] sm:$0xff]
    %v1519 = vsel %vm216, %v1311, 0
    %v1522 = vsel %vm216, %v1314, 0
    %v1525 = vsel %vm216, %v1317, 0
    %v1528 = vsel %vm216, %v1320, 0
    %v1531 = vsel %vm216, %v1323, 0
    %v1534 = vsel %vm216, %v1326, 0
    %v1537 = vsel %vm216, %v1329, 0
    %v1540 = vsel %vm216, %v1332, 0
    %1542 = vmatpush.msra.mxu0 0.0
    %1543 = vmatpush.msra.mxu0 0.0
    %1544 = vmatpush.msra.mxu0 0.0
    %1545 = vmatpush.msra.mxu0 0.0
    %1546 = vmatpush.msra.mxu0 0.0
    %1547 = vmatpush.msra.mxu0 0.0
    %1548 = vmatpush.msra.mxu0 0.0
    %1549 = vmatpush.msra.mxu0 0.0
    %1550 = vmatpush.msra.mxu0 %v1517
    %1551 = vmatpush.msra.mxu0 %v1516
    %1552 = vmatpush.msra.mxu0 %v1515
    %1553 = vmatpush.msra.mxu0 %v1514
    %1554 = vmatpush.msra.mxu0 %v1513
    %1555 = vmatpush.msra.mxu0 %v1512
    %1556 = vmatpush.msra.mxu0 %v1511
    %1557 = vmatpush.msra.mxu0 %v1510
    %1558 = vmatmul.f32.gmra.mxu0 %v1519
    %v1559 = vpop.f32.mrf.mxu0
    %v1560 = vadd.f32 0.0, %v1559
    %1561 = vmatmul.f32.gmra.mxu0 %v1522
    %v1562 = vpop.f32.mrf.mxu0
    %v1563 = vadd.f32 0.0, %v1562
    %1564 = vmatmul.f32.gmra.mxu0 %v1525
    %v1565 = vpop.f32.mrf.mxu0
    %v1566 = vadd.f32 0.0, %v1565
    %1567 = vmatmul.f32.gmra.mxu0 %v1528
    %v1568 = vpop.f32.mrf.mxu0
    %v1569 = vadd.f32 0.0, %v1568
    %1570 = vmatmul.f32.gmra.mxu0 %v1531
    %v1571 = vpop.f32.mrf.mxu0
    %v1572 = vadd.f32 0.0, %v1571
    %1573 = vmatmul.f32.gmra.mxu0 %v1534
    %v1574 = vpop.f32.mrf.mxu0
    %v1575 = vadd.f32 0.0, %v1574
    %1576 = vmatmul.f32.gmra.mxu0 %v1537
    %v1577 = vpop.f32.mrf.mxu0
    %v1578 = vadd.f32 0.0, %v1577
    %1579 = vmatmul.f32.gmra.mxu0 %v1540
    %v1580 = vpop.f32.mrf.mxu0
    %v1581 = vadd.f32 0.0, %v1580
    %1582 = vdwg.mxu0
    %v1583 = vadd.f32 %v1502, %v1560
    %v1584 = vadd.f32 %v1503, %v1563
    %v1585 = vadd.f32 %v1504, %v1566
    %v1586 = vadd.f32 %v1505, %v1569
    %v1587 = vadd.f32 %v1506, %v1572
    %v1588 = vadd.f32 %v1507, %v1575
    %v1589 = vadd.f32 %v1508, %v1578
    %v1590 = vadd.f32 %v1509, %v1581
    %v1591 = vld [vmem:[#allocation4 + $0x40] sm:$0xff]
    %v1592 = vld [vmem:[#allocation4 + $0x48] sm:$0xff]
    %v1593 = vld [vmem:[#allocation4 + $0x50] sm:$0xff]
    %v1594 = vld [vmem:[#allocation4 + $0x58] sm:$0xff]
    %v1595 = vld [vmem:[#allocation4 + $0x60] sm:$0xff]
    %v1596 = vld [vmem:[#allocation4 + $0x68] sm:$0xff]
    %v1597 = vld [vmem:[#allocation4 + $0x70] sm:$0xff]
    %v1598 = vld [vmem:[#allocation4 + $0x78] sm:$0xff]
    %v1600 = vsel %vm216, %v1335, 0
    %v1603 = vsel %vm216, %v1338, 0
    %v1606 = vsel %vm216, %v1341, 0
    %v1609 = vsel %vm216, %v1344, 0
    %v1612 = vsel %vm216, %v1347, 0
    %v1615 = vsel %vm216, %v1350, 0
    %v1618 = vsel %vm216, %v1353, 0
    %v1621 = vsel %vm216, %v1356, 0
    %1623 = vmatpush.msra.mxu0 0.0
    %1624 = vmatpush.msra.mxu0 0.0
    %1625 = vmatpush.msra.mxu0 0.0
    %1626 = vmatpush.msra.mxu0 0.0
    %1627 = vmatpush.msra.mxu0 0.0
    %1628 = vmatpush.msra.mxu0 0.0
    %1629 = vmatpush.msra.mxu0 0.0
    %1630 = vmatpush.msra.mxu0 0.0
    %1631 = vmatpush.msra.mxu0 %v1598
    %1632 = vmatpush.msra.mxu0 %v1597
    %1633 = vmatpush.msra.mxu0 %v1596
    %1634 = vmatpush.msra.mxu0 %v1595
    %1635 = vmatpush.msra.mxu0 %v1594
    %1636 = vmatpush.msra.mxu0 %v1593
    %1637 = vmatpush.msra.mxu0 %v1592
    %1638 = vmatpush.msra.mxu0 %v1591
    %1639 = vmatmul.f32.gmra.mxu0 %v1600
    %v1640 = vpop.f32.mrf.mxu0
    %v1641 = vadd.f32 0.0, %v1640
    %1642 = vmatmul.f32.gmra.mxu0 %v1603
    %v1643 = vpop.f32.mrf.mxu0
    %v1644 = vadd.f32 0.0, %v1643
    %1645 = vmatmul.f32.gmra.mxu0 %v1606
    %v1646 = vpop.f32.mrf.mxu0
    %v1647 = vadd.f32 0.0, %v1646
    %1648 = vmatmul.f32.gmra.mxu0 %v1609
    %v1649 = vpop.f32.mrf.mxu0
    %v1650 = vadd.f32 0.0, %v1649
    %1651 = vmatmul.f32.gmra.mxu0 %v1612
    %v1652 = vpop.f32.mrf.mxu0
    %v1653 = vadd.f32 0.0, %v1652
    %1654 = vmatmul.f32.gmra.mxu0 %v1615
    %v1655 = vpop.f32.mrf.mxu0
    %v1656 = vadd.f32 0.0, %v1655
    %1657 = vmatmul.f32.gmra.mxu0 %v1618
    %v1658 = vpop.f32.mrf.mxu0
    %v1659 = vadd.f32 0.0, %v1658
    %1660 = vmatmul.f32.gmra.mxu0 %v1621
    %v1661 = vpop.f32.mrf.mxu0
    %v1662 = vadd.f32 0.0, %v1661
    %1663 = vdwg.mxu0
    %v1664 = vadd.f32 %v1583, %v1641
    %v1665 = vadd.f32 %v1584, %v1644
    %v1666 = vadd.f32 %v1585, %v1647
    %v1667 = vadd.f32 %v1586, %v1650
    %v1668 = vadd.f32 %v1587, %v1653
    %v1669 = vadd.f32 %v1588, %v1656
    %v1670 = vadd.f32 %v1589, %v1659
    %v1671 = vadd.f32 %v1590, %v1662
    %v1672 = vld [vmem:[#allocation4 + $0x80] sm:$0xff]
    %v1673 = vld [vmem:[#allocation4 + $0x88] sm:$0xff]
    %v1674 = vld [vmem:[#allocation4 + $0x90] sm:$0xff]
    %v1675 = vld [vmem:[#allocation4 + $0x98] sm:$0xff]
    %v1676 = vld [vmem:[#allocation4 + $0xa0] sm:$0xff]
    %v1677 = vld [vmem:[#allocation4 + $0xa8] sm:$0xff]
    %v1678 = vld [vmem:[#allocation4 + $0xb0] sm:$0xff]
    %v1679 = vld [vmem:[#allocation4 + $0xb8] sm:$0xff]
    %v1681 = vsel %vm216, %v1359, 0
    %v1684 = vsel %vm216, %v1362, 0
    %v1687 = vsel %vm216, %v1365, 0
    %v1690 = vsel %vm216, %v1368, 0
    %v1693 = vsel %vm216, %v1371, 0
    %v1696 = vsel %vm216, %v1374, 0
    %v1699 = vsel %vm216, %v1377, 0
    %v1702 = vsel %vm216, %v1380, 0
    %1704 = vmatpush.msra.mxu0 0.0
    %1705 = vmatpush.msra.mxu0 0.0
    %1706 = vmatpush.msra.mxu0 0.0
    %1707 = vmatpush.msra.mxu0 0.0
    %1708 = vmatpush.msra.mxu0 0.0
    %1709 = vmatpush.msra.mxu0 0.0
    %1710 = vmatpush.msra.mxu0 0.0
    %1711 = vmatpush.msra.mxu0 0.0
    %1712 = vmatpush.msra.mxu0 %v1679
    %1713 = vmatpush.msra.mxu0 %v1678
    %1714 = vmatpush.msra.mxu0 %v1677
    %1715 = vmatpush.msra.mxu0 %v1676
    %1716 = vmatpush.msra.mxu0 %v1675
    %1717 = vmatpush.msra.mxu0 %v1674
    %1718 = vmatpush.msra.mxu0 %v1673
    %1719 = vmatpush.msra.mxu0 %v1672
    %1720 = vmatmul.f32.gmra.mxu0 %v1681
    %v1721 = vpop.f32.mrf.mxu0
    %v1722 = vadd.f32 0.0, %v1721
    %1723 = vmatmul.f32.gmra.mxu0 %v1684
    %v1724 = vpop.f32.mrf.mxu0
    %v1725 = vadd.f32 0.0, %v1724
    %1726 = vmatmul.f32.gmra.mxu0 %v1687
    %v1727 = vpop.f32.mrf.mxu0
    %v1728 = vadd.f32 0.0, %v1727
    %1729 = vmatmul.f32.gmra.mxu0 %v1690
    %v1730 = vpop.f32.mrf.mxu0
    %v1731 = vadd.f32 0.0, %v1730
    %1732 = vmatmul.f32.gmra.mxu0 %v1693
    %v1733 = vpop.f32.mrf.mxu0
    %v1734 = vadd.f32 0.0, %v1733
    %1735 = vmatmul.f32.gmra.mxu0 %v1696
    %v1736 = vpop.f32.mrf.mxu0
    %v1737 = vadd.f32 0.0, %v1736
    %1738 = vmatmul.f32.gmra.mxu0 %v1699
    %v1739 = vpop.f32.mrf.mxu0
    %v1740 = vadd.f32 0.0, %v1739
    %1741 = vmatmul.f32.gmra.mxu0 %v1702
    %v1742 = vpop.f32.mrf.mxu0
    %v1743 = vadd.f32 0.0, %v1742
    %1744 = vdwg.mxu0
    %v1745 = vadd.f32 %v1664, %v1722
    %v1746 = vadd.f32 %v1665, %v1725
    %v1747 = vadd.f32 %v1666, %v1728
    %v1748 = vadd.f32 %v1667, %v1731
    %v1749 = vadd.f32 %v1668, %v1734
    %v1750 = vadd.f32 %v1669, %v1737
    %v1751 = vadd.f32 %v1670, %v1740
    %v1752 = vadd.f32 %v1671, %v1743
    %v1753 = vld [vmem:[#allocation4 + $0xc0] sm:$0xff]
    %v1754 = vld [vmem:[#allocation4 + $0xc8] sm:$0xff]
    %v1755 = vld [vmem:[#allocation4 + $0xd0] sm:$0xff]
    %v1756 = vld [vmem:[#allocation4 + $0xd8] sm:$0xff]
    %v1757 = vld [vmem:[#allocation4 + $0xe0] sm:$0xff]
    %v1758 = vld [vmem:[#allocation4 + $0xe8] sm:$0xff]
    %v1759 = vld [vmem:[#allocation4 + $0xf0] sm:$0xff]
    %v1760 = vld [vmem:[#allocation4 + $0xf8] sm:$0xff]
    %v1762 = vsel %vm216, %v1383, 0
    %v1765 = vsel %vm216, %v1386, 0
    %v1768 = vsel %vm216, %v1389, 0
    %v1771 = vsel %vm216, %v1392, 0
    %v1774 = vsel %vm216, %v1395, 0
    %v1777 = vsel %vm216, %v1398, 0
    %v1780 = vsel %vm216, %v1401, 0
    %v1783 = vsel %vm216, %v1404, 0
    %1785 = vmatpush.msra.mxu0 0.0
    %1786 = vmatpush.msra.mxu0 0.0
    %1787 = vmatpush.msra.mxu0 0.0
    %1788 = vmatpush.msra.mxu0 0.0
    %1789 = vmatpush.msra.mxu0 0.0
    %1790 = vmatpush.msra.mxu0 0.0
    %1791 = vmatpush.msra.mxu0 0.0
    %1792 = vmatpush.msra.mxu0 0.0
    %1793 = vmatpush.msra.mxu0 %v1760
    %1794 = vmatpush.msra.mxu0 %v1759
    %1795 = vmatpush.msra.mxu0 %v1758
    %1796 = vmatpush.msra.mxu0 %v1757
    %1797 = vmatpush.msra.mxu0 %v1756
    %1798 = vmatpush.msra.mxu0 %v1755
    %1799 = vmatpush.msra.mxu0 %v1754
    %1800 = vmatpush.msra.mxu0 %v1753
    %1801 = vmatmul.f32.gmra.mxu0 %v1762
    %v1802 = vpop.f32.mrf.mxu0
    %v1803 = vadd.f32 0.0, %v1802
    %1804 = vmatmul.f32.gmra.mxu0 %v1765
    %v1805 = vpop.f32.mrf.mxu0
    %v1806 = vadd.f32 0.0, %v1805
    %1807 = vmatmul.f32.gmra.mxu0 %v1768
    %v1808 = vpop.f32.mrf.mxu0
    %v1809 = vadd.f32 0.0, %v1808
    %1810 = vmatmul.f32.gmra.mxu0 %v1771
    %v1811 = vpop.f32.mrf.mxu0
    %v1812 = vadd.f32 0.0, %v1811
    %1813 = vmatmul.f32.gmra.mxu0 %v1774
    %v1814 = vpop.f32.mrf.mxu0
    %v1815 = vadd.f32 0.0, %v1814
    %1816 = vmatmul.f32.gmra.mxu0 %v1777
    %v1817 = vpop.f32.mrf.mxu0
    %v1818 = vadd.f32 0.0, %v1817
    %1819 = vmatmul.f32.gmra.mxu0 %v1780
    %v1820 = vpop.f32.mrf.mxu0
    %v1821 = vadd.f32 0.0, %v1820
    %1822 = vmatmul.f32.gmra.mxu0 %v1783
    %v1823 = vpop.f32.mrf.mxu0
    %v1824 = vadd.f32 0.0, %v1823
    %1825 = vdwg.mxu0
    %v1826 = vadd.f32 %v1745, %v1803
    %v1827 = vadd.f32 %v1746, %v1806
    %v1828 = vadd.f32 %v1747, %v1809
    %v1829 = vadd.f32 %v1748, %v1812
    %v1830 = vadd.f32 %v1749, %v1815
    %v1831 = vadd.f32 %v1750, %v1818
    %v1832 = vadd.f32 %v1751, %v1821
    %v1833 = vadd.f32 %v1752, %v1824
    %v1834 = vld [vmem:[#allocation4 + $0x100] sm:$0xff]
    %v1835 = vld [vmem:[#allocation4 + $0x108] sm:$0xff]
    %v1836 = vld [vmem:[#allocation4 + $0x110] sm:$0xff]
    %v1837 = vld [vmem:[#allocation4 + $0x118] sm:$0xff]
    %v1838 = vld [vmem:[#allocation4 + $0x120] sm:$0xff]
    %v1839 = vld [vmem:[#allocation4 + $0x128] sm:$0xff]
    %v1840 = vld [vmem:[#allocation4 + $0x130] sm:$0xff]
    %v1841 = vld [vmem:[#allocation4 + $0x138] sm:$0xff]
    %v1843 = vsel %vm216, %v1285, 0
    %v1846 = vsel %vm216, %v1286, 0
    %v1849 = vsel %vm216, %v1287, 0
    %v1852 = vsel %vm216, %v1288, 0
    %v1855 = vsel %vm216, %v1289, 0
    %v1858 = vsel %vm216, %v1290, 0
    %v1861 = vsel %vm216, %v1291, 0
    %v1864 = vsel %vm216, %v1292, 0
    %1866 = vmatpush.msra.mxu0 0.0
    %1867 = vmatpush.msra.mxu0 0.0
    %1868 = vmatpush.msra.mxu0 0.0
    %1869 = vmatpush.msra.mxu0 0.0
    %1870 = vmatpush.msra.mxu0 0.0
    %1871 = vmatpush.msra.mxu0 0.0
    %1872 = vmatpush.msra.mxu0 0.0
    %1873 = vmatpush.msra.mxu0 0.0
    %1874 = vmatpush.msra.mxu0 %v1841
    %1875 = vmatpush.msra.mxu0 %v1840
    %1876 = vmatpush.msra.mxu0 %v1839
    %1877 = vmatpush.msra.mxu0 %v1838
    %1878 = vmatpush.msra.mxu0 %v1837
    %1879 = vmatpush.msra.mxu0 %v1836
    %1880 = vmatpush.msra.mxu0 %v1835
    %1881 = vmatpush.msra.mxu0 %v1834
    %1882 = vmatmul.f32.gmra.mxu0 %v1843
    %v1883 = vpop.f32.mrf.mxu0
    %v1884 = vadd.f32 0.0, %v1883
    %1885 = vmatmul.f32.gmra.mxu0 %v1846
    %v1886 = vpop.f32.mrf.mxu0
    %v1887 = vadd.f32 0.0, %v1886
    %1888 = vmatmul.f32.gmra.mxu0 %v1849
    %v1889 = vpop.f32.mrf.mxu0
    %v1890 = vadd.f32 0.0, %v1889
    %1891 = vmatmul.f32.gmra.mxu0 %v1852
    %v1892 = vpop.f32.mrf.mxu0
    %v1893 = vadd.f32 0.0, %v1892
    %1894 = vmatmul.f32.gmra.mxu0 %v1855
    %v1895 = vpop.f32.mrf.mxu0
    %v1896 = vadd.f32 0.0, %v1895
    %1897 = vmatmul.f32.gmra.mxu0 %v1858
    %v1898 = vpop.f32.mrf.mxu0
    %v1899 = vadd.f32 0.0, %v1898
    %1900 = vmatmul.f32.gmra.mxu0 %v1861
    %v1901 = vpop.f32.mrf.mxu0
    %v1902 = vadd.f32 0.0, %v1901
    %1903 = vmatmul.f32.gmra.mxu0 %v1864
    %v1904 = vpop.f32.mrf.mxu0
    %v1905 = vadd.f32 0.0, %v1904
    %1906 = vdwg.mxu0
    %v1907 = vadd.f32 %v1826, %v1884
    %v1908 = vadd.f32 %v1827, %v1887
    %v1909 = vadd.f32 %v1828, %v1890
    %v1910 = vadd.f32 %v1829, %v1893
    %v1911 = vadd.f32 %v1830, %v1896
    %v1912 = vadd.f32 %v1831, %v1899
    %v1913 = vadd.f32 %v1832, %v1902
    %v1914 = vadd.f32 %v1833, %v1905
    %v1915 = vld [vmem:[#allocation4 + $0x140] sm:$0xff]
    %v1916 = vld [vmem:[#allocation4 + $0x148] sm:$0xff]
    %v1917 = vld [vmem:[#allocation4 + $0x150] sm:$0xff]
    %v1918 = vld [vmem:[#allocation4 + $0x158] sm:$0xff]
    %v1919 = vld [vmem:[#allocation4 + $0x160] sm:$0xff]
    %v1920 = vld [vmem:[#allocation4 + $0x168] sm:$0xff]
    %v1921 = vld [vmem:[#allocation4 + $0x170] sm:$0xff]
    %v1922 = vld [vmem:[#allocation4 + $0x178] sm:$0xff]
    %v1924 = vsel %vm216, %v1407, 0
    %v1927 = vsel %vm216, %v1410, 0
    %v1930 = vsel %vm216, %v1413, 0
    %v1933 = vsel %vm216, %v1416, 0
    %v1936 = vsel %vm216, %v1419, 0
    %v1939 = vsel %vm216, %v1422, 0
    %v1942 = vsel %vm216, %v1425, 0
    %v1945 = vsel %vm216, %v1428, 0
    %1947 = vmatpush.msra.mxu0 0.0
    %1948 = vmatpush.msra.mxu0 0.0
    %1949 = vmatpush.msra.mxu0 0.0
    %1950 = vmatpush.msra.mxu0 0.0
    %1951 = vmatpush.msra.mxu0 0.0
    %1952 = vmatpush.msra.mxu0 0.0
    %1953 = vmatpush.msra.mxu0 0.0
    %1954 = vmatpush.msra.mxu0 0.0
    %1955 = vmatpush.msra.mxu0 %v1922
    %1956 = vmatpush.msra.mxu0 %v1921
    %1957 = vmatpush.msra.mxu0 %v1920
    %1958 = vmatpush.msra.mxu0 %v1919
    %1959 = vmatpush.msra.mxu0 %v1918
    %1960 = vmatpush.msra.mxu0 %v1917
    %1961 = vmatpush.msra.mxu0 %v1916
    %1962 = vmatpush.msra.mxu0 %v1915
    %1963 = vmatmul.f32.gmra.mxu0 %v1924
    %v1964 = vpop.f32.mrf.mxu0
    %v1965 = vadd.f32 0.0, %v1964
    %1966 = vmatmul.f32.gmra.mxu0 %v1927
    %v1967 = vpop.f32.mrf.mxu0
    %v1968 = vadd.f32 0.0, %v1967
    %1969 = vmatmul.f32.gmra.mxu0 %v1930
    %v1970 = vpop.f32.mrf.mxu0
    %v1971 = vadd.f32 0.0, %v1970
    %1972 = vmatmul.f32.gmra.mxu0 %v1933
    %v1973 = vpop.f32.mrf.mxu0
    %v1974 = vadd.f32 0.0, %v1973
    %1975 = vmatmul.f32.gmra.mxu0 %v1936
    %v1976 = vpop.f32.mrf.mxu0
    %v1977 = vadd.f32 0.0, %v1976
    %1978 = vmatmul.f32.gmra.mxu0 %v1939
    %v1979 = vpop.f32.mrf.mxu0
    %v1980 = vadd.f32 0.0, %v1979
    %1981 = vmatmul.f32.gmra.mxu0 %v1942
    %v1982 = vpop.f32.mrf.mxu0
    %v1983 = vadd.f32 0.0, %v1982
    %1984 = vmatmul.f32.gmra.mxu0 %v1945
    %v1985 = vpop.f32.mrf.mxu0
    %v1986 = vadd.f32 0.0, %v1985
    %1987 = vdwg.mxu0
    %v1988 = vadd.f32 %v1907, %v1965
    %v1989 = vadd.f32 %v1908, %v1968
    %v1990 = vadd.f32 %v1909, %v1971
    %v1991 = vadd.f32 %v1910, %v1974
    %v1992 = vadd.f32 %v1911, %v1977
    %v1993 = vadd.f32 %v1912, %v1980
    %v1994 = vadd.f32 %v1913, %v1983
    %v1995 = vadd.f32 %v1914, %v1986
    %v1996 = vld [vmem:[#allocation4 + $0x180] sm:$0xff]
    %v1997 = vld [vmem:[#allocation4 + $0x188] sm:$0xff]
    %v1998 = vld [vmem:[#allocation4 + $0x190] sm:$0xff]
    %v1999 = vld [vmem:[#allocation4 + $0x198] sm:$0xff]
    %v2000 = vld [vmem:[#allocation4 + $0x1a0] sm:$0xff]
    %v2001 = vld [vmem:[#allocation4 + $0x1a8] sm:$0xff]
    %v2002 = vld [vmem:[#allocation4 + $0x1b0] sm:$0xff]
    %v2003 = vld [vmem:[#allocation4 + $0x1b8] sm:$0xff]
    %v2005 = vsel %vm216, %v1431, 0
    %v2008 = vsel %vm216, %v1434, 0
    %v2011 = vsel %vm216, %v1437, 0
    %v2014 = vsel %vm216, %v1440, 0
    %v2017 = vsel %vm216, %v1443, 0
    %v2020 = vsel %vm216, %v1446, 0
    %v2023 = vsel %vm216, %v1449, 0
    %v2026 = vsel %vm216, %v1452, 0
    %2028 = vmatpush.msra.mxu0 0.0
    %2029 = vmatpush.msra.mxu0 0.0
    %2030 = vmatpush.msra.mxu0 0.0
    %2031 = vmatpush.msra.mxu0 0.0
    %2032 = vmatpush.msra.mxu0 0.0
    %2033 = vmatpush.msra.mxu0 0.0
    %2034 = vmatpush.msra.mxu0 0.0
    %2035 = vmatpush.msra.mxu0 0.0
    %2036 = vmatpush.msra.mxu0 %v2003
    %2037 = vmatpush.msra.mxu0 %v2002
    %2038 = vmatpush.msra.mxu0 %v2001
    %2039 = vmatpush.msra.mxu0 %v2000
    %2040 = vmatpush.msra.mxu0 %v1999
    %2041 = vmatpush.msra.mxu0 %v1998
    %2042 = vmatpush.msra.mxu0 %v1997
    %2043 = vmatpush.msra.mxu0 %v1996
    %2044 = vmatmul.f32.gmra.mxu0 %v2005
    %v2045 = vpop.f32.mrf.mxu0
    %v2046 = vadd.f32 0.0, %v2045
    %2047 = vmatmul.f32.gmra.mxu0 %v2008
    %v2048 = vpop.f32.mrf.mxu0
    %v2049 = vadd.f32 0.0, %v2048
    %2050 = vmatmul.f32.gmra.mxu0 %v2011
    %v2051 = vpop.f32.mrf.mxu0
    %v2052 = vadd.f32 0.0, %v2051
    %2053 = vmatmul.f32.gmra.mxu0 %v2014
    %v2054 = vpop.f32.mrf.mxu0
    %v2055 = vadd.f32 0.0, %v2054
    %2056 = vmatmul.f32.gmra.mxu0 %v2017
    %v2057 = vpop.f32.mrf.mxu0
    %v2058 = vadd.f32 0.0, %v2057
    %2059 = vmatmul.f32.gmra.mxu0 %v2020
    %v2060 = vpop.f32.mrf.mxu0
    %v2061 = vadd.f32 0.0, %v2060
    %2062 = vmatmul.f32.gmra.mxu0 %v2023
    %v2063 = vpop.f32.mrf.mxu0
    %v2064 = vadd.f32 0.0, %v2063
    %2065 = vmatmul.f32.gmra.mxu0 %v2026
    %v2066 = vpop.f32.mrf.mxu0
    %v2067 = vadd.f32 0.0, %v2066
    %2068 = vdwg.mxu0
    %v2069 = vadd.f32 %v1988, %v2046
    %v2070 = vadd.f32 %v1989, %v2049
    %v2071 = vadd.f32 %v1990, %v2052
    %v2072 = vadd.f32 %v1991, %v2055
    %v2073 = vadd.f32 %v1992, %v2058
    %v2074 = vadd.f32 %v1993, %v2061
    %v2075 = vadd.f32 %v1994, %v2064
    %v2076 = vadd.f32 %v1995, %v2067
    %v2077 = vld [vmem:[#allocation4 + $0x1c0] sm:$0xff]
    %v2078 = vld [vmem:[#allocation4 + $0x1c8] sm:$0xff]
    %v2079 = vld [vmem:[#allocation4 + $0x1d0] sm:$0xff]
    %v2080 = vld [vmem:[#allocation4 + $0x1d8] sm:$0xff]
    %v2081 = vld [vmem:[#allocation4 + $0x1e0] sm:$0xff]
    %v2082 = vld [vmem:[#allocation4 + $0x1e8] sm:$0xff]
    %v2083 = vld [vmem:[#allocation4 + $0x1f0] sm:$0xff]
    %v2084 = vld [vmem:[#allocation4 + $0x1f8] sm:$0xff]
    %v2086 = vsel %vm216, %v1455, 0
    %v2089 = vsel %vm216, %v1458, 0
    %v2092 = vsel %vm216, %v1461, 0
    %v2095 = vsel %vm216, %v1464, 0
    %v2098 = vsel %vm216, %v1467, 0
    %v2101 = vsel %vm216, %v1470, 0
    %v2104 = vsel %vm216, %v1473, 0
    %v2107 = vsel %vm216, %v1476, 0
    %2109 = vmatpush.msra.mxu0 0.0
    %2110 = vmatpush.msra.mxu0 0.0
    %2111 = vmatpush.msra.mxu0 0.0
    %2112 = vmatpush.msra.mxu0 0.0
    %2113 = vmatpush.msra.mxu0 0.0
    %2114 = vmatpush.msra.mxu0 0.0
    %2115 = vmatpush.msra.mxu0 0.0
    %2116 = vmatpush.msra.mxu0 0.0
    %2117 = vmatpush.msra.mxu0 %v2084
    %2118 = vmatpush.msra.mxu0 %v2083
    %2119 = vmatpush.msra.mxu0 %v2082
    %2120 = vmatpush.msra.mxu0 %v2081
    %2121 = vmatpush.msra.mxu0 %v2080
    %2122 = vmatpush.msra.mxu0 %v2079
    %2123 = vmatpush.msra.mxu0 %v2078
    %2124 = vmatpush.msra.mxu0 %v2077
    %2125 = vmatmul.f32.gmra.mxu0 %v2086
    %v2126 = vpop.f32.mrf.mxu0
    %v2127 = vadd.f32 0.0, %v2126
    %2128 = vmatmul.f32.gmra.mxu0 %v2089
    %v2129 = vpop.f32.mrf.mxu0
    %v2130 = vadd.f32 0.0, %v2129
    %2131 = vmatmul.f32.gmra.mxu0 %v2092
    %v2132 = vpop.f32.mrf.mxu0
    %v2133 = vadd.f32 0.0, %v2132
    %2134 = vmatmul.f32.gmra.mxu0 %v2095
    %v2135 = vpop.f32.mrf.mxu0
    %v2136 = vadd.f32 0.0, %v2135
    %2137 = vmatmul.f32.gmra.mxu0 %v2098
    %v2138 = vpop.f32.mrf.mxu0
    %v2139 = vadd.f32 0.0, %v2138
    %2140 = vmatmul.f32.gmra.mxu0 %v2101
    %v2141 = vpop.f32.mrf.mxu0
    %v2142 = vadd.f32 0.0, %v2141
    %2143 = vmatmul.f32.gmra.mxu0 %v2104
    %v2144 = vpop.f32.mrf.mxu0
    %v2145 = vadd.f32 0.0, %v2144
    %2146 = vmatmul.f32.gmra.mxu0 %v2107
    %v2147 = vpop.f32.mrf.mxu0
    %v2148 = vadd.f32 0.0, %v2147
    %2149 = vdwg.mxu0
    %v2150 = vadd.f32 %v2069, %v2127
    %v2151 = vadd.f32 %v2070, %v2130
    %v2152 = vadd.f32 %v2071, %v2133
    %v2153 = vadd.f32 %v2072, %v2136
    %v2154 = vadd.f32 %v2073, %v2139
    %v2155 = vadd.f32 %v2074, %v2142
    %v2156 = vadd.f32 %v2075, %v2145
    %v2157 = vadd.f32 %v2076, %v2148
    %v2158 = vld [vmem:[#allocation4 + $0x200] sm:$0xff]
    %v2159 = vld [vmem:[#allocation4 + $0x208] sm:$0xff]
    %v2160 = vld [vmem:[#allocation4 + $0x210] sm:$0xff]
    %v2161 = vld [vmem:[#allocation4 + $0x218] sm:$0xff]
    %v2162 = vld [vmem:[#allocation4 + $0x220] sm:$0xff]
    %v2163 = vld [vmem:[#allocation4 + $0x228] sm:$0xff]
    %v2164 = vld [vmem:[#allocation4 + $0x230] sm:$0xff]
    %v2165 = vld [vmem:[#allocation4 + $0x238] sm:$0xff]
    %v2167 = vsel %vm216, %v1479, 0
    %v2170 = vsel %vm216, %v1482, 0
    %v2173 = vsel %vm216, %v1485, 0
    %v2176 = vsel %vm216, %v1488, 0
    %v2179 = vsel %vm216, %v1491, 0
    %v2182 = vsel %vm216, %v1494, 0
    %v2185 = vsel %vm216, %v1497, 0
    %v2188 = vsel %vm216, %v1500, 0
    %2190 = vmatpush.msra.mxu0 0.0
    %2191 = vmatpush.msra.mxu0 0.0
    %2192 = vmatpush.msra.mxu0 0.0
    %2193 = vmatpush.msra.mxu0 0.0
    %2194 = vmatpush.msra.mxu0 0.0
    %2195 = vmatpush.msra.mxu0 0.0
    %2196 = vmatpush.msra.mxu0 0.0
    %2197 = vmatpush.msra.mxu0 0.0
    %2198 = vmatpush.msra.mxu0 %v2165
    %2199 = vmatpush.msra.mxu0 %v2164
    %2200 = vmatpush.msra.mxu0 %v2163
    %2201 = vmatpush.msra.mxu0 %v2162
    %2202 = vmatpush.msra.mxu0 %v2161
    %2203 = vmatpush.msra.mxu0 %v2160
    %2204 = vmatpush.msra.mxu0 %v2159
    %2205 = vmatpush.msra.mxu0 %v2158
    %2206 = vmatmul.f32.gmra.mxu0 %v2167
    %v2207 = vpop.f32.mrf.mxu0
    %v2208 = vadd.f32 0.0, %v2207
    %2209 = vmatmul.f32.gmra.mxu0 %v2170
    %v2210 = vpop.f32.mrf.mxu0
    %v2211 = vadd.f32 0.0, %v2210
    %2212 = vmatmul.f32.gmra.mxu0 %v2173
    %v2213 = vpop.f32.mrf.mxu0
    %v2214 = vadd.f32 0.0, %v2213
    %2215 = vmatmul.f32.gmra.mxu0 %v2176
    %v2216 = vpop.f32.mrf.mxu0
    %v2217 = vadd.f32 0.0, %v2216
    %2218 = vmatmul.f32.gmra.mxu0 %v2179
    %v2219 = vpop.f32.mrf.mxu0
    %v2220 = vadd.f32 0.0, %v2219
    %2221 = vmatmul.f32.gmra.mxu0 %v2182
    %v2222 = vpop.f32.mrf.mxu0
    %v2223 = vadd.f32 0.0, %v2222
    %2224 = vmatmul.f32.gmra.mxu0 %v2185
    %v2225 = vpop.f32.mrf.mxu0
    %v2226 = vadd.f32 0.0, %v2225
    %2227 = vmatmul.f32.gmra.mxu0 %v2188
    %v2228 = vpop.f32.mrf.mxu0
    %v2229 = vadd.f32 0.0, %v2228
    %2230 = vdwg.mxu0
    %v2231 = vadd.f32 %v2150, %v2208
    %v2232 = vadd.f32 %v2151, %v2211
    %v2233 = vadd.f32 %v2152, %v2214
    %v2234 = vadd.f32 %v2153, %v2217
    %v2235 = vadd.f32 %v2154, %v2220
    %v2236 = vadd.f32 %v2155, %v2223
    %v2237 = vadd.f32 %v2156, %v2226
    %v2238 = vadd.f32 %v2157, %v2229
    %2239 = vmatpush.msra.mxu0 0.0
    %2240 = vmatpush.msra.mxu0 0.0
    %2241 = vmatpush.msra.mxu0 0.0
    %2242 = vmatpush.msra.mxu0 0.0
    %2243 = vmatpush.msra.mxu0 0.0
    %2244 = vmatpush.msra.mxu0 0.0
    %2245 = vmatpush.msra.mxu0 0.0
    %2246 = vmatpush.msra.mxu0 0.0
    %2247 = vmatpush.msra.mxu0 %v2238
    %2248 = vmatpush.msra.mxu0 %v2237
    %2249 = vmatpush.msra.mxu0 %v2236
    %2250 = vmatpush.msra.mxu0 %v2235
    %2251 = vmatpush.msra.mxu0 %v2234
    %2252 = vmatpush.msra.mxu0 %v2233
    %2253 = vmatpush.msra.mxu0 %v2232
    %2254 = vmatpush.msra.mxu0 %v2231
    %2255 = vmatmul.f32.gmra.mxu0 %v218
    %v2256 = vpop.f32.mrf.mxu0
    %v2257 = vadd.f32 0.0, %v2256
    %2258 = vmatmul.f32.gmra.mxu0 %v221
    %v2259 = vpop.f32.mrf.mxu0
    %v2260 = vadd.f32 0.0, %v2259
    %2261 = vmatmul.f32.gmra.mxu0 %v224
    %v2262 = vpop.f32.mrf.mxu0
    %v2263 = vadd.f32 0.0, %v2262
    %2264 = vmatmul.f32.gmra.mxu0 %v227
    %v2265 = vpop.f32.mrf.mxu0
    %v2266 = vadd.f32 0.0, %v2265
    %2267 = vmatmul.f32.gmra.mxu0 %v230
    %v2268 = vpop.f32.mrf.mxu0
    %v2269 = vadd.f32 0.0, %v2268
    %2270 = vmatmul.f32.gmra.mxu0 %v233
    %v2271 = vpop.f32.mrf.mxu0
    %v2272 = vadd.f32 0.0, %v2271
    %2273 = vmatmul.f32.gmra.mxu0 %v236
    %v2274 = vpop.f32.mrf.mxu0
    %v2275 = vadd.f32 0.0, %v2274
    %2276 = vmatmul.f32.gmra.mxu0 %v239
    %v2277 = vpop.f32.mrf.mxu0
    %v2278 = vadd.f32 0.0, %v2277
    %2279 = vmatmul.f32.gmra.mxu0 %v242
    %v2280 = vpop.f32.mrf.mxu0
    %v2281 = vadd.f32 0.0, %v2280
    %2282 = vmatmul.f32.gmra.mxu0 %v245
    %v2283 = vpop.f32.mrf.mxu0
    %v2284 = vadd.f32 0.0, %v2283
    %2285 = vmatmul.f32.gmra.mxu0 %v248
    %v2286 = vpop.f32.mrf.mxu0
    %v2287 = vadd.f32 0.0, %v2286
    %2288 = vmatmul.f32.gmra.mxu0 %v251
    %v2289 = vpop.f32.mrf.mxu0
    %v2290 = vadd.f32 0.0, %v2289
    %2291 = vmatmul.f32.gmra.mxu0 %v254
    %v2292 = vpop.f32.mrf.mxu0
    %v2293 = vadd.f32 0.0, %v2292
    %2294 = vmatmul.f32.gmra.mxu0 %v257
    %v2295 = vpop.f32.mrf.mxu0
    %v2296 = vadd.f32 0.0, %v2295
    %2297 = vmatmul.f32.gmra.mxu0 %v260
    %v2298 = vpop.f32.mrf.mxu0
    %v2299 = vadd.f32 0.0, %v2298
    %2300 = vmatmul.f32.gmra.mxu0 %v263
    %v2301 = vpop.f32.mrf.mxu0
    %v2302 = vadd.f32 0.0, %v2301
    %2303 = vmatmul.f32.gmra.mxu0 %v266
    %v2304 = vpop.f32.mrf.mxu0
    %v2305 = vadd.f32 0.0, %v2304
    %2306 = vmatmul.f32.gmra.mxu0 %v269
    %v2307 = vpop.f32.mrf.mxu0
    %v2308 = vadd.f32 0.0, %v2307
    %2309 = vmatmul.f32.gmra.mxu0 %v272
    %v2310 = vpop.f32.mrf.mxu0
    %v2311 = vadd.f32 0.0, %v2310
    %2312 = vmatmul.f32.gmra.mxu0 %v275
    %v2313 = vpop.f32.mrf.mxu0
    %v2314 = vadd.f32 0.0, %v2313
    %2315 = vmatmul.f32.gmra.mxu0 %v278
    %v2316 = vpop.f32.mrf.mxu0
    %v2317 = vadd.f32 0.0, %v2316
    %2318 = vmatmul.f32.gmra.mxu0 %v281
    %v2319 = vpop.f32.mrf.mxu0
    %v2320 = vadd.f32 0.0, %v2319
    %2321 = vmatmul.f32.gmra.mxu0 %v284
    %v2322 = vpop.f32.mrf.mxu0
    %v2323 = vadd.f32 0.0, %v2322
    %2324 = vmatmul.f32.gmra.mxu0 %v287
    %v2325 = vpop.f32.mrf.mxu0
    %v2326 = vadd.f32 0.0, %v2325
    %2327 = vmatmul.f32.gmra.mxu0 %v290
    %v2328 = vpop.f32.mrf.mxu0
    %v2329 = vadd.f32 0.0, %v2328
    %2330 = vmatmul.f32.gmra.mxu0 %v293
    %v2331 = vpop.f32.mrf.mxu0
    %v2332 = vadd.f32 0.0, %v2331
    %2333 = vmatmul.f32.gmra.mxu0 %v296
    %v2334 = vpop.f32.mrf.mxu0
    %v2335 = vadd.f32 0.0, %v2334
    %2336 = vmatmul.f32.gmra.mxu0 %v299
    %v2337 = vpop.f32.mrf.mxu0
    %v2338 = vadd.f32 0.0, %v2337
    %2339 = vmatmul.f32.gmra.mxu0 %v302
    %v2340 = vpop.f32.mrf.mxu0
    %v2341 = vadd.f32 0.0, %v2340
    %2342 = vmatmul.f32.gmra.mxu0 %v305
    %v2343 = vpop.f32.mrf.mxu0
    %v2344 = vadd.f32 0.0, %v2343
    %2345 = vmatmul.f32.gmra.mxu0 %v308
    %v2346 = vpop.f32.mrf.mxu0
    %v2347 = vadd.f32 0.0, %v2346
    %2348 = vmatmul.f32.gmra.mxu0 %v311
    %v2349 = vpop.f32.mrf.mxu0
    %v2350 = vadd.f32 0.0, %v2349
    %2351 = vmatmul.f32.gmra.mxu0 %v314
    %v2352 = vpop.f32.mrf.mxu0
    %v2353 = vadd.f32 0.0, %v2352
    %2354 = vmatmul.f32.gmra.mxu0 %v317
    %v2355 = vpop.f32.mrf.mxu0
    %v2356 = vadd.f32 0.0, %v2355
    %2357 = vmatmul.f32.gmra.mxu0 %v320
    %v2358 = vpop.f32.mrf.mxu0
    %v2359 = vadd.f32 0.0, %v2358
    %2360 = vmatmul.f32.gmra.mxu0 %v323
    %v2361 = vpop.f32.mrf.mxu0
    %v2362 = vadd.f32 0.0, %v2361
    %2363 = vmatmul.f32.gmra.mxu0 %v326
    %v2364 = vpop.f32.mrf.mxu0
    %v2365 = vadd.f32 0.0, %v2364
    %2366 = vmatmul.f32.gmra.mxu0 %v329
    %v2367 = vpop.f32.mrf.mxu0
    %v2368 = vadd.f32 0.0, %v2367
    %2369 = vmatmul.f32.gmra.mxu0 %v332
    %v2370 = vpop.f32.mrf.mxu0
    %v2371 = vadd.f32 0.0, %v2370
    %2372 = vmatmul.f32.gmra.mxu0 %v335
    %v2373 = vpop.f32.mrf.mxu0
    %v2374 = vadd.f32 0.0, %v2373
    %2375 = vmatmul.f32.gmra.mxu0 %v338
    %v2376 = vpop.f32.mrf.mxu0
    %v2377 = vadd.f32 0.0, %v2376
    %2378 = vmatmul.f32.gmra.mxu0 %v341
    %v2379 = vpop.f32.mrf.mxu0
    %v2380 = vadd.f32 0.0, %v2379
    %2381 = vmatmul.f32.gmra.mxu0 %v344
    %v2382 = vpop.f32.mrf.mxu0
    %v2383 = vadd.f32 0.0, %v2382
    %2384 = vmatmul.f32.gmra.mxu0 %v347
    %v2385 = vpop.f32.mrf.mxu0
    %v2386 = vadd.f32 0.0, %v2385
    %2387 = vmatmul.f32.gmra.mxu0 %v350
    %v2388 = vpop.f32.mrf.mxu0
    %v2389 = vadd.f32 0.0, %v2388
    %2390 = vmatmul.f32.gmra.mxu0 %v353
    %v2391 = vpop.f32.mrf.mxu0
    %v2392 = vadd.f32 0.0, %v2391
    %2393 = vmatmul.f32.gmra.mxu0 %v356
    %v2394 = vpop.f32.mrf.mxu0
    %v2395 = vadd.f32 0.0, %v2394
    %2396 = vmatmul.f32.gmra.mxu0 %v359
    %v2397 = vpop.f32.mrf.mxu0
    %v2398 = vadd.f32 0.0, %v2397
    %2399 = vmatmul.f32.gmra.mxu0 %v362
    %v2400 = vpop.f32.mrf.mxu0
    %v2401 = vadd.f32 0.0, %v2400
    %2402 = vmatmul.f32.gmra.mxu0 %v365
    %v2403 = vpop.f32.mrf.mxu0
    %v2404 = vadd.f32 0.0, %v2403
    %2405 = vmatmul.f32.gmra.mxu0 %v368
    %v2406 = vpop.f32.mrf.mxu0
    %v2407 = vadd.f32 0.0, %v2406
    %2408 = vmatmul.f32.gmra.mxu0 %v371
    %v2409 = vpop.f32.mrf.mxu0
    %v2410 = vadd.f32 0.0, %v2409
    %2411 = vmatmul.f32.gmra.mxu0 %v374
    %v2412 = vpop.f32.mrf.mxu0
    %v2413 = vadd.f32 0.0, %v2412
    %2414 = vmatmul.f32.gmra.mxu0 %v377
    %v2415 = vpop.f32.mrf.mxu0
    %v2416 = vadd.f32 0.0, %v2415
    %2417 = vmatmul.f32.gmra.mxu0 %v380
    %v2418 = vpop.f32.mrf.mxu0
    %v2419 = vadd.f32 0.0, %v2418
    %2420 = vmatmul.f32.gmra.mxu0 %v383
    %v2421 = vpop.f32.mrf.mxu0
    %v2422 = vadd.f32 0.0, %v2421
    %2423 = vmatmul.f32.gmra.mxu0 %v386
    %v2424 = vpop.f32.mrf.mxu0
    %v2425 = vadd.f32 0.0, %v2424
    %2426 = vmatmul.f32.gmra.mxu0 %v389
    %v2427 = vpop.f32.mrf.mxu0
    %v2428 = vadd.f32 0.0, %v2427
    %2429 = vmatmul.f32.gmra.mxu0 %v392
    %v2430 = vpop.f32.mrf.mxu0
    %v2431 = vadd.f32 0.0, %v2430
    %2432 = vmatmul.f32.gmra.mxu0 %v395
    %v2433 = vpop.f32.mrf.mxu0
    %v2434 = vadd.f32 0.0, %v2433
    %2435 = vmatmul.f32.gmra.mxu0 %v398
    %v2436 = vpop.f32.mrf.mxu0
    %v2437 = vadd.f32 0.0, %v2436
    %2438 = vmatmul.f32.gmra.mxu0 %v401
    %v2439 = vpop.f32.mrf.mxu0
    %v2440 = vadd.f32 0.0, %v2439
    %2441 = vmatmul.f32.gmra.mxu0 %v404
    %v2442 = vpop.f32.mrf.mxu0
    %v2443 = vadd.f32 0.0, %v2442
    %2444 = vmatmul.f32.gmra.mxu0 %v407
    %v2445 = vpop.f32.mrf.mxu0
    %v2446 = vadd.f32 0.0, %v2445
    %2447 = vdwg.mxu0
    %v2448 = vld [vmem:[#allocation9] sm:$0xff]
    %v2449 = vld [vmem:[#allocation9 + $0x8] sm:$0xff]
    %v2450 = vld [vmem:[#allocation9 + $0x10] sm:$0xff]
    %v2451 = vld [vmem:[#allocation9 + $0x18] sm:$0xff]
    %v2452 = vld [vmem:[#allocation9 + $0x20] sm:$0xff]
    %v2453 = vld [vmem:[#allocation9 + $0x28] sm:$0xff]
    %v2454 = vld [vmem:[#allocation9 + $0x30] sm:$0xff]
    %v2455 = vld [vmem:[#allocation9 + $0x38] sm:$0xff]
    %v2456 = vld [vmem:[#allocation9 + $0x40] sm:$0xff]
    %v2457 = vld [vmem:[#allocation9 + $0x48] sm:$0xff]
    %v2458 = vld [vmem:[#allocation9 + $0x50] sm:$0xff]
    %v2459 = vld [vmem:[#allocation9 + $0x58] sm:$0xff]
    %v2460 = vld [vmem:[#allocation9 + $0x60] sm:$0xff]
    %v2461 = vld [vmem:[#allocation9 + $0x68] sm:$0xff]
    %v2462 = vld [vmem:[#allocation9 + $0x70] sm:$0xff]
    %v2463 = vld [vmem:[#allocation9 + $0x78] sm:$0xff]
    %v2464 = vld [vmem:[#allocation7] sm:$0xff]
    %v2465 = vld [vmem:[#allocation7 + $0x8] sm:$0xff]
    %v2466 = vld [vmem:[#allocation7 + $0x10] sm:$0xff]
    %v2467 = vld [vmem:[#allocation7 + $0x18] sm:$0xff]
    %v2468 = vld [vmem:[#allocation7 + $0x20] sm:$0xff]
    %v2469 = vld [vmem:[#allocation7 + $0x28] sm:$0xff]
    %v2470 = vld [vmem:[#allocation7 + $0x30] sm:$0xff]
    %v2471 = vld [vmem:[#allocation7 + $0x38] sm:$0xff]
    %v2472 = vld [vmem:[#allocation7 + $0x40] sm:$0xff]
    %v2473 = vld [vmem:[#allocation7 + $0x48] sm:$0xff]
    %v2474 = vld [vmem:[#allocation7 + $0x50] sm:$0xff]
    %v2475 = vld [vmem:[#allocation7 + $0x58] sm:$0xff]
    %v2476 = vld [vmem:[#allocation7 + $0x60] sm:$0xff]
    %v2477 = vld [vmem:[#allocation7 + $0x68] sm:$0xff]
    %v2478 = vld [vmem:[#allocation7 + $0x70] sm:$0xff]
    %v2479 = vld [vmem:[#allocation7 + $0x78] sm:$0xff]
    %v2480 = vld [vmem:[#allocation7 + $0x80] sm:$0xff]
    %v2481 = vld [vmem:[#allocation7 + $0x88] sm:$0xff]
    %v2482 = vld [vmem:[#allocation7 + $0x90] sm:$0xff]
    %v2483 = vld [vmem:[#allocation7 + $0x98] sm:$0xff]
    %v2484 = vld [vmem:[#allocation7 + $0xa0] sm:$0xff]
    %v2485 = vld [vmem:[#allocation7 + $0xa8] sm:$0xff]
    %v2486 = vld [vmem:[#allocation7 + $0xb0] sm:$0xff]
    %v2487 = vld [vmem:[#allocation7 + $0xb8] sm:$0xff]
    %v2488 = vld [vmem:[#allocation7 + $0xc0] sm:$0xff]
    %v2489 = vld [vmem:[#allocation7 + $0xc8] sm:$0xff]
    %v2490 = vld [vmem:[#allocation7 + $0xd0] sm:$0xff]
    %v2491 = vld [vmem:[#allocation7 + $0xd8] sm:$0xff]
    %v2492 = vld [vmem:[#allocation7 + $0xe0] sm:$0xff]
    %v2493 = vld [vmem:[#allocation7 + $0xe8] sm:$0xff]
    %v2494 = vld [vmem:[#allocation7 + $0xf0] sm:$0xff]
    %v2495 = vld [vmem:[#allocation7 + $0xf8] sm:$0xff]
    %2496 = vmatpush.msra.mxu0 %v2494
    %2497 = vmatpush.msra.mxu0 %v2492
    %2498 = vmatpush.msra.mxu0 %v2490
    %2499 = vmatpush.msra.mxu0 %v2488
    %2500 = vmatpush.msra.mxu0 %v2486
    %2501 = vmatpush.msra.mxu0 %v2484
    %2502 = vmatpush.msra.mxu0 %v2482
    %2503 = vmatpush.msra.mxu0 %v2480
    %2504 = vmatpush.msra.mxu0 %v2478
    %2505 = vmatpush.msra.mxu0 %v2476
    %2506 = vmatpush.msra.mxu0 %v2474
    %2507 = vmatpush.msra.mxu0 %v2472
    %2508 = vmatpush.msra.mxu0 %v2470
    %2509 = vmatpush.msra.mxu0 %v2468
    %2510 = vmatpush.msra.mxu0 %v2466
    %2511 = vmatpush.msra.mxu0 %v2464
    %2512 = vmatmul.f32.gmra.mxu0 %v2257
    %v2513 = vpop.f32.mrf.mxu0
    %v2514 = vadd.f32 0.0, %v2513
    %2515 = vmatmul.f32.gmra.mxu0 %v2260
    %v2516 = vpop.f32.mrf.mxu0
    %v2517 = vadd.f32 0.0, %v2516
    %2518 = vmatmul.f32.gmra.mxu0 %v2263
    %v2519 = vpop.f32.mrf.mxu0
    %v2520 = vadd.f32 0.0, %v2519
    %2521 = vmatmul.f32.gmra.mxu0 %v2266
    %v2522 = vpop.f32.mrf.mxu0
    %v2523 = vadd.f32 0.0, %v2522
    %2524 = vmatmul.f32.gmra.mxu0 %v2269
    %v2525 = vpop.f32.mrf.mxu0
    %v2526 = vadd.f32 0.0, %v2525
    %2527 = vmatmul.f32.gmra.mxu0 %v2272
    %v2528 = vpop.f32.mrf.mxu0
    %v2529 = vadd.f32 0.0, %v2528
    %2530 = vmatmul.f32.gmra.mxu0 %v2275
    %v2531 = vpop.f32.mrf.mxu0
    %v2532 = vadd.f32 0.0, %v2531
    %2533 = vmatmul.f32.gmra.mxu0 %v2278
    %v2534 = vpop.f32.mrf.mxu0
    %v2535 = vadd.f32 0.0, %v2534
    %2536 = vdwg.mxu0
    %2537 = vmatpush.msra.mxu0 %v2495
    %2538 = vmatpush.msra.mxu0 %v2493
    %2539 = vmatpush.msra.mxu0 %v2491
    %2540 = vmatpush.msra.mxu0 %v2489
    %2541 = vmatpush.msra.mxu0 %v2487
    %2542 = vmatpush.msra.mxu0 %v2485
    %2543 = vmatpush.msra.mxu0 %v2483
    %2544 = vmatpush.msra.mxu0 %v2481
    %2545 = vmatpush.msra.mxu0 %v2479
    %2546 = vmatpush.msra.mxu0 %v2477
    %2547 = vmatpush.msra.mxu0 %v2475
    %2548 = vmatpush.msra.mxu0 %v2473
    %2549 = vmatpush.msra.mxu0 %v2471
    %2550 = vmatpush.msra.mxu0 %v2469
    %2551 = vmatpush.msra.mxu0 %v2467
    %2552 = vmatpush.msra.mxu0 %v2465
    %2553 = vmatmul.f32.gmra.mxu0 %v2257
    %v2554 = vpop.f32.mrf.mxu0
    %v2555 = vadd.f32 0.0, %v2554
    %2556 = vmatmul.f32.gmra.mxu0 %v2260
    %v2557 = vpop.f32.mrf.mxu0
    %v2558 = vadd.f32 0.0, %v2557
    %2559 = vmatmul.f32.gmra.mxu0 %v2263
    %v2560 = vpop.f32.mrf.mxu0
    %v2561 = vadd.f32 0.0, %v2560
    %2562 = vmatmul.f32.gmra.mxu0 %v2266
    %v2563 = vpop.f32.mrf.mxu0
    %v2564 = vadd.f32 0.0, %v2563
    %2565 = vmatmul.f32.gmra.mxu0 %v2269
    %v2566 = vpop.f32.mrf.mxu0
    %v2567 = vadd.f32 0.0, %v2566
    %2568 = vmatmul.f32.gmra.mxu0 %v2272
    %v2569 = vpop.f32.mrf.mxu0
    %v2570 = vadd.f32 0.0, %v2569
    %2571 = vmatmul.f32.gmra.mxu0 %v2275
    %v2572 = vpop.f32.mrf.mxu0
    %v2573 = vadd.f32 0.0, %v2572
    %2574 = vmatmul.f32.gmra.mxu0 %v2278
    %v2575 = vpop.f32.mrf.mxu0
    %v2576 = vadd.f32 0.0, %v2575
    %2577 = vdwg.mxu0
    %v2578 = vadd.f32 %v2448, %v2514
    %v2579 = vadd.f32 %v2449, %v2555
    %v2580 = vadd.f32 %v2450, %v2517
    %v2581 = vadd.f32 %v2451, %v2558
    %v2582 = vadd.f32 %v2452, %v2520
    %v2583 = vadd.f32 %v2453, %v2561
    %v2584 = vadd.f32 %v2454, %v2523
    %v2585 = vadd.f32 %v2455, %v2564
    %v2586 = vadd.f32 %v2456, %v2526
    %v2587 = vadd.f32 %v2457, %v2567
    %v2588 = vadd.f32 %v2458, %v2529
    %v2589 = vadd.f32 %v2459, %v2570
    %v2590 = vadd.f32 %v2460, %v2532
    %v2591 = vadd.f32 %v2461, %v2573
    %v2592 = vadd.f32 %v2462, %v2535
    %v2593 = vadd.f32 %v2463, %v2576
    %v2594 = vld [vmem:[#allocation7 + $0x100] sm:$0xff]
    %v2595 = vld [vmem:[#allocation7 + $0x108] sm:$0xff]
    %v2596 = vld [vmem:[#allocation7 + $0x110] sm:$0xff]
    %v2597 = vld [vmem:[#allocation7 + $0x118] sm:$0xff]
    %v2598 = vld [vmem:[#allocation7 + $0x120] sm:$0xff]
    %v2599 = vld [vmem:[#allocation7 + $0x128] sm:$0xff]
    %v2600 = vld [vmem:[#allocation7 + $0x130] sm:$0xff]
    %v2601 = vld [vmem:[#allocation7 + $0x138] sm:$0xff]
    %v2602 = vld [vmem:[#allocation7 + $0x140] sm:$0xff]
    %v2603 = vld [vmem:[#allocation7 + $0x148] sm:$0xff]
    %v2604 = vld [vmem:[#allocation7 + $0x150] sm:$0xff]
    %v2605 = vld [vmem:[#allocation7 + $0x158] sm:$0xff]
    %v2606 = vld [vmem:[#allocation7 + $0x160] sm:$0xff]
    %v2607 = vld [vmem:[#allocation7 + $0x168] sm:$0xff]
    %v2608 = vld [vmem:[#allocation7 + $0x170] sm:$0xff]
    %v2609 = vld [vmem:[#allocation7 + $0x178] sm:$0xff]
    %v2610 = vld [vmem:[#allocation7 + $0x180] sm:$0xff]
    %v2611 = vld [vmem:[#allocation7 + $0x188] sm:$0xff]
    %v2612 = vld [vmem:[#allocation7 + $0x190] sm:$0xff]
    %v2613 = vld [vmem:[#allocation7 + $0x198] sm:$0xff]
    %v2614 = vld [vmem:[#allocation7 + $0x1a0] sm:$0xff]
    %v2615 = vld [vmem:[#allocation7 + $0x1a8] sm:$0xff]
    %v2616 = vld [vmem:[#allocation7 + $0x1b0] sm:$0xff]
    %v2617 = vld [vmem:[#allocation7 + $0x1b8] sm:$0xff]
    %v2618 = vld [vmem:[#allocation7 + $0x1c0] sm:$0xff]
    %v2619 = vld [vmem:[#allocation7 + $0x1c8] sm:$0xff]
    %v2620 = vld [vmem:[#allocation7 + $0x1d0] sm:$0xff]
    %v2621 = vld [vmem:[#allocation7 + $0x1d8] sm:$0xff]
    %v2622 = vld [vmem:[#allocation7 + $0x1e0] sm:$0xff]
    %v2623 = vld [vmem:[#allocation7 + $0x1e8] sm:$0xff]
    %v2624 = vld [vmem:[#allocation7 + $0x1f0] sm:$0xff]
    %v2625 = vld [vmem:[#allocation7 + $0x1f8] sm:$0xff]
    %2626 = vmatpush.msra.mxu0 %v2624
    %2627 = vmatpush.msra.mxu0 %v2622
    %2628 = vmatpush.msra.mxu0 %v2620
    %2629 = vmatpush.msra.mxu0 %v2618
    %2630 = vmatpush.msra.mxu0 %v2616
    %2631 = vmatpush.msra.mxu0 %v2614
    %2632 = vmatpush.msra.mxu0 %v2612
    %2633 = vmatpush.msra.mxu0 %v2610
    %2634 = vmatpush.msra.mxu0 %v2608
    %2635 = vmatpush.msra.mxu0 %v2606
    %2636 = vmatpush.msra.mxu0 %v2604
    %2637 = vmatpush.msra.mxu0 %v2602
    %2638 = vmatpush.msra.mxu0 %v2600
    %2639 = vmatpush.msra.mxu0 %v2598
    %2640 = vmatpush.msra.mxu0 %v2596
    %2641 = vmatpush.msra.mxu0 %v2594
    %2642 = vmatmul.f32.gmra.mxu0 %v2281
    %v2643 = vpop.f32.mrf.mxu0
    %v2644 = vadd.f32 0.0, %v2643
    %2645 = vmatmul.f32.gmra.mxu0 %v2284
    %v2646 = vpop.f32.mrf.mxu0
    %v2647 = vadd.f32 0.0, %v2646
    %2648 = vmatmul.f32.gmra.mxu0 %v2287
    %v2649 = vpop.f32.mrf.mxu0
    %v2650 = vadd.f32 0.0, %v2649
    %2651 = vmatmul.f32.gmra.mxu0 %v2290
    %v2652 = vpop.f32.mrf.mxu0
    %v2653 = vadd.f32 0.0, %v2652
    %2654 = vmatmul.f32.gmra.mxu0 %v2293
    %v2655 = vpop.f32.mrf.mxu0
    %v2656 = vadd.f32 0.0, %v2655
    %2657 = vmatmul.f32.gmra.mxu0 %v2296
    %v2658 = vpop.f32.mrf.mxu0
    %v2659 = vadd.f32 0.0, %v2658
    %2660 = vmatmul.f32.gmra.mxu0 %v2299
    %v2661 = vpop.f32.mrf.mxu0
    %v2662 = vadd.f32 0.0, %v2661
    %2663 = vmatmul.f32.gmra.mxu0 %v2302
    %v2664 = vpop.f32.mrf.mxu0
    %v2665 = vadd.f32 0.0, %v2664
    %2666 = vdwg.mxu0
    %2667 = vmatpush.msra.mxu0 %v2625
    %2668 = vmatpush.msra.mxu0 %v2623
    %2669 = vmatpush.msra.mxu0 %v2621
    %2670 = vmatpush.msra.mxu0 %v2619
    %2671 = vmatpush.msra.mxu0 %v2617
    %2672 = vmatpush.msra.mxu0 %v2615
    %2673 = vmatpush.msra.mxu0 %v2613
    %2674 = vmatpush.msra.mxu0 %v2611
    %2675 = vmatpush.msra.mxu0 %v2609
    %2676 = vmatpush.msra.mxu0 %v2607
    %2677 = vmatpush.msra.mxu0 %v2605
    %2678 = vmatpush.msra.mxu0 %v2603
    %2679 = vmatpush.msra.mxu0 %v2601
    %2680 = vmatpush.msra.mxu0 %v2599
    %2681 = vmatpush.msra.mxu0 %v2597
    %2682 = vmatpush.msra.mxu0 %v2595
    %2683 = vmatmul.f32.gmra.mxu0 %v2281
    %v2684 = vpop.f32.mrf.mxu0
    %v2685 = vadd.f32 0.0, %v2684
    %2686 = vmatmul.f32.gmra.mxu0 %v2284
    %v2687 = vpop.f32.mrf.mxu0
    %v2688 = vadd.f32 0.0, %v2687
    %2689 = vmatmul.f32.gmra.mxu0 %v2287
    %v2690 = vpop.f32.mrf.mxu0
    %v2691 = vadd.f32 0.0, %v2690
    %2692 = vmatmul.f32.gmra.mxu0 %v2290
    %v2693 = vpop.f32.mrf.mxu0
    %v2694 = vadd.f32 0.0, %v2693
    %2695 = vmatmul.f32.gmra.mxu0 %v2293
    %v2696 = vpop.f32.mrf.mxu0
    %v2697 = vadd.f32 0.0, %v2696
    %2698 = vmatmul.f32.gmra.mxu0 %v2296
    %v2699 = vpop.f32.mrf.mxu0
    %v2700 = vadd.f32 0.0, %v2699
    %2701 = vmatmul.f32.gmra.mxu0 %v2299
    %v2702 = vpop.f32.mrf.mxu0
    %v2703 = vadd.f32 0.0, %v2702
    %2704 = vmatmul.f32.gmra.mxu0 %v2302
    %v2705 = vpop.f32.mrf.mxu0
    %v2706 = vadd.f32 0.0, %v2705
    %2707 = vdwg.mxu0
    %v2708 = vadd.f32 %v2578, %v2644
    %v2709 = vadd.f32 %v2579, %v2685
    %v2710 = vadd.f32 %v2580, %v2647
    %v2711 = vadd.f32 %v2581, %v2688
    %v2712 = vadd.f32 %v2582, %v2650
    %v2713 = vadd.f32 %v2583, %v2691
    %v2714 = vadd.f32 %v2584, %v2653
    %v2715 = vadd.f32 %v2585, %v2694
    %v2716 = vadd.f32 %v2586, %v2656
    %v2717 = vadd.f32 %v2587, %v2697
    %v2718 = vadd.f32 %v2588, %v2659
    %v2719 = vadd.f32 %v2589, %v2700
    %v2720 = vadd.f32 %v2590, %v2662
    %v2721 = vadd.f32 %v2591, %v2703
    %v2722 = vadd.f32 %v2592, %v2665
    %v2723 = vadd.f32 %v2593, %v2706
    %v2724 = vld [vmem:[#allocation7 + $0x200] sm:$0xff]
    %v2725 = vld [vmem:[#allocation7 + $0x208] sm:$0xff]
    %v2726 = vld [vmem:[#allocation7 + $0x210] sm:$0xff]
    %v2727 = vld [vmem:[#allocation7 + $0x218] sm:$0xff]
    %v2728 = vld [vmem:[#allocation7 + $0x220] sm:$0xff]
    %v2729 = vld [vmem:[#allocation7 + $0x228] sm:$0xff]
    %v2730 = vld [vmem:[#allocation7 + $0x230] sm:$0xff]
    %v2731 = vld [vmem:[#allocation7 + $0x238] sm:$0xff]
    %v2732 = vld [vmem:[#allocation7 + $0x240] sm:$0xff]
    %v2733 = vld [vmem:[#allocation7 + $0x248] sm:$0xff]
    %v2734 = vld [vmem:[#allocation7 + $0x250] sm:$0xff]
    %v2735 = vld [vmem:[#allocation7 + $0x258] sm:$0xff]
    %v2736 = vld [vmem:[#allocation7 + $0x260] sm:$0xff]
    %v2737 = vld [vmem:[#allocation7 + $0x268] sm:$0xff]
    %v2738 = vld [vmem:[#allocation7 + $0x270] sm:$0xff]
    %v2739 = vld [vmem:[#allocation7 + $0x278] sm:$0xff]
    %v2740 = vld [vmem:[#allocation7 + $0x280] sm:$0xff]
    %v2741 = vld [vmem:[#allocation7 + $0x288] sm:$0xff]
    %v2742 = vld [vmem:[#allocation7 + $0x290] sm:$0xff]
    %v2743 = vld [vmem:[#allocation7 + $0x298] sm:$0xff]
    %v2744 = vld [vmem:[#allocation7 + $0x2a0] sm:$0xff]
    %v2745 = vld [vmem:[#allocation7 + $0x2a8] sm:$0xff]
    %v2746 = vld [vmem:[#allocation7 + $0x2b0] sm:$0xff]
    %v2747 = vld [vmem:[#allocation7 + $0x2b8] sm:$0xff]
    %v2748 = vld [vmem:[#allocation7 + $0x2c0] sm:$0xff]
    %v2749 = vld [vmem:[#allocation7 + $0x2c8] sm:$0xff]
    %v2750 = vld [vmem:[#allocation7 + $0x2d0] sm:$0xff]
    %v2751 = vld [vmem:[#allocation7 + $0x2d8] sm:$0xff]
    %v2752 = vld [vmem:[#allocation7 + $0x2e0] sm:$0xff]
    %v2753 = vld [vmem:[#allocation7 + $0x2e8] sm:$0xff]
    %v2754 = vld [vmem:[#allocation7 + $0x2f0] sm:$0xff]
    %v2755 = vld [vmem:[#allocation7 + $0x2f8] sm:$0xff]
    %2756 = vmatpush.msra.mxu0 %v2754
    %2757 = vmatpush.msra.mxu0 %v2752
    %2758 = vmatpush.msra.mxu0 %v2750
    %2759 = vmatpush.msra.mxu0 %v2748
    %2760 = vmatpush.msra.mxu0 %v2746
    %2761 = vmatpush.msra.mxu0 %v2744
    %2762 = vmatpush.msra.mxu0 %v2742
    %2763 = vmatpush.msra.mxu0 %v2740
    %2764 = vmatpush.msra.mxu0 %v2738
    %2765 = vmatpush.msra.mxu0 %v2736
    %2766 = vmatpush.msra.mxu0 %v2734
    %2767 = vmatpush.msra.mxu0 %v2732
    %2768 = vmatpush.msra.mxu0 %v2730
    %2769 = vmatpush.msra.mxu0 %v2728
    %2770 = vmatpush.msra.mxu0 %v2726
    %2771 = vmatpush.msra.mxu0 %v2724
    %2772 = vmatmul.f32.gmra.mxu0 %v2305
    %v2773 = vpop.f32.mrf.mxu0
    %v2774 = vadd.f32 0.0, %v2773
    %2775 = vmatmul.f32.gmra.mxu0 %v2308
    %v2776 = vpop.f32.mrf.mxu0
    %v2777 = vadd.f32 0.0, %v2776
    %2778 = vmatmul.f32.gmra.mxu0 %v2311
    %v2779 = vpop.f32.mrf.mxu0
    %v2780 = vadd.f32 0.0, %v2779
    %2781 = vmatmul.f32.gmra.mxu0 %v2314
    %v2782 = vpop.f32.mrf.mxu0
    %v2783 = vadd.f32 0.0, %v2782
    %2784 = vmatmul.f32.gmra.mxu0 %v2317
    %v2785 = vpop.f32.mrf.mxu0
    %v2786 = vadd.f32 0.0, %v2785
    %2787 = vmatmul.f32.gmra.mxu0 %v2320
    %v2788 = vpop.f32.mrf.mxu0
    %v2789 = vadd.f32 0.0, %v2788
    %2790 = vmatmul.f32.gmra.mxu0 %v2323
    %v2791 = vpop.f32.mrf.mxu0
    %v2792 = vadd.f32 0.0, %v2791
    %2793 = vmatmul.f32.gmra.mxu0 %v2326
    %v2794 = vpop.f32.mrf.mxu0
    %v2795 = vadd.f32 0.0, %v2794
    %2796 = vdwg.mxu0
    %2797 = vmatpush.msra.mxu0 %v2755
    %2798 = vmatpush.msra.mxu0 %v2753
    %2799 = vmatpush.msra.mxu0 %v2751
    %2800 = vmatpush.msra.mxu0 %v2749
    %2801 = vmatpush.msra.mxu0 %v2747
    %2802 = vmatpush.msra.mxu0 %v2745
    %2803 = vmatpush.msra.mxu0 %v2743
    %2804 = vmatpush.msra.mxu0 %v2741
    %2805 = vmatpush.msra.mxu0 %v2739
    %2806 = vmatpush.msra.mxu0 %v2737
    %2807 = vmatpush.msra.mxu0 %v2735
    %2808 = vmatpush.msra.mxu0 %v2733
    %2809 = vmatpush.msra.mxu0 %v2731
    %2810 = vmatpush.msra.mxu0 %v2729
    %2811 = vmatpush.msra.mxu0 %v2727
    %2812 = vmatpush.msra.mxu0 %v2725
    %2813 = vmatmul.f32.gmra.mxu0 %v2305
    %v2814 = vpop.f32.mrf.mxu0
    %v2815 = vadd.f32 0.0, %v2814
    %2816 = vmatmul.f32.gmra.mxu0 %v2308
    %v2817 = vpop.f32.mrf.mxu0
    %v2818 = vadd.f32 0.0, %v2817
    %2819 = vmatmul.f32.gmra.mxu0 %v2311
    %v2820 = vpop.f32.mrf.mxu0
    %v2821 = vadd.f32 0.0, %v2820
    %2822 = vmatmul.f32.gmra.mxu0 %v2314
    %v2823 = vpop.f32.mrf.mxu0
    %v2824 = vadd.f32 0.0, %v2823
    %2825 = vmatmul.f32.gmra.mxu0 %v2317
    %v2826 = vpop.f32.mrf.mxu0
    %v2827 = vadd.f32 0.0, %v2826
    %2828 = vmatmul.f32.gmra.mxu0 %v2320
    %v2829 = vpop.f32.mrf.mxu0
    %v2830 = vadd.f32 0.0, %v2829
    %2831 = vmatmul.f32.gmra.mxu0 %v2323
    %v2832 = vpop.f32.mrf.mxu0
    %v2833 = vadd.f32 0.0, %v2832
    %2834 = vmatmul.f32.gmra.mxu0 %v2326
    %v2835 = vpop.f32.mrf.mxu0
    %v2836 = vadd.f32 0.0, %v2835
    %2837 = vdwg.mxu0
    %v2838 = vadd.f32 %v2708, %v2774
    %v2839 = vadd.f32 %v2709, %v2815
    %v2840 = vadd.f32 %v2710, %v2777
    %v2841 = vadd.f32 %v2711, %v2818
    %v2842 = vadd.f32 %v2712, %v2780
    %v2843 = vadd.f32 %v2713, %v2821
    %v2844 = vadd.f32 %v2714, %v2783
    %v2845 = vadd.f32 %v2715, %v2824
    %v2846 = vadd.f32 %v2716, %v2786
    %v2847 = vadd.f32 %v2717, %v2827
    %v2848 = vadd.f32 %v2718, %v2789
    %v2849 = vadd.f32 %v2719, %v2830
    %v2850 = vadd.f32 %v2720, %v2792
    %v2851 = vadd.f32 %v2721, %v2833
    %v2852 = vadd.f32 %v2722, %v2795
    %v2853 = vadd.f32 %v2723, %v2836
    %v2854 = vld [vmem:[#allocation7 + $0x300] sm:$0xff]
    %v2855 = vld [vmem:[#allocation7 + $0x308] sm:$0xff]
    %v2856 = vld [vmem:[#allocation7 + $0x310] sm:$0xff]
    %v2857 = vld [vmem:[#allocation7 + $0x318] sm:$0xff]
    %v2858 = vld [vmem:[#allocation7 + $0x320] sm:$0xff]
    %v2859 = vld [vmem:[#allocation7 + $0x328] sm:$0xff]
    %v2860 = vld [vmem:[#allocation7 + $0x330] sm:$0xff]
    %v2861 = vld [vmem:[#allocation7 + $0x338] sm:$0xff]
    %v2862 = vld [vmem:[#allocation7 + $0x340] sm:$0xff]
    %v2863 = vld [vmem:[#allocation7 + $0x348] sm:$0xff]
    %v2864 = vld [vmem:[#allocation7 + $0x350] sm:$0xff]
    %v2865 = vld [vmem:[#allocation7 + $0x358] sm:$0xff]
    %v2866 = vld [vmem:[#allocation7 + $0x360] sm:$0xff]
    %v2867 = vld [vmem:[#allocation7 + $0x368] sm:$0xff]
    %v2868 = vld [vmem:[#allocation7 + $0x370] sm:$0xff]
    %v2869 = vld [vmem:[#allocation7 + $0x378] sm:$0xff]
    %v2870 = vld [vmem:[#allocation7 + $0x380] sm:$0xff]
    %v2871 = vld [vmem:[#allocation7 + $0x388] sm:$0xff]
    %v2872 = vld [vmem:[#allocation7 + $0x390] sm:$0xff]
    %v2873 = vld [vmem:[#allocation7 + $0x398] sm:$0xff]
    %v2874 = vld [vmem:[#allocation7 + $0x3a0] sm:$0xff]
    %v2875 = vld [vmem:[#allocation7 + $0x3a8] sm:$0xff]
    %v2876 = vld [vmem:[#allocation7 + $0x3b0] sm:$0xff]
    %v2877 = vld [vmem:[#allocation7 + $0x3b8] sm:$0xff]
    %v2878 = vld [vmem:[#allocation7 + $0x3c0] sm:$0xff]
    %v2879 = vld [vmem:[#allocation7 + $0x3c8] sm:$0xff]
    %v2880 = vld [vmem:[#allocation7 + $0x3d0] sm:$0xff]
    %v2881 = vld [vmem:[#allocation7 + $0x3d8] sm:$0xff]
    %v2882 = vld [vmem:[#allocation7 + $0x3e0] sm:$0xff]
    %v2883 = vld [vmem:[#allocation7 + $0x3e8] sm:$0xff]
    %v2884 = vld [vmem:[#allocation7 + $0x3f0] sm:$0xff]
    %v2885 = vld [vmem:[#allocation7 + $0x3f8] sm:$0xff]
    %2886 = vmatpush.msra.mxu0 %v2884
    %2887 = vmatpush.msra.mxu0 %v2882
    %2888 = vmatpush.msra.mxu0 %v2880
    %2889 = vmatpush.msra.mxu0 %v2878
    %2890 = vmatpush.msra.mxu0 %v2876
    %2891 = vmatpush.msra.mxu0 %v2874
    %2892 = vmatpush.msra.mxu0 %v2872
    %2893 = vmatpush.msra.mxu0 %v2870
    %2894 = vmatpush.msra.mxu0 %v2868
    %2895 = vmatpush.msra.mxu0 %v2866
    %2896 = vmatpush.msra.mxu0 %v2864
    %2897 = vmatpush.msra.mxu0 %v2862
    %2898 = vmatpush.msra.mxu0 %v2860
    %2899 = vmatpush.msra.mxu0 %v2858
    %2900 = vmatpush.msra.mxu0 %v2856
    %2901 = vmatpush.msra.mxu0 %v2854
    %2902 = vmatmul.f32.gmra.mxu0 %v2329
    %v2903 = vpop.f32.mrf.mxu0
    %v2904 = vadd.f32 0.0, %v2903
    %2905 = vmatmul.f32.gmra.mxu0 %v2332
    %v2906 = vpop.f32.mrf.mxu0
    %v2907 = vadd.f32 0.0, %v2906
    %2908 = vmatmul.f32.gmra.mxu0 %v2335
    %v2909 = vpop.f32.mrf.mxu0
    %v2910 = vadd.f32 0.0, %v2909
    %2911 = vmatmul.f32.gmra.mxu0 %v2338
    %v2912 = vpop.f32.mrf.mxu0
    %v2913 = vadd.f32 0.0, %v2912
    %2914 = vmatmul.f32.gmra.mxu0 %v2341
    %v2915 = vpop.f32.mrf.mxu0
    %v2916 = vadd.f32 0.0, %v2915
    %2917 = vmatmul.f32.gmra.mxu0 %v2344
    %v2918 = vpop.f32.mrf.mxu0
    %v2919 = vadd.f32 0.0, %v2918
    %2920 = vmatmul.f32.gmra.mxu0 %v2347
    %v2921 = vpop.f32.mrf.mxu0
    %v2922 = vadd.f32 0.0, %v2921
    %2923 = vmatmul.f32.gmra.mxu0 %v2350
    %v2924 = vpop.f32.mrf.mxu0
    %v2925 = vadd.f32 0.0, %v2924
    %2926 = vdwg.mxu0
    %2927 = vmatpush.msra.mxu0 %v2885
    %2928 = vmatpush.msra.mxu0 %v2883
    %2929 = vmatpush.msra.mxu0 %v2881
    %2930 = vmatpush.msra.mxu0 %v2879
    %2931 = vmatpush.msra.mxu0 %v2877
    %2932 = vmatpush.msra.mxu0 %v2875
    %2933 = vmatpush.msra.mxu0 %v2873
    %2934 = vmatpush.msra.mxu0 %v2871
    %2935 = vmatpush.msra.mxu0 %v2869
    %2936 = vmatpush.msra.mxu0 %v2867
    %2937 = vmatpush.msra.mxu0 %v2865
    %2938 = vmatpush.msra.mxu0 %v2863
    %2939 = vmatpush.msra.mxu0 %v2861
    %2940 = vmatpush.msra.mxu0 %v2859
    %2941 = vmatpush.msra.mxu0 %v2857
    %2942 = vmatpush.msra.mxu0 %v2855
    %2943 = vmatmul.f32.gmra.mxu0 %v2329
    %v2944 = vpop.f32.mrf.mxu0
    %v2945 = vadd.f32 0.0, %v2944
    %2946 = vmatmul.f32.gmra.mxu0 %v2332
    %v2947 = vpop.f32.mrf.mxu0
    %v2948 = vadd.f32 0.0, %v2947
    %2949 = vmatmul.f32.gmra.mxu0 %v2335
    %v2950 = vpop.f32.mrf.mxu0
    %v2951 = vadd.f32 0.0, %v2950
    %2952 = vmatmul.f32.gmra.mxu0 %v2338
    %v2953 = vpop.f32.mrf.mxu0
    %v2954 = vadd.f32 0.0, %v2953
    %2955 = vmatmul.f32.gmra.mxu0 %v2341
    %v2956 = vpop.f32.mrf.mxu0
    %v2957 = vadd.f32 0.0, %v2956
    %2958 = vmatmul.f32.gmra.mxu0 %v2344
    %v2959 = vpop.f32.mrf.mxu0
    %v2960 = vadd.f32 0.0, %v2959
    %2961 = vmatmul.f32.gmra.mxu0 %v2347
    %v2962 = vpop.f32.mrf.mxu0
    %v2963 = vadd.f32 0.0, %v2962
    %2964 = vmatmul.f32.gmra.mxu0 %v2350
    %v2965 = vpop.f32.mrf.mxu0
    %v2966 = vadd.f32 0.0, %v2965
    %2967 = vdwg.mxu0
    %v2968 = vadd.f32 %v2838, %v2904
    %v2969 = vadd.f32 %v2839, %v2945
    %v2970 = vadd.f32 %v2840, %v2907
    %v2971 = vadd.f32 %v2841, %v2948
    %v2972 = vadd.f32 %v2842, %v2910
    %v2973 = vadd.f32 %v2843, %v2951
    %v2974 = vadd.f32 %v2844, %v2913
    %v2975 = vadd.f32 %v2845, %v2954
    %v2976 = vadd.f32 %v2846, %v2916
    %v2977 = vadd.f32 %v2847, %v2957
    %v2978 = vadd.f32 %v2848, %v2919
    %v2979 = vadd.f32 %v2849, %v2960
    %v2980 = vadd.f32 %v2850, %v2922
    %v2981 = vadd.f32 %v2851, %v2963
    %v2982 = vadd.f32 %v2852, %v2925
    %v2983 = vadd.f32 %v2853, %v2966
    %v2984 = vld [vmem:[#allocation7 + $0x400] sm:$0xff]
    %v2985 = vld [vmem:[#allocation7 + $0x408] sm:$0xff]
    %v2986 = vld [vmem:[#allocation7 + $0x410] sm:$0xff]
    %v2987 = vld [vmem:[#allocation7 + $0x418] sm:$0xff]
    %v2988 = vld [vmem:[#allocation7 + $0x420] sm:$0xff]
    %v2989 = vld [vmem:[#allocation7 + $0x428] sm:$0xff]
    %v2990 = vld [vmem:[#allocation7 + $0x430] sm:$0xff]
    %v2991 = vld [vmem:[#allocation7 + $0x438] sm:$0xff]
    %v2992 = vld [vmem:[#allocation7 + $0x440] sm:$0xff]
    %v2993 = vld [vmem:[#allocation7 + $0x448] sm:$0xff]
    %v2994 = vld [vmem:[#allocation7 + $0x450] sm:$0xff]
    %v2995 = vld [vmem:[#allocation7 + $0x458] sm:$0xff]
    %v2996 = vld [vmem:[#allocation7 + $0x460] sm:$0xff]
    %v2997 = vld [vmem:[#allocation7 + $0x468] sm:$0xff]
    %v2998 = vld [vmem:[#allocation7 + $0x470] sm:$0xff]
    %v2999 = vld [vmem:[#allocation7 + $0x478] sm:$0xff]
    %v3000 = vld [vmem:[#allocation7 + $0x480] sm:$0xff]
    %v3001 = vld [vmem:[#allocation7 + $0x488] sm:$0xff]
    %v3002 = vld [vmem:[#allocation7 + $0x490] sm:$0xff]
    %v3003 = vld [vmem:[#allocation7 + $0x498] sm:$0xff]
    %v3004 = vld [vmem:[#allocation7 + $0x4a0] sm:$0xff]
    %v3005 = vld [vmem:[#allocation7 + $0x4a8] sm:$0xff]
    %v3006 = vld [vmem:[#allocation7 + $0x4b0] sm:$0xff]
    %v3007 = vld [vmem:[#allocation7 + $0x4b8] sm:$0xff]
    %v3008 = vld [vmem:[#allocation7 + $0x4c0] sm:$0xff]
    %v3009 = vld [vmem:[#allocation7 + $0x4c8] sm:$0xff]
    %v3010 = vld [vmem:[#allocation7 + $0x4d0] sm:$0xff]
    %v3011 = vld [vmem:[#allocation7 + $0x4d8] sm:$0xff]
    %v3012 = vld [vmem:[#allocation7 + $0x4e0] sm:$0xff]
    %v3013 = vld [vmem:[#allocation7 + $0x4e8] sm:$0xff]
    %v3014 = vld [vmem:[#allocation7 + $0x4f0] sm:$0xff]
    %v3015 = vld [vmem:[#allocation7 + $0x4f8] sm:$0xff]
    %3016 = vmatpush.msra.mxu0 %v3014
    %3017 = vmatpush.msra.mxu0 %v3012
    %3018 = vmatpush.msra.mxu0 %v3010
    %3019 = vmatpush.msra.mxu0 %v3008
    %3020 = vmatpush.msra.mxu0 %v3006
    %3021 = vmatpush.msra.mxu0 %v3004
    %3022 = vmatpush.msra.mxu0 %v3002
    %3023 = vmatpush.msra.mxu0 %v3000
    %3024 = vmatpush.msra.mxu0 %v2998
    %3025 = vmatpush.msra.mxu0 %v2996
    %3026 = vmatpush.msra.mxu0 %v2994
    %3027 = vmatpush.msra.mxu0 %v2992
    %3028 = vmatpush.msra.mxu0 %v2990
    %3029 = vmatpush.msra.mxu0 %v2988
    %3030 = vmatpush.msra.mxu0 %v2986
    %3031 = vmatpush.msra.mxu0 %v2984
    %3032 = vmatmul.f32.gmra.mxu0 %v2231
    %v3033 = vpop.f32.mrf.mxu0
    %v3034 = vadd.f32 0.0, %v3033
    %3035 = vmatmul.f32.gmra.mxu0 %v2232
    %v3036 = vpop.f32.mrf.mxu0
    %v3037 = vadd.f32 0.0, %v3036
    %3038 = vmatmul.f32.gmra.mxu0 %v2233
    %v3039 = vpop.f32.mrf.mxu0
    %v3040 = vadd.f32 0.0, %v3039
    %3041 = vmatmul.f32.gmra.mxu0 %v2234
    %v3042 = vpop.f32.mrf.mxu0
    %v3043 = vadd.f32 0.0, %v3042
    %3044 = vmatmul.f32.gmra.mxu0 %v2235
    %v3045 = vpop.f32.mrf.mxu0
    %v3046 = vadd.f32 0.0, %v3045
    %3047 = vmatmul.f32.gmra.mxu0 %v2236
    %v3048 = vpop.f32.mrf.mxu0
    %v3049 = vadd.f32 0.0, %v3048
    %3050 = vmatmul.f32.gmra.mxu0 %v2237
    %v3051 = vpop.f32.mrf.mxu0
    %v3052 = vadd.f32 0.0, %v3051
    %3053 = vmatmul.f32.gmra.mxu0 %v2238
    %v3054 = vpop.f32.mrf.mxu0
    %v3055 = vadd.f32 0.0, %v3054
    %3056 = vdwg.mxu0
    %3057 = vmatpush.msra.mxu0 %v3015
    %3058 = vmatpush.msra.mxu0 %v3013
    %3059 = vmatpush.msra.mxu0 %v3011
    %3060 = vmatpush.msra.mxu0 %v3009
    %3061 = vmatpush.msra.mxu0 %v3007
    %3062 = vmatpush.msra.mxu0 %v3005
    %3063 = vmatpush.msra.mxu0 %v3003
    %3064 = vmatpush.msra.mxu0 %v3001
    %3065 = vmatpush.msra.mxu0 %v2999
    %3066 = vmatpush.msra.mxu0 %v2997
    %3067 = vmatpush.msra.mxu0 %v2995
    %3068 = vmatpush.msra.mxu0 %v2993
    %3069 = vmatpush.msra.mxu0 %v2991
    %3070 = vmatpush.msra.mxu0 %v2989
    %3071 = vmatpush.msra.mxu0 %v2987
    %3072 = vmatpush.msra.mxu0 %v2985
    %3073 = vmatmul.f32.gmra.mxu0 %v2231
    %v3074 = vpop.f32.mrf.mxu0
    %v3075 = vadd.f32 0.0, %v3074
    %3076 = vmatmul.f32.gmra.mxu0 %v2232
    %v3077 = vpop.f32.mrf.mxu0
    %v3078 = vadd.f32 0.0, %v3077
    %3079 = vmatmul.f32.gmra.mxu0 %v2233
    %v3080 = vpop.f32.mrf.mxu0
    %v3081 = vadd.f32 0.0, %v3080
    %3082 = vmatmul.f32.gmra.mxu0 %v2234
    %v3083 = vpop.f32.mrf.mxu0
    %v3084 = vadd.f32 0.0, %v3083
    %3085 = vmatmul.f32.gmra.mxu0 %v2235
    %v3086 = vpop.f32.mrf.mxu0
    %v3087 = vadd.f32 0.0, %v3086
    %3088 = vmatmul.f32.gmra.mxu0 %v2236
    %v3089 = vpop.f32.mrf.mxu0
    %v3090 = vadd.f32 0.0, %v3089
    %3091 = vmatmul.f32.gmra.mxu0 %v2237
    %v3092 = vpop.f32.mrf.mxu0
    %v3093 = vadd.f32 0.0, %v3092
    %3094 = vmatmul.f32.gmra.mxu0 %v2238
    %v3095 = vpop.f32.mrf.mxu0
    %v3096 = vadd.f32 0.0, %v3095
    %3097 = vdwg.mxu0
    %v3098 = vadd.f32 %v2968, %v3034
    %v3099 = vadd.f32 %v2969, %v3075
    %v3100 = vadd.f32 %v2970, %v3037
    %v3101 = vadd.f32 %v2971, %v3078
    %v3102 = vadd.f32 %v2972, %v3040
    %v3103 = vadd.f32 %v2973, %v3081
    %v3104 = vadd.f32 %v2974, %v3043
    %v3105 = vadd.f32 %v2975, %v3084
    %v3106 = vadd.f32 %v2976, %v3046
    %v3107 = vadd.f32 %v2977, %v3087
    %v3108 = vadd.f32 %v2978, %v3049
    %v3109 = vadd.f32 %v2979, %v3090
    %v3110 = vadd.f32 %v2980, %v3052
    %v3111 = vadd.f32 %v2981, %v3093
    %v3112 = vadd.f32 %v2982, %v3055
    %v3113 = vadd.f32 %v2983, %v3096
    %v3114 = vld [vmem:[#allocation7 + $0x500] sm:$0xff]
    %v3115 = vld [vmem:[#allocation7 + $0x508] sm:$0xff]
    %v3116 = vld [vmem:[#allocation7 + $0x510] sm:$0xff]
    %v3117 = vld [vmem:[#allocation7 + $0x518] sm:$0xff]
    %v3118 = vld [vmem:[#allocation7 + $0x520] sm:$0xff]
    %v3119 = vld [vmem:[#allocation7 + $0x528] sm:$0xff]
    %v3120 = vld [vmem:[#allocation7 + $0x530] sm:$0xff]
    %v3121 = vld [vmem:[#allocation7 + $0x538] sm:$0xff]
    %v3122 = vld [vmem:[#allocation7 + $0x540] sm:$0xff]
    %v3123 = vld [vmem:[#allocation7 + $0x548] sm:$0xff]
    %v3124 = vld [vmem:[#allocation7 + $0x550] sm:$0xff]
    %v3125 = vld [vmem:[#allocation7 + $0x558] sm:$0xff]
    %v3126 = vld [vmem:[#allocation7 + $0x560] sm:$0xff]
    %v3127 = vld [vmem:[#allocation7 + $0x568] sm:$0xff]
    %v3128 = vld [vmem:[#allocation7 + $0x570] sm:$0xff]
    %v3129 = vld [vmem:[#allocation7 + $0x578] sm:$0xff]
    %v3130 = vld [vmem:[#allocation7 + $0x580] sm:$0xff]
    %v3131 = vld [vmem:[#allocation7 + $0x588] sm:$0xff]
    %v3132 = vld [vmem:[#allocation7 + $0x590] sm:$0xff]
    %v3133 = vld [vmem:[#allocation7 + $0x598] sm:$0xff]
    %v3134 = vld [vmem:[#allocation7 + $0x5a0] sm:$0xff]
    %v3135 = vld [vmem:[#allocation7 + $0x5a8] sm:$0xff]
    %v3136 = vld [vmem:[#allocation7 + $0x5b0] sm:$0xff]
    %v3137 = vld [vmem:[#allocation7 + $0x5b8] sm:$0xff]
    %v3138 = vld [vmem:[#allocation7 + $0x5c0] sm:$0xff]
    %v3139 = vld [vmem:[#allocation7 + $0x5c8] sm:$0xff]
    %v3140 = vld [vmem:[#allocation7 + $0x5d0] sm:$0xff]
    %v3141 = vld [vmem:[#allocation7 + $0x5d8] sm:$0xff]
    %v3142 = vld [vmem:[#allocation7 + $0x5e0] sm:$0xff]
    %v3143 = vld [vmem:[#allocation7 + $0x5e8] sm:$0xff]
    %v3144 = vld [vmem:[#allocation7 + $0x5f0] sm:$0xff]
    %v3145 = vld [vmem:[#allocation7 + $0x5f8] sm:$0xff]
    %3146 = vmatpush.msra.mxu0 %v3144
    %3147 = vmatpush.msra.mxu0 %v3142
    %3148 = vmatpush.msra.mxu0 %v3140
    %3149 = vmatpush.msra.mxu0 %v3138
    %3150 = vmatpush.msra.mxu0 %v3136
    %3151 = vmatpush.msra.mxu0 %v3134
    %3152 = vmatpush.msra.mxu0 %v3132
    %3153 = vmatpush.msra.mxu0 %v3130
    %3154 = vmatpush.msra.mxu0 %v3128
    %3155 = vmatpush.msra.mxu0 %v3126
    %3156 = vmatpush.msra.mxu0 %v3124
    %3157 = vmatpush.msra.mxu0 %v3122
    %3158 = vmatpush.msra.mxu0 %v3120
    %3159 = vmatpush.msra.mxu0 %v3118
    %3160 = vmatpush.msra.mxu0 %v3116
    %3161 = vmatpush.msra.mxu0 %v3114
    %3162 = vmatmul.f32.gmra.mxu0 %v2353
    %v3163 = vpop.f32.mrf.mxu0
    %v3164 = vadd.f32 0.0, %v3163
    %3165 = vmatmul.f32.gmra.mxu0 %v2356
    %v3166 = vpop.f32.mrf.mxu0
    %v3167 = vadd.f32 0.0, %v3166
    %3168 = vmatmul.f32.gmra.mxu0 %v2359
    %v3169 = vpop.f32.mrf.mxu0
    %v3170 = vadd.f32 0.0, %v3169
    %3171 = vmatmul.f32.gmra.mxu0 %v2362
    %v3172 = vpop.f32.mrf.mxu0
    %v3173 = vadd.f32 0.0, %v3172
    %3174 = vmatmul.f32.gmra.mxu0 %v2365
    %v3175 = vpop.f32.mrf.mxu0
    %v3176 = vadd.f32 0.0, %v3175
    %3177 = vmatmul.f32.gmra.mxu0 %v2368
    %v3178 = vpop.f32.mrf.mxu0
    %v3179 = vadd.f32 0.0, %v3178
    %3180 = vmatmul.f32.gmra.mxu0 %v2371
    %v3181 = vpop.f32.mrf.mxu0
    %v3182 = vadd.f32 0.0, %v3181
    %3183 = vmatmul.f32.gmra.mxu0 %v2374
    %v3184 = vpop.f32.mrf.mxu0
    %v3185 = vadd.f32 0.0, %v3184
    %3186 = vdwg.mxu0
    %3187 = vmatpush.msra.mxu0 %v3145
    %3188 = vmatpush.msra.mxu0 %v3143
    %3189 = vmatpush.msra.mxu0 %v3141
    %3190 = vmatpush.msra.mxu0 %v3139
    %3191 = vmatpush.msra.mxu0 %v3137
    %3192 = vmatpush.msra.mxu0 %v3135
    %3193 = vmatpush.msra.mxu0 %v3133
    %3194 = vmatpush.msra.mxu0 %v3131
    %3195 = vmatpush.msra.mxu0 %v3129
    %3196 = vmatpush.msra.mxu0 %v3127
    %3197 = vmatpush.msra.mxu0 %v3125
    %3198 = vmatpush.msra.mxu0 %v3123
    %3199 = vmatpush.msra.mxu0 %v3121
    %3200 = vmatpush.msra.mxu0 %v3119
    %3201 = vmatpush.msra.mxu0 %v3117
    %3202 = vmatpush.msra.mxu0 %v3115
    %3203 = vmatmul.f32.gmra.mxu0 %v2353
    %v3204 = vpop.f32.mrf.mxu0
    %v3205 = vadd.f32 0.0, %v3204
    %3206 = vmatmul.f32.gmra.mxu0 %v2356
    %v3207 = vpop.f32.mrf.mxu0
    %v3208 = vadd.f32 0.0, %v3207
    %3209 = vmatmul.f32.gmra.mxu0 %v2359
    %v3210 = vpop.f32.mrf.mxu0
    %v3211 = vadd.f32 0.0, %v3210
    %3212 = vmatmul.f32.gmra.mxu0 %v2362
    %v3213 = vpop.f32.mrf.mxu0
    %v3214 = vadd.f32 0.0, %v3213
    %3215 = vmatmul.f32.gmra.mxu0 %v2365
    %v3216 = vpop.f32.mrf.mxu0
    %v3217 = vadd.f32 0.0, %v3216
    %3218 = vmatmul.f32.gmra.mxu0 %v2368
    %v3219 = vpop.f32.mrf.mxu0
    %v3220 = vadd.f32 0.0, %v3219
    %3221 = vmatmul.f32.gmra.mxu0 %v2371
    %v3222 = vpop.f32.mrf.mxu0
    %v3223 = vadd.f32 0.0, %v3222
    %3224 = vmatmul.f32.gmra.mxu0 %v2374
    %v3225 = vpop.f32.mrf.mxu0
    %v3226 = vadd.f32 0.0, %v3225
    %3227 = vdwg.mxu0
    %v3228 = vadd.f32 %v3098, %v3164
    %v3229 = vadd.f32 %v3099, %v3205
    %v3230 = vadd.f32 %v3100, %v3167
    %v3231 = vadd.f32 %v3101, %v3208
    %v3232 = vadd.f32 %v3102, %v3170
    %v3233 = vadd.f32 %v3103, %v3211
    %v3234 = vadd.f32 %v3104, %v3173
    %v3235 = vadd.f32 %v3105, %v3214
    %v3236 = vadd.f32 %v3106, %v3176
    %v3237 = vadd.f32 %v3107, %v3217
    %v3238 = vadd.f32 %v3108, %v3179
    %v3239 = vadd.f32 %v3109, %v3220
    %v3240 = vadd.f32 %v3110, %v3182
    %v3241 = vadd.f32 %v3111, %v3223
    %v3242 = vadd.f32 %v3112, %v3185
    %v3243 = vadd.f32 %v3113, %v3226
    %v3244 = vld [vmem:[#allocation7 + $0x600] sm:$0xff]
    %v3245 = vld [vmem:[#allocation7 + $0x608] sm:$0xff]
    %v3246 = vld [vmem:[#allocation7 + $0x610] sm:$0xff]
    %v3247 = vld [vmem:[#allocation7 + $0x618] sm:$0xff]
    %v3248 = vld [vmem:[#allocation7 + $0x620] sm:$0xff]
    %v3249 = vld [vmem:[#allocation7 + $0x628] sm:$0xff]
    %v3250 = vld [vmem:[#allocation7 + $0x630] sm:$0xff]
    %v3251 = vld [vmem:[#allocation7 + $0x638] sm:$0xff]
    %v3252 = vld [vmem:[#allocation7 + $0x640] sm:$0xff]
    %v3253 = vld [vmem:[#allocation7 + $0x648] sm:$0xff]
    %v3254 = vld [vmem:[#allocation7 + $0x650] sm:$0xff]
    %v3255 = vld [vmem:[#allocation7 + $0x658] sm:$0xff]
    %v3256 = vld [vmem:[#allocation7 + $0x660] sm:$0xff]
    %v3257 = vld [vmem:[#allocation7 + $0x668] sm:$0xff]
    %v3258 = vld [vmem:[#allocation7 + $0x670] sm:$0xff]
    %v3259 = vld [vmem:[#allocation7 + $0x678] sm:$0xff]
    %v3260 = vld [vmem:[#allocation7 + $0x680] sm:$0xff]
    %v3261 = vld [vmem:[#allocation7 + $0x688] sm:$0xff]
    %v3262 = vld [vmem:[#allocation7 + $0x690] sm:$0xff]
    %v3263 = vld [vmem:[#allocation7 + $0x698] sm:$0xff]
    %v3264 = vld [vmem:[#allocation7 + $0x6a0] sm:$0xff]
    %v3265 = vld [vmem:[#allocation7 + $0x6a8] sm:$0xff]
    %v3266 = vld [vmem:[#allocation7 + $0x6b0] sm:$0xff]
    %v3267 = vld [vmem:[#allocation7 + $0x6b8] sm:$0xff]
    %v3268 = vld [vmem:[#allocation7 + $0x6c0] sm:$0xff]
    %v3269 = vld [vmem:[#allocation7 + $0x6c8] sm:$0xff]
    %v3270 = vld [vmem:[#allocation7 + $0x6d0] sm:$0xff]
    %v3271 = vld [vmem:[#allocation7 + $0x6d8] sm:$0xff]
    %v3272 = vld [vmem:[#allocation7 + $0x6e0] sm:$0xff]
    %v3273 = vld [vmem:[#allocation7 + $0x6e8] sm:$0xff]
    %v3274 = vld [vmem:[#allocation7 + $0x6f0] sm:$0xff]
    %v3275 = vld [vmem:[#allocation7 + $0x6f8] sm:$0xff]
    %3276 = vmatpush.msra.mxu0 %v3274
    %3277 = vmatpush.msra.mxu0 %v3272
    %3278 = vmatpush.msra.mxu0 %v3270
    %3279 = vmatpush.msra.mxu0 %v3268
    %3280 = vmatpush.msra.mxu0 %v3266
    %3281 = vmatpush.msra.mxu0 %v3264
    %3282 = vmatpush.msra.mxu0 %v3262
    %3283 = vmatpush.msra.mxu0 %v3260
    %3284 = vmatpush.msra.mxu0 %v3258
    %3285 = vmatpush.msra.mxu0 %v3256
    %3286 = vmatpush.msra.mxu0 %v3254
    %3287 = vmatpush.msra.mxu0 %v3252
    %3288 = vmatpush.msra.mxu0 %v3250
    %3289 = vmatpush.msra.mxu0 %v3248
    %3290 = vmatpush.msra.mxu0 %v3246
    %3291 = vmatpush.msra.mxu0 %v3244
    %3292 = vmatmul.f32.gmra.mxu0 %v2377
    %v3293 = vpop.f32.mrf.mxu0
    %v3294 = vadd.f32 0.0, %v3293
    %3295 = vmatmul.f32.gmra.mxu0 %v2380
    %v3296 = vpop.f32.mrf.mxu0
    %v3297 = vadd.f32 0.0, %v3296
    %3298 = vmatmul.f32.gmra.mxu0 %v2383
    %v3299 = vpop.f32.mrf.mxu0
    %v3300 = vadd.f32 0.0, %v3299
    %3301 = vmatmul.f32.gmra.mxu0 %v2386
    %v3302 = vpop.f32.mrf.mxu0
    %v3303 = vadd.f32 0.0, %v3302
    %3304 = vmatmul.f32.gmra.mxu0 %v2389
    %v3305 = vpop.f32.mrf.mxu0
    %v3306 = vadd.f32 0.0, %v3305
    %3307 = vmatmul.f32.gmra.mxu0 %v2392
    %v3308 = vpop.f32.mrf.mxu0
    %v3309 = vadd.f32 0.0, %v3308
    %3310 = vmatmul.f32.gmra.mxu0 %v2395
    %v3311 = vpop.f32.mrf.mxu0
    %v3312 = vadd.f32 0.0, %v3311
    %3313 = vmatmul.f32.gmra.mxu0 %v2398
    %v3314 = vpop.f32.mrf.mxu0
    %v3315 = vadd.f32 0.0, %v3314
    %3316 = vdwg.mxu0
    %3317 = vmatpush.msra.mxu0 %v3275
    %3318 = vmatpush.msra.mxu0 %v3273
    %3319 = vmatpush.msra.mxu0 %v3271
    %3320 = vmatpush.msra.mxu0 %v3269
    %3321 = vmatpush.msra.mxu0 %v3267
    %3322 = vmatpush.msra.mxu0 %v3265
    %3323 = vmatpush.msra.mxu0 %v3263
    %3324 = vmatpush.msra.mxu0 %v3261
    %3325 = vmatpush.msra.mxu0 %v3259
    %3326 = vmatpush.msra.mxu0 %v3257
    %3327 = vmatpush.msra.mxu0 %v3255
    %3328 = vmatpush.msra.mxu0 %v3253
    %3329 = vmatpush.msra.mxu0 %v3251
    %3330 = vmatpush.msra.mxu0 %v3249
    %3331 = vmatpush.msra.mxu0 %v3247
    %3332 = vmatpush.msra.mxu0 %v3245
    %3333 = vmatmul.f32.gmra.mxu0 %v2377
    %v3334 = vpop.f32.mrf.mxu0
    %v3335 = vadd.f32 0.0, %v3334
    %3336 = vmatmul.f32.gmra.mxu0 %v2380
    %v3337 = vpop.f32.mrf.mxu0
    %v3338 = vadd.f32 0.0, %v3337
    %3339 = vmatmul.f32.gmra.mxu0 %v2383
    %v3340 = vpop.f32.mrf.mxu0
    %v3341 = vadd.f32 0.0, %v3340
    %3342 = vmatmul.f32.gmra.mxu0 %v2386
    %v3343 = vpop.f32.mrf.mxu0
    %v3344 = vadd.f32 0.0, %v3343
    %3345 = vmatmul.f32.gmra.mxu0 %v2389
    %v3346 = vpop.f32.mrf.mxu0
    %v3347 = vadd.f32 0.0, %v3346
    %3348 = vmatmul.f32.gmra.mxu0 %v2392
    %v3349 = vpop.f32.mrf.mxu0
    %v3350 = vadd.f32 0.0, %v3349
    %3351 = vmatmul.f32.gmra.mxu0 %v2395
    %v3352 = vpop.f32.mrf.mxu0
    %v3353 = vadd.f32 0.0, %v3352
    %3354 = vmatmul.f32.gmra.mxu0 %v2398
    %v3355 = vpop.f32.mrf.mxu0
    %v3356 = vadd.f32 0.0, %v3355
    %3357 = vdwg.mxu0
    %v3358 = vadd.f32 %v3228, %v3294
    %v3359 = vadd.f32 %v3229, %v3335
    %v3360 = vadd.f32 %v3230, %v3297
    %v3361 = vadd.f32 %v3231, %v3338
    %v3362 = vadd.f32 %v3232, %v3300
    %v3363 = vadd.f32 %v3233, %v3341
    %v3364 = vadd.f32 %v3234, %v3303
    %v3365 = vadd.f32 %v3235, %v3344
    %v3366 = vadd.f32 %v3236, %v3306
    %v3367 = vadd.f32 %v3237, %v3347
    %v3368 = vadd.f32 %v3238, %v3309
    %v3369 = vadd.f32 %v3239, %v3350
    %v3370 = vadd.f32 %v3240, %v3312
    %v3371 = vadd.f32 %v3241, %v3353
    %v3372 = vadd.f32 %v3242, %v3315
    %v3373 = vadd.f32 %v3243, %v3356
    %v3374 = vld [vmem:[#allocation7 + $0x700] sm:$0xff]
    %v3375 = vld [vmem:[#allocation7 + $0x708] sm:$0xff]
    %v3376 = vld [vmem:[#allocation7 + $0x710] sm:$0xff]
    %v3377 = vld [vmem:[#allocation7 + $0x718] sm:$0xff]
    %v3378 = vld [vmem:[#allocation7 + $0x720] sm:$0xff]
    %v3379 = vld [vmem:[#allocation7 + $0x728] sm:$0xff]
    %v3380 = vld [vmem:[#allocation7 + $0x730] sm:$0xff]
    %v3381 = vld [vmem:[#allocation7 + $0x738] sm:$0xff]
    %v3382 = vld [vmem:[#allocation7 + $0x740] sm:$0xff]
    %v3383 = vld [vmem:[#allocation7 + $0x748] sm:$0xff]
    %v3384 = vld [vmem:[#allocation7 + $0x750] sm:$0xff]
    %v3385 = vld [vmem:[#allocation7 + $0x758] sm:$0xff]
    %v3386 = vld [vmem:[#allocation7 + $0x760] sm:$0xff]
    %v3387 = vld [vmem:[#allocation7 + $0x768] sm:$0xff]
    %v3388 = vld [vmem:[#allocation7 + $0x770] sm:$0xff]
    %v3389 = vld [vmem:[#allocation7 + $0x778] sm:$0xff]
    %v3390 = vld [vmem:[#allocation7 + $0x780] sm:$0xff]
    %v3391 = vld [vmem:[#allocation7 + $0x788] sm:$0xff]
    %v3392 = vld [vmem:[#allocation7 + $0x790] sm:$0xff]
    %v3393 = vld [vmem:[#allocation7 + $0x798] sm:$0xff]
    %v3394 = vld [vmem:[#allocation7 + $0x7a0] sm:$0xff]
    %v3395 = vld [vmem:[#allocation7 + $0x7a8] sm:$0xff]
    %v3396 = vld [vmem:[#allocation7 + $0x7b0] sm:$0xff]
    %v3397 = vld [vmem:[#allocation7 + $0x7b8] sm:$0xff]
    %v3398 = vld [vmem:[#allocation7 + $0x7c0] sm:$0xff]
    %v3399 = vld [vmem:[#allocation7 + $0x7c8] sm:$0xff]
    %v3400 = vld [vmem:[#allocation7 + $0x7d0] sm:$0xff]
    %v3401 = vld [vmem:[#allocation7 + $0x7d8] sm:$0xff]
    %v3402 = vld [vmem:[#allocation7 + $0x7e0] sm:$0xff]
    %v3403 = vld [vmem:[#allocation7 + $0x7e8] sm:$0xff]
    %v3404 = vld [vmem:[#allocation7 + $0x7f0] sm:$0xff]
    %v3405 = vld [vmem:[#allocation7 + $0x7f8] sm:$0xff]
    %3406 = vmatpush.msra.mxu0 %v3404
    %3407 = vmatpush.msra.mxu0 %v3402
    %3408 = vmatpush.msra.mxu0 %v3400
    %3409 = vmatpush.msra.mxu0 %v3398
    %3410 = vmatpush.msra.mxu0 %v3396
    %3411 = vmatpush.msra.mxu0 %v3394
    %3412 = vmatpush.msra.mxu0 %v3392
    %3413 = vmatpush.msra.mxu0 %v3390
    %3414 = vmatpush.msra.mxu0 %v3388
    %3415 = vmatpush.msra.mxu0 %v3386
    %3416 = vmatpush.msra.mxu0 %v3384
    %3417 = vmatpush.msra.mxu0 %v3382
    %3418 = vmatpush.msra.mxu0 %v3380
    %3419 = vmatpush.msra.mxu0 %v3378
    %3420 = vmatpush.msra.mxu0 %v3376
    %3421 = vmatpush.msra.mxu0 %v3374
    %3422 = vmatmul.f32.gmra.mxu0 %v2401
    %v3423 = vpop.f32.mrf.mxu0
    %v3424 = vadd.f32 0.0, %v3423
    %3425 = vmatmul.f32.gmra.mxu0 %v2404
    %v3426 = vpop.f32.mrf.mxu0
    %v3427 = vadd.f32 0.0, %v3426
    %3428 = vmatmul.f32.gmra.mxu0 %v2407
    %v3429 = vpop.f32.mrf.mxu0
    %v3430 = vadd.f32 0.0, %v3429
    %3431 = vmatmul.f32.gmra.mxu0 %v2410
    %v3432 = vpop.f32.mrf.mxu0
    %v3433 = vadd.f32 0.0, %v3432
    %3434 = vmatmul.f32.gmra.mxu0 %v2413
    %v3435 = vpop.f32.mrf.mxu0
    %v3436 = vadd.f32 0.0, %v3435
    %3437 = vmatmul.f32.gmra.mxu0 %v2416
    %v3438 = vpop.f32.mrf.mxu0
    %v3439 = vadd.f32 0.0, %v3438
    %3440 = vmatmul.f32.gmra.mxu0 %v2419
    %v3441 = vpop.f32.mrf.mxu0
    %v3442 = vadd.f32 0.0, %v3441
    %3443 = vmatmul.f32.gmra.mxu0 %v2422
    %v3444 = vpop.f32.mrf.mxu0
    %v3445 = vadd.f32 0.0, %v3444
    %3446 = vdwg.mxu0
    %3447 = vmatpush.msra.mxu0 %v3405
    %3448 = vmatpush.msra.mxu0 %v3403
    %3449 = vmatpush.msra.mxu0 %v3401
    %3450 = vmatpush.msra.mxu0 %v3399
    %3451 = vmatpush.msra.mxu0 %v3397
    %3452 = vmatpush.msra.mxu0 %v3395
    %3453 = vmatpush.msra.mxu0 %v3393
    %3454 = vmatpush.msra.mxu0 %v3391
    %3455 = vmatpush.msra.mxu0 %v3389
    %3456 = vmatpush.msra.mxu0 %v3387
    %3457 = vmatpush.msra.mxu0 %v3385
    %3458 = vmatpush.msra.mxu0 %v3383
    %3459 = vmatpush.msra.mxu0 %v3381
    %3460 = vmatpush.msra.mxu0 %v3379
    %3461 = vmatpush.msra.mxu0 %v3377
    %3462 = vmatpush.msra.mxu0 %v3375
    %3463 = vmatmul.f32.gmra.mxu0 %v2401
    %v3464 = vpop.f32.mrf.mxu0
    %v3465 = vadd.f32 0.0, %v3464
    %3466 = vmatmul.f32.gmra.mxu0 %v2404
    %v3467 = vpop.f32.mrf.mxu0
    %v3468 = vadd.f32 0.0, %v3467
    %3469 = vmatmul.f32.gmra.mxu0 %v2407
    %v3470 = vpop.f32.mrf.mxu0
    %v3471 = vadd.f32 0.0, %v3470
    %3472 = vmatmul.f32.gmra.mxu0 %v2410
    %v3473 = vpop.f32.mrf.mxu0
    %v3474 = vadd.f32 0.0, %v3473
    %3475 = vmatmul.f32.gmra.mxu0 %v2413
    %v3476 = vpop.f32.mrf.mxu0
    %v3477 = vadd.f32 0.0, %v3476
    %3478 = vmatmul.f32.gmra.mxu0 %v2416
    %v3479 = vpop.f32.mrf.mxu0
    %v3480 = vadd.f32 0.0, %v3479
    %3481 = vmatmul.f32.gmra.mxu0 %v2419
    %v3482 = vpop.f32.mrf.mxu0
    %v3483 = vadd.f32 0.0, %v3482
    %3484 = vmatmul.f32.gmra.mxu0 %v2422
    %v3485 = vpop.f32.mrf.mxu0
    %v3486 = vadd.f32 0.0, %v3485
    %3487 = vdwg.mxu0
    %v3488 = vadd.f32 %v3358, %v3424
    %v3489 = vadd.f32 %v3359, %v3465
    %v3490 = vadd.f32 %v3360, %v3427
    %v3491 = vadd.f32 %v3361, %v3468
    %v3492 = vadd.f32 %v3362, %v3430
    %v3493 = vadd.f32 %v3363, %v3471
    %v3494 = vadd.f32 %v3364, %v3433
    %v3495 = vadd.f32 %v3365, %v3474
    %v3496 = vadd.f32 %v3366, %v3436
    %v3497 = vadd.f32 %v3367, %v3477
    %v3498 = vadd.f32 %v3368, %v3439
    %v3499 = vadd.f32 %v3369, %v3480
    %v3500 = vadd.f32 %v3370, %v3442
    %v3501 = vadd.f32 %v3371, %v3483
    %v3502 = vadd.f32 %v3372, %v3445
    %v3503 = vadd.f32 %v3373, %v3486
    %v3504 = vld [vmem:[#allocation7 + $0x800] sm:$0xff]
    %v3505 = vld [vmem:[#allocation7 + $0x808] sm:$0xff]
    %v3506 = vld [vmem:[#allocation7 + $0x810] sm:$0xff]
    %v3507 = vld [vmem:[#allocation7 + $0x818] sm:$0xff]
    %v3508 = vld [vmem:[#allocation7 + $0x820] sm:$0xff]
    %v3509 = vld [vmem:[#allocation7 + $0x828] sm:$0xff]
    %v3510 = vld [vmem:[#allocation7 + $0x830] sm:$0xff]
    %v3511 = vld [vmem:[#allocation7 + $0x838] sm:$0xff]
    %v3512 = vld [vmem:[#allocation7 + $0x840] sm:$0xff]
    %v3513 = vld [vmem:[#allocation7 + $0x848] sm:$0xff]
    %v3514 = vld [vmem:[#allocation7 + $0x850] sm:$0xff]
    %v3515 = vld [vmem:[#allocation7 + $0x858] sm:$0xff]
    %v3516 = vld [vmem:[#allocation7 + $0x860] sm:$0xff]
    %v3517 = vld [vmem:[#allocation7 + $0x868] sm:$0xff]
    %v3518 = vld [vmem:[#allocation7 + $0x870] sm:$0xff]
    %v3519 = vld [vmem:[#allocation7 + $0x878] sm:$0xff]
    %v3520 = vld [vmem:[#allocation7 + $0x880] sm:$0xff]
    %v3521 = vld [vmem:[#allocation7 + $0x888] sm:$0xff]
    %v3522 = vld [vmem:[#allocation7 + $0x890] sm:$0xff]
    %v3523 = vld [vmem:[#allocation7 + $0x898] sm:$0xff]
    %v3524 = vld [vmem:[#allocation7 + $0x8a0] sm:$0xff]
    %v3525 = vld [vmem:[#allocation7 + $0x8a8] sm:$0xff]
    %v3526 = vld [vmem:[#allocation7 + $0x8b0] sm:$0xff]
    %v3527 = vld [vmem:[#allocation7 + $0x8b8] sm:$0xff]
    %v3528 = vld [vmem:[#allocation7 + $0x8c0] sm:$0xff]
    %v3529 = vld [vmem:[#allocation7 + $0x8c8] sm:$0xff]
    %v3530 = vld [vmem:[#allocation7 + $0x8d0] sm:$0xff]
    %v3531 = vld [vmem:[#allocation7 + $0x8d8] sm:$0xff]
    %v3532 = vld [vmem:[#allocation7 + $0x8e0] sm:$0xff]
    %v3533 = vld [vmem:[#allocation7 + $0x8e8] sm:$0xff]
    %v3534 = vld [vmem:[#allocation7 + $0x8f0] sm:$0xff]
    %v3535 = vld [vmem:[#allocation7 + $0x8f8] sm:$0xff]
    %3536 = vmatpush.msra.mxu0 %v3534
    %3537 = vmatpush.msra.mxu0 %v3532
    %3538 = vmatpush.msra.mxu0 %v3530
    %3539 = vmatpush.msra.mxu0 %v3528
    %3540 = vmatpush.msra.mxu0 %v3526
    %3541 = vmatpush.msra.mxu0 %v3524
    %3542 = vmatpush.msra.mxu0 %v3522
    %3543 = vmatpush.msra.mxu0 %v3520
    %3544 = vmatpush.msra.mxu0 %v3518
    %3545 = vmatpush.msra.mxu0 %v3516
    %3546 = vmatpush.msra.mxu0 %v3514
    %3547 = vmatpush.msra.mxu0 %v3512
    %3548 = vmatpush.msra.mxu0 %v3510
    %3549 = vmatpush.msra.mxu0 %v3508
    %3550 = vmatpush.msra.mxu0 %v3506
    %3551 = vmatpush.msra.mxu0 %v3504
    %3552 = vmatmul.f32.gmra.mxu0 %v2425
    %v3553 = vpop.f32.mrf.mxu0
    %v3554 = vadd.f32 0.0, %v3553
    %3555 = vmatmul.f32.gmra.mxu0 %v2428
    %v3556 = vpop.f32.mrf.mxu0
    %v3557 = vadd.f32 0.0, %v3556
    %3558 = vmatmul.f32.gmra.mxu0 %v2431
    %v3559 = vpop.f32.mrf.mxu0
    %v3560 = vadd.f32 0.0, %v3559
    %3561 = vmatmul.f32.gmra.mxu0 %v2434
    %v3562 = vpop.f32.mrf.mxu0
    %v3563 = vadd.f32 0.0, %v3562
    %3564 = vmatmul.f32.gmra.mxu0 %v2437
    %v3565 = vpop.f32.mrf.mxu0
    %v3566 = vadd.f32 0.0, %v3565
    %3567 = vmatmul.f32.gmra.mxu0 %v2440
    %v3568 = vpop.f32.mrf.mxu0
    %v3569 = vadd.f32 0.0, %v3568
    %3570 = vmatmul.f32.gmra.mxu0 %v2443
    %v3571 = vpop.f32.mrf.mxu0
    %v3572 = vadd.f32 0.0, %v3571
    %3573 = vmatmul.f32.gmra.mxu0 %v2446
    %v3574 = vpop.f32.mrf.mxu0
    %v3575 = vadd.f32 0.0, %v3574
    %3576 = vdwg.mxu0
    %3577 = vmatpush.msra.mxu0 %v3535
    %3578 = vmatpush.msra.mxu0 %v3533
    %3579 = vmatpush.msra.mxu0 %v3531
    %3580 = vmatpush.msra.mxu0 %v3529
    %3581 = vmatpush.msra.mxu0 %v3527
    %3582 = vmatpush.msra.mxu0 %v3525
    %3583 = vmatpush.msra.mxu0 %v3523
    %3584 = vmatpush.msra.mxu0 %v3521
    %3585 = vmatpush.msra.mxu0 %v3519
    %3586 = vmatpush.msra.mxu0 %v3517
    %3587 = vmatpush.msra.mxu0 %v3515
    %3588 = vmatpush.msra.mxu0 %v3513
    %3589 = vmatpush.msra.mxu0 %v3511
    %3590 = vmatpush.msra.mxu0 %v3509
    %3591 = vmatpush.msra.mxu0 %v3507
    %3592 = vmatpush.msra.mxu0 %v3505
    %3593 = vmatmul.f32.gmra.mxu0 %v2425
    %v3594 = vpop.f32.mrf.mxu0
    %v3595 = vadd.f32 0.0, %v3594
    %3596 = vmatmul.f32.gmra.mxu0 %v2428
    %v3597 = vpop.f32.mrf.mxu0
    %v3598 = vadd.f32 0.0, %v3597
    %3599 = vmatmul.f32.gmra.mxu0 %v2431
    %v3600 = vpop.f32.mrf.mxu0
    %v3601 = vadd.f32 0.0, %v3600
    %3602 = vmatmul.f32.gmra.mxu0 %v2434
    %v3603 = vpop.f32.mrf.mxu0
    %v3604 = vadd.f32 0.0, %v3603
    %3605 = vmatmul.f32.gmra.mxu0 %v2437
    %v3606 = vpop.f32.mrf.mxu0
    %v3607 = vadd.f32 0.0, %v3606
    %3608 = vmatmul.f32.gmra.mxu0 %v2440
    %v3609 = vpop.f32.mrf.mxu0
    %v3610 = vadd.f32 0.0, %v3609
    %3611 = vmatmul.f32.gmra.mxu0 %v2443
    %v3612 = vpop.f32.mrf.mxu0
    %v3613 = vadd.f32 0.0, %v3612
    %3614 = vmatmul.f32.gmra.mxu0 %v2446
    %v3615 = vpop.f32.mrf.mxu0
    %v3616 = vadd.f32 0.0, %v3615
    %3617 = vdwg.mxu0
    %v3618 = vadd.f32 %v3488, %v3554
    %v3619 = vadd.f32 %v3489, %v3595
    %v3620 = vadd.f32 %v3490, %v3557
    %v3621 = vadd.f32 %v3491, %v3598
    %v3622 = vadd.f32 %v3492, %v3560
    %v3623 = vadd.f32 %v3493, %v3601
    %v3624 = vadd.f32 %v3494, %v3563
    %v3625 = vadd.f32 %v3495, %v3604
    %v3626 = vadd.f32 %v3496, %v3566
    %v3627 = vadd.f32 %v3497, %v3607
    %v3628 = vadd.f32 %v3498, %v3569
    %v3629 = vadd.f32 %v3499, %v3610
    %v3630 = vadd.f32 %v3500, %v3572
    %v3631 = vadd.f32 %v3501, %v3613
    %v3632 = vadd.f32 %v3502, %v3575
    %v3633 = vadd.f32 %v3503, %v3616
    %3634 = vmatpush.msra.mxu0 0.0
    %3635 = vmatpush.msra.mxu0 0.0
    %3636 = vmatpush.msra.mxu0 0.0
    %3637 = vmatpush.msra.mxu0 0.0
    %3638 = vmatpush.msra.mxu0 0.0
    %3639 = vmatpush.msra.mxu0 0.0
    %3640 = vmatpush.msra.mxu0 0.0
    %3641 = vmatpush.msra.mxu0 0.0
    %3642 = vmatpush.msra.mxu0 %v3632
    %3643 = vmatpush.msra.mxu0 %v3630
    %3644 = vmatpush.msra.mxu0 %v3628
    %3645 = vmatpush.msra.mxu0 %v3626
    %3646 = vmatpush.msra.mxu0 %v3624
    %3647 = vmatpush.msra.mxu0 %v3622
    %3648 = vmatpush.msra.mxu0 %v3620
    %3649 = vmatpush.msra.mxu0 %v3618
    %3650 = vmatmul.f32.gmra.mxu0 %v218
    %v3651 = vpop.f32.mrf.mxu0
    %v3652 = vadd.f32 0.0, %v3651
    %3653 = vmatmul.f32.gmra.mxu0 %v221
    %v3654 = vpop.f32.mrf.mxu0
    %v3655 = vadd.f32 0.0, %v3654
    %3656 = vmatmul.f32.gmra.mxu0 %v224
    %v3657 = vpop.f32.mrf.mxu0
    %v3658 = vadd.f32 0.0, %v3657
    %3659 = vmatmul.f32.gmra.mxu0 %v227
    %v3660 = vpop.f32.mrf.mxu0
    %v3661 = vadd.f32 0.0, %v3660
    %3662 = vmatmul.f32.gmra.mxu0 %v230
    %v3663 = vpop.f32.mrf.mxu0
    %v3664 = vadd.f32 0.0, %v3663
    %3665 = vmatmul.f32.gmra.mxu0 %v233
    %v3666 = vpop.f32.mrf.mxu0
    %v3667 = vadd.f32 0.0, %v3666
    %3668 = vmatmul.f32.gmra.mxu0 %v236
    %v3669 = vpop.f32.mrf.mxu0
    %v3670 = vadd.f32 0.0, %v3669
    %3671 = vmatmul.f32.gmra.mxu0 %v239
    %v3672 = vpop.f32.mrf.mxu0
    %v3673 = vadd.f32 0.0, %v3672
    %3674 = vmatmul.f32.gmra.mxu0 %v242
    %v3675 = vpop.f32.mrf.mxu0
    %v3676 = vadd.f32 0.0, %v3675
    %3677 = vmatmul.f32.gmra.mxu0 %v245
    %v3678 = vpop.f32.mrf.mxu0
    %v3679 = vadd.f32 0.0, %v3678
    %3680 = vmatmul.f32.gmra.mxu0 %v248
    %v3681 = vpop.f32.mrf.mxu0
    %v3682 = vadd.f32 0.0, %v3681
    %3683 = vmatmul.f32.gmra.mxu0 %v251
    %v3684 = vpop.f32.mrf.mxu0
    %v3685 = vadd.f32 0.0, %v3684
    %3686 = vmatmul.f32.gmra.mxu0 %v254
    %v3687 = vpop.f32.mrf.mxu0
    %v3688 = vadd.f32 0.0, %v3687
    %3689 = vmatmul.f32.gmra.mxu0 %v257
    %v3690 = vpop.f32.mrf.mxu0
    %v3691 = vadd.f32 0.0, %v3690
    %3692 = vmatmul.f32.gmra.mxu0 %v260
    %v3693 = vpop.f32.mrf.mxu0
    %v3694 = vadd.f32 0.0, %v3693
    %3695 = vmatmul.f32.gmra.mxu0 %v263
    %v3696 = vpop.f32.mrf.mxu0
    %v3697 = vadd.f32 0.0, %v3696
    %3698 = vmatmul.f32.gmra.mxu0 %v266
    %v3699 = vpop.f32.mrf.mxu0
    %v3700 = vadd.f32 0.0, %v3699
    %3701 = vmatmul.f32.gmra.mxu0 %v269
    %v3702 = vpop.f32.mrf.mxu0
    %v3703 = vadd.f32 0.0, %v3702
    %3704 = vmatmul.f32.gmra.mxu0 %v272
    %v3705 = vpop.f32.mrf.mxu0
    %v3706 = vadd.f32 0.0, %v3705
    %3707 = vmatmul.f32.gmra.mxu0 %v275
    %v3708 = vpop.f32.mrf.mxu0
    %v3709 = vadd.f32 0.0, %v3708
    %3710 = vmatmul.f32.gmra.mxu0 %v278
    %v3711 = vpop.f32.mrf.mxu0
    %v3712 = vadd.f32 0.0, %v3711
    %3713 = vmatmul.f32.gmra.mxu0 %v281
    %v3714 = vpop.f32.mrf.mxu0
    %v3715 = vadd.f32 0.0, %v3714
    %3716 = vmatmul.f32.gmra.mxu0 %v284
    %v3717 = vpop.f32.mrf.mxu0
    %v3718 = vadd.f32 0.0, %v3717
    %3719 = vmatmul.f32.gmra.mxu0 %v287
    %v3720 = vpop.f32.mrf.mxu0
    %v3721 = vadd.f32 0.0, %v3720
    %3722 = vmatmul.f32.gmra.mxu0 %v290
    %v3723 = vpop.f32.mrf.mxu0
    %v3724 = vadd.f32 0.0, %v3723
    %3725 = vmatmul.f32.gmra.mxu0 %v293
    %v3726 = vpop.f32.mrf.mxu0
    %v3727 = vadd.f32 0.0, %v3726
    %3728 = vmatmul.f32.gmra.mxu0 %v296
    %v3729 = vpop.f32.mrf.mxu0
    %v3730 = vadd.f32 0.0, %v3729
    %3731 = vmatmul.f32.gmra.mxu0 %v299
    %v3732 = vpop.f32.mrf.mxu0
    %v3733 = vadd.f32 0.0, %v3732
    %3734 = vmatmul.f32.gmra.mxu0 %v302
    %v3735 = vpop.f32.mrf.mxu0
    %v3736 = vadd.f32 0.0, %v3735
    %3737 = vmatmul.f32.gmra.mxu0 %v305
    %v3738 = vpop.f32.mrf.mxu0
    %v3739 = vadd.f32 0.0, %v3738
    %3740 = vmatmul.f32.gmra.mxu0 %v308
    %v3741 = vpop.f32.mrf.mxu0
    %v3742 = vadd.f32 0.0, %v3741
    %3743 = vmatmul.f32.gmra.mxu0 %v311
    %v3744 = vpop.f32.mrf.mxu0
    %v3745 = vadd.f32 0.0, %v3744
    %3746 = vmatmul.f32.gmra.mxu0 %v314
    %v3747 = vpop.f32.mrf.mxu0
    %v3748 = vadd.f32 0.0, %v3747
    %3749 = vmatmul.f32.gmra.mxu0 %v317
    %v3750 = vpop.f32.mrf.mxu0
    %v3751 = vadd.f32 0.0, %v3750
    %3752 = vmatmul.f32.gmra.mxu0 %v320
    %v3753 = vpop.f32.mrf.mxu0
    %v3754 = vadd.f32 0.0, %v3753
    %3755 = vmatmul.f32.gmra.mxu0 %v323
    %v3756 = vpop.f32.mrf.mxu0
    %v3757 = vadd.f32 0.0, %v3756
    %3758 = vmatmul.f32.gmra.mxu0 %v326
    %v3759 = vpop.f32.mrf.mxu0
    %v3760 = vadd.f32 0.0, %v3759
    %3761 = vmatmul.f32.gmra.mxu0 %v329
    %v3762 = vpop.f32.mrf.mxu0
    %v3763 = vadd.f32 0.0, %v3762
    %3764 = vmatmul.f32.gmra.mxu0 %v332
    %v3765 = vpop.f32.mrf.mxu0
    %v3766 = vadd.f32 0.0, %v3765
    %3767 = vmatmul.f32.gmra.mxu0 %v335
    %v3768 = vpop.f32.mrf.mxu0
    %v3769 = vadd.f32 0.0, %v3768
    %3770 = vmatmul.f32.gmra.mxu0 %v338
    %v3771 = vpop.f32.mrf.mxu0
    %v3772 = vadd.f32 0.0, %v3771
    %3773 = vmatmul.f32.gmra.mxu0 %v341
    %v3774 = vpop.f32.mrf.mxu0
    %v3775 = vadd.f32 0.0, %v3774
    %3776 = vmatmul.f32.gmra.mxu0 %v344
    %v3777 = vpop.f32.mrf.mxu0
    %v3778 = vadd.f32 0.0, %v3777
    %3779 = vmatmul.f32.gmra.mxu0 %v347
    %v3780 = vpop.f32.mrf.mxu0
    %v3781 = vadd.f32 0.0, %v3780
    %3782 = vmatmul.f32.gmra.mxu0 %v350
    %v3783 = vpop.f32.mrf.mxu0
    %v3784 = vadd.f32 0.0, %v3783
    %3785 = vmatmul.f32.gmra.mxu0 %v353
    %v3786 = vpop.f32.mrf.mxu0
    %v3787 = vadd.f32 0.0, %v3786
    %3788 = vmatmul.f32.gmra.mxu0 %v356
    %v3789 = vpop.f32.mrf.mxu0
    %v3790 = vadd.f32 0.0, %v3789
    %3791 = vmatmul.f32.gmra.mxu0 %v359
    %v3792 = vpop.f32.mrf.mxu0
    %v3793 = vadd.f32 0.0, %v3792
    %3794 = vmatmul.f32.gmra.mxu0 %v362
    %v3795 = vpop.f32.mrf.mxu0
    %v3796 = vadd.f32 0.0, %v3795
    %3797 = vmatmul.f32.gmra.mxu0 %v365
    %v3798 = vpop.f32.mrf.mxu0
    %v3799 = vadd.f32 0.0, %v3798
    %3800 = vmatmul.f32.gmra.mxu0 %v368
    %v3801 = vpop.f32.mrf.mxu0
    %v3802 = vadd.f32 0.0, %v3801
    %3803 = vmatmul.f32.gmra.mxu0 %v371
    %v3804 = vpop.f32.mrf.mxu0
    %v3805 = vadd.f32 0.0, %v3804
    %3806 = vmatmul.f32.gmra.mxu0 %v374
    %v3807 = vpop.f32.mrf.mxu0
    %v3808 = vadd.f32 0.0, %v3807
    %3809 = vmatmul.f32.gmra.mxu0 %v377
    %v3810 = vpop.f32.mrf.mxu0
    %v3811 = vadd.f32 0.0, %v3810
    %3812 = vmatmul.f32.gmra.mxu0 %v380
    %v3813 = vpop.f32.mrf.mxu0
    %v3814 = vadd.f32 0.0, %v3813
    %3815 = vmatmul.f32.gmra.mxu0 %v383
    %v3816 = vpop.f32.mrf.mxu0
    %v3817 = vadd.f32 0.0, %v3816
    %3818 = vmatmul.f32.gmra.mxu0 %v386
    %v3819 = vpop.f32.mrf.mxu0
    %v3820 = vadd.f32 0.0, %v3819
    %3821 = vmatmul.f32.gmra.mxu0 %v389
    %v3822 = vpop.f32.mrf.mxu0
    %v3823 = vadd.f32 0.0, %v3822
    %3824 = vmatmul.f32.gmra.mxu0 %v392
    %v3825 = vpop.f32.mrf.mxu0
    %v3826 = vadd.f32 0.0, %v3825
    %3827 = vmatmul.f32.gmra.mxu0 %v395
    %v3828 = vpop.f32.mrf.mxu0
    %v3829 = vadd.f32 0.0, %v3828
    %3830 = vmatmul.f32.gmra.mxu0 %v398
    %v3831 = vpop.f32.mrf.mxu0
    %v3832 = vadd.f32 0.0, %v3831
    %3833 = vmatmul.f32.gmra.mxu0 %v401
    %v3834 = vpop.f32.mrf.mxu0
    %v3835 = vadd.f32 0.0, %v3834
    %3836 = vmatmul.f32.gmra.mxu0 %v404
    %v3837 = vpop.f32.mrf.mxu0
    %v3838 = vadd.f32 0.0, %v3837
    %3839 = vmatmul.f32.gmra.mxu0 %v407
    %v3840 = vpop.f32.mrf.mxu0
    %v3841 = vadd.f32 0.0, %v3840
    %3842 = vdwg.mxu0
    %3843 = vmatpush.msra.mxu0 0.0
    %3844 = vmatpush.msra.mxu0 0.0
    %3845 = vmatpush.msra.mxu0 0.0
    %3846 = vmatpush.msra.mxu0 0.0
    %3847 = vmatpush.msra.mxu0 0.0
    %3848 = vmatpush.msra.mxu0 0.0
    %3849 = vmatpush.msra.mxu0 0.0
    %3850 = vmatpush.msra.mxu0 0.0
    %3851 = vmatpush.msra.mxu0 %v3633
    %3852 = vmatpush.msra.mxu0 %v3631
    %3853 = vmatpush.msra.mxu0 %v3629
    %3854 = vmatpush.msra.mxu0 %v3627
    %3855 = vmatpush.msra.mxu0 %v3625
    %3856 = vmatpush.msra.mxu0 %v3623
    %3857 = vmatpush.msra.mxu0 %v3621
    %3858 = vmatpush.msra.mxu0 %v3619
    %3859 = vmatmul.f32.gmra.mxu0 %v218
    %v3860 = vpop.f32.mrf.mxu0
    %v3861 = vadd.f32 0.0, %v3860
    %3862 = vmatmul.f32.gmra.mxu0 %v221
    %v3863 = vpop.f32.mrf.mxu0
    %v3864 = vadd.f32 0.0, %v3863
    %3865 = vmatmul.f32.gmra.mxu0 %v224
    %v3866 = vpop.f32.mrf.mxu0
    %v3867 = vadd.f32 0.0, %v3866
    %3868 = vmatmul.f32.gmra.mxu0 %v227
    %v3869 = vpop.f32.mrf.mxu0
    %v3870 = vadd.f32 0.0, %v3869
    %3871 = vmatmul.f32.gmra.mxu0 %v230
    %v3872 = vpop.f32.mrf.mxu0
    %v3873 = vadd.f32 0.0, %v3872
    %3874 = vmatmul.f32.gmra.mxu0 %v233
    %v3875 = vpop.f32.mrf.mxu0
    %v3876 = vadd.f32 0.0, %v3875
    %3877 = vmatmul.f32.gmra.mxu0 %v236
    %v3878 = vpop.f32.mrf.mxu0
    %v3879 = vadd.f32 0.0, %v3878
    %3880 = vmatmul.f32.gmra.mxu0 %v239
    %v3881 = vpop.f32.mrf.mxu0
    %v3882 = vadd.f32 0.0, %v3881
    %3883 = vmatmul.f32.gmra.mxu0 %v242
    %v3884 = vpop.f32.mrf.mxu0
    %v3885 = vadd.f32 0.0, %v3884
    %3886 = vmatmul.f32.gmra.mxu0 %v245
    %v3887 = vpop.f32.mrf.mxu0
    %v3888 = vadd.f32 0.0, %v3887
    %3889 = vmatmul.f32.gmra.mxu0 %v248
    %v3890 = vpop.f32.mrf.mxu0
    %v3891 = vadd.f32 0.0, %v3890
    %3892 = vmatmul.f32.gmra.mxu0 %v251
    %v3893 = vpop.f32.mrf.mxu0
    %v3894 = vadd.f32 0.0, %v3893
    %3895 = vmatmul.f32.gmra.mxu0 %v254
    %v3896 = vpop.f32.mrf.mxu0
    %v3897 = vadd.f32 0.0, %v3896
    %3898 = vmatmul.f32.gmra.mxu0 %v257
    %v3899 = vpop.f32.mrf.mxu0
    %v3900 = vadd.f32 0.0, %v3899
    %3901 = vmatmul.f32.gmra.mxu0 %v260
    %v3902 = vpop.f32.mrf.mxu0
    %v3903 = vadd.f32 0.0, %v3902
    %3904 = vmatmul.f32.gmra.mxu0 %v263
    %v3905 = vpop.f32.mrf.mxu0
    %v3906 = vadd.f32 0.0, %v3905
    %3907 = vmatmul.f32.gmra.mxu0 %v266
    %v3908 = vpop.f32.mrf.mxu0
    %v3909 = vadd.f32 0.0, %v3908
    %3910 = vmatmul.f32.gmra.mxu0 %v269
    %v3911 = vpop.f32.mrf.mxu0
    %v3912 = vadd.f32 0.0, %v3911
    %3913 = vmatmul.f32.gmra.mxu0 %v272
    %v3914 = vpop.f32.mrf.mxu0
    %v3915 = vadd.f32 0.0, %v3914
    %3916 = vmatmul.f32.gmra.mxu0 %v275
    %v3917 = vpop.f32.mrf.mxu0
    %v3918 = vadd.f32 0.0, %v3917
    %3919 = vmatmul.f32.gmra.mxu0 %v278
    %v3920 = vpop.f32.mrf.mxu0
    %v3921 = vadd.f32 0.0, %v3920
    %3922 = vmatmul.f32.gmra.mxu0 %v281
    %v3923 = vpop.f32.mrf.mxu0
    %v3924 = vadd.f32 0.0, %v3923
    %3925 = vmatmul.f32.gmra.mxu0 %v284
    %v3926 = vpop.f32.mrf.mxu0
    %v3927 = vadd.f32 0.0, %v3926
    %3928 = vmatmul.f32.gmra.mxu0 %v287
    %v3929 = vpop.f32.mrf.mxu0
    %v3930 = vadd.f32 0.0, %v3929
    %3931 = vmatmul.f32.gmra.mxu0 %v290
    %v3932 = vpop.f32.mrf.mxu0
    %v3933 = vadd.f32 0.0, %v3932
    %3934 = vmatmul.f32.gmra.mxu0 %v293
    %v3935 = vpop.f32.mrf.mxu0
    %v3936 = vadd.f32 0.0, %v3935
    %3937 = vmatmul.f32.gmra.mxu0 %v296
    %v3938 = vpop.f32.mrf.mxu0
    %v3939 = vadd.f32 0.0, %v3938
    %3940 = vmatmul.f32.gmra.mxu0 %v299
    %v3941 = vpop.f32.mrf.mxu0
    %v3942 = vadd.f32 0.0, %v3941
    %3943 = vmatmul.f32.gmra.mxu0 %v302
    %v3944 = vpop.f32.mrf.mxu0
    %v3945 = vadd.f32 0.0, %v3944
    %3946 = vmatmul.f32.gmra.mxu0 %v305
    %v3947 = vpop.f32.mrf.mxu0
    %v3948 = vadd.f32 0.0, %v3947
    %3949 = vmatmul.f32.gmra.mxu0 %v308
    %v3950 = vpop.f32.mrf.mxu0
    %v3951 = vadd.f32 0.0, %v3950
    %3952 = vmatmul.f32.gmra.mxu0 %v311
    %v3953 = vpop.f32.mrf.mxu0
    %v3954 = vadd.f32 0.0, %v3953
    %3955 = vmatmul.f32.gmra.mxu0 %v314
    %v3956 = vpop.f32.mrf.mxu0
    %v3957 = vadd.f32 0.0, %v3956
    %3958 = vmatmul.f32.gmra.mxu0 %v317
    %v3959 = vpop.f32.mrf.mxu0
    %v3960 = vadd.f32 0.0, %v3959
    %3961 = vmatmul.f32.gmra.mxu0 %v320
    %v3962 = vpop.f32.mrf.mxu0
    %v3963 = vadd.f32 0.0, %v3962
    %3964 = vmatmul.f32.gmra.mxu0 %v323
    %v3965 = vpop.f32.mrf.mxu0
    %v3966 = vadd.f32 0.0, %v3965
    %3967 = vmatmul.f32.gmra.mxu0 %v326
    %v3968 = vpop.f32.mrf.mxu0
    %v3969 = vadd.f32 0.0, %v3968
    %3970 = vmatmul.f32.gmra.mxu0 %v329
    %v3971 = vpop.f32.mrf.mxu0
    %v3972 = vadd.f32 0.0, %v3971
    %3973 = vmatmul.f32.gmra.mxu0 %v332
    %v3974 = vpop.f32.mrf.mxu0
    %v3975 = vadd.f32 0.0, %v3974
    %3976 = vmatmul.f32.gmra.mxu0 %v335
    %v3977 = vpop.f32.mrf.mxu0
    %v3978 = vadd.f32 0.0, %v3977
    %3979 = vmatmul.f32.gmra.mxu0 %v338
    %v3980 = vpop.f32.mrf.mxu0
    %v3981 = vadd.f32 0.0, %v3980
    %3982 = vmatmul.f32.gmra.mxu0 %v341
    %v3983 = vpop.f32.mrf.mxu0
    %v3984 = vadd.f32 0.0, %v3983
    %3985 = vmatmul.f32.gmra.mxu0 %v344
    %v3986 = vpop.f32.mrf.mxu0
    %v3987 = vadd.f32 0.0, %v3986
    %3988 = vmatmul.f32.gmra.mxu0 %v347
    %v3989 = vpop.f32.mrf.mxu0
    %v3990 = vadd.f32 0.0, %v3989
    %3991 = vmatmul.f32.gmra.mxu0 %v350
    %v3992 = vpop.f32.mrf.mxu0
    %v3993 = vadd.f32 0.0, %v3992
    %3994 = vmatmul.f32.gmra.mxu0 %v353
    %v3995 = vpop.f32.mrf.mxu0
    %v3996 = vadd.f32 0.0, %v3995
    %3997 = vmatmul.f32.gmra.mxu0 %v356
    %v3998 = vpop.f32.mrf.mxu0
    %v3999 = vadd.f32 0.0, %v3998
    %4000 = vmatmul.f32.gmra.mxu0 %v359
    %v4001 = vpop.f32.mrf.mxu0
    %v4002 = vadd.f32 0.0, %v4001
    %4003 = vmatmul.f32.gmra.mxu0 %v362
    %v4004 = vpop.f32.mrf.mxu0
    %v4005 = vadd.f32 0.0, %v4004
    %4006 = vmatmul.f32.gmra.mxu0 %v365
    %v4007 = vpop.f32.mrf.mxu0
    %v4008 = vadd.f32 0.0, %v4007
    %4009 = vmatmul.f32.gmra.mxu0 %v368
    %v4010 = vpop.f32.mrf.mxu0
    %v4011 = vadd.f32 0.0, %v4010
    %4012 = vmatmul.f32.gmra.mxu0 %v371
    %v4013 = vpop.f32.mrf.mxu0
    %v4014 = vadd.f32 0.0, %v4013
    %4015 = vmatmul.f32.gmra.mxu0 %v374
    %v4016 = vpop.f32.mrf.mxu0
    %v4017 = vadd.f32 0.0, %v4016
    %4018 = vmatmul.f32.gmra.mxu0 %v377
    %v4019 = vpop.f32.mrf.mxu0
    %v4020 = vadd.f32 0.0, %v4019
    %4021 = vmatmul.f32.gmra.mxu0 %v380
    %v4022 = vpop.f32.mrf.mxu0
    %v4023 = vadd.f32 0.0, %v4022
    %4024 = vmatmul.f32.gmra.mxu0 %v383
    %v4025 = vpop.f32.mrf.mxu0
    %v4026 = vadd.f32 0.0, %v4025
    %4027 = vmatmul.f32.gmra.mxu0 %v386
    %v4028 = vpop.f32.mrf.mxu0
    %v4029 = vadd.f32 0.0, %v4028
    %4030 = vmatmul.f32.gmra.mxu0 %v389
    %v4031 = vpop.f32.mrf.mxu0
    %v4032 = vadd.f32 0.0, %v4031
    %4033 = vmatmul.f32.gmra.mxu0 %v392
    %v4034 = vpop.f32.mrf.mxu0
    %v4035 = vadd.f32 0.0, %v4034
    %4036 = vmatmul.f32.gmra.mxu0 %v395
    %v4037 = vpop.f32.mrf.mxu0
    %v4038 = vadd.f32 0.0, %v4037
    %4039 = vmatmul.f32.gmra.mxu0 %v398
    %v4040 = vpop.f32.mrf.mxu0
    %v4041 = vadd.f32 0.0, %v4040
    %4042 = vmatmul.f32.gmra.mxu0 %v401
    %v4043 = vpop.f32.mrf.mxu0
    %v4044 = vadd.f32 0.0, %v4043
    %4045 = vmatmul.f32.gmra.mxu0 %v404
    %v4046 = vpop.f32.mrf.mxu0
    %v4047 = vadd.f32 0.0, %v4046
    %4048 = vmatmul.f32.gmra.mxu0 %v407
    %v4049 = vpop.f32.mrf.mxu0
    %v4050 = vadd.f32 0.0, %v4049
    %4051 = vdwg.mxu0
    %v4052 = vld [vmem:[#allocation12] sm:$0xff]
    %v4053 = vld [vmem:[#allocation12 + $0x8] sm:$0xff]
    %v4054 = vld [vmem:[#allocation12 + $0x10] sm:$0xff]
    %v4055 = vld [vmem:[#allocation12 + $0x18] sm:$0xff]
    %v4056 = vld [vmem:[#allocation12 + $0x20] sm:$0xff]
    %v4057 = vld [vmem:[#allocation12 + $0x28] sm:$0xff]
    %v4058 = vld [vmem:[#allocation12 + $0x30] sm:$0xff]
    %v4059 = vld [vmem:[#allocation12 + $0x38] sm:$0xff]
    %v4060 = vld [vmem:[#allocation12 + $0x40] sm:$0xff]
    %v4061 = vld [vmem:[#allocation12 + $0x48] sm:$0xff]
    %v4062 = vld [vmem:[#allocation12 + $0x50] sm:$0xff]
    %v4063 = vld [vmem:[#allocation12 + $0x58] sm:$0xff]
    %v4064 = vld [vmem:[#allocation12 + $0x60] sm:$0xff]
    %v4065 = vld [vmem:[#allocation12 + $0x68] sm:$0xff]
    %v4066 = vld [vmem:[#allocation12 + $0x70] sm:$0xff]
    %v4067 = vld [vmem:[#allocation12 + $0x78] sm:$0xff]
    %v4068 = vld [vmem:[#allocation10] sm:$0xff]
    %v4069 = vld [vmem:[#allocation10 + $0x8] sm:$0xff]
    %v4070 = vld [vmem:[#allocation10 + $0x10] sm:$0xff]
    %v4071 = vld [vmem:[#allocation10 + $0x18] sm:$0xff]
    %v4072 = vld [vmem:[#allocation10 + $0x20] sm:$0xff]
    %v4073 = vld [vmem:[#allocation10 + $0x28] sm:$0xff]
    %v4074 = vld [vmem:[#allocation10 + $0x30] sm:$0xff]
    %v4075 = vld [vmem:[#allocation10 + $0x38] sm:$0xff]
    %v4076 = vld [vmem:[#allocation10 + $0x40] sm:$0xff]
    %v4077 = vld [vmem:[#allocation10 + $0x48] sm:$0xff]
    %v4078 = vld [vmem:[#allocation10 + $0x50] sm:$0xff]
    %v4079 = vld [vmem:[#allocation10 + $0x58] sm:$0xff]
    %v4080 = vld [vmem:[#allocation10 + $0x60] sm:$0xff]
    %v4081 = vld [vmem:[#allocation10 + $0x68] sm:$0xff]
    %v4082 = vld [vmem:[#allocation10 + $0x70] sm:$0xff]
    %v4083 = vld [vmem:[#allocation10 + $0x78] sm:$0xff]
    %v4084 = vld [vmem:[#allocation10 + $0x80] sm:$0xff]
    %v4085 = vld [vmem:[#allocation10 + $0x88] sm:$0xff]
    %v4086 = vld [vmem:[#allocation10 + $0x90] sm:$0xff]
    %v4087 = vld [vmem:[#allocation10 + $0x98] sm:$0xff]
    %v4088 = vld [vmem:[#allocation10 + $0xa0] sm:$0xff]
    %v4089 = vld [vmem:[#allocation10 + $0xa8] sm:$0xff]
    %v4090 = vld [vmem:[#allocation10 + $0xb0] sm:$0xff]
    %v4091 = vld [vmem:[#allocation10 + $0xb8] sm:$0xff]
    %v4092 = vld [vmem:[#allocation10 + $0xc0] sm:$0xff]
    %v4093 = vld [vmem:[#allocation10 + $0xc8] sm:$0xff]
    %v4094 = vld [vmem:[#allocation10 + $0xd0] sm:$0xff]
    %v4095 = vld [vmem:[#allocation10 + $0xd8] sm:$0xff]
    %v4096 = vld [vmem:[#allocation10 + $0xe0] sm:$0xff]
    %v4097 = vld [vmem:[#allocation10 + $0xe8] sm:$0xff]
    %v4098 = vld [vmem:[#allocation10 + $0xf0] sm:$0xff]
    %v4099 = vld [vmem:[#allocation10 + $0xf8] sm:$0xff]
    %v4100 = vld [vmem:[#allocation10 + $0x100] sm:$0xff]
    %v4101 = vld [vmem:[#allocation10 + $0x108] sm:$0xff]
    %v4102 = vld [vmem:[#allocation10 + $0x110] sm:$0xff]
    %v4103 = vld [vmem:[#allocation10 + $0x118] sm:$0xff]
    %v4104 = vld [vmem:[#allocation10 + $0x120] sm:$0xff]
    %v4105 = vld [vmem:[#allocation10 + $0x128] sm:$0xff]
    %v4106 = vld [vmem:[#allocation10 + $0x130] sm:$0xff]
    %v4107 = vld [vmem:[#allocation10 + $0x138] sm:$0xff]
    %v4108 = vld [vmem:[#allocation10 + $0x140] sm:$0xff]
    %v4109 = vld [vmem:[#allocation10 + $0x148] sm:$0xff]
    %v4110 = vld [vmem:[#allocation10 + $0x150] sm:$0xff]
    %v4111 = vld [vmem:[#allocation10 + $0x158] sm:$0xff]
    %v4112 = vld [vmem:[#allocation10 + $0x160] sm:$0xff]
    %v4113 = vld [vmem:[#allocation10 + $0x168] sm:$0xff]
    %v4114 = vld [vmem:[#allocation10 + $0x170] sm:$0xff]
    %v4115 = vld [vmem:[#allocation10 + $0x178] sm:$0xff]
    %v4116 = vld [vmem:[#allocation10 + $0x180] sm:$0xff]
    %v4117 = vld [vmem:[#allocation10 + $0x188] sm:$0xff]
    %v4118 = vld [vmem:[#allocation10 + $0x190] sm:$0xff]
    %v4119 = vld [vmem:[#allocation10 + $0x198] sm:$0xff]
    %v4120 = vld [vmem:[#allocation10 + $0x1a0] sm:$0xff]
    %v4121 = vld [vmem:[#allocation10 + $0x1a8] sm:$0xff]
    %v4122 = vld [vmem:[#allocation10 + $0x1b0] sm:$0xff]
    %v4123 = vld [vmem:[#allocation10 + $0x1b8] sm:$0xff]
    %v4124 = vld [vmem:[#allocation10 + $0x1c0] sm:$0xff]
    %v4125 = vld [vmem:[#allocation10 + $0x1c8] sm:$0xff]
    %v4126 = vld [vmem:[#allocation10 + $0x1d0] sm:$0xff]
    %v4127 = vld [vmem:[#allocation10 + $0x1d8] sm:$0xff]
    %v4128 = vld [vmem:[#allocation10 + $0x1e0] sm:$0xff]
    %v4129 = vld [vmem:[#allocation10 + $0x1e8] sm:$0xff]
    %v4130 = vld [vmem:[#allocation10 + $0x1f0] sm:$0xff]
    %v4131 = vld [vmem:[#allocation10 + $0x1f8] sm:$0xff]
    %4132 = vmatpush.msra.mxu0 %v4098
    %4133 = vmatpush.msra.mxu0 %v4096
    %4134 = vmatpush.msra.mxu0 %v4094
    %4135 = vmatpush.msra.mxu0 %v4092
    %4136 = vmatpush.msra.mxu0 %v4090
    %4137 = vmatpush.msra.mxu0 %v4088
    %4138 = vmatpush.msra.mxu0 %v4086
    %4139 = vmatpush.msra.mxu0 %v4084
    %4140 = vmatpush.msra.mxu0 %v4082
    %4141 = vmatpush.msra.mxu0 %v4080
    %4142 = vmatpush.msra.mxu0 %v4078
    %4143 = vmatpush.msra.mxu0 %v4076
    %4144 = vmatpush.msra.mxu0 %v4074
    %4145 = vmatpush.msra.mxu0 %v4072
    %4146 = vmatpush.msra.mxu0 %v4070
    %4147 = vmatpush.msra.mxu0 %v4068
    %4148 = vmatmul.f32.gmra.mxu0 %v3652
    %v4149 = vpop.f32.mrf.mxu0
    %v4150 = vadd.f32 0.0, %v4149
    %4151 = vmatmul.f32.gmra.mxu0 %v3655
    %v4152 = vpop.f32.mrf.mxu0
    %v4153 = vadd.f32 0.0, %v4152
    %4154 = vmatmul.f32.gmra.mxu0 %v3658
    %v4155 = vpop.f32.mrf.mxu0
    %v4156 = vadd.f32 0.0, %v4155
    %4157 = vmatmul.f32.gmra.mxu0 %v3661
    %v4158 = vpop.f32.mrf.mxu0
    %v4159 = vadd.f32 0.0, %v4158
    %4160 = vmatmul.f32.gmra.mxu0 %v3664
    %v4161 = vpop.f32.mrf.mxu0
    %v4162 = vadd.f32 0.0, %v4161
    %4163 = vmatmul.f32.gmra.mxu0 %v3667
    %v4164 = vpop.f32.mrf.mxu0
    %v4165 = vadd.f32 0.0, %v4164
    %4166 = vmatmul.f32.gmra.mxu0 %v3670
    %v4167 = vpop.f32.mrf.mxu0
    %v4168 = vadd.f32 0.0, %v4167
    %4169 = vmatmul.f32.gmra.mxu0 %v3673
    %v4170 = vpop.f32.mrf.mxu0
    %v4171 = vadd.f32 0.0, %v4170
    %4172 = vdwg.mxu0
    %4173 = vmatpush.msra.mxu0 %v4130
    %4174 = vmatpush.msra.mxu0 %v4128
    %4175 = vmatpush.msra.mxu0 %v4126
    %4176 = vmatpush.msra.mxu0 %v4124
    %4177 = vmatpush.msra.mxu0 %v4122
    %4178 = vmatpush.msra.mxu0 %v4120
    %4179 = vmatpush.msra.mxu0 %v4118
    %4180 = vmatpush.msra.mxu0 %v4116
    %4181 = vmatpush.msra.mxu0 %v4114
    %4182 = vmatpush.msra.mxu0 %v4112
    %4183 = vmatpush.msra.mxu0 %v4110
    %4184 = vmatpush.msra.mxu0 %v4108
    %4185 = vmatpush.msra.mxu0 %v4106
    %4186 = vmatpush.msra.mxu0 %v4104
    %4187 = vmatpush.msra.mxu0 %v4102
    %4188 = vmatpush.msra.mxu0 %v4100
    %4189 = vmatmul.f32.gmra.mxu0 %v3861
    %v4190 = vpop.f32.mrf.mxu0
    %v4191 = vadd.f32 %v4150, %v4190
    %4192 = vmatmul.f32.gmra.mxu0 %v3864
    %v4193 = vpop.f32.mrf.mxu0
    %v4194 = vadd.f32 %v4153, %v4193
    %4195 = vmatmul.f32.gmra.mxu0 %v3867
    %v4196 = vpop.f32.mrf.mxu0
    %v4197 = vadd.f32 %v4156, %v4196
    %4198 = vmatmul.f32.gmra.mxu0 %v3870
    %v4199 = vpop.f32.mrf.mxu0
    %v4200 = vadd.f32 %v4159, %v4199
    %4201 = vmatmul.f32.gmra.mxu0 %v3873
    %v4202 = vpop.f32.mrf.mxu0
    %v4203 = vadd.f32 %v4162, %v4202
    %4204 = vmatmul.f32.gmra.mxu0 %v3876
    %v4205 = vpop.f32.mrf.mxu0
    %v4206 = vadd.f32 %v4165, %v4205
    %4207 = vmatmul.f32.gmra.mxu0 %v3879
    %v4208 = vpop.f32.mrf.mxu0
    %v4209 = vadd.f32 %v4168, %v4208
    %4210 = vmatmul.f32.gmra.mxu0 %v3882
    %v4211 = vpop.f32.mrf.mxu0
    %v4212 = vadd.f32 %v4171, %v4211
    %4213 = vdwg.mxu0
    %4214 = vmatpush.msra.mxu0 %v4099
    %4215 = vmatpush.msra.mxu0 %v4097
    %4216 = vmatpush.msra.mxu0 %v4095
    %4217 = vmatpush.msra.mxu0 %v4093
    %4218 = vmatpush.msra.mxu0 %v4091
    %4219 = vmatpush.msra.mxu0 %v4089
    %4220 = vmatpush.msra.mxu0 %v4087
    %4221 = vmatpush.msra.mxu0 %v4085
    %4222 = vmatpush.msra.mxu0 %v4083
    %4223 = vmatpush.msra.mxu0 %v4081
    %4224 = vmatpush.msra.mxu0 %v4079
    %4225 = vmatpush.msra.mxu0 %v4077
    %4226 = vmatpush.msra.mxu0 %v4075
    %4227 = vmatpush.msra.mxu0 %v4073
    %4228 = vmatpush.msra.mxu0 %v4071
    %4229 = vmatpush.msra.mxu0 %v4069
    %4230 = vmatmul.f32.gmra.mxu0 %v3652
    %v4231 = vpop.f32.mrf.mxu0
    %v4232 = vadd.f32 0.0, %v4231
    %4233 = vmatmul.f32.gmra.mxu0 %v3655
    %v4234 = vpop.f32.mrf.mxu0
    %v4235 = vadd.f32 0.0, %v4234
    %4236 = vmatmul.f32.gmra.mxu0 %v3658
    %v4237 = vpop.f32.mrf.mxu0
    %v4238 = vadd.f32 0.0, %v4237
    %4239 = vmatmul.f32.gmra.mxu0 %v3661
    %v4240 = vpop.f32.mrf.mxu0
    %v4241 = vadd.f32 0.0, %v4240
    %4242 = vmatmul.f32.gmra.mxu0 %v3664
    %v4243 = vpop.f32.mrf.mxu0
    %v4244 = vadd.f32 0.0, %v4243
    %4245 = vmatmul.f32.gmra.mxu0 %v3667
    %v4246 = vpop.f32.mrf.mxu0
    %v4247 = vadd.f32 0.0, %v4246
    %4248 = vmatmul.f32.gmra.mxu0 %v3670
    %v4249 = vpop.f32.mrf.mxu0
    %v4250 = vadd.f32 0.0, %v4249
    %4251 = vmatmul.f32.gmra.mxu0 %v3673
    %v4252 = vpop.f32.mrf.mxu0
    %v4253 = vadd.f32 0.0, %v4252
    %4254 = vdwg.mxu0
    %4255 = vmatpush.msra.mxu0 %v4131
    %4256 = vmatpush.msra.mxu0 %v4129
    %4257 = vmatpush.msra.mxu0 %v4127
    %4258 = vmatpush.msra.mxu0 %v4125
    %4259 = vmatpush.msra.mxu0 %v4123
    %4260 = vmatpush.msra.mxu0 %v4121
    %4261 = vmatpush.msra.mxu0 %v4119
    %4262 = vmatpush.msra.mxu0 %v4117
    %4263 = vmatpush.msra.mxu0 %v4115
    %4264 = vmatpush.msra.mxu0 %v4113
    %4265 = vmatpush.msra.mxu0 %v4111
    %4266 = vmatpush.msra.mxu0 %v4109
    %4267 = vmatpush.msra.mxu0 %v4107
    %4268 = vmatpush.msra.mxu0 %v4105
    %4269 = vmatpush.msra.mxu0 %v4103
    %4270 = vmatpush.msra.mxu0 %v4101
    %4271 = vmatmul.f32.gmra.mxu0 %v3861
    %v4272 = vpop.f32.mrf.mxu0
    %v4273 = vadd.f32 %v4232, %v4272
    %4274 = vmatmul.f32.gmra.mxu0 %v3864
    %v4275 = vpop.f32.mrf.mxu0
    %v4276 = vadd.f32 %v4235, %v4275
    %4277 = vmatmul.f32.gmra.mxu0 %v3867
    %v4278 = vpop.f32.mrf.mxu0
    %v4279 = vadd.f32 %v4238, %v4278
    %4280 = vmatmul.f32.gmra.mxu0 %v3870
    %v4281 = vpop.f32.mrf.mxu0
    %v4282 = vadd.f32 %v4241, %v4281
    %4283 = vmatmul.f32.gmra.mxu0 %v3873
    %v4284 = vpop.f32.mrf.mxu0
    %v4285 = vadd.f32 %v4244, %v4284
    %4286 = vmatmul.f32.gmra.mxu0 %v3876
    %v4287 = vpop.f32.mrf.mxu0
    %v4288 = vadd.f32 %v4247, %v4287
    %4289 = vmatmul.f32.gmra.mxu0 %v3879
    %v4290 = vpop.f32.mrf.mxu0
    %v4291 = vadd.f32 %v4250, %v4290
    %4292 = vmatmul.f32.gmra.mxu0 %v3882
    %v4293 = vpop.f32.mrf.mxu0
    %v4294 = vadd.f32 %v4253, %v4293
    %4295 = vdwg.mxu0
    %v4296 = vadd.f32 %v4052, %v4191
    %v4297 = vadd.f32 %v4053, %v4273
    %v4298 = vadd.f32 %v4054, %v4194
    %v4299 = vadd.f32 %v4055, %v4276
    %v4300 = vadd.f32 %v4056, %v4197
    %v4301 = vadd.f32 %v4057, %v4279
    %v4302 = vadd.f32 %v4058, %v4200
    %v4303 = vadd.f32 %v4059, %v4282
    %v4304 = vadd.f32 %v4060, %v4203
    %v4305 = vadd.f32 %v4061, %v4285
    %v4306 = vadd.f32 %v4062, %v4206
    %v4307 = vadd.f32 %v4063, %v4288
    %v4308 = vadd.f32 %v4064, %v4209
    %v4309 = vadd.f32 %v4065, %v4291
    %v4310 = vadd.f32 %v4066, %v4212
    %v4311 = vadd.f32 %v4067, %v4294
    %v4312 = vld [vmem:[#allocation10 + $0x200] sm:$0xff]
    %v4313 = vld [vmem:[#allocation10 + $0x208] sm:$0xff]
    %v4314 = vld [vmem:[#allocation10 + $0x210] sm:$0xff]
    %v4315 = vld [vmem:[#allocation10 + $0x218] sm:$0xff]
    %v4316 = vld [vmem:[#allocation10 + $0x220] sm:$0xff]
    %v4317 = vld [vmem:[#allocation10 + $0x228] sm:$0xff]
    %v4318 = vld [vmem:[#allocation10 + $0x230] sm:$0xff]
    %v4319 = vld [vmem:[#allocation10 + $0x238] sm:$0xff]
    %v4320 = vld [vmem:[#allocation10 + $0x240] sm:$0xff]
    %v4321 = vld [vmem:[#allocation10 + $0x248] sm:$0xff]
    %v4322 = vld [vmem:[#allocation10 + $0x250] sm:$0xff]
    %v4323 = vld [vmem:[#allocation10 + $0x258] sm:$0xff]
    %v4324 = vld [vmem:[#allocation10 + $0x260] sm:$0xff]
    %v4325 = vld [vmem:[#allocation10 + $0x268] sm:$0xff]
    %v4326 = vld [vmem:[#allocation10 + $0x270] sm:$0xff]
    %v4327 = vld [vmem:[#allocation10 + $0x278] sm:$0xff]
    %v4328 = vld [vmem:[#allocation10 + $0x280] sm:$0xff]
    %v4329 = vld [vmem:[#allocation10 + $0x288] sm:$0xff]
    %v4330 = vld [vmem:[#allocation10 + $0x290] sm:$0xff]
    %v4331 = vld [vmem:[#allocation10 + $0x298] sm:$0xff]
    %v4332 = vld [vmem:[#allocation10 + $0x2a0] sm:$0xff]
    %v4333 = vld [vmem:[#allocation10 + $0x2a8] sm:$0xff]
    %v4334 = vld [vmem:[#allocation10 + $0x2b0] sm:$0xff]
    %v4335 = vld [vmem:[#allocation10 + $0x2b8] sm:$0xff]
    %v4336 = vld [vmem:[#allocation10 + $0x2c0] sm:$0xff]
    %v4337 = vld [vmem:[#allocation10 + $0x2c8] sm:$0xff]
    %v4338 = vld [vmem:[#allocation10 + $0x2d0] sm:$0xff]
    %v4339 = vld [vmem:[#allocation10 + $0x2d8] sm:$0xff]
    %v4340 = vld [vmem:[#allocation10 + $0x2e0] sm:$0xff]
    %v4341 = vld [vmem:[#allocation10 + $0x2e8] sm:$0xff]
    %v4342 = vld [vmem:[#allocation10 + $0x2f0] sm:$0xff]
    %v4343 = vld [vmem:[#allocation10 + $0x2f8] sm:$0xff]
    %v4344 = vld [vmem:[#allocation10 + $0x300] sm:$0xff]
    %v4345 = vld [vmem:[#allocation10 + $0x308] sm:$0xff]
    %v4346 = vld [vmem:[#allocation10 + $0x310] sm:$0xff]
    %v4347 = vld [vmem:[#allocation10 + $0x318] sm:$0xff]
    %v4348 = vld [vmem:[#allocation10 + $0x320] sm:$0xff]
    %v4349 = vld [vmem:[#allocation10 + $0x328] sm:$0xff]
    %v4350 = vld [vmem:[#allocation10 + $0x330] sm:$0xff]
    %v4351 = vld [vmem:[#allocation10 + $0x338] sm:$0xff]
    %v4352 = vld [vmem:[#allocation10 + $0x340] sm:$0xff]
    %v4353 = vld [vmem:[#allocation10 + $0x348] sm:$0xff]
    %v4354 = vld [vmem:[#allocation10 + $0x350] sm:$0xff]
    %v4355 = vld [vmem:[#allocation10 + $0x358] sm:$0xff]
    %v4356 = vld [vmem:[#allocation10 + $0x360] sm:$0xff]
    %v4357 = vld [vmem:[#allocation10 + $0x368] sm:$0xff]
    %v4358 = vld [vmem:[#allocation10 + $0x370] sm:$0xff]
    %v4359 = vld [vmem:[#allocation10 + $0x378] sm:$0xff]
    %v4360 = vld [vmem:[#allocation10 + $0x380] sm:$0xff]
    %v4361 = vld [vmem:[#allocation10 + $0x388] sm:$0xff]
    %v4362 = vld [vmem:[#allocation10 + $0x390] sm:$0xff]
    %v4363 = vld [vmem:[#allocation10 + $0x398] sm:$0xff]
    %v4364 = vld [vmem:[#allocation10 + $0x3a0] sm:$0xff]
    %v4365 = vld [vmem:[#allocation10 + $0x3a8] sm:$0xff]
    %v4366 = vld [vmem:[#allocation10 + $0x3b0] sm:$0xff]
    %v4367 = vld [vmem:[#allocation10 + $0x3b8] sm:$0xff]
    %v4368 = vld [vmem:[#allocation10 + $0x3c0] sm:$0xff]
    %v4369 = vld [vmem:[#allocation10 + $0x3c8] sm:$0xff]
    %v4370 = vld [vmem:[#allocation10 + $0x3d0] sm:$0xff]
    %v4371 = vld [vmem:[#allocation10 + $0x3d8] sm:$0xff]
    %v4372 = vld [vmem:[#allocation10 + $0x3e0] sm:$0xff]
    %v4373 = vld [vmem:[#allocation10 + $0x3e8] sm:$0xff]
    %v4374 = vld [vmem:[#allocation10 + $0x3f0] sm:$0xff]
    %v4375 = vld [vmem:[#allocation10 + $0x3f8] sm:$0xff]
    %4376 = vmatpush.msra.mxu0 %v4342
    %4377 = vmatpush.msra.mxu0 %v4340
    %4378 = vmatpush.msra.mxu0 %v4338
    %4379 = vmatpush.msra.mxu0 %v4336
    %4380 = vmatpush.msra.mxu0 %v4334
    %4381 = vmatpush.msra.mxu0 %v4332
    %4382 = vmatpush.msra.mxu0 %v4330
    %4383 = vmatpush.msra.mxu0 %v4328
    %4384 = vmatpush.msra.mxu0 %v4326
    %4385 = vmatpush.msra.mxu0 %v4324
    %4386 = vmatpush.msra.mxu0 %v4322
    %4387 = vmatpush.msra.mxu0 %v4320
    %4388 = vmatpush.msra.mxu0 %v4318
    %4389 = vmatpush.msra.mxu0 %v4316
    %4390 = vmatpush.msra.mxu0 %v4314
    %4391 = vmatpush.msra.mxu0 %v4312
    %4392 = vmatmul.f32.gmra.mxu0 %v3676
    %v4393 = vpop.f32.mrf.mxu0
    %v4394 = vadd.f32 0.0, %v4393
    %4395 = vmatmul.f32.gmra.mxu0 %v3679
    %v4396 = vpop.f32.mrf.mxu0
    %v4397 = vadd.f32 0.0, %v4396
    %4398 = vmatmul.f32.gmra.mxu0 %v3682
    %v4399 = vpop.f32.mrf.mxu0
    %v4400 = vadd.f32 0.0, %v4399
    %4401 = vmatmul.f32.gmra.mxu0 %v3685
    %v4402 = vpop.f32.mrf.mxu0
    %v4403 = vadd.f32 0.0, %v4402
    %4404 = vmatmul.f32.gmra.mxu0 %v3688
    %v4405 = vpop.f32.mrf.mxu0
    %v4406 = vadd.f32 0.0, %v4405
    %4407 = vmatmul.f32.gmra.mxu0 %v3691
    %v4408 = vpop.f32.mrf.mxu0
    %v4409 = vadd.f32 0.0, %v4408
    %4410 = vmatmul.f32.gmra.mxu0 %v3694
    %v4411 = vpop.f32.mrf.mxu0
    %v4412 = vadd.f32 0.0, %v4411
    %4413 = vmatmul.f32.gmra.mxu0 %v3697
    %v4414 = vpop.f32.mrf.mxu0
    %v4415 = vadd.f32 0.0, %v4414
    %4416 = vdwg.mxu0
    %4417 = vmatpush.msra.mxu0 %v4374
    %4418 = vmatpush.msra.mxu0 %v4372
    %4419 = vmatpush.msra.mxu0 %v4370
    %4420 = vmatpush.msra.mxu0 %v4368
    %4421 = vmatpush.msra.mxu0 %v4366
    %4422 = vmatpush.msra.mxu0 %v4364
    %4423 = vmatpush.msra.mxu0 %v4362
    %4424 = vmatpush.msra.mxu0 %v4360
    %4425 = vmatpush.msra.mxu0 %v4358
    %4426 = vmatpush.msra.mxu0 %v4356
    %4427 = vmatpush.msra.mxu0 %v4354
    %4428 = vmatpush.msra.mxu0 %v4352
    %4429 = vmatpush.msra.mxu0 %v4350
    %4430 = vmatpush.msra.mxu0 %v4348
    %4431 = vmatpush.msra.mxu0 %v4346
    %4432 = vmatpush.msra.mxu0 %v4344
    %4433 = vmatmul.f32.gmra.mxu0 %v3885
    %v4434 = vpop.f32.mrf.mxu0
    %v4435 = vadd.f32 %v4394, %v4434
    %4436 = vmatmul.f32.gmra.mxu0 %v3888
    %v4437 = vpop.f32.mrf.mxu0
    %v4438 = vadd.f32 %v4397, %v4437
    %4439 = vmatmul.f32.gmra.mxu0 %v3891
    %v4440 = vpop.f32.mrf.mxu0
    %v4441 = vadd.f32 %v4400, %v4440
    %4442 = vmatmul.f32.gmra.mxu0 %v3894
    %v4443 = vpop.f32.mrf.mxu0
    %v4444 = vadd.f32 %v4403, %v4443
    %4445 = vmatmul.f32.gmra.mxu0 %v3897
    %v4446 = vpop.f32.mrf.mxu0
    %v4447 = vadd.f32 %v4406, %v4446
    %4448 = vmatmul.f32.gmra.mxu0 %v3900
    %v4449 = vpop.f32.mrf.mxu0
    %v4450 = vadd.f32 %v4409, %v4449
    %4451 = vmatmul.f32.gmra.mxu0 %v3903
    %v4452 = vpop.f32.mrf.mxu0
    %v4453 = vadd.f32 %v4412, %v4452
    %4454 = vmatmul.f32.gmra.mxu0 %v3906
    %v4455 = vpop.f32.mrf.mxu0
    %v4456 = vadd.f32 %v4415, %v4455
    %4457 = vdwg.mxu0
    %4458 = vmatpush.msra.mxu0 %v4343
    %4459 = vmatpush.msra.mxu0 %v4341
    %4460 = vmatpush.msra.mxu0 %v4339
    %4461 = vmatpush.msra.mxu0 %v4337
    %4462 = vmatpush.msra.mxu0 %v4335
    %4463 = vmatpush.msra.mxu0 %v4333
    %4464 = vmatpush.msra.mxu0 %v4331
    %4465 = vmatpush.msra.mxu0 %v4329
    %4466 = vmatpush.msra.mxu0 %v4327
    %4467 = vmatpush.msra.mxu0 %v4325
    %4468 = vmatpush.msra.mxu0 %v4323
    %4469 = vmatpush.msra.mxu0 %v4321
    %4470 = vmatpush.msra.mxu0 %v4319
    %4471 = vmatpush.msra.mxu0 %v4317
    %4472 = vmatpush.msra.mxu0 %v4315
    %4473 = vmatpush.msra.mxu0 %v4313
    %4474 = vmatmul.f32.gmra.mxu0 %v3676
    %v4475 = vpop.f32.mrf.mxu0
    %v4476 = vadd.f32 0.0, %v4475
    %4477 = vmatmul.f32.gmra.mxu0 %v3679
    %v4478 = vpop.f32.mrf.mxu0
    %v4479 = vadd.f32 0.0, %v4478
    %4480 = vmatmul.f32.gmra.mxu0 %v3682
    %v4481 = vpop.f32.mrf.mxu0
    %v4482 = vadd.f32 0.0, %v4481
    %4483 = vmatmul.f32.gmra.mxu0 %v3685
    %v4484 = vpop.f32.mrf.mxu0
    %v4485 = vadd.f32 0.0, %v4484
    %4486 = vmatmul.f32.gmra.mxu0 %v3688
    %v4487 = vpop.f32.mrf.mxu0
    %v4488 = vadd.f32 0.0, %v4487
    %4489 = vmatmul.f32.gmra.mxu0 %v3691
    %v4490 = vpop.f32.mrf.mxu0
    %v4491 = vadd.f32 0.0, %v4490
    %4492 = vmatmul.f32.gmra.mxu0 %v3694
    %v4493 = vpop.f32.mrf.mxu0
    %v4494 = vadd.f32 0.0, %v4493
    %4495 = vmatmul.f32.gmra.mxu0 %v3697
    %v4496 = vpop.f32.mrf.mxu0
    %v4497 = vadd.f32 0.0, %v4496
    %4498 = vdwg.mxu0
    %4499 = vmatpush.msra.mxu0 %v4375
    %4500 = vmatpush.msra.mxu0 %v4373
    %4501 = vmatpush.msra.mxu0 %v4371
    %4502 = vmatpush.msra.mxu0 %v4369
    %4503 = vmatpush.msra.mxu0 %v4367
    %4504 = vmatpush.msra.mxu0 %v4365
    %4505 = vmatpush.msra.mxu0 %v4363
    %4506 = vmatpush.msra.mxu0 %v4361
    %4507 = vmatpush.msra.mxu0 %v4359
    %4508 = vmatpush.msra.mxu0 %v4357
    %4509 = vmatpush.msra.mxu0 %v4355
    %4510 = vmatpush.msra.mxu0 %v4353
    %4511 = vmatpush.msra.mxu0 %v4351
    %4512 = vmatpush.msra.mxu0 %v4349
    %4513 = vmatpush.msra.mxu0 %v4347
    %4514 = vmatpush.msra.mxu0 %v4345
    %4515 = vmatmul.f32.gmra.mxu0 %v3885
    %v4516 = vpop.f32.mrf.mxu0
    %v4517 = vadd.f32 %v4476, %v4516
    %4518 = vmatmul.f32.gmra.mxu0 %v3888
    %v4519 = vpop.f32.mrf.mxu0
    %v4520 = vadd.f32 %v4479, %v4519
    %4521 = vmatmul.f32.gmra.mxu0 %v3891
    %v4522 = vpop.f32.mrf.mxu0
    %v4523 = vadd.f32 %v4482, %v4522
    %4524 = vmatmul.f32.gmra.mxu0 %v3894
    %v4525 = vpop.f32.mrf.mxu0
    %v4526 = vadd.f32 %v4485, %v4525
    %4527 = vmatmul.f32.gmra.mxu0 %v3897
    %v4528 = vpop.f32.mrf.mxu0
    %v4529 = vadd.f32 %v4488, %v4528
    %4530 = vmatmul.f32.gmra.mxu0 %v3900
    %v4531 = vpop.f32.mrf.mxu0
    %v4532 = vadd.f32 %v4491, %v4531
    %4533 = vmatmul.f32.gmra.mxu0 %v3903
    %v4534 = vpop.f32.mrf.mxu0
    %v4535 = vadd.f32 %v4494, %v4534
    %4536 = vmatmul.f32.gmra.mxu0 %v3906
    %v4537 = vpop.f32.mrf.mxu0
    %v4538 = vadd.f32 %v4497, %v4537
    %4539 = vdwg.mxu0
    %v4540 = vadd.f32 %v4296, %v4435
    %v4541 = vadd.f32 %v4297, %v4517
    %v4542 = vadd.f32 %v4298, %v4438
    %v4543 = vadd.f32 %v4299, %v4520
    %v4544 = vadd.f32 %v4300, %v4441
    %v4545 = vadd.f32 %v4301, %v4523
    %v4546 = vadd.f32 %v4302, %v4444
    %v4547 = vadd.f32 %v4303, %v4526
    %v4548 = vadd.f32 %v4304, %v4447
    %v4549 = vadd.f32 %v4305, %v4529
    %v4550 = vadd.f32 %v4306, %v4450
    %v4551 = vadd.f32 %v4307, %v4532
    %v4552 = vadd.f32 %v4308, %v4453
    %v4553 = vadd.f32 %v4309, %v4535
    %v4554 = vadd.f32 %v4310, %v4456
    %v4555 = vadd.f32 %v4311, %v4538
    %v4556 = vld [vmem:[#allocation10 + $0x400] sm:$0xff]
    %v4557 = vld [vmem:[#allocation10 + $0x408] sm:$0xff]
    %v4558 = vld [vmem:[#allocation10 + $0x410] sm:$0xff]
    %v4559 = vld [vmem:[#allocation10 + $0x418] sm:$0xff]
    %v4560 = vld [vmem:[#allocation10 + $0x420] sm:$0xff]
    %v4561 = vld [vmem:[#allocation10 + $0x428] sm:$0xff]
    %v4562 = vld [vmem:[#allocation10 + $0x430] sm:$0xff]
    %v4563 = vld [vmem:[#allocation10 + $0x438] sm:$0xff]
    %v4564 = vld [vmem:[#allocation10 + $0x440] sm:$0xff]
    %v4565 = vld [vmem:[#allocation10 + $0x448] sm:$0xff]
    %v4566 = vld [vmem:[#allocation10 + $0x450] sm:$0xff]
    %v4567 = vld [vmem:[#allocation10 + $0x458] sm:$0xff]
    %v4568 = vld [vmem:[#allocation10 + $0x460] sm:$0xff]
    %v4569 = vld [vmem:[#allocation10 + $0x468] sm:$0xff]
    %v4570 = vld [vmem:[#allocation10 + $0x470] sm:$0xff]
    %v4571 = vld [vmem:[#allocation10 + $0x478] sm:$0xff]
    %v4572 = vld [vmem:[#allocation10 + $0x480] sm:$0xff]
    %v4573 = vld [vmem:[#allocation10 + $0x488] sm:$0xff]
    %v4574 = vld [vmem:[#allocation10 + $0x490] sm:$0xff]
    %v4575 = vld [vmem:[#allocation10 + $0x498] sm:$0xff]
    %v4576 = vld [vmem:[#allocation10 + $0x4a0] sm:$0xff]
    %v4577 = vld [vmem:[#allocation10 + $0x4a8] sm:$0xff]
    %v4578 = vld [vmem:[#allocation10 + $0x4b0] sm:$0xff]
    %v4579 = vld [vmem:[#allocation10 + $0x4b8] sm:$0xff]
    %v4580 = vld [vmem:[#allocation10 + $0x4c0] sm:$0xff]
    %v4581 = vld [vmem:[#allocation10 + $0x4c8] sm:$0xff]
    %v4582 = vld [vmem:[#allocation10 + $0x4d0] sm:$0xff]
    %v4583 = vld [vmem:[#allocation10 + $0x4d8] sm:$0xff]
    %v4584 = vld [vmem:[#allocation10 + $0x4e0] sm:$0xff]
    %v4585 = vld [vmem:[#allocation10 + $0x4e8] sm:$0xff]
    %v4586 = vld [vmem:[#allocation10 + $0x4f0] sm:$0xff]
    %v4587 = vld [vmem:[#allocation10 + $0x4f8] sm:$0xff]
    %v4588 = vld [vmem:[#allocation10 + $0x500] sm:$0xff]
    %v4589 = vld [vmem:[#allocation10 + $0x508] sm:$0xff]
    %v4590 = vld [vmem:[#allocation10 + $0x510] sm:$0xff]
    %v4591 = vld [vmem:[#allocation10 + $0x518] sm:$0xff]
    %v4592 = vld [vmem:[#allocation10 + $0x520] sm:$0xff]
    %v4593 = vld [vmem:[#allocation10 + $0x528] sm:$0xff]
    %v4594 = vld [vmem:[#allocation10 + $0x530] sm:$0xff]
    %v4595 = vld [vmem:[#allocation10 + $0x538] sm:$0xff]
    %v4596 = vld [vmem:[#allocation10 + $0x540] sm:$0xff]
    %v4597 = vld [vmem:[#allocation10 + $0x548] sm:$0xff]
    %v4598 = vld [vmem:[#allocation10 + $0x550] sm:$0xff]
    %v4599 = vld [vmem:[#allocation10 + $0x558] sm:$0xff]
    %v4600 = vld [vmem:[#allocation10 + $0x560] sm:$0xff]
    %v4601 = vld [vmem:[#allocation10 + $0x568] sm:$0xff]
    %v4602 = vld [vmem:[#allocation10 + $0x570] sm:$0xff]
    %v4603 = vld [vmem:[#allocation10 + $0x578] sm:$0xff]
    %v4604 = vld [vmem:[#allocation10 + $0x580] sm:$0xff]
    %v4605 = vld [vmem:[#allocation10 + $0x588] sm:$0xff]
    %v4606 = vld [vmem:[#allocation10 + $0x590] sm:$0xff]
    %v4607 = vld [vmem:[#allocation10 + $0x598] sm:$0xff]
    %v4608 = vld [vmem:[#allocation10 + $0x5a0] sm:$0xff]
    %v4609 = vld [vmem:[#allocation10 + $0x5a8] sm:$0xff]
    %v4610 = vld [vmem:[#allocation10 + $0x5b0] sm:$0xff]
    %v4611 = vld [vmem:[#allocation10 + $0x5b8] sm:$0xff]
    %v4612 = vld [vmem:[#allocation10 + $0x5c0] sm:$0xff]
    %v4613 = vld [vmem:[#allocation10 + $0x5c8] sm:$0xff]
    %v4614 = vld [vmem:[#allocation10 + $0x5d0] sm:$0xff]
    %v4615 = vld [vmem:[#allocation10 + $0x5d8] sm:$0xff]
    %v4616 = vld [vmem:[#allocation10 + $0x5e0] sm:$0xff]
    %v4617 = vld [vmem:[#allocation10 + $0x5e8] sm:$0xff]
    %v4618 = vld [vmem:[#allocation10 + $0x5f0] sm:$0xff]
    %v4619 = vld [vmem:[#allocation10 + $0x5f8] sm:$0xff]
    %4620 = vmatpush.msra.mxu0 %v4586
    %4621 = vmatpush.msra.mxu0 %v4584
    %4622 = vmatpush.msra.mxu0 %v4582
    %4623 = vmatpush.msra.mxu0 %v4580
    %4624 = vmatpush.msra.mxu0 %v4578
    %4625 = vmatpush.msra.mxu0 %v4576
    %4626 = vmatpush.msra.mxu0 %v4574
    %4627 = vmatpush.msra.mxu0 %v4572
    %4628 = vmatpush.msra.mxu0 %v4570
    %4629 = vmatpush.msra.mxu0 %v4568
    %4630 = vmatpush.msra.mxu0 %v4566
    %4631 = vmatpush.msra.mxu0 %v4564
    %4632 = vmatpush.msra.mxu0 %v4562
    %4633 = vmatpush.msra.mxu0 %v4560
    %4634 = vmatpush.msra.mxu0 %v4558
    %4635 = vmatpush.msra.mxu0 %v4556
    %4636 = vmatmul.f32.gmra.mxu0 %v3700
    %v4637 = vpop.f32.mrf.mxu0
    %v4638 = vadd.f32 0.0, %v4637
    %4639 = vmatmul.f32.gmra.mxu0 %v3703
    %v4640 = vpop.f32.mrf.mxu0
    %v4641 = vadd.f32 0.0, %v4640
    %4642 = vmatmul.f32.gmra.mxu0 %v3706
    %v4643 = vpop.f32.mrf.mxu0
    %v4644 = vadd.f32 0.0, %v4643
    %4645 = vmatmul.f32.gmra.mxu0 %v3709
    %v4646 = vpop.f32.mrf.mxu0
    %v4647 = vadd.f32 0.0, %v4646
    %4648 = vmatmul.f32.gmra.mxu0 %v3712
    %v4649 = vpop.f32.mrf.mxu0
    %v4650 = vadd.f32 0.0, %v4649
    %4651 = vmatmul.f32.gmra.mxu0 %v3715
    %v4652 = vpop.f32.mrf.mxu0
    %v4653 = vadd.f32 0.0, %v4652
    %4654 = vmatmul.f32.gmra.mxu0 %v3718
    %v4655 = vpop.f32.mrf.mxu0
    %v4656 = vadd.f32 0.0, %v4655
    %4657 = vmatmul.f32.gmra.mxu0 %v3721
    %v4658 = vpop.f32.mrf.mxu0
    %v4659 = vadd.f32 0.0, %v4658
    %4660 = vdwg.mxu0
    %4661 = vmatpush.msra.mxu0 %v4618
    %4662 = vmatpush.msra.mxu0 %v4616
    %4663 = vmatpush.msra.mxu0 %v4614
    %4664 = vmatpush.msra.mxu0 %v4612
    %4665 = vmatpush.msra.mxu0 %v4610
    %4666 = vmatpush.msra.mxu0 %v4608
    %4667 = vmatpush.msra.mxu0 %v4606
    %4668 = vmatpush.msra.mxu0 %v4604
    %4669 = vmatpush.msra.mxu0 %v4602
    %4670 = vmatpush.msra.mxu0 %v4600
    %4671 = vmatpush.msra.mxu0 %v4598
    %4672 = vmatpush.msra.mxu0 %v4596
    %4673 = vmatpush.msra.mxu0 %v4594
    %4674 = vmatpush.msra.mxu0 %v4592
    %4675 = vmatpush.msra.mxu0 %v4590
    %4676 = vmatpush.msra.mxu0 %v4588
    %4677 = vmatmul.f32.gmra.mxu0 %v3909
    %v4678 = vpop.f32.mrf.mxu0
    %v4679 = vadd.f32 %v4638, %v4678
    %4680 = vmatmul.f32.gmra.mxu0 %v3912
    %v4681 = vpop.f32.mrf.mxu0
    %v4682 = vadd.f32 %v4641, %v4681
    %4683 = vmatmul.f32.gmra.mxu0 %v3915
    %v4684 = vpop.f32.mrf.mxu0
    %v4685 = vadd.f32 %v4644, %v4684
    %4686 = vmatmul.f32.gmra.mxu0 %v3918
    %v4687 = vpop.f32.mrf.mxu0
    %v4688 = vadd.f32 %v4647, %v4687
    %4689 = vmatmul.f32.gmra.mxu0 %v3921
    %v4690 = vpop.f32.mrf.mxu0
    %v4691 = vadd.f32 %v4650, %v4690
    %4692 = vmatmul.f32.gmra.mxu0 %v3924
    %v4693 = vpop.f32.mrf.mxu0
    %v4694 = vadd.f32 %v4653, %v4693
    %4695 = vmatmul.f32.gmra.mxu0 %v3927
    %v4696 = vpop.f32.mrf.mxu0
    %v4697 = vadd.f32 %v4656, %v4696
    %4698 = vmatmul.f32.gmra.mxu0 %v3930
    %v4699 = vpop.f32.mrf.mxu0
    %v4700 = vadd.f32 %v4659, %v4699
    %4701 = vdwg.mxu0
    %4702 = vmatpush.msra.mxu0 %v4587
    %4703 = vmatpush.msra.mxu0 %v4585
    %4704 = vmatpush.msra.mxu0 %v4583
    %4705 = vmatpush.msra.mxu0 %v4581
    %4706 = vmatpush.msra.mxu0 %v4579
    %4707 = vmatpush.msra.mxu0 %v4577
    %4708 = vmatpush.msra.mxu0 %v4575
    %4709 = vmatpush.msra.mxu0 %v4573
    %4710 = vmatpush.msra.mxu0 %v4571
    %4711 = vmatpush.msra.mxu0 %v4569
    %4712 = vmatpush.msra.mxu0 %v4567
    %4713 = vmatpush.msra.mxu0 %v4565
    %4714 = vmatpush.msra.mxu0 %v4563
    %4715 = vmatpush.msra.mxu0 %v4561
    %4716 = vmatpush.msra.mxu0 %v4559
    %4717 = vmatpush.msra.mxu0 %v4557
    %4718 = vmatmul.f32.gmra.mxu0 %v3700
    %v4719 = vpop.f32.mrf.mxu0
    %v4720 = vadd.f32 0.0, %v4719
    %4721 = vmatmul.f32.gmra.mxu0 %v3703
    %v4722 = vpop.f32.mrf.mxu0
    %v4723 = vadd.f32 0.0, %v4722
    %4724 = vmatmul.f32.gmra.mxu0 %v3706
    %v4725 = vpop.f32.mrf.mxu0
    %v4726 = vadd.f32 0.0, %v4725
    %4727 = vmatmul.f32.gmra.mxu0 %v3709
    %v4728 = vpop.f32.mrf.mxu0
    %v4729 = vadd.f32 0.0, %v4728
    %4730 = vmatmul.f32.gmra.mxu0 %v3712
    %v4731 = vpop.f32.mrf.mxu0
    %v4732 = vadd.f32 0.0, %v4731
    %4733 = vmatmul.f32.gmra.mxu0 %v3715
    %v4734 = vpop.f32.mrf.mxu0
    %v4735 = vadd.f32 0.0, %v4734
    %4736 = vmatmul.f32.gmra.mxu0 %v3718
    %v4737 = vpop.f32.mrf.mxu0
    %v4738 = vadd.f32 0.0, %v4737
    %4739 = vmatmul.f32.gmra.mxu0 %v3721
    %v4740 = vpop.f32.mrf.mxu0
    %v4741 = vadd.f32 0.0, %v4740
    %4742 = vdwg.mxu0
    %4743 = vmatpush.msra.mxu0 %v4619
    %4744 = vmatpush.msra.mxu0 %v4617
    %4745 = vmatpush.msra.mxu0 %v4615
    %4746 = vmatpush.msra.mxu0 %v4613
    %4747 = vmatpush.msra.mxu0 %v4611
    %4748 = vmatpush.msra.mxu0 %v4609
    %4749 = vmatpush.msra.mxu0 %v4607
    %4750 = vmatpush.msra.mxu0 %v4605
    %4751 = vmatpush.msra.mxu0 %v4603
    %4752 = vmatpush.msra.mxu0 %v4601
    %4753 = vmatpush.msra.mxu0 %v4599
    %4754 = vmatpush.msra.mxu0 %v4597
    %4755 = vmatpush.msra.mxu0 %v4595
    %4756 = vmatpush.msra.mxu0 %v4593
    %4757 = vmatpush.msra.mxu0 %v4591
    %4758 = vmatpush.msra.mxu0 %v4589
    %4759 = vmatmul.f32.gmra.mxu0 %v3909
    %v4760 = vpop.f32.mrf.mxu0
    %v4761 = vadd.f32 %v4720, %v4760
    %4762 = vmatmul.f32.gmra.mxu0 %v3912
    %v4763 = vpop.f32.mrf.mxu0
    %v4764 = vadd.f32 %v4723, %v4763
    %4765 = vmatmul.f32.gmra.mxu0 %v3915
    %v4766 = vpop.f32.mrf.mxu0
    %v4767 = vadd.f32 %v4726, %v4766
    %4768 = vmatmul.f32.gmra.mxu0 %v3918
    %v4769 = vpop.f32.mrf.mxu0
    %v4770 = vadd.f32 %v4729, %v4769
    %4771 = vmatmul.f32.gmra.mxu0 %v3921
    %v4772 = vpop.f32.mrf.mxu0
    %v4773 = vadd.f32 %v4732, %v4772
    %4774 = vmatmul.f32.gmra.mxu0 %v3924
    %v4775 = vpop.f32.mrf.mxu0
    %v4776 = vadd.f32 %v4735, %v4775
    %4777 = vmatmul.f32.gmra.mxu0 %v3927
    %v4778 = vpop.f32.mrf.mxu0
    %v4779 = vadd.f32 %v4738, %v4778
    %4780 = vmatmul.f32.gmra.mxu0 %v3930
    %v4781 = vpop.f32.mrf.mxu0
    %v4782 = vadd.f32 %v4741, %v4781
    %4783 = vdwg.mxu0
    %v4784 = vadd.f32 %v4540, %v4679
    %v4785 = vadd.f32 %v4541, %v4761
    %v4786 = vadd.f32 %v4542, %v4682
    %v4787 = vadd.f32 %v4543, %v4764
    %v4788 = vadd.f32 %v4544, %v4685
    %v4789 = vadd.f32 %v4545, %v4767
    %v4790 = vadd.f32 %v4546, %v4688
    %v4791 = vadd.f32 %v4547, %v4770
    %v4792 = vadd.f32 %v4548, %v4691
    %v4793 = vadd.f32 %v4549, %v4773
    %v4794 = vadd.f32 %v4550, %v4694
    %v4795 = vadd.f32 %v4551, %v4776
    %v4796 = vadd.f32 %v4552, %v4697
    %v4797 = vadd.f32 %v4553, %v4779
    %v4798 = vadd.f32 %v4554, %v4700
    %v4799 = vadd.f32 %v4555, %v4782
    %v4800 = vld [vmem:[#allocation10 + $0x600] sm:$0xff]
    %v4801 = vld [vmem:[#allocation10 + $0x608] sm:$0xff]
    %v4802 = vld [vmem:[#allocation10 + $0x610] sm:$0xff]
    %v4803 = vld [vmem:[#allocation10 + $0x618] sm:$0xff]
    %v4804 = vld [vmem:[#allocation10 + $0x620] sm:$0xff]
    %v4805 = vld [vmem:[#allocation10 + $0x628] sm:$0xff]
    %v4806 = vld [vmem:[#allocation10 + $0x630] sm:$0xff]
    %v4807 = vld [vmem:[#allocation10 + $0x638] sm:$0xff]
    %v4808 = vld [vmem:[#allocation10 + $0x640] sm:$0xff]
    %v4809 = vld [vmem:[#allocation10 + $0x648] sm:$0xff]
    %v4810 = vld [vmem:[#allocation10 + $0x650] sm:$0xff]
    %v4811 = vld [vmem:[#allocation10 + $0x658] sm:$0xff]
    %v4812 = vld [vmem:[#allocation10 + $0x660] sm:$0xff]
    %v4813 = vld [vmem:[#allocation10 + $0x668] sm:$0xff]
    %v4814 = vld [vmem:[#allocation10 + $0x670] sm:$0xff]
    %v4815 = vld [vmem:[#allocation10 + $0x678] sm:$0xff]
    %v4816 = vld [vmem:[#allocation10 + $0x680] sm:$0xff]
    %v4817 = vld [vmem:[#allocation10 + $0x688] sm:$0xff]
    %v4818 = vld [vmem:[#allocation10 + $0x690] sm:$0xff]
    %v4819 = vld [vmem:[#allocation10 + $0x698] sm:$0xff]
    %v4820 = vld [vmem:[#allocation10 + $0x6a0] sm:$0xff]
    %v4821 = vld [vmem:[#allocation10 + $0x6a8] sm:$0xff]
    %v4822 = vld [vmem:[#allocation10 + $0x6b0] sm:$0xff]
    %v4823 = vld [vmem:[#allocation10 + $0x6b8] sm:$0xff]
    %v4824 = vld [vmem:[#allocation10 + $0x6c0] sm:$0xff]
    %v4825 = vld [vmem:[#allocation10 + $0x6c8] sm:$0xff]
    %v4826 = vld [vmem:[#allocation10 + $0x6d0] sm:$0xff]
    %v4827 = vld [vmem:[#allocation10 + $0x6d8] sm:$0xff]
    %v4828 = vld [vmem:[#allocation10 + $0x6e0] sm:$0xff]
    %v4829 = vld [vmem:[#allocation10 + $0x6e8] sm:$0xff]
    %v4830 = vld [vmem:[#allocation10 + $0x6f0] sm:$0xff]
    %v4831 = vld [vmem:[#allocation10 + $0x6f8] sm:$0xff]
    %v4832 = vld [vmem:[#allocation10 + $0x700] sm:$0xff]
    %v4833 = vld [vmem:[#allocation10 + $0x708] sm:$0xff]
    %v4834 = vld [vmem:[#allocation10 + $0x710] sm:$0xff]
    %v4835 = vld [vmem:[#allocation10 + $0x718] sm:$0xff]
    %v4836 = vld [vmem:[#allocation10 + $0x720] sm:$0xff]
    %v4837 = vld [vmem:[#allocation10 + $0x728] sm:$0xff]
    %v4838 = vld [vmem:[#allocation10 + $0x730] sm:$0xff]
    %v4839 = vld [vmem:[#allocation10 + $0x738] sm:$0xff]
    %v4840 = vld [vmem:[#allocation10 + $0x740] sm:$0xff]
    %v4841 = vld [vmem:[#allocation10 + $0x748] sm:$0xff]
    %v4842 = vld [vmem:[#allocation10 + $0x750] sm:$0xff]
    %v4843 = vld [vmem:[#allocation10 + $0x758] sm:$0xff]
    %v4844 = vld [vmem:[#allocation10 + $0x760] sm:$0xff]
    %v4845 = vld [vmem:[#allocation10 + $0x768] sm:$0xff]
    %v4846 = vld [vmem:[#allocation10 + $0x770] sm:$0xff]
    %v4847 = vld [vmem:[#allocation10 + $0x778] sm:$0xff]
    %v4848 = vld [vmem:[#allocation10 + $0x780] sm:$0xff]
    %v4849 = vld [vmem:[#allocation10 + $0x788] sm:$0xff]
    %v4850 = vld [vmem:[#allocation10 + $0x790] sm:$0xff]
    %v4851 = vld [vmem:[#allocation10 + $0x798] sm:$0xff]
    %v4852 = vld [vmem:[#allocation10 + $0x7a0] sm:$0xff]
    %v4853 = vld [vmem:[#allocation10 + $0x7a8] sm:$0xff]
    %v4854 = vld [vmem:[#allocation10 + $0x7b0] sm:$0xff]
    %v4855 = vld [vmem:[#allocation10 + $0x7b8] sm:$0xff]
    %v4856 = vld [vmem:[#allocation10 + $0x7c0] sm:$0xff]
    %v4857 = vld [vmem:[#allocation10 + $0x7c8] sm:$0xff]
    %v4858 = vld [vmem:[#allocation10 + $0x7d0] sm:$0xff]
    %v4859 = vld [vmem:[#allocation10 + $0x7d8] sm:$0xff]
    %v4860 = vld [vmem:[#allocation10 + $0x7e0] sm:$0xff]
    %v4861 = vld [vmem:[#allocation10 + $0x7e8] sm:$0xff]
    %v4862 = vld [vmem:[#allocation10 + $0x7f0] sm:$0xff]
    %v4863 = vld [vmem:[#allocation10 + $0x7f8] sm:$0xff]
    %4864 = vmatpush.msra.mxu0 %v4830
    %4865 = vmatpush.msra.mxu0 %v4828
    %4866 = vmatpush.msra.mxu0 %v4826
    %4867 = vmatpush.msra.mxu0 %v4824
    %4868 = vmatpush.msra.mxu0 %v4822
    %4869 = vmatpush.msra.mxu0 %v4820
    %4870 = vmatpush.msra.mxu0 %v4818
    %4871 = vmatpush.msra.mxu0 %v4816
    %4872 = vmatpush.msra.mxu0 %v4814
    %4873 = vmatpush.msra.mxu0 %v4812
    %4874 = vmatpush.msra.mxu0 %v4810
    %4875 = vmatpush.msra.mxu0 %v4808
    %4876 = vmatpush.msra.mxu0 %v4806
    %4877 = vmatpush.msra.mxu0 %v4804
    %4878 = vmatpush.msra.mxu0 %v4802
    %4879 = vmatpush.msra.mxu0 %v4800
    %4880 = vmatmul.f32.gmra.mxu0 %v3724
    %v4881 = vpop.f32.mrf.mxu0
    %v4882 = vadd.f32 0.0, %v4881
    %4883 = vmatmul.f32.gmra.mxu0 %v3727
    %v4884 = vpop.f32.mrf.mxu0
    %v4885 = vadd.f32 0.0, %v4884
    %4886 = vmatmul.f32.gmra.mxu0 %v3730
    %v4887 = vpop.f32.mrf.mxu0
    %v4888 = vadd.f32 0.0, %v4887
    %4889 = vmatmul.f32.gmra.mxu0 %v3733
    %v4890 = vpop.f32.mrf.mxu0
    %v4891 = vadd.f32 0.0, %v4890
    %4892 = vmatmul.f32.gmra.mxu0 %v3736
    %v4893 = vpop.f32.mrf.mxu0
    %v4894 = vadd.f32 0.0, %v4893
    %4895 = vmatmul.f32.gmra.mxu0 %v3739
    %v4896 = vpop.f32.mrf.mxu0
    %v4897 = vadd.f32 0.0, %v4896
    %4898 = vmatmul.f32.gmra.mxu0 %v3742
    %v4899 = vpop.f32.mrf.mxu0
    %v4900 = vadd.f32 0.0, %v4899
    %4901 = vmatmul.f32.gmra.mxu0 %v3745
    %v4902 = vpop.f32.mrf.mxu0
    %v4903 = vadd.f32 0.0, %v4902
    %4904 = vdwg.mxu0
    %4905 = vmatpush.msra.mxu0 %v4862
    %4906 = vmatpush.msra.mxu0 %v4860
    %4907 = vmatpush.msra.mxu0 %v4858
    %4908 = vmatpush.msra.mxu0 %v4856
    %4909 = vmatpush.msra.mxu0 %v4854
    %4910 = vmatpush.msra.mxu0 %v4852
    %4911 = vmatpush.msra.mxu0 %v4850
    %4912 = vmatpush.msra.mxu0 %v4848
    %4913 = vmatpush.msra.mxu0 %v4846
    %4914 = vmatpush.msra.mxu0 %v4844
    %4915 = vmatpush.msra.mxu0 %v4842
    %4916 = vmatpush.msra.mxu0 %v4840
    %4917 = vmatpush.msra.mxu0 %v4838
    %4918 = vmatpush.msra.mxu0 %v4836
    %4919 = vmatpush.msra.mxu0 %v4834
    %4920 = vmatpush.msra.mxu0 %v4832
    %4921 = vmatmul.f32.gmra.mxu0 %v3933
    %v4922 = vpop.f32.mrf.mxu0
    %v4923 = vadd.f32 %v4882, %v4922
    %4924 = vmatmul.f32.gmra.mxu0 %v3936
    %v4925 = vpop.f32.mrf.mxu0
    %v4926 = vadd.f32 %v4885, %v4925
    %4927 = vmatmul.f32.gmra.mxu0 %v3939
    %v4928 = vpop.f32.mrf.mxu0
    %v4929 = vadd.f32 %v4888, %v4928
    %4930 = vmatmul.f32.gmra.mxu0 %v3942
    %v4931 = vpop.f32.mrf.mxu0
    %v4932 = vadd.f32 %v4891, %v4931
    %4933 = vmatmul.f32.gmra.mxu0 %v3945
    %v4934 = vpop.f32.mrf.mxu0
    %v4935 = vadd.f32 %v4894, %v4934
    %4936 = vmatmul.f32.gmra.mxu0 %v3948
    %v4937 = vpop.f32.mrf.mxu0
    %v4938 = vadd.f32 %v4897, %v4937
    %4939 = vmatmul.f32.gmra.mxu0 %v3951
    %v4940 = vpop.f32.mrf.mxu0
    %v4941 = vadd.f32 %v4900, %v4940
    %4942 = vmatmul.f32.gmra.mxu0 %v3954
    %v4943 = vpop.f32.mrf.mxu0
    %v4944 = vadd.f32 %v4903, %v4943
    %4945 = vdwg.mxu0
    %4946 = vmatpush.msra.mxu0 %v4831
    %4947 = vmatpush.msra.mxu0 %v4829
    %4948 = vmatpush.msra.mxu0 %v4827
    %4949 = vmatpush.msra.mxu0 %v4825
    %4950 = vmatpush.msra.mxu0 %v4823
    %4951 = vmatpush.msra.mxu0 %v4821
    %4952 = vmatpush.msra.mxu0 %v4819
    %4953 = vmatpush.msra.mxu0 %v4817
    %4954 = vmatpush.msra.mxu0 %v4815
    %4955 = vmatpush.msra.mxu0 %v4813
    %4956 = vmatpush.msra.mxu0 %v4811
    %4957 = vmatpush.msra.mxu0 %v4809
    %4958 = vmatpush.msra.mxu0 %v4807
    %4959 = vmatpush.msra.mxu0 %v4805
    %4960 = vmatpush.msra.mxu0 %v4803
    %4961 = vmatpush.msra.mxu0 %v4801
    %4962 = vmatmul.f32.gmra.mxu0 %v3724
    %v4963 = vpop.f32.mrf.mxu0
    %v4964 = vadd.f32 0.0, %v4963
    %4965 = vmatmul.f32.gmra.mxu0 %v3727
    %v4966 = vpop.f32.mrf.mxu0
    %v4967 = vadd.f32 0.0, %v4966
    %4968 = vmatmul.f32.gmra.mxu0 %v3730
    %v4969 = vpop.f32.mrf.mxu0
    %v4970 = vadd.f32 0.0, %v4969
    %4971 = vmatmul.f32.gmra.mxu0 %v3733
    %v4972 = vpop.f32.mrf.mxu0
    %v4973 = vadd.f32 0.0, %v4972
    %4974 = vmatmul.f32.gmra.mxu0 %v3736
    %v4975 = vpop.f32.mrf.mxu0
    %v4976 = vadd.f32 0.0, %v4975
    %4977 = vmatmul.f32.gmra.mxu0 %v3739
    %v4978 = vpop.f32.mrf.mxu0
    %v4979 = vadd.f32 0.0, %v4978
    %4980 = vmatmul.f32.gmra.mxu0 %v3742
    %v4981 = vpop.f32.mrf.mxu0
    %v4982 = vadd.f32 0.0, %v4981
    %4983 = vmatmul.f32.gmra.mxu0 %v3745
    %v4984 = vpop.f32.mrf.mxu0
    %v4985 = vadd.f32 0.0, %v4984
    %4986 = vdwg.mxu0
    %4987 = vmatpush.msra.mxu0 %v4863
    %4988 = vmatpush.msra.mxu0 %v4861
    %4989 = vmatpush.msra.mxu0 %v4859
    %4990 = vmatpush.msra.mxu0 %v4857
    %4991 = vmatpush.msra.mxu0 %v4855
    %4992 = vmatpush.msra.mxu0 %v4853
    %4993 = vmatpush.msra.mxu0 %v4851
    %4994 = vmatpush.msra.mxu0 %v4849
    %4995 = vmatpush.msra.mxu0 %v4847
    %4996 = vmatpush.msra.mxu0 %v4845
    %4997 = vmatpush.msra.mxu0 %v4843
    %4998 = vmatpush.msra.mxu0 %v4841
    %4999 = vmatpush.msra.mxu0 %v4839
    %5000 = vmatpush.msra.mxu0 %v4837
    %5001 = vmatpush.msra.mxu0 %v4835
    %5002 = vmatpush.msra.mxu0 %v4833
    %5003 = vmatmul.f32.gmra.mxu0 %v3933
    %v5004 = vpop.f32.mrf.mxu0
    %v5005 = vadd.f32 %v4964, %v5004
    %5006 = vmatmul.f32.gmra.mxu0 %v3936
    %v5007 = vpop.f32.mrf.mxu0
    %v5008 = vadd.f32 %v4967, %v5007
    %5009 = vmatmul.f32.gmra.mxu0 %v3939
    %v5010 = vpop.f32.mrf.mxu0
    %v5011 = vadd.f32 %v4970, %v5010
    %5012 = vmatmul.f32.gmra.mxu0 %v3942
    %v5013 = vpop.f32.mrf.mxu0
    %v5014 = vadd.f32 %v4973, %v5013
    %5015 = vmatmul.f32.gmra.mxu0 %v3945
    %v5016 = vpop.f32.mrf.mxu0
    %v5017 = vadd.f32 %v4976, %v5016
    %5018 = vmatmul.f32.gmra.mxu0 %v3948
    %v5019 = vpop.f32.mrf.mxu0
    %v5020 = vadd.f32 %v4979, %v5019
    %5021 = vmatmul.f32.gmra.mxu0 %v3951
    %v5022 = vpop.f32.mrf.mxu0
    %v5023 = vadd.f32 %v4982, %v5022
    %5024 = vmatmul.f32.gmra.mxu0 %v3954
    %v5025 = vpop.f32.mrf.mxu0
    %v5026 = vadd.f32 %v4985, %v5025
    %5027 = vdwg.mxu0
    %v5028 = vadd.f32 %v4784, %v4923
    %v5029 = vadd.f32 %v4785, %v5005
    %v5030 = vadd.f32 %v4786, %v4926
    %v5031 = vadd.f32 %v4787, %v5008
    %v5032 = vadd.f32 %v4788, %v4929
    %v5033 = vadd.f32 %v4789, %v5011
    %v5034 = vadd.f32 %v4790, %v4932
    %v5035 = vadd.f32 %v4791, %v5014
    %v5036 = vadd.f32 %v4792, %v4935
    %v5037 = vadd.f32 %v4793, %v5017
    %v5038 = vadd.f32 %v4794, %v4938
    %v5039 = vadd.f32 %v4795, %v5020
    %v5040 = vadd.f32 %v4796, %v4941
    %v5041 = vadd.f32 %v4797, %v5023
    %v5042 = vadd.f32 %v4798, %v4944
    %v5043 = vadd.f32 %v4799, %v5026
    %v5044 = vld [vmem:[#allocation10 + $0x800] sm:$0xff]
    %v5045 = vld [vmem:[#allocation10 + $0x808] sm:$0xff]
    %v5046 = vld [vmem:[#allocation10 + $0x810] sm:$0xff]
    %v5047 = vld [vmem:[#allocation10 + $0x818] sm:$0xff]
    %v5048 = vld [vmem:[#allocation10 + $0x820] sm:$0xff]
    %v5049 = vld [vmem:[#allocation10 + $0x828] sm:$0xff]
    %v5050 = vld [vmem:[#allocation10 + $0x830] sm:$0xff]
    %v5051 = vld [vmem:[#allocation10 + $0x838] sm:$0xff]
    %v5052 = vld [vmem:[#allocation10 + $0x840] sm:$0xff]
    %v5053 = vld [vmem:[#allocation10 + $0x848] sm:$0xff]
    %v5054 = vld [vmem:[#allocation10 + $0x850] sm:$0xff]
    %v5055 = vld [vmem:[#allocation10 + $0x858] sm:$0xff]
    %v5056 = vld [vmem:[#allocation10 + $0x860] sm:$0xff]
    %v5057 = vld [vmem:[#allocation10 + $0x868] sm:$0xff]
    %v5058 = vld [vmem:[#allocation10 + $0x870] sm:$0xff]
    %v5059 = vld [vmem:[#allocation10 + $0x878] sm:$0xff]
    %v5060 = vld [vmem:[#allocation10 + $0x880] sm:$0xff]
    %v5061 = vld [vmem:[#allocation10 + $0x888] sm:$0xff]
    %v5062 = vld [vmem:[#allocation10 + $0x890] sm:$0xff]
    %v5063 = vld [vmem:[#allocation10 + $0x898] sm:$0xff]
    %v5064 = vld [vmem:[#allocation10 + $0x8a0] sm:$0xff]
    %v5065 = vld [vmem:[#allocation10 + $0x8a8] sm:$0xff]
    %v5066 = vld [vmem:[#allocation10 + $0x8b0] sm:$0xff]
    %v5067 = vld [vmem:[#allocation10 + $0x8b8] sm:$0xff]
    %v5068 = vld [vmem:[#allocation10 + $0x8c0] sm:$0xff]
    %v5069 = vld [vmem:[#allocation10 + $0x8c8] sm:$0xff]
    %v5070 = vld [vmem:[#allocation10 + $0x8d0] sm:$0xff]
    %v5071 = vld [vmem:[#allocation10 + $0x8d8] sm:$0xff]
    %v5072 = vld [vmem:[#allocation10 + $0x8e0] sm:$0xff]
    %v5073 = vld [vmem:[#allocation10 + $0x8e8] sm:$0xff]
    %v5074 = vld [vmem:[#allocation10 + $0x8f0] sm:$0xff]
    %v5075 = vld [vmem:[#allocation10 + $0x8f8] sm:$0xff]
    %v5076 = vld [vmem:[#allocation10 + $0x900] sm:$0xff]
    %v5077 = vld [vmem:[#allocation10 + $0x908] sm:$0xff]
    %v5078 = vld [vmem:[#allocation10 + $0x910] sm:$0xff]
    %v5079 = vld [vmem:[#allocation10 + $0x918] sm:$0xff]
    %v5080 = vld [vmem:[#allocation10 + $0x920] sm:$0xff]
    %v5081 = vld [vmem:[#allocation10 + $0x928] sm:$0xff]
    %v5082 = vld [vmem:[#allocation10 + $0x930] sm:$0xff]
    %v5083 = vld [vmem:[#allocation10 + $0x938] sm:$0xff]
    %v5084 = vld [vmem:[#allocation10 + $0x940] sm:$0xff]
    %v5085 = vld [vmem:[#allocation10 + $0x948] sm:$0xff]
    %v5086 = vld [vmem:[#allocation10 + $0x950] sm:$0xff]
    %v5087 = vld [vmem:[#allocation10 + $0x958] sm:$0xff]
    %v5088 = vld [vmem:[#allocation10 + $0x960] sm:$0xff]
    %v5089 = vld [vmem:[#allocation10 + $0x968] sm:$0xff]
    %v5090 = vld [vmem:[#allocation10 + $0x970] sm:$0xff]
    %v5091 = vld [vmem:[#allocation10 + $0x978] sm:$0xff]
    %v5092 = vld [vmem:[#allocation10 + $0x980] sm:$0xff]
    %v5093 = vld [vmem:[#allocation10 + $0x988] sm:$0xff]
    %v5094 = vld [vmem:[#allocation10 + $0x990] sm:$0xff]
    %v5095 = vld [vmem:[#allocation10 + $0x998] sm:$0xff]
    %v5096 = vld [vmem:[#allocation10 + $0x9a0] sm:$0xff]
    %v5097 = vld [vmem:[#allocation10 + $0x9a8] sm:$0xff]
    %v5098 = vld [vmem:[#allocation10 + $0x9b0] sm:$0xff]
    %v5099 = vld [vmem:[#allocation10 + $0x9b8] sm:$0xff]
    %v5100 = vld [vmem:[#allocation10 + $0x9c0] sm:$0xff]
    %v5101 = vld [vmem:[#allocation10 + $0x9c8] sm:$0xff]
    %v5102 = vld [vmem:[#allocation10 + $0x9d0] sm:$0xff]
    %v5103 = vld [vmem:[#allocation10 + $0x9d8] sm:$0xff]
    %v5104 = vld [vmem:[#allocation10 + $0x9e0] sm:$0xff]
    %v5105 = vld [vmem:[#allocation10 + $0x9e8] sm:$0xff]
    %v5106 = vld [vmem:[#allocation10 + $0x9f0] sm:$0xff]
    %v5107 = vld [vmem:[#allocation10 + $0x9f8] sm:$0xff]
    %5108 = vmatpush.msra.mxu0 %v5074
    %5109 = vmatpush.msra.mxu0 %v5072
    %5110 = vmatpush.msra.mxu0 %v5070
    %5111 = vmatpush.msra.mxu0 %v5068
    %5112 = vmatpush.msra.mxu0 %v5066
    %5113 = vmatpush.msra.mxu0 %v5064
    %5114 = vmatpush.msra.mxu0 %v5062
    %5115 = vmatpush.msra.mxu0 %v5060
    %5116 = vmatpush.msra.mxu0 %v5058
    %5117 = vmatpush.msra.mxu0 %v5056
    %5118 = vmatpush.msra.mxu0 %v5054
    %5119 = vmatpush.msra.mxu0 %v5052
    %5120 = vmatpush.msra.mxu0 %v5050
    %5121 = vmatpush.msra.mxu0 %v5048
    %5122 = vmatpush.msra.mxu0 %v5046
    %5123 = vmatpush.msra.mxu0 %v5044
    %5124 = vmatmul.f32.gmra.mxu0 %v3618
    %v5125 = vpop.f32.mrf.mxu0
    %v5126 = vadd.f32 0.0, %v5125
    %5127 = vmatmul.f32.gmra.mxu0 %v3620
    %v5128 = vpop.f32.mrf.mxu0
    %v5129 = vadd.f32 0.0, %v5128
    %5130 = vmatmul.f32.gmra.mxu0 %v3622
    %v5131 = vpop.f32.mrf.mxu0
    %v5132 = vadd.f32 0.0, %v5131
    %5133 = vmatmul.f32.gmra.mxu0 %v3624
    %v5134 = vpop.f32.mrf.mxu0
    %v5135 = vadd.f32 0.0, %v5134
    %5136 = vmatmul.f32.gmra.mxu0 %v3626
    %v5137 = vpop.f32.mrf.mxu0
    %v5138 = vadd.f32 0.0, %v5137
    %5139 = vmatmul.f32.gmra.mxu0 %v3628
    %v5140 = vpop.f32.mrf.mxu0
    %v5141 = vadd.f32 0.0, %v5140
    %5142 = vmatmul.f32.gmra.mxu0 %v3630
    %v5143 = vpop.f32.mrf.mxu0
    %v5144 = vadd.f32 0.0, %v5143
    %5145 = vmatmul.f32.gmra.mxu0 %v3632
    %v5146 = vpop.f32.mrf.mxu0
    %v5147 = vadd.f32 0.0, %v5146
    %5148 = vdwg.mxu0
    %5149 = vmatpush.msra.mxu0 %v5106
    %5150 = vmatpush.msra.mxu0 %v5104
    %5151 = vmatpush.msra.mxu0 %v5102
    %5152 = vmatpush.msra.mxu0 %v5100
    %5153 = vmatpush.msra.mxu0 %v5098
    %5154 = vmatpush.msra.mxu0 %v5096
    %5155 = vmatpush.msra.mxu0 %v5094
    %5156 = vmatpush.msra.mxu0 %v5092
    %5157 = vmatpush.msra.mxu0 %v5090
    %5158 = vmatpush.msra.mxu0 %v5088
    %5159 = vmatpush.msra.mxu0 %v5086
    %5160 = vmatpush.msra.mxu0 %v5084
    %5161 = vmatpush.msra.mxu0 %v5082
    %5162 = vmatpush.msra.mxu0 %v5080
    %5163 = vmatpush.msra.mxu0 %v5078
    %5164 = vmatpush.msra.mxu0 %v5076
    %5165 = vmatmul.f32.gmra.mxu0 %v3619
    %v5166 = vpop.f32.mrf.mxu0
    %v5167 = vadd.f32 %v5126, %v5166
    %5168 = vmatmul.f32.gmra.mxu0 %v3621
    %v5169 = vpop.f32.mrf.mxu0
    %v5170 = vadd.f32 %v5129, %v5169
    %5171 = vmatmul.f32.gmra.mxu0 %v3623
    %v5172 = vpop.f32.mrf.mxu0
    %v5173 = vadd.f32 %v5132, %v5172
    %5174 = vmatmul.f32.gmra.mxu0 %v3625
    %v5175 = vpop.f32.mrf.mxu0
    %v5176 = vadd.f32 %v5135, %v5175
    %5177 = vmatmul.f32.gmra.mxu0 %v3627
    %v5178 = vpop.f32.mrf.mxu0
    %v5179 = vadd.f32 %v5138, %v5178
    %5180 = vmatmul.f32.gmra.mxu0 %v3629
    %v5181 = vpop.f32.mrf.mxu0
    %v5182 = vadd.f32 %v5141, %v5181
    %5183 = vmatmul.f32.gmra.mxu0 %v3631
    %v5184 = vpop.f32.mrf.mxu0
    %v5185 = vadd.f32 %v5144, %v5184
    %5186 = vmatmul.f32.gmra.mxu0 %v3633
    %v5187 = vpop.f32.mrf.mxu0
    %v5188 = vadd.f32 %v5147, %v5187
    %5189 = vdwg.mxu0
    %5190 = vmatpush.msra.mxu0 %v5075
    %5191 = vmatpush.msra.mxu0 %v5073
    %5192 = vmatpush.msra.mxu0 %v5071
    %5193 = vmatpush.msra.mxu0 %v5069
    %5194 = vmatpush.msra.mxu0 %v5067
    %5195 = vmatpush.msra.mxu0 %v5065
    %5196 = vmatpush.msra.mxu0 %v5063
    %5197 = vmatpush.msra.mxu0 %v5061
    %5198 = vmatpush.msra.mxu0 %v5059
    %5199 = vmatpush.msra.mxu0 %v5057
    %5200 = vmatpush.msra.mxu0 %v5055
    %5201 = vmatpush.msra.mxu0 %v5053
    %5202 = vmatpush.msra.mxu0 %v5051
    %5203 = vmatpush.msra.mxu0 %v5049
    %5204 = vmatpush.msra.mxu0 %v5047
    %5205 = vmatpush.msra.mxu0 %v5045
    %5206 = vmatmul.f32.gmra.mxu0 %v3618
    %v5207 = vpop.f32.mrf.mxu0
    %v5208 = vadd.f32 0.0, %v5207
    %5209 = vmatmul.f32.gmra.mxu0 %v3620
    %v5210 = vpop.f32.mrf.mxu0
    %v5211 = vadd.f32 0.0, %v5210
    %5212 = vmatmul.f32.gmra.mxu0 %v3622
    %v5213 = vpop.f32.mrf.mxu0
    %v5214 = vadd.f32 0.0, %v5213
    %5215 = vmatmul.f32.gmra.mxu0 %v3624
    %v5216 = vpop.f32.mrf.mxu0
    %v5217 = vadd.f32 0.0, %v5216
    %5218 = vmatmul.f32.gmra.mxu0 %v3626
    %v5219 = vpop.f32.mrf.mxu0
    %v5220 = vadd.f32 0.0, %v5219
    %5221 = vmatmul.f32.gmra.mxu0 %v3628
    %v5222 = vpop.f32.mrf.mxu0
    %v5223 = vadd.f32 0.0, %v5222
    %5224 = vmatmul.f32.gmra.mxu0 %v3630
    %v5225 = vpop.f32.mrf.mxu0
    %v5226 = vadd.f32 0.0, %v5225
    %5227 = vmatmul.f32.gmra.mxu0 %v3632
    %v5228 = vpop.f32.mrf.mxu0
    %v5229 = vadd.f32 0.0, %v5228
    %5230 = vdwg.mxu0
    %5231 = vmatpush.msra.mxu0 %v5107
    %5232 = vmatpush.msra.mxu0 %v5105
    %5233 = vmatpush.msra.mxu0 %v5103
    %5234 = vmatpush.msra.mxu0 %v5101
    %5235 = vmatpush.msra.mxu0 %v5099
    %5236 = vmatpush.msra.mxu0 %v5097
    %5237 = vmatpush.msra.mxu0 %v5095
    %5238 = vmatpush.msra.mxu0 %v5093
    %5239 = vmatpush.msra.mxu0 %v5091
    %5240 = vmatpush.msra.mxu0 %v5089
    %5241 = vmatpush.msra.mxu0 %v5087
    %5242 = vmatpush.msra.mxu0 %v5085
    %5243 = vmatpush.msra.mxu0 %v5083
    %5244 = vmatpush.msra.mxu0 %v5081
    %5245 = vmatpush.msra.mxu0 %v5079
    %5246 = vmatpush.msra.mxu0 %v5077
    %5247 = vmatmul.f32.gmra.mxu0 %v3619
    %v5248 = vpop.f32.mrf.mxu0
    %v5249 = vadd.f32 %v5208, %v5248
    %5250 = vmatmul.f32.gmra.mxu0 %v3621
    %v5251 = vpop.f32.mrf.mxu0
    %v5252 = vadd.f32 %v5211, %v5251
    %5253 = vmatmul.f32.gmra.mxu0 %v3623
    %v5254 = vpop.f32.mrf.mxu0
    %v5255 = vadd.f32 %v5214, %v5254
    %5256 = vmatmul.f32.gmra.mxu0 %v3625
    %v5257 = vpop.f32.mrf.mxu0
    %v5258 = vadd.f32 %v5217, %v5257
    %5259 = vmatmul.f32.gmra.mxu0 %v3627
    %v5260 = vpop.f32.mrf.mxu0
    %v5261 = vadd.f32 %v5220, %v5260
    %5262 = vmatmul.f32.gmra.mxu0 %v3629
    %v5263 = vpop.f32.mrf.mxu0
    %v5264 = vadd.f32 %v5223, %v5263
    %5265 = vmatmul.f32.gmra.mxu0 %v3631
    %v5266 = vpop.f32.mrf.mxu0
    %v5267 = vadd.f32 %v5226, %v5266
    %5268 = vmatmul.f32.gmra.mxu0 %v3633
    %v5269 = vpop.f32.mrf.mxu0
    %v5270 = vadd.f32 %v5229, %v5269
    %5271 = vdwg.mxu0
    %v5272 = vadd.f32 %v5028, %v5167
    %v5273 = vadd.f32 %v5029, %v5249
    %v5274 = vadd.f32 %v5030, %v5170
    %v5275 = vadd.f32 %v5031, %v5252
    %v5276 = vadd.f32 %v5032, %v5173
    %v5277 = vadd.f32 %v5033, %v5255
    %v5278 = vadd.f32 %v5034, %v5176
    %v5279 = vadd.f32 %v5035, %v5258
    %v5280 = vadd.f32 %v5036, %v5179
    %v5281 = vadd.f32 %v5037, %v5261
    %v5282 = vadd.f32 %v5038, %v5182
    %v5283 = vadd.f32 %v5039, %v5264
    %v5284 = vadd.f32 %v5040, %v5185
    %v5285 = vadd.f32 %v5041, %v5267
    %v5286 = vadd.f32 %v5042, %v5188
    %v5287 = vadd.f32 %v5043, %v5270
    %v5288 = vld [vmem:[#allocation10 + $0xa00] sm:$0xff]
    %v5289 = vld [vmem:[#allocation10 + $0xa08] sm:$0xff]
    %v5290 = vld [vmem:[#allocation10 + $0xa10] sm:$0xff]
    %v5291 = vld [vmem:[#allocation10 + $0xa18] sm:$0xff]
    %v5292 = vld [vmem:[#allocation10 + $0xa20] sm:$0xff]
    %v5293 = vld [vmem:[#allocation10 + $0xa28] sm:$0xff]
    %v5294 = vld [vmem:[#allocation10 + $0xa30] sm:$0xff]
    %v5295 = vld [vmem:[#allocation10 + $0xa38] sm:$0xff]
    %v5296 = vld [vmem:[#allocation10 + $0xa40] sm:$0xff]
    %v5297 = vld [vmem:[#allocation10 + $0xa48] sm:$0xff]
    %v5298 = vld [vmem:[#allocation10 + $0xa50] sm:$0xff]
    %v5299 = vld [vmem:[#allocation10 + $0xa58] sm:$0xff]
    %v5300 = vld [vmem:[#allocation10 + $0xa60] sm:$0xff]
    %v5301 = vld [vmem:[#allocation10 + $0xa68] sm:$0xff]
    %v5302 = vld [vmem:[#allocation10 + $0xa70] sm:$0xff]
    %v5303 = vld [vmem:[#allocation10 + $0xa78] sm:$0xff]
    %v5304 = vld [vmem:[#allocation10 + $0xa80] sm:$0xff]
    %v5305 = vld [vmem:[#allocation10 + $0xa88] sm:$0xff]
    %v5306 = vld [vmem:[#allocation10 + $0xa90] sm:$0xff]
    %v5307 = vld [vmem:[#allocation10 + $0xa98] sm:$0xff]
    %v5308 = vld [vmem:[#allocation10 + $0xaa0] sm:$0xff]
    %v5309 = vld [vmem:[#allocation10 + $0xaa8] sm:$0xff]
    %v5310 = vld [vmem:[#allocation10 + $0xab0] sm:$0xff]
    %v5311 = vld [vmem:[#allocation10 + $0xab8] sm:$0xff]
    %v5312 = vld [vmem:[#allocation10 + $0xac0] sm:$0xff]
    %v5313 = vld [vmem:[#allocation10 + $0xac8] sm:$0xff]
    %v5314 = vld [vmem:[#allocation10 + $0xad0] sm:$0xff]
    %v5315 = vld [vmem:[#allocation10 + $0xad8] sm:$0xff]
    %v5316 = vld [vmem:[#allocation10 + $0xae0] sm:$0xff]
    %v5317 = vld [vmem:[#allocation10 + $0xae8] sm:$0xff]
    %v5318 = vld [vmem:[#allocation10 + $0xaf0] sm:$0xff]
    %v5319 = vld [vmem:[#allocation10 + $0xaf8] sm:$0xff]
    %v5320 = vld [vmem:[#allocation10 + $0xb00] sm:$0xff]
    %v5321 = vld [vmem:[#allocation10 + $0xb08] sm:$0xff]
    %v5322 = vld [vmem:[#allocation10 + $0xb10] sm:$0xff]
    %v5323 = vld [vmem:[#allocation10 + $0xb18] sm:$0xff]
    %v5324 = vld [vmem:[#allocation10 + $0xb20] sm:$0xff]
    %v5325 = vld [vmem:[#allocation10 + $0xb28] sm:$0xff]
    %v5326 = vld [vmem:[#allocation10 + $0xb30] sm:$0xff]
    %v5327 = vld [vmem:[#allocation10 + $0xb38] sm:$0xff]
    %v5328 = vld [vmem:[#allocation10 + $0xb40] sm:$0xff]
    %v5329 = vld [vmem:[#allocation10 + $0xb48] sm:$0xff]
    %v5330 = vld [vmem:[#allocation10 + $0xb50] sm:$0xff]
    %v5331 = vld [vmem:[#allocation10 + $0xb58] sm:$0xff]
    %v5332 = vld [vmem:[#allocation10 + $0xb60] sm:$0xff]
    %v5333 = vld [vmem:[#allocation10 + $0xb68] sm:$0xff]
    %v5334 = vld [vmem:[#allocation10 + $0xb70] sm:$0xff]
    %v5335 = vld [vmem:[#allocation10 + $0xb78] sm:$0xff]
    %v5336 = vld [vmem:[#allocation10 + $0xb80] sm:$0xff]
    %v5337 = vld [vmem:[#allocation10 + $0xb88] sm:$0xff]
    %v5338 = vld [vmem:[#allocation10 + $0xb90] sm:$0xff]
    %v5339 = vld [vmem:[#allocation10 + $0xb98] sm:$0xff]
    %v5340 = vld [vmem:[#allocation10 + $0xba0] sm:$0xff]
    %v5341 = vld [vmem:[#allocation10 + $0xba8] sm:$0xff]
    %v5342 = vld [vmem:[#allocation10 + $0xbb0] sm:$0xff]
    %v5343 = vld [vmem:[#allocation10 + $0xbb8] sm:$0xff]
    %v5344 = vld [vmem:[#allocation10 + $0xbc0] sm:$0xff]
    %v5345 = vld [vmem:[#allocation10 + $0xbc8] sm:$0xff]
    %v5346 = vld [vmem:[#allocation10 + $0xbd0] sm:$0xff]
    %v5347 = vld [vmem:[#allocation10 + $0xbd8] sm:$0xff]
    %v5348 = vld [vmem:[#allocation10 + $0xbe0] sm:$0xff]
    %v5349 = vld [vmem:[#allocation10 + $0xbe8] sm:$0xff]
    %v5350 = vld [vmem:[#allocation10 + $0xbf0] sm:$0xff]
    %v5351 = vld [vmem:[#allocation10 + $0xbf8] sm:$0xff]
    %5352 = vmatpush.msra.mxu0 %v5318
    %5353 = vmatpush.msra.mxu0 %v5316
    %5354 = vmatpush.msra.mxu0 %v5314
    %5355 = vmatpush.msra.mxu0 %v5312
    %5356 = vmatpush.msra.mxu0 %v5310
    %5357 = vmatpush.msra.mxu0 %v5308
    %5358 = vmatpush.msra.mxu0 %v5306
    %5359 = vmatpush.msra.mxu0 %v5304
    %5360 = vmatpush.msra.mxu0 %v5302
    %5361 = vmatpush.msra.mxu0 %v5300
    %5362 = vmatpush.msra.mxu0 %v5298
    %5363 = vmatpush.msra.mxu0 %v5296
    %5364 = vmatpush.msra.mxu0 %v5294
    %5365 = vmatpush.msra.mxu0 %v5292
    %5366 = vmatpush.msra.mxu0 %v5290
    %5367 = vmatpush.msra.mxu0 %v5288
    %5368 = vmatmul.f32.gmra.mxu0 %v3748
    %v5369 = vpop.f32.mrf.mxu0
    %v5370 = vadd.f32 0.0, %v5369
    %5371 = vmatmul.f32.gmra.mxu0 %v3751
    %v5372 = vpop.f32.mrf.mxu0
    %v5373 = vadd.f32 0.0, %v5372
    %5374 = vmatmul.f32.gmra.mxu0 %v3754
    %v5375 = vpop.f32.mrf.mxu0
    %v5376 = vadd.f32 0.0, %v5375
    %5377 = vmatmul.f32.gmra.mxu0 %v3757
    %v5378 = vpop.f32.mrf.mxu0
    %v5379 = vadd.f32 0.0, %v5378
    %5380 = vmatmul.f32.gmra.mxu0 %v3760
    %v5381 = vpop.f32.mrf.mxu0
    %v5382 = vadd.f32 0.0, %v5381
    %5383 = vmatmul.f32.gmra.mxu0 %v3763
    %v5384 = vpop.f32.mrf.mxu0
    %v5385 = vadd.f32 0.0, %v5384
    %5386 = vmatmul.f32.gmra.mxu0 %v3766
    %v5387 = vpop.f32.mrf.mxu0
    %v5388 = vadd.f32 0.0, %v5387
    %5389 = vmatmul.f32.gmra.mxu0 %v3769
    %v5390 = vpop.f32.mrf.mxu0
    %v5391 = vadd.f32 0.0, %v5390
    %5392 = vdwg.mxu0
    %5393 = vmatpush.msra.mxu0 %v5350
    %5394 = vmatpush.msra.mxu0 %v5348
    %5395 = vmatpush.msra.mxu0 %v5346
    %5396 = vmatpush.msra.mxu0 %v5344
    %5397 = vmatpush.msra.mxu0 %v5342
    %5398 = vmatpush.msra.mxu0 %v5340
    %5399 = vmatpush.msra.mxu0 %v5338
    %5400 = vmatpush.msra.mxu0 %v5336
    %5401 = vmatpush.msra.mxu0 %v5334
    %5402 = vmatpush.msra.mxu0 %v5332
    %5403 = vmatpush.msra.mxu0 %v5330
    %5404 = vmatpush.msra.mxu0 %v5328
    %5405 = vmatpush.msra.mxu0 %v5326
    %5406 = vmatpush.msra.mxu0 %v5324
    %5407 = vmatpush.msra.mxu0 %v5322
    %5408 = vmatpush.msra.mxu0 %v5320
    %5409 = vmatmul.f32.gmra.mxu0 %v3957
    %v5410 = vpop.f32.mrf.mxu0
    %v5411 = vadd.f32 %v5370, %v5410
    %5412 = vmatmul.f32.gmra.mxu0 %v3960
    %v5413 = vpop.f32.mrf.mxu0
    %v5414 = vadd.f32 %v5373, %v5413
    %5415 = vmatmul.f32.gmra.mxu0 %v3963
    %v5416 = vpop.f32.mrf.mxu0
    %v5417 = vadd.f32 %v5376, %v5416
    %5418 = vmatmul.f32.gmra.mxu0 %v3966
    %v5419 = vpop.f32.mrf.mxu0
    %v5420 = vadd.f32 %v5379, %v5419
    %5421 = vmatmul.f32.gmra.mxu0 %v3969
    %v5422 = vpop.f32.mrf.mxu0
    %v5423 = vadd.f32 %v5382, %v5422
    %5424 = vmatmul.f32.gmra.mxu0 %v3972
    %v5425 = vpop.f32.mrf.mxu0
    %v5426 = vadd.f32 %v5385, %v5425
    %5427 = vmatmul.f32.gmra.mxu0 %v3975
    %v5428 = vpop.f32.mrf.mxu0
    %v5429 = vadd.f32 %v5388, %v5428
    %5430 = vmatmul.f32.gmra.mxu0 %v3978
    %v5431 = vpop.f32.mrf.mxu0
    %v5432 = vadd.f32 %v5391, %v5431
    %5433 = vdwg.mxu0
    %5434 = vmatpush.msra.mxu0 %v5319
    %5435 = vmatpush.msra.mxu0 %v5317
    %5436 = vmatpush.msra.mxu0 %v5315
    %5437 = vmatpush.msra.mxu0 %v5313
    %5438 = vmatpush.msra.mxu0 %v5311
    %5439 = vmatpush.msra.mxu0 %v5309
    %5440 = vmatpush.msra.mxu0 %v5307
    %5441 = vmatpush.msra.mxu0 %v5305
    %5442 = vmatpush.msra.mxu0 %v5303
    %5443 = vmatpush.msra.mxu0 %v5301
    %5444 = vmatpush.msra.mxu0 %v5299
    %5445 = vmatpush.msra.mxu0 %v5297
    %5446 = vmatpush.msra.mxu0 %v5295
    %5447 = vmatpush.msra.mxu0 %v5293
    %5448 = vmatpush.msra.mxu0 %v5291
    %5449 = vmatpush.msra.mxu0 %v5289
    %5450 = vmatmul.f32.gmra.mxu0 %v3748
    %v5451 = vpop.f32.mrf.mxu0
    %v5452 = vadd.f32 0.0, %v5451
    %5453 = vmatmul.f32.gmra.mxu0 %v3751
    %v5454 = vpop.f32.mrf.mxu0
    %v5455 = vadd.f32 0.0, %v5454
    %5456 = vmatmul.f32.gmra.mxu0 %v3754
    %v5457 = vpop.f32.mrf.mxu0
    %v5458 = vadd.f32 0.0, %v5457
    %5459 = vmatmul.f32.gmra.mxu0 %v3757
    %v5460 = vpop.f32.mrf.mxu0
    %v5461 = vadd.f32 0.0, %v5460
    %5462 = vmatmul.f32.gmra.mxu0 %v3760
    %v5463 = vpop.f32.mrf.mxu0
    %v5464 = vadd.f32 0.0, %v5463
    %5465 = vmatmul.f32.gmra.mxu0 %v3763
    %v5466 = vpop.f32.mrf.mxu0
    %v5467 = vadd.f32 0.0, %v5466
    %5468 = vmatmul.f32.gmra.mxu0 %v3766
    %v5469 = vpop.f32.mrf.mxu0
    %v5470 = vadd.f32 0.0, %v5469
    %5471 = vmatmul.f32.gmra.mxu0 %v3769
    %v5472 = vpop.f32.mrf.mxu0
    %v5473 = vadd.f32 0.0, %v5472
    %5474 = vdwg.mxu0
    %5475 = vmatpush.msra.mxu0 %v5351
    %5476 = vmatpush.msra.mxu0 %v5349
    %5477 = vmatpush.msra.mxu0 %v5347
    %5478 = vmatpush.msra.mxu0 %v5345
    %5479 = vmatpush.msra.mxu0 %v5343
    %5480 = vmatpush.msra.mxu0 %v5341
    %5481 = vmatpush.msra.mxu0 %v5339
    %5482 = vmatpush.msra.mxu0 %v5337
    %5483 = vmatpush.msra.mxu0 %v5335
    %5484 = vmatpush.msra.mxu0 %v5333
    %5485 = vmatpush.msra.mxu0 %v5331
    %5486 = vmatpush.msra.mxu0 %v5329
    %5487 = vmatpush.msra.mxu0 %v5327
    %5488 = vmatpush.msra.mxu0 %v5325
    %5489 = vmatpush.msra.mxu0 %v5323
    %5490 = vmatpush.msra.mxu0 %v5321
    %5491 = vmatmul.f32.gmra.mxu0 %v3957
    %v5492 = vpop.f32.mrf.mxu0
    %v5493 = vadd.f32 %v5452, %v5492
    %5494 = vmatmul.f32.gmra.mxu0 %v3960
    %v5495 = vpop.f32.mrf.mxu0
    %v5496 = vadd.f32 %v5455, %v5495
    %5497 = vmatmul.f32.gmra.mxu0 %v3963
    %v5498 = vpop.f32.mrf.mxu0
    %v5499 = vadd.f32 %v5458, %v5498
    %5500 = vmatmul.f32.gmra.mxu0 %v3966
    %v5501 = vpop.f32.mrf.mxu0
    %v5502 = vadd.f32 %v5461, %v5501
    %5503 = vmatmul.f32.gmra.mxu0 %v3969
    %v5504 = vpop.f32.mrf.mxu0
    %v5505 = vadd.f32 %v5464, %v5504
    %5506 = vmatmul.f32.gmra.mxu0 %v3972
    %v5507 = vpop.f32.mrf.mxu0
    %v5508 = vadd.f32 %v5467, %v5507
    %5509 = vmatmul.f32.gmra.mxu0 %v3975
    %v5510 = vpop.f32.mrf.mxu0
    %v5511 = vadd.f32 %v5470, %v5510
    %5512 = vmatmul.f32.gmra.mxu0 %v3978
    %v5513 = vpop.f32.mrf.mxu0
    %v5514 = vadd.f32 %v5473, %v5513
    %5515 = vdwg.mxu0
    %v5516 = vadd.f32 %v5272, %v5411
    %v5517 = vadd.f32 %v5273, %v5493
    %v5518 = vadd.f32 %v5274, %v5414
    %v5519 = vadd.f32 %v5275, %v5496
    %v5520 = vadd.f32 %v5276, %v5417
    %v5521 = vadd.f32 %v5277, %v5499
    %v5522 = vadd.f32 %v5278, %v5420
    %v5523 = vadd.f32 %v5279, %v5502
    %v5524 = vadd.f32 %v5280, %v5423
    %v5525 = vadd.f32 %v5281, %v5505
    %v5526 = vadd.f32 %v5282, %v5426
    %v5527 = vadd.f32 %v5283, %v5508
    %v5528 = vadd.f32 %v5284, %v5429
    %v5529 = vadd.f32 %v5285, %v5511
    %v5530 = vadd.f32 %v5286, %v5432
    %v5531 = vadd.f32 %v5287, %v5514
    %v5532 = vld [vmem:[#allocation10 + $0xc00] sm:$0xff]
    %v5533 = vld [vmem:[#allocation10 + $0xc08] sm:$0xff]
    %v5534 = vld [vmem:[#allocation10 + $0xc10] sm:$0xff]
    %v5535 = vld [vmem:[#allocation10 + $0xc18] sm:$0xff]
    %v5536 = vld [vmem:[#allocation10 + $0xc20] sm:$0xff]
    %v5537 = vld [vmem:[#allocation10 + $0xc28] sm:$0xff]
    %v5538 = vld [vmem:[#allocation10 + $0xc30] sm:$0xff]
    %v5539 = vld [vmem:[#allocation10 + $0xc38] sm:$0xff]
    %v5540 = vld [vmem:[#allocation10 + $0xc40] sm:$0xff]
    %v5541 = vld [vmem:[#allocation10 + $0xc48] sm:$0xff]
    %v5542 = vld [vmem:[#allocation10 + $0xc50] sm:$0xff]
    %v5543 = vld [vmem:[#allocation10 + $0xc58] sm:$0xff]
    %v5544 = vld [vmem:[#allocation10 + $0xc60] sm:$0xff]
    %v5545 = vld [vmem:[#allocation10 + $0xc68] sm:$0xff]
    %v5546 = vld [vmem:[#allocation10 + $0xc70] sm:$0xff]
    %v5547 = vld [vmem:[#allocation10 + $0xc78] sm:$0xff]
    %v5548 = vld [vmem:[#allocation10 + $0xc80] sm:$0xff]
    %v5549 = vld [vmem:[#allocation10 + $0xc88] sm:$0xff]
    %v5550 = vld [vmem:[#allocation10 + $0xc90] sm:$0xff]
    %v5551 = vld [vmem:[#allocation10 + $0xc98] sm:$0xff]
    %v5552 = vld [vmem:[#allocation10 + $0xca0] sm:$0xff]
    %v5553 = vld [vmem:[#allocation10 + $0xca8] sm:$0xff]
    %v5554 = vld [vmem:[#allocation10 + $0xcb0] sm:$0xff]
    %v5555 = vld [vmem:[#allocation10 + $0xcb8] sm:$0xff]
    %v5556 = vld [vmem:[#allocation10 + $0xcc0] sm:$0xff]
    %v5557 = vld [vmem:[#allocation10 + $0xcc8] sm:$0xff]
    %v5558 = vld [vmem:[#allocation10 + $0xcd0] sm:$0xff]
    %v5559 = vld [vmem:[#allocation10 + $0xcd8] sm:$0xff]
    %v5560 = vld [vmem:[#allocation10 + $0xce0] sm:$0xff]
    %v5561 = vld [vmem:[#allocation10 + $0xce8] sm:$0xff]
    %v5562 = vld [vmem:[#allocation10 + $0xcf0] sm:$0xff]
    %v5563 = vld [vmem:[#allocation10 + $0xcf8] sm:$0xff]
    %v5564 = vld [vmem:[#allocation10 + $0xd00] sm:$0xff]
    %v5565 = vld [vmem:[#allocation10 + $0xd08] sm:$0xff]
    %v5566 = vld [vmem:[#allocation10 + $0xd10] sm:$0xff]
    %v5567 = vld [vmem:[#allocation10 + $0xd18] sm:$0xff]
    %v5568 = vld [vmem:[#allocation10 + $0xd20] sm:$0xff]
    %v5569 = vld [vmem:[#allocation10 + $0xd28] sm:$0xff]
    %v5570 = vld [vmem:[#allocation10 + $0xd30] sm:$0xff]
    %v5571 = vld [vmem:[#allocation10 + $0xd38] sm:$0xff]
    %v5572 = vld [vmem:[#allocation10 + $0xd40] sm:$0xff]
    %v5573 = vld [vmem:[#allocation10 + $0xd48] sm:$0xff]
    %v5574 = vld [vmem:[#allocation10 + $0xd50] sm:$0xff]
    %v5575 = vld [vmem:[#allocation10 + $0xd58] sm:$0xff]
    %v5576 = vld [vmem:[#allocation10 + $0xd60] sm:$0xff]
    %v5577 = vld [vmem:[#allocation10 + $0xd68] sm:$0xff]
    %v5578 = vld [vmem:[#allocation10 + $0xd70] sm:$0xff]
    %v5579 = vld [vmem:[#allocation10 + $0xd78] sm:$0xff]
    %v5580 = vld [vmem:[#allocation10 + $0xd80] sm:$0xff]
    %v5581 = vld [vmem:[#allocation10 + $0xd88] sm:$0xff]
    %v5582 = vld [vmem:[#allocation10 + $0xd90] sm:$0xff]
    %v5583 = vld [vmem:[#allocation10 + $0xd98] sm:$0xff]
    %v5584 = vld [vmem:[#allocation10 + $0xda0] sm:$0xff]
    %v5585 = vld [vmem:[#allocation10 + $0xda8] sm:$0xff]
    %v5586 = vld [vmem:[#allocation10 + $0xdb0] sm:$0xff]
    %v5587 = vld [vmem:[#allocation10 + $0xdb8] sm:$0xff]
    %v5588 = vld [vmem:[#allocation10 + $0xdc0] sm:$0xff]
    %v5589 = vld [vmem:[#allocation10 + $0xdc8] sm:$0xff]
    %v5590 = vld [vmem:[#allocation10 + $0xdd0] sm:$0xff]
    %v5591 = vld [vmem:[#allocation10 + $0xdd8] sm:$0xff]
    %v5592 = vld [vmem:[#allocation10 + $0xde0] sm:$0xff]
    %v5593 = vld [vmem:[#allocation10 + $0xde8] sm:$0xff]
    %v5594 = vld [vmem:[#allocation10 + $0xdf0] sm:$0xff]
    %v5595 = vld [vmem:[#allocation10 + $0xdf8] sm:$0xff]
    %5596 = vmatpush.msra.mxu0 %v5562
    %5597 = vmatpush.msra.mxu0 %v5560
    %5598 = vmatpush.msra.mxu0 %v5558
    %5599 = vmatpush.msra.mxu0 %v5556
    %5600 = vmatpush.msra.mxu0 %v5554
    %5601 = vmatpush.msra.mxu0 %v5552
    %5602 = vmatpush.msra.mxu0 %v5550
    %5603 = vmatpush.msra.mxu0 %v5548
    %5604 = vmatpush.msra.mxu0 %v5546
    %5605 = vmatpush.msra.mxu0 %v5544
    %5606 = vmatpush.msra.mxu0 %v5542
    %5607 = vmatpush.msra.mxu0 %v5540
    %5608 = vmatpush.msra.mxu0 %v5538
    %5609 = vmatpush.msra.mxu0 %v5536
    %5610 = vmatpush.msra.mxu0 %v5534
    %5611 = vmatpush.msra.mxu0 %v5532
    %5612 = vmatmul.f32.gmra.mxu0 %v3772
    %v5613 = vpop.f32.mrf.mxu0
    %v5614 = vadd.f32 0.0, %v5613
    %5615 = vmatmul.f32.gmra.mxu0 %v3775
    %v5616 = vpop.f32.mrf.mxu0
    %v5617 = vadd.f32 0.0, %v5616
    %5618 = vmatmul.f32.gmra.mxu0 %v3778
    %v5619 = vpop.f32.mrf.mxu0
    %v5620 = vadd.f32 0.0, %v5619
    %5621 = vmatmul.f32.gmra.mxu0 %v3781
    %v5622 = vpop.f32.mrf.mxu0
    %v5623 = vadd.f32 0.0, %v5622
    %5624 = vmatmul.f32.gmra.mxu0 %v3784
    %v5625 = vpop.f32.mrf.mxu0
    %v5626 = vadd.f32 0.0, %v5625
    %5627 = vmatmul.f32.gmra.mxu0 %v3787
    %v5628 = vpop.f32.mrf.mxu0
    %v5629 = vadd.f32 0.0, %v5628
    %5630 = vmatmul.f32.gmra.mxu0 %v3790
    %v5631 = vpop.f32.mrf.mxu0
    %v5632 = vadd.f32 0.0, %v5631
    %5633 = vmatmul.f32.gmra.mxu0 %v3793
    %v5634 = vpop.f32.mrf.mxu0
    %v5635 = vadd.f32 0.0, %v5634
    %5636 = vdwg.mxu0
    %5637 = vmatpush.msra.mxu0 %v5594
    %5638 = vmatpush.msra.mxu0 %v5592
    %5639 = vmatpush.msra.mxu0 %v5590
    %5640 = vmatpush.msra.mxu0 %v5588
    %5641 = vmatpush.msra.mxu0 %v5586
    %5642 = vmatpush.msra.mxu0 %v5584
    %5643 = vmatpush.msra.mxu0 %v5582
    %5644 = vmatpush.msra.mxu0 %v5580
    %5645 = vmatpush.msra.mxu0 %v5578
    %5646 = vmatpush.msra.mxu0 %v5576
    %5647 = vmatpush.msra.mxu0 %v5574
    %5648 = vmatpush.msra.mxu0 %v5572
    %5649 = vmatpush.msra.mxu0 %v5570
    %5650 = vmatpush.msra.mxu0 %v5568
    %5651 = vmatpush.msra.mxu0 %v5566
    %5652 = vmatpush.msra.mxu0 %v5564
    %5653 = vmatmul.f32.gmra.mxu0 %v3981
    %v5654 = vpop.f32.mrf.mxu0
    %v5655 = vadd.f32 %v5614, %v5654
    %5656 = vmatmul.f32.gmra.mxu0 %v3984
    %v5657 = vpop.f32.mrf.mxu0
    %v5658 = vadd.f32 %v5617, %v5657
    %5659 = vmatmul.f32.gmra.mxu0 %v3987
    %v5660 = vpop.f32.mrf.mxu0
    %v5661 = vadd.f32 %v5620, %v5660
    %5662 = vmatmul.f32.gmra.mxu0 %v3990
    %v5663 = vpop.f32.mrf.mxu0
    %v5664 = vadd.f32 %v5623, %v5663
    %5665 = vmatmul.f32.gmra.mxu0 %v3993
    %v5666 = vpop.f32.mrf.mxu0
    %v5667 = vadd.f32 %v5626, %v5666
    %5668 = vmatmul.f32.gmra.mxu0 %v3996
    %v5669 = vpop.f32.mrf.mxu0
    %v5670 = vadd.f32 %v5629, %v5669
    %5671 = vmatmul.f32.gmra.mxu0 %v3999
    %v5672 = vpop.f32.mrf.mxu0
    %v5673 = vadd.f32 %v5632, %v5672
    %5674 = vmatmul.f32.gmra.mxu0 %v4002
    %v5675 = vpop.f32.mrf.mxu0
    %v5676 = vadd.f32 %v5635, %v5675
    %5677 = vdwg.mxu0
    %5678 = vmatpush.msra.mxu0 %v5563
    %5679 = vmatpush.msra.mxu0 %v5561
    %5680 = vmatpush.msra.mxu0 %v5559
    %5681 = vmatpush.msra.mxu0 %v5557
    %5682 = vmatpush.msra.mxu0 %v5555
    %5683 = vmatpush.msra.mxu0 %v5553
    %5684 = vmatpush.msra.mxu0 %v5551
    %5685 = vmatpush.msra.mxu0 %v5549
    %5686 = vmatpush.msra.mxu0 %v5547
    %5687 = vmatpush.msra.mxu0 %v5545
    %5688 = vmatpush.msra.mxu0 %v5543
    %5689 = vmatpush.msra.mxu0 %v5541
    %5690 = vmatpush.msra.mxu0 %v5539
    %5691 = vmatpush.msra.mxu0 %v5537
    %5692 = vmatpush.msra.mxu0 %v5535
    %5693 = vmatpush.msra.mxu0 %v5533
    %5694 = vmatmul.f32.gmra.mxu0 %v3772
    %v5695 = vpop.f32.mrf.mxu0
    %v5696 = vadd.f32 0.0, %v5695
    %5697 = vmatmul.f32.gmra.mxu0 %v3775
    %v5698 = vpop.f32.mrf.mxu0
    %v5699 = vadd.f32 0.0, %v5698
    %5700 = vmatmul.f32.gmra.mxu0 %v3778
    %v5701 = vpop.f32.mrf.mxu0
    %v5702 = vadd.f32 0.0, %v5701
    %5703 = vmatmul.f32.gmra.mxu0 %v3781
    %v5704 = vpop.f32.mrf.mxu0
    %v5705 = vadd.f32 0.0, %v5704
    %5706 = vmatmul.f32.gmra.mxu0 %v3784
    %v5707 = vpop.f32.mrf.mxu0
    %v5708 = vadd.f32 0.0, %v5707
    %5709 = vmatmul.f32.gmra.mxu0 %v3787
    %v5710 = vpop.f32.mrf.mxu0
    %v5711 = vadd.f32 0.0, %v5710
    %5712 = vmatmul.f32.gmra.mxu0 %v3790
    %v5713 = vpop.f32.mrf.mxu0
    %v5714 = vadd.f32 0.0, %v5713
    %5715 = vmatmul.f32.gmra.mxu0 %v3793
    %v5716 = vpop.f32.mrf.mxu0
    %v5717 = vadd.f32 0.0, %v5716
    %5718 = vdwg.mxu0
    %5719 = vmatpush.msra.mxu0 %v5595
    %5720 = vmatpush.msra.mxu0 %v5593
    %5721 = vmatpush.msra.mxu0 %v5591
    %5722 = vmatpush.msra.mxu0 %v5589
    %5723 = vmatpush.msra.mxu0 %v5587
    %5724 = vmatpush.msra.mxu0 %v5585
    %5725 = vmatpush.msra.mxu0 %v5583
    %5726 = vmatpush.msra.mxu0 %v5581
    %5727 = vmatpush.msra.mxu0 %v5579
    %5728 = vmatpush.msra.mxu0 %v5577
    %5729 = vmatpush.msra.mxu0 %v5575
    %5730 = vmatpush.msra.mxu0 %v5573
    %5731 = vmatpush.msra.mxu0 %v5571
    %5732 = vmatpush.msra.mxu0 %v5569
    %5733 = vmatpush.msra.mxu0 %v5567
    %5734 = vmatpush.msra.mxu0 %v5565
    %5735 = vmatmul.f32.gmra.mxu0 %v3981
    %v5736 = vpop.f32.mrf.mxu0
    %v5737 = vadd.f32 %v5696, %v5736
    %5738 = vmatmul.f32.gmra.mxu0 %v3984
    %v5739 = vpop.f32.mrf.mxu0
    %v5740 = vadd.f32 %v5699, %v5739
    %5741 = vmatmul.f32.gmra.mxu0 %v3987
    %v5742 = vpop.f32.mrf.mxu0
    %v5743 = vadd.f32 %v5702, %v5742
    %5744 = vmatmul.f32.gmra.mxu0 %v3990
    %v5745 = vpop.f32.mrf.mxu0
    %v5746 = vadd.f32 %v5705, %v5745
    %5747 = vmatmul.f32.gmra.mxu0 %v3993
    %v5748 = vpop.f32.mrf.mxu0
    %v5749 = vadd.f32 %v5708, %v5748
    %5750 = vmatmul.f32.gmra.mxu0 %v3996
    %v5751 = vpop.f32.mrf.mxu0
    %v5752 = vadd.f32 %v5711, %v5751
    %5753 = vmatmul.f32.gmra.mxu0 %v3999
    %v5754 = vpop.f32.mrf.mxu0
    %v5755 = vadd.f32 %v5714, %v5754
    %5756 = vmatmul.f32.gmra.mxu0 %v4002
    %v5757 = vpop.f32.mrf.mxu0
    %v5758 = vadd.f32 %v5717, %v5757
    %5759 = vdwg.mxu0
    %v5760 = vadd.f32 %v5516, %v5655
    %v5761 = vadd.f32 %v5517, %v5737
    %v5762 = vadd.f32 %v5518, %v5658
    %v5763 = vadd.f32 %v5519, %v5740
    %v5764 = vadd.f32 %v5520, %v5661
    %v5765 = vadd.f32 %v5521, %v5743
    %v5766 = vadd.f32 %v5522, %v5664
    %v5767 = vadd.f32 %v5523, %v5746
    %v5768 = vadd.f32 %v5524, %v5667
    %v5769 = vadd.f32 %v5525, %v5749
    %v5770 = vadd.f32 %v5526, %v5670
    %v5771 = vadd.f32 %v5527, %v5752
    %v5772 = vadd.f32 %v5528, %v5673
    %v5773 = vadd.f32 %v5529, %v5755
    %v5774 = vadd.f32 %v5530, %v5676
    %v5775 = vadd.f32 %v5531, %v5758
    %v5776 = vld [vmem:[#allocation10 + $0xe00] sm:$0xff]
    %v5777 = vld [vmem:[#allocation10 + $0xe08] sm:$0xff]
    %v5778 = vld [vmem:[#allocation10 + $0xe10] sm:$0xff]
    %v5779 = vld [vmem:[#allocation10 + $0xe18] sm:$0xff]
    %v5780 = vld [vmem:[#allocation10 + $0xe20] sm:$0xff]
    %v5781 = vld [vmem:[#allocation10 + $0xe28] sm:$0xff]
    %v5782 = vld [vmem:[#allocation10 + $0xe30] sm:$0xff]
    %v5783 = vld [vmem:[#allocation10 + $0xe38] sm:$0xff]
    %v5784 = vld [vmem:[#allocation10 + $0xe40] sm:$0xff]
    %v5785 = vld [vmem:[#allocation10 + $0xe48] sm:$0xff]
    %v5786 = vld [vmem:[#allocation10 + $0xe50] sm:$0xff]
    %v5787 = vld [vmem:[#allocation10 + $0xe58] sm:$0xff]
    %v5788 = vld [vmem:[#allocation10 + $0xe60] sm:$0xff]
    %v5789 = vld [vmem:[#allocation10 + $0xe68] sm:$0xff]
    %v5790 = vld [vmem:[#allocation10 + $0xe70] sm:$0xff]
    %v5791 = vld [vmem:[#allocation10 + $0xe78] sm:$0xff]
    %v5792 = vld [vmem:[#allocation10 + $0xe80] sm:$0xff]
    %v5793 = vld [vmem:[#allocation10 + $0xe88] sm:$0xff]
    %v5794 = vld [vmem:[#allocation10 + $0xe90] sm:$0xff]
    %v5795 = vld [vmem:[#allocation10 + $0xe98] sm:$0xff]
    %v5796 = vld [vmem:[#allocation10 + $0xea0] sm:$0xff]
    %v5797 = vld [vmem:[#allocation10 + $0xea8] sm:$0xff]
    %v5798 = vld [vmem:[#allocation10 + $0xeb0] sm:$0xff]
    %v5799 = vld [vmem:[#allocation10 + $0xeb8] sm:$0xff]
    %v5800 = vld [vmem:[#allocation10 + $0xec0] sm:$0xff]
    %v5801 = vld [vmem:[#allocation10 + $0xec8] sm:$0xff]
    %v5802 = vld [vmem:[#allocation10 + $0xed0] sm:$0xff]
    %v5803 = vld [vmem:[#allocation10 + $0xed8] sm:$0xff]
    %v5804 = vld [vmem:[#allocation10 + $0xee0] sm:$0xff]
    %v5805 = vld [vmem:[#allocation10 + $0xee8] sm:$0xff]
    %v5806 = vld [vmem:[#allocation10 + $0xef0] sm:$0xff]
    %v5807 = vld [vmem:[#allocation10 + $0xef8] sm:$0xff]
    %v5808 = vld [vmem:[#allocation10 + $0xf00] sm:$0xff]
    %v5809 = vld [vmem:[#allocation10 + $0xf08] sm:$0xff]
    %v5810 = vld [vmem:[#allocation10 + $0xf10] sm:$0xff]
    %v5811 = vld [vmem:[#allocation10 + $0xf18] sm:$0xff]
    %v5812 = vld [vmem:[#allocation10 + $0xf20] sm:$0xff]
    %v5813 = vld [vmem:[#allocation10 + $0xf28] sm:$0xff]
    %v5814 = vld [vmem:[#allocation10 + $0xf30] sm:$0xff]
    %v5815 = vld [vmem:[#allocation10 + $0xf38] sm:$0xff]
    %v5816 = vld [vmem:[#allocation10 + $0xf40] sm:$0xff]
    %v5817 = vld [vmem:[#allocation10 + $0xf48] sm:$0xff]
    %v5818 = vld [vmem:[#allocation10 + $0xf50] sm:$0xff]
    %v5819 = vld [vmem:[#allocation10 + $0xf58] sm:$0xff]
    %v5820 = vld [vmem:[#allocation10 + $0xf60] sm:$0xff]
    %v5821 = vld [vmem:[#allocation10 + $0xf68] sm:$0xff]
    %v5822 = vld [vmem:[#allocation10 + $0xf70] sm:$0xff]
    %v5823 = vld [vmem:[#allocation10 + $0xf78] sm:$0xff]
    %v5824 = vld [vmem:[#allocation10 + $0xf80] sm:$0xff]
    %v5825 = vld [vmem:[#allocation10 + $0xf88] sm:$0xff]
    %v5826 = vld [vmem:[#allocation10 + $0xf90] sm:$0xff]
    %v5827 = vld [vmem:[#allocation10 + $0xf98] sm:$0xff]
    %v5828 = vld [vmem:[#allocation10 + $0xfa0] sm:$0xff]
    %v5829 = vld [vmem:[#allocation10 + $0xfa8] sm:$0xff]
    %v5830 = vld [vmem:[#allocation10 + $0xfb0] sm:$0xff]
    %v5831 = vld [vmem:[#allocation10 + $0xfb8] sm:$0xff]
    %v5832 = vld [vmem:[#allocation10 + $0xfc0] sm:$0xff]
    %v5833 = vld [vmem:[#allocation10 + $0xfc8] sm:$0xff]
    %v5834 = vld [vmem:[#allocation10 + $0xfd0] sm:$0xff]
    %v5835 = vld [vmem:[#allocation10 + $0xfd8] sm:$0xff]
    %v5836 = vld [vmem:[#allocation10 + $0xfe0] sm:$0xff]
    %v5837 = vld [vmem:[#allocation10 + $0xfe8] sm:$0xff]
    %v5838 = vld [vmem:[#allocation10 + $0xff0] sm:$0xff]
    %v5839 = vld [vmem:[#allocation10 + $0xff8] sm:$0xff]
    %5840 = vmatpush.msra.mxu0 %v5806
    %5841 = vmatpush.msra.mxu0 %v5804
    %5842 = vmatpush.msra.mxu0 %v5802
    %5843 = vmatpush.msra.mxu0 %v5800
    %5844 = vmatpush.msra.mxu0 %v5798
    %5845 = vmatpush.msra.mxu0 %v5796
    %5846 = vmatpush.msra.mxu0 %v5794
    %5847 = vmatpush.msra.mxu0 %v5792
    %5848 = vmatpush.msra.mxu0 %v5790
    %5849 = vmatpush.msra.mxu0 %v5788
    %5850 = vmatpush.msra.mxu0 %v5786
    %5851 = vmatpush.msra.mxu0 %v5784
    %5852 = vmatpush.msra.mxu0 %v5782
    %5853 = vmatpush.msra.mxu0 %v5780
    %5854 = vmatpush.msra.mxu0 %v5778
    %5855 = vmatpush.msra.mxu0 %v5776
    %5856 = vmatmul.f32.gmra.mxu0 %v3796
    %v5857 = vpop.f32.mrf.mxu0
    %v5858 = vadd.f32 0.0, %v5857
    %5859 = vmatmul.f32.gmra.mxu0 %v3799
    %v5860 = vpop.f32.mrf.mxu0
    %v5861 = vadd.f32 0.0, %v5860
    %5862 = vmatmul.f32.gmra.mxu0 %v3802
    %v5863 = vpop.f32.mrf.mxu0
    %v5864 = vadd.f32 0.0, %v5863
    %5865 = vmatmul.f32.gmra.mxu0 %v3805
    %v5866 = vpop.f32.mrf.mxu0
    %v5867 = vadd.f32 0.0, %v5866
    %5868 = vmatmul.f32.gmra.mxu0 %v3808
    %v5869 = vpop.f32.mrf.mxu0
    %v5870 = vadd.f32 0.0, %v5869
    %5871 = vmatmul.f32.gmra.mxu0 %v3811
    %v5872 = vpop.f32.mrf.mxu0
    %v5873 = vadd.f32 0.0, %v5872
    %5874 = vmatmul.f32.gmra.mxu0 %v3814
    %v5875 = vpop.f32.mrf.mxu0
    %v5876 = vadd.f32 0.0, %v5875
    %5877 = vmatmul.f32.gmra.mxu0 %v3817
    %v5878 = vpop.f32.mrf.mxu0
    %v5879 = vadd.f32 0.0, %v5878
    %5880 = vdwg.mxu0
    %5881 = vmatpush.msra.mxu0 %v5838
    %5882 = vmatpush.msra.mxu0 %v5836
    %5883 = vmatpush.msra.mxu0 %v5834
    %5884 = vmatpush.msra.mxu0 %v5832
    %5885 = vmatpush.msra.mxu0 %v5830
    %5886 = vmatpush.msra.mxu0 %v5828
    %5887 = vmatpush.msra.mxu0 %v5826
    %5888 = vmatpush.msra.mxu0 %v5824
    %5889 = vmatpush.msra.mxu0 %v5822
    %5890 = vmatpush.msra.mxu0 %v5820
    %5891 = vmatpush.msra.mxu0 %v5818
    %5892 = vmatpush.msra.mxu0 %v5816
    %5893 = vmatpush.msra.mxu0 %v5814
    %5894 = vmatpush.msra.mxu0 %v5812
    %5895 = vmatpush.msra.mxu0 %v5810
    %5896 = vmatpush.msra.mxu0 %v5808
    %5897 = vmatmul.f32.gmra.mxu0 %v4005
    %v5898 = vpop.f32.mrf.mxu0
    %v5899 = vadd.f32 %v5858, %v5898
    %5900 = vmatmul.f32.gmra.mxu0 %v4008
    %v5901 = vpop.f32.mrf.mxu0
    %v5902 = vadd.f32 %v5861, %v5901
    %5903 = vmatmul.f32.gmra.mxu0 %v4011
    %v5904 = vpop.f32.mrf.mxu0
    %v5905 = vadd.f32 %v5864, %v5904
    %5906 = vmatmul.f32.gmra.mxu0 %v4014
    %v5907 = vpop.f32.mrf.mxu0
    %v5908 = vadd.f32 %v5867, %v5907
    %5909 = vmatmul.f32.gmra.mxu0 %v4017
    %v5910 = vpop.f32.mrf.mxu0
    %v5911 = vadd.f32 %v5870, %v5910
    %5912 = vmatmul.f32.gmra.mxu0 %v4020
    %v5913 = vpop.f32.mrf.mxu0
    %v5914 = vadd.f32 %v5873, %v5913
    %5915 = vmatmul.f32.gmra.mxu0 %v4023
    %v5916 = vpop.f32.mrf.mxu0
    %v5917 = vadd.f32 %v5876, %v5916
    %5918 = vmatmul.f32.gmra.mxu0 %v4026
    %v5919 = vpop.f32.mrf.mxu0
    %v5920 = vadd.f32 %v5879, %v5919
    %5921 = vdwg.mxu0
    %5922 = vmatpush.msra.mxu0 %v5807
    %5923 = vmatpush.msra.mxu0 %v5805
    %5924 = vmatpush.msra.mxu0 %v5803
    %5925 = vmatpush.msra.mxu0 %v5801
    %5926 = vmatpush.msra.mxu0 %v5799
    %5927 = vmatpush.msra.mxu0 %v5797
    %5928 = vmatpush.msra.mxu0 %v5795
    %5929 = vmatpush.msra.mxu0 %v5793
    %5930 = vmatpush.msra.mxu0 %v5791
    %5931 = vmatpush.msra.mxu0 %v5789
    %5932 = vmatpush.msra.mxu0 %v5787
    %5933 = vmatpush.msra.mxu0 %v5785
    %5934 = vmatpush.msra.mxu0 %v5783
    %5935 = vmatpush.msra.mxu0 %v5781
    %5936 = vmatpush.msra.mxu0 %v5779
    %5937 = vmatpush.msra.mxu0 %v5777
    %5938 = vmatmul.f32.gmra.mxu0 %v3796
    %v5939 = vpop.f32.mrf.mxu0
    %v5940 = vadd.f32 0.0, %v5939
    %5941 = vmatmul.f32.gmra.mxu0 %v3799
    %v5942 = vpop.f32.mrf.mxu0
    %v5943 = vadd.f32 0.0, %v5942
    %5944 = vmatmul.f32.gmra.mxu0 %v3802
    %v5945 = vpop.f32.mrf.mxu0
    %v5946 = vadd.f32 0.0, %v5945
    %5947 = vmatmul.f32.gmra.mxu0 %v3805
    %v5948 = vpop.f32.mrf.mxu0
    %v5949 = vadd.f32 0.0, %v5948
    %5950 = vmatmul.f32.gmra.mxu0 %v3808
    %v5951 = vpop.f32.mrf.mxu0
    %v5952 = vadd.f32 0.0, %v5951
    %5953 = vmatmul.f32.gmra.mxu0 %v3811
    %v5954 = vpop.f32.mrf.mxu0
    %v5955 = vadd.f32 0.0, %v5954
    %5956 = vmatmul.f32.gmra.mxu0 %v3814
    %v5957 = vpop.f32.mrf.mxu0
    %v5958 = vadd.f32 0.0, %v5957
    %5959 = vmatmul.f32.gmra.mxu0 %v3817
    %v5960 = vpop.f32.mrf.mxu0
    %v5961 = vadd.f32 0.0, %v5960
    %5962 = vdwg.mxu0
    %5963 = vmatpush.msra.mxu0 %v5839
    %5964 = vmatpush.msra.mxu0 %v5837
    %5965 = vmatpush.msra.mxu0 %v5835
    %5966 = vmatpush.msra.mxu0 %v5833
    %5967 = vmatpush.msra.mxu0 %v5831
    %5968 = vmatpush.msra.mxu0 %v5829
    %5969 = vmatpush.msra.mxu0 %v5827
    %5970 = vmatpush.msra.mxu0 %v5825
    %5971 = vmatpush.msra.mxu0 %v5823
    %5972 = vmatpush.msra.mxu0 %v5821
    %5973 = vmatpush.msra.mxu0 %v5819
    %5974 = vmatpush.msra.mxu0 %v5817
    %5975 = vmatpush.msra.mxu0 %v5815
    %5976 = vmatpush.msra.mxu0 %v5813
    %5977 = vmatpush.msra.mxu0 %v5811
    %5978 = vmatpush.msra.mxu0 %v5809
    %5979 = vmatmul.f32.gmra.mxu0 %v4005
    %v5980 = vpop.f32.mrf.mxu0
    %v5981 = vadd.f32 %v5940, %v5980
    %5982 = vmatmul.f32.gmra.mxu0 %v4008
    %v5983 = vpop.f32.mrf.mxu0
    %v5984 = vadd.f32 %v5943, %v5983
    %5985 = vmatmul.f32.gmra.mxu0 %v4011
    %v5986 = vpop.f32.mrf.mxu0
    %v5987 = vadd.f32 %v5946, %v5986
    %5988 = vmatmul.f32.gmra.mxu0 %v4014
    %v5989 = vpop.f32.mrf.mxu0
    %v5990 = vadd.f32 %v5949, %v5989
    %5991 = vmatmul.f32.gmra.mxu0 %v4017
    %v5992 = vpop.f32.mrf.mxu0
    %v5993 = vadd.f32 %v5952, %v5992
    %5994 = vmatmul.f32.gmra.mxu0 %v4020
    %v5995 = vpop.f32.mrf.mxu0
    %v5996 = vadd.f32 %v5955, %v5995
    %5997 = vmatmul.f32.gmra.mxu0 %v4023
    %v5998 = vpop.f32.mrf.mxu0
    %v5999 = vadd.f32 %v5958, %v5998
    %6000 = vmatmul.f32.gmra.mxu0 %v4026
    %v6001 = vpop.f32.mrf.mxu0
    %v6002 = vadd.f32 %v5961, %v6001
    %6003 = vdwg.mxu0
    %v6004 = vadd.f32 %v5760, %v5899
    %v6005 = vadd.f32 %v5761, %v5981
    %v6006 = vadd.f32 %v5762, %v5902
    %v6007 = vadd.f32 %v5763, %v5984
    %v6008 = vadd.f32 %v5764, %v5905
    %v6009 = vadd.f32 %v5765, %v5987
    %v6010 = vadd.f32 %v5766, %v5908
    %v6011 = vadd.f32 %v5767, %v5990
    %v6012 = vadd.f32 %v5768, %v5911
    %v6013 = vadd.f32 %v5769, %v5993
    %v6014 = vadd.f32 %v5770, %v5914
    %v6015 = vadd.f32 %v5771, %v5996
    %v6016 = vadd.f32 %v5772, %v5917
    %v6017 = vadd.f32 %v5773, %v5999
    %v6018 = vadd.f32 %v5774, %v5920
    %v6019 = vadd.f32 %v5775, %v6002
    %v6020 = vld [vmem:[#allocation10 + $0x1000] sm:$0xff]
    %v6021 = vld [vmem:[#allocation10 + $0x1008] sm:$0xff]
    %v6022 = vld [vmem:[#allocation10 + $0x1010] sm:$0xff]
    %v6023 = vld [vmem:[#allocation10 + $0x1018] sm:$0xff]
    %v6024 = vld [vmem:[#allocation10 + $0x1020] sm:$0xff]
    %v6025 = vld [vmem:[#allocation10 + $0x1028] sm:$0xff]
    %v6026 = vld [vmem:[#allocation10 + $0x1030] sm:$0xff]
    %v6027 = vld [vmem:[#allocation10 + $0x1038] sm:$0xff]
    %v6028 = vld [vmem:[#allocation10 + $0x1040] sm:$0xff]
    %v6029 = vld [vmem:[#allocation10 + $0x1048] sm:$0xff]
    %v6030 = vld [vmem:[#allocation10 + $0x1050] sm:$0xff]
    %v6031 = vld [vmem:[#allocation10 + $0x1058] sm:$0xff]
    %v6032 = vld [vmem:[#allocation10 + $0x1060] sm:$0xff]
    %v6033 = vld [vmem:[#allocation10 + $0x1068] sm:$0xff]
    %v6034 = vld [vmem:[#allocation10 + $0x1070] sm:$0xff]
    %v6035 = vld [vmem:[#allocation10 + $0x1078] sm:$0xff]
    %v6036 = vld [vmem:[#allocation10 + $0x1080] sm:$0xff]
    %v6037 = vld [vmem:[#allocation10 + $0x1088] sm:$0xff]
    %v6038 = vld [vmem:[#allocation10 + $0x1090] sm:$0xff]
    %v6039 = vld [vmem:[#allocation10 + $0x1098] sm:$0xff]
    %v6040 = vld [vmem:[#allocation10 + $0x10a0] sm:$0xff]
    %v6041 = vld [vmem:[#allocation10 + $0x10a8] sm:$0xff]
    %v6042 = vld [vmem:[#allocation10 + $0x10b0] sm:$0xff]
    %v6043 = vld [vmem:[#allocation10 + $0x10b8] sm:$0xff]
    %v6044 = vld [vmem:[#allocation10 + $0x10c0] sm:$0xff]
    %v6045 = vld [vmem:[#allocation10 + $0x10c8] sm:$0xff]
    %v6046 = vld [vmem:[#allocation10 + $0x10d0] sm:$0xff]
    %v6047 = vld [vmem:[#allocation10 + $0x10d8] sm:$0xff]
    %v6048 = vld [vmem:[#allocation10 + $0x10e0] sm:$0xff]
    %v6049 = vld [vmem:[#allocation10 + $0x10e8] sm:$0xff]
    %v6050 = vld [vmem:[#allocation10 + $0x10f0] sm:$0xff]
    %v6051 = vld [vmem:[#allocation10 + $0x10f8] sm:$0xff]
    %v6052 = vld [vmem:[#allocation10 + $0x1100] sm:$0xff]
    %v6053 = vld [vmem:[#allocation10 + $0x1108] sm:$0xff]
    %v6054 = vld [vmem:[#allocation10 + $0x1110] sm:$0xff]
    %v6055 = vld [vmem:[#allocation10 + $0x1118] sm:$0xff]
    %v6056 = vld [vmem:[#allocation10 + $0x1120] sm:$0xff]
    %v6057 = vld [vmem:[#allocation10 + $0x1128] sm:$0xff]
    %v6058 = vld [vmem:[#allocation10 + $0x1130] sm:$0xff]
    %v6059 = vld [vmem:[#allocation10 + $0x1138] sm:$0xff]
    %v6060 = vld [vmem:[#allocation10 + $0x1140] sm:$0xff]
    %v6061 = vld [vmem:[#allocation10 + $0x1148] sm:$0xff]
    %v6062 = vld [vmem:[#allocation10 + $0x1150] sm:$0xff]
    %v6063 = vld [vmem:[#allocation10 + $0x1158] sm:$0xff]
    %v6064 = vld [vmem:[#allocation10 + $0x1160] sm:$0xff]
    %v6065 = vld [vmem:[#allocation10 + $0x1168] sm:$0xff]
    %v6066 = vld [vmem:[#allocation10 + $0x1170] sm:$0xff]
    %v6067 = vld [vmem:[#allocation10 + $0x1178] sm:$0xff]
    %v6068 = vld [vmem:[#allocation10 + $0x1180] sm:$0xff]
    %v6069 = vld [vmem:[#allocation10 + $0x1188] sm:$0xff]
    %v6070 = vld [vmem:[#allocation10 + $0x1190] sm:$0xff]
    %v6071 = vld [vmem:[#allocation10 + $0x1198] sm:$0xff]
    %v6072 = vld [vmem:[#allocation10 + $0x11a0] sm:$0xff]
    %v6073 = vld [vmem:[#allocation10 + $0x11a8] sm:$0xff]
    %v6074 = vld [vmem:[#allocation10 + $0x11b0] sm:$0xff]
    %v6075 = vld [vmem:[#allocation10 + $0x11b8] sm:$0xff]
    %v6076 = vld [vmem:[#allocation10 + $0x11c0] sm:$0xff]
    %v6077 = vld [vmem:[#allocation10 + $0x11c8] sm:$0xff]
    %v6078 = vld [vmem:[#allocation10 + $0x11d0] sm:$0xff]
    %v6079 = vld [vmem:[#allocation10 + $0x11d8] sm:$0xff]
    %v6080 = vld [vmem:[#allocation10 + $0x11e0] sm:$0xff]
    %v6081 = vld [vmem:[#allocation10 + $0x11e8] sm:$0xff]
    %v6082 = vld [vmem:[#allocation10 + $0x11f0] sm:$0xff]
    %v6083 = vld [vmem:[#allocation10 + $0x11f8] sm:$0xff]
    %6084 = vmatpush.msra.mxu0 %v6050
    %6085 = vmatpush.msra.mxu0 %v6048
    %6086 = vmatpush.msra.mxu0 %v6046
    %6087 = vmatpush.msra.mxu0 %v6044
    %6088 = vmatpush.msra.mxu0 %v6042
    %6089 = vmatpush.msra.mxu0 %v6040
    %6090 = vmatpush.msra.mxu0 %v6038
    %6091 = vmatpush.msra.mxu0 %v6036
    %6092 = vmatpush.msra.mxu0 %v6034
    %6093 = vmatpush.msra.mxu0 %v6032
    %6094 = vmatpush.msra.mxu0 %v6030
    %6095 = vmatpush.msra.mxu0 %v6028
    %6096 = vmatpush.msra.mxu0 %v6026
    %6097 = vmatpush.msra.mxu0 %v6024
    %6098 = vmatpush.msra.mxu0 %v6022
    %6099 = vmatpush.msra.mxu0 %v6020
    %6100 = vmatmul.f32.gmra.mxu0 %v3820
    %v6101 = vpop.f32.mrf.mxu0
    %v6102 = vadd.f32 0.0, %v6101
    %6103 = vmatmul.f32.gmra.mxu0 %v3823
    %v6104 = vpop.f32.mrf.mxu0
    %v6105 = vadd.f32 0.0, %v6104
    %6106 = vmatmul.f32.gmra.mxu0 %v3826
    %v6107 = vpop.f32.mrf.mxu0
    %v6108 = vadd.f32 0.0, %v6107
    %6109 = vmatmul.f32.gmra.mxu0 %v3829
    %v6110 = vpop.f32.mrf.mxu0
    %v6111 = vadd.f32 0.0, %v6110
    %6112 = vmatmul.f32.gmra.mxu0 %v3832
    %v6113 = vpop.f32.mrf.mxu0
    %v6114 = vadd.f32 0.0, %v6113
    %6115 = vmatmul.f32.gmra.mxu0 %v3835
    %v6116 = vpop.f32.mrf.mxu0
    %v6117 = vadd.f32 0.0, %v6116
    %6118 = vmatmul.f32.gmra.mxu0 %v3838
    %v6119 = vpop.f32.mrf.mxu0
    %v6120 = vadd.f32 0.0, %v6119
    %6121 = vmatmul.f32.gmra.mxu0 %v3841
    %v6122 = vpop.f32.mrf.mxu0
    %v6123 = vadd.f32 0.0, %v6122
    %6124 = vdwg.mxu0
    %6125 = vmatpush.msra.mxu0 %v6082
    %6126 = vmatpush.msra.mxu0 %v6080
    %6127 = vmatpush.msra.mxu0 %v6078
    %6128 = vmatpush.msra.mxu0 %v6076
    %6129 = vmatpush.msra.mxu0 %v6074
    %6130 = vmatpush.msra.mxu0 %v6072
    %6131 = vmatpush.msra.mxu0 %v6070
    %6132 = vmatpush.msra.mxu0 %v6068
    %6133 = vmatpush.msra.mxu0 %v6066
    %6134 = vmatpush.msra.mxu0 %v6064
    %6135 = vmatpush.msra.mxu0 %v6062
    %6136 = vmatpush.msra.mxu0 %v6060
    %6137 = vmatpush.msra.mxu0 %v6058
    %6138 = vmatpush.msra.mxu0 %v6056
    %6139 = vmatpush.msra.mxu0 %v6054
    %6140 = vmatpush.msra.mxu0 %v6052
    %6141 = vmatmul.f32.gmra.mxu0 %v4029
    %v6142 = vpop.f32.mrf.mxu0
    %v6143 = vadd.f32 %v6102, %v6142
    %6144 = vmatmul.f32.gmra.mxu0 %v4032
    %v6145 = vpop.f32.mrf.mxu0
    %v6146 = vadd.f32 %v6105, %v6145
    %6147 = vmatmul.f32.gmra.mxu0 %v4035
    %v6148 = vpop.f32.mrf.mxu0
    %v6149 = vadd.f32 %v6108, %v6148
    %6150 = vmatmul.f32.gmra.mxu0 %v4038
    %v6151 = vpop.f32.mrf.mxu0
    %v6152 = vadd.f32 %v6111, %v6151
    %6153 = vmatmul.f32.gmra.mxu0 %v4041
    %v6154 = vpop.f32.mrf.mxu0
    %v6155 = vadd.f32 %v6114, %v6154
    %6156 = vmatmul.f32.gmra.mxu0 %v4044
    %v6157 = vpop.f32.mrf.mxu0
    %v6158 = vadd.f32 %v6117, %v6157
    %6159 = vmatmul.f32.gmra.mxu0 %v4047
    %v6160 = vpop.f32.mrf.mxu0
    %v6161 = vadd.f32 %v6120, %v6160
    %6162 = vmatmul.f32.gmra.mxu0 %v4050
    %v6163 = vpop.f32.mrf.mxu0
    %v6164 = vadd.f32 %v6123, %v6163
    %6165 = vdwg.mxu0
    %6166 = vmatpush.msra.mxu0 %v6051
    %6167 = vmatpush.msra.mxu0 %v6049
    %6168 = vmatpush.msra.mxu0 %v6047
    %6169 = vmatpush.msra.mxu0 %v6045
    %6170 = vmatpush.msra.mxu0 %v6043
    %6171 = vmatpush.msra.mxu0 %v6041
    %6172 = vmatpush.msra.mxu0 %v6039
    %6173 = vmatpush.msra.mxu0 %v6037
    %6174 = vmatpush.msra.mxu0 %v6035
    %6175 = vmatpush.msra.mxu0 %v6033
    %6176 = vmatpush.msra.mxu0 %v6031
    %6177 = vmatpush.msra.mxu0 %v6029
    %6178 = vmatpush.msra.mxu0 %v6027
    %6179 = vmatpush.msra.mxu0 %v6025
    %6180 = vmatpush.msra.mxu0 %v6023
    %6181 = vmatpush.msra.mxu0 %v6021
    %6182 = vmatmul.f32.gmra.mxu0 %v3820
    %v6183 = vpop.f32.mrf.mxu0
    %v6184 = vadd.f32 0.0, %v6183
    %6185 = vmatmul.f32.gmra.mxu0 %v3823
    %v6186 = vpop.f32.mrf.mxu0
    %v6187 = vadd.f32 0.0, %v6186
    %6188 = vmatmul.f32.gmra.mxu0 %v3826
    %v6189 = vpop.f32.mrf.mxu0
    %v6190 = vadd.f32 0.0, %v6189
    %6191 = vmatmul.f32.gmra.mxu0 %v3829
    %v6192 = vpop.f32.mrf.mxu0
    %v6193 = vadd.f32 0.0, %v6192
    %6194 = vmatmul.f32.gmra.mxu0 %v3832
    %v6195 = vpop.f32.mrf.mxu0
    %v6196 = vadd.f32 0.0, %v6195
    %6197 = vmatmul.f32.gmra.mxu0 %v3835
    %v6198 = vpop.f32.mrf.mxu0
    %v6199 = vadd.f32 0.0, %v6198
    %6200 = vmatmul.f32.gmra.mxu0 %v3838
    %v6201 = vpop.f32.mrf.mxu0
    %v6202 = vadd.f32 0.0, %v6201
    %6203 = vmatmul.f32.gmra.mxu0 %v3841
    %v6204 = vpop.f32.mrf.mxu0
    %v6205 = vadd.f32 0.0, %v6204
    %6206 = vdwg.mxu0
    %6207 = vmatpush.msra.mxu0 %v6083
    %6208 = vmatpush.msra.mxu0 %v6081
    %6209 = vmatpush.msra.mxu0 %v6079
    %6210 = vmatpush.msra.mxu0 %v6077
    %6211 = vmatpush.msra.mxu0 %v6075
    %6212 = vmatpush.msra.mxu0 %v6073
    %6213 = vmatpush.msra.mxu0 %v6071
    %6214 = vmatpush.msra.mxu0 %v6069
    %6215 = vmatpush.msra.mxu0 %v6067
    %6216 = vmatpush.msra.mxu0 %v6065
    %6217 = vmatpush.msra.mxu0 %v6063
    %6218 = vmatpush.msra.mxu0 %v6061
    %6219 = vmatpush.msra.mxu0 %v6059
    %6220 = vmatpush.msra.mxu0 %v6057
    %6221 = vmatpush.msra.mxu0 %v6055
    %6222 = vmatpush.msra.mxu0 %v6053
    %6223 = vmatmul.f32.gmra.mxu0 %v4029
    %v6224 = vpop.f32.mrf.mxu0
    %v6225 = vadd.f32 %v6184, %v6224
    %6226 = vmatmul.f32.gmra.mxu0 %v4032
    %v6227 = vpop.f32.mrf.mxu0
    %v6228 = vadd.f32 %v6187, %v6227
    %6229 = vmatmul.f32.gmra.mxu0 %v4035
    %v6230 = vpop.f32.mrf.mxu0
    %v6231 = vadd.f32 %v6190, %v6230
    %6232 = vmatmul.f32.gmra.mxu0 %v4038
    %v6233 = vpop.f32.mrf.mxu0
    %v6234 = vadd.f32 %v6193, %v6233
    %6235 = vmatmul.f32.gmra.mxu0 %v4041
    %v6236 = vpop.f32.mrf.mxu0
    %v6237 = vadd.f32 %v6196, %v6236
    %6238 = vmatmul.f32.gmra.mxu0 %v4044
    %v6239 = vpop.f32.mrf.mxu0
    %v6240 = vadd.f32 %v6199, %v6239
    %6241 = vmatmul.f32.gmra.mxu0 %v4047
    %v6242 = vpop.f32.mrf.mxu0
    %v6243 = vadd.f32 %v6202, %v6242
    %6244 = vmatmul.f32.gmra.mxu0 %v4050
    %v6245 = vpop.f32.mrf.mxu0
    %v6246 = vadd.f32 %v6205, %v6245
    %6247 = vdwg.mxu0
    %v6248 = vadd.f32 %v6004, %v6143
    %v6249 = vadd.f32 %v6005, %v6225
    %v6250 = vadd.f32 %v6006, %v6146
    %v6251 = vadd.f32 %v6007, %v6228
    %v6252 = vadd.f32 %v6008, %v6149
    %v6253 = vadd.f32 %v6009, %v6231
    %v6254 = vadd.f32 %v6010, %v6152
    %v6255 = vadd.f32 %v6011, %v6234
    %v6256 = vadd.f32 %v6012, %v6155
    %v6257 = vadd.f32 %v6013, %v6237
    %v6258 = vadd.f32 %v6014, %v6158
    %v6259 = vadd.f32 %v6015, %v6240
    %v6260 = vadd.f32 %v6016, %v6161
    %v6261 = vadd.f32 %v6017, %v6243
    %v6262 = vadd.f32 %v6018, %v6164
    %v6263 = vadd.f32 %v6019, %v6246
    %6264 = vst [vmem:[%s10] sm:$0xff] %v6248
    %6265 = vst [vmem:[%s10 + $0x8] sm:$0xff] %v6249
    %6266 = vst [vmem:[%s10 + $0x10] sm:$0xff] %v6250
    %6267 = vst [vmem:[%s10 + $0x18] sm:$0xff] %v6251
    %6268 = vst [vmem:[%s10 + $0x20] sm:$0xff] %v6252
    %6269 = vst [vmem:[%s10 + $0x28] sm:$0xff] %v6253
    %6270 = vst [vmem:[%s10 + $0x30] sm:$0xff] %v6254
    %6271 = vst [vmem:[%s10 + $0x38] sm:$0xff] %v6255
    %6272 = vst [vmem:[%s10 + $0x40] sm:$0xff] %v6256
    %6273 = vst [vmem:[%s10 + $0x48] sm:$0xff] %v6257
    %6274 = vst [vmem:[%s10 + $0x50] sm:$0xff] %v6258
    %6275 = vst [vmem:[%s10 + $0x58] sm:$0xff] %v6259
    %6276 = vst [vmem:[%s10 + $0x60] sm:$0xff] %v6260
    %6277 = vst [vmem:[%s10 + $0x68] sm:$0xff] %v6261
    %6278 = vst [vmem:[%s10 + $0x70] sm:$0xff] %v6262
    %6279 = vst [vmem:[%s10 + $0x78] sm:$0xff] %v6263
    // Predicated region
    $region70: #{cnn_c_forward.1} parent=1 // pred_check
      _
    $region71: #{cnn_c_forward.1} parent=1 // pred_check_branch
      %6281 = sbr.rel (0) target = $region73
    $region72: #{cnn_c_forward.1} parent=1 // pred_region
      _
    $region73: #{cnn_c_forward.1} parent=1 // pred_fallthru
      _
    // Predicated region
    $region74: #{cnn_c_forward.1} parent=1 // pred_check
      _
    $region75: #{cnn_c_forward.1} parent=1 // pred_check_branch
      %6283 = sbr.rel (0) target = $region77
    $region76: #{cnn_c_forward.1} parent=1 // pred_region
      _
    $region77: #{cnn_c_forward.1} parent=1 // pred_fallthru
      _
    %6284 = vsyncpa [#allocation3], 1
    %6285 = vsyncpa [#allocation5], 1
    %6286 = vsyncpa [#allocation8], 1
    %6287 = vsyncpa [#allocation11], 1

</llo_original>
